<compile_context>
chip_gen: v5e
topology: v5e:2x2
jax: 0.10.0
libtpu: 0.0.40
codegen_flags: <defaults>
</compile_context>

<pallas_src>
import math

import jax
import jax.numpy as jnp
from jax import lax
from jax.experimental import pallas as pl
from jax.experimental.pallas import tpu as pltpu


# ----------------------------- fused kernel ----------------------------------
def _make_fused_kernel(n_layer):
    """Build the fused LSTM-stack + classifier kernel for `n_layer` layers.

    Ref order: x, [wih_t, whh4, bias] * n_layer, cls_w_t, cls_b, out,
               gx_i, gx_f, gx_g, gx_o, seq_buf
    """

    def kernel(*refs):
        x_ref = refs[0]
        layer_refs = refs[1:1 + 3 * n_layer]
        cls_w_ref = refs[1 + 3 * n_layer]
        cls_b_ref = refs[2 + 3 * n_layer]
        out_ref = refs[3 + 3 * n_layer]
        gx_i_scr = refs[4 + 3 * n_layer]
        gx_f_scr = refs[5 + 3 * n_layer]
        gx_g_scr = refs[6 + 3 * n_layer]
        gx_o_scr = refs[7 + 3 * n_layer]
        seq_scr = refs[8 + 3 * n_layer]          # inter-layer activations

        seq = x_ref.shape[0]
        batch = x_ref.shape[1]
        hidden = seq_scr.shape[2]

        h_final = None
        for layer in range(n_layer):
            wih_ref = layer_refs[3 * layer + 0]   # (feat_in, 4H)
            whh_ref = layer_refs[3 * layer + 1]   # (4, H, H)   per-gate W_hh^T
            b_ref = layer_refs[3 * layer + 2]     # (1, 4H)     b_ih + b_hh
            is_first = layer == 0
            is_last = layer == n_layer - 1

            # ---------- phase 1: time-parallel input projection (off the
            # recurrent critical path). One (batch, feat_in)x(feat_in, 4H)
            # MXU push per step; gate split happens here, not in the loop.
            def project(t, carry, wih_ref=wih_ref, b_ref=b_ref,
                        is_first=is_first):
                x_t = x_ref[t] if is_first else seq_scr[t]      # (batch, feat)
                gx = (jnp.dot(x_t, wih_ref[...],
                              preferred_element_type=jnp.float32)
                      + b_ref[...])                             # (batch, 4H)
                gx_i_scr[t] = gx[:, 0 * hidden:1 * hidden]
                gx_f_scr[t] = gx[:, 1 * hidden:2 * hidden]
                gx_g_scr[t] = gx[:, 2 * hidden:3 * hidden]
                gx_o_scr[t] = gx[:, 3 * hidden:4 * hidden]
                return carry

            lax.fori_loop(0, seq, project, 0, unroll=True)

            # ---------- phase 2: recurrence. Only h @ W_hh_g and the gate
            # elementwise math sit on the serial chain; no lane slicing.
            def step(t, carry, whh_ref=whh_ref, is_last=is_last):
                h, c = carry
                pre_i = gx_i_scr[t] + jnp.dot(
                    h, whh_ref[0], preferred_element_type=jnp.float32)
                pre_f = gx_f_scr[t] + jnp.dot(
                    h, whh_ref[1], preferred_element_type=jnp.float32)
                pre_g = gx_g_scr[t] + jnp.dot(
                    h, whh_ref[2], preferred_element_type=jnp.float32)
                pre_o = gx_o_scr[t] + jnp.dot(
                    h, whh_ref[3], preferred_element_type=jnp.float32)

                i_g = jax.nn.sigmoid(pre_i)
                f_g = jax.nn.sigmoid(pre_f)
                g_g = jnp.tanh(pre_g)
                o_g = jax.nn.sigmoid(pre_o)

                c_new = f_g * c + i_g * g_g
                h_new = o_g * jnp.tanh(c_new)

                if not is_last:
                    seq_scr[t] = h_new            # feed the next layer
                return (h_new, c_new)

            h0 = jnp.zeros((batch, hidden), jnp.float32)
            c0 = jnp.zeros((batch, hidden), jnp.float32)
            h_final, _ = lax.fori_loop(0, seq, step, (h0, c0), unroll=True)

        # ---------- fused classifier on the last timestep's hidden state.
        out_ref[...] = (jnp.dot(h_final, cls_w_ref[...],
                                preferred_element_type=jnp.float32)
                        + cls_b_ref[...])

    return kernel


# ----------------------------- full forward ----------------------------------
def rnn_forward(x_bsd, params):
    """Equivalent of Rnn.forward. x_bsd: (batch, seq, in_dim) -> (batch, n_class)."""
    x = jnp.transpose(x_bsd, (1, 0, 2)).astype(jnp.float32)  # (seq, batch, in_dim)
    seq, batch, _ = x.shape
    layers = params["lstm_layers"]
    n_layer = len(layers)
    hidden = layers[0][1].shape[-1]
    n_class = params["cls_w_t"].shape[1]

    kernel = _make_fused_kernel(n_layer)

    flat_inputs = [x]
    in_specs = [pl.BlockSpec(x.shape, lambda *_: (0, 0, 0))]
    for (wih_t, whh4, bias) in layers:
        flat_inputs += [wih_t, whh4, bias]
        in_specs += [
            pl.BlockSpec(wih_t.shape, lambda *_: (0, 0)),
            pl.BlockSpec(whh4.shape, lambda *_: (0, 0, 0)),
            pl.BlockSpec(bias.shape, lambda *_: (0, 0)),
        ]
    flat_inputs += [params["cls_w_t"], params["cls_b"]]
    in_specs += [
        pl.BlockSpec(params["cls_w_t"].shape, lambda *_: (0, 0)),
        pl.BlockSpec(params["cls_b"].shape, lambda *_: (0, 0)),
    ]

    return pl.pallas_call(
        kernel,
        out_shape=jax.ShapeDtypeStruct((batch, n_class), jnp.float32),
        grid_spec=pltpu.PrefetchScalarGridSpec(
            num_scalar_prefetch=0,
            grid=(1,),
            in_specs=in_specs,
            out_specs=pl.BlockSpec((batch, n_class), lambda *_: (0, 0)),
            scratch_shapes=[
                pltpu.VMEM((seq, batch, hidden), jnp.float32),  # gx_i
                pltpu.VMEM((seq, batch, hidden), jnp.float32),  # gx_f
                pltpu.VMEM((seq, batch, hidden), jnp.float32),  # gx_g
                pltpu.VMEM((seq, batch, hidden), jnp.float32),  # gx_o
                pltpu.VMEM((seq, batch, hidden), jnp.float32),  # inter-layer buf
            ],
        ),
        compiler_params=pltpu.CompilerParams(
            dimension_semantics=("arbitrary",),
            vmem_limit_bytes=32 * 1024 * 1024,
        ),
    )(*flat_inputs)


# ----------------------------- parameter init --------------------------------
def init_params(key, in_dim, hidden_dim, n_layer, n_class):
    """Deterministic init matching PyTorch shapes: U(-1/sqrt(H), 1/sqrt(H)).

    Stored per layer as:
      wih_t : (feat_in, 4H)  = weight_ih^T                 (gate order i,f,g,o)
      whh4  : (4, H, H)      = per-gate weight_hh_g^T
      bias  : (1, 4H)        = b_ih + b_hh
    """
    bound = 1.0 / math.sqrt(hidden_dim)
    params = {"lstm_layers": []}
    for layer in range(n_layer):
        feat_in = in_dim if layer == 0 else hidden_dim
        key, k1, k2, k3, k4 = jax.random.split(key, 5)
        w_ih = jax.random.uniform(k1, (4 * hidden_dim, feat_in), jnp.float32,
                                  -bound, bound)
        w_hh = jax.random.uniform(k2, (4 * hidden_dim, hidden_dim), jnp.float32,
                                  -bound, bound)
        b_ih = jax.random.uniform(k3, (4 * hidden_dim,), jnp.float32, -bound, bound)
        b_hh = jax.random.uniform(k4, (4 * hidden_dim,), jnp.float32, -bound, bound)
        wih_t = w_ih.T
        whh4 = w_hh.reshape(4, hidden_dim, hidden_dim).transpose(0, 2, 1)
        bias = (b_ih + b_hh)[None, :]
        params["lstm_layers"].append((wih_t, whh4, bias))

    key, k5, k6 = jax.random.split(key, 3)
    cls_bound = 1.0 / math.sqrt(hidden_dim)
    cls_w = jax.random.uniform(k5, (n_class, hidden_dim), jnp.float32,
                               -cls_bound, cls_bound)
    cls_b = jax.random.uniform(k6, (n_class,), jnp.float32, -cls_bound, cls_bound)
    params["cls_w_t"] = cls_w.T
    params["cls_b"] = cls_b[None, :]
    return params


# ----------------------------- pure-JAX reference ----------------------------
def rnn_forward_ref(x_bsd, params):
    x = jnp.transpose(x_bsd, (1, 0, 2)).astype(jnp.float32)
    for (wih_t, whh4, bias) in params["lstm_layers"]:
        seq, batch, _ = x.shape
        hidden = whh4.shape[-1]
        h = jnp.zeros((batch, hidden), jnp.float32)
        c = jnp.zeros((batch, hidden), jnp.float32)
        outs = []
        for t in range(seq):
            gx = x[t] @ wih_t + bias
            pre_i = gx[:, 0 * hidden:1 * hidden] + h @ whh4[0]
            pre_f = gx[:, 1 * hidden:2 * hidden] + h @ whh4[1]
            pre_g = gx[:, 2 * hidden:3 * hidden] + h @ whh4[2]
            pre_o = gx[:, 3 * hidden:4 * hidden] + h @ whh4[3]
            i_g = jax.nn.sigmoid(pre_i)
            f_g = jax.nn.sigmoid(pre_f)
            g_g = jnp.tanh(pre_g)
            o_g = jax.nn.sigmoid(pre_o)
            c = f_g * c + i_g * g_g
            h = o_g * jnp.tanh(c)
            outs.append(h)
        x = jnp.stack(outs, axis=0)
    return x[-1] @ params["cls_w_t"] + params["cls_b"]


# ----------------------------- main -------------------------------------------
if __name__ == "__main__":
    # Small shapes consistent with the module's forward (MNIST-row RNN style).
    batch, seq, in_dim = 2, 8, 16
    hidden_dim, n_layer, n_class = 32, 2, 10

    key = jax.random.PRNGKey(0)
    key, kx, kp = jax.random.split(key, 3)
    x = jax.random.normal(kx, (batch, seq, in_dim), jnp.float32)
    params = init_params(kp, in_dim, hidden_dim, n_layer, n_class)

    out = rnn_forward(x, params)
    out = jax.block_until_ready(out)

    ref = rnn_forward_ref(x, params)
    assert out.shape == (batch, n_class)
    assert jnp.allclose(out, ref, rtol=1e-4, atol=1e-4), "mismatch vs. JAX reference"

    print("KERNEL_OK")
</pallas_src>

<mosaic_0001>
module attributes {stable_mosaic.version = 11 : i64} {
  func.func @kernel(%arg0: i32, %arg1: memref<8x2x16xf32, #tpu.memory_space<vmem>>, %arg2: memref<16x128xf32, #tpu.memory_space<vmem>>, %arg3: memref<4x32x32xf32, #tpu.memory_space<vmem>>, %arg4: memref<1x128xf32, #tpu.memory_space<vmem>>, %arg5: memref<32x128xf32, #tpu.memory_space<vmem>>, %arg6: memref<4x32x32xf32, #tpu.memory_space<vmem>>, %arg7: memref<1x128xf32, #tpu.memory_space<vmem>>, %arg8: memref<32x10xf32, #tpu.memory_space<vmem>>, %arg9: memref<1x10xf32, #tpu.memory_space<vmem>>, %arg10: memref<2x10xf32, #tpu.memory_space<vmem>>, %arg11: memref<8x2x32xf32, #tpu.memory_space<vmem>>, %arg12: memref<8x2x32xf32, #tpu.memory_space<vmem>>, %arg13: memref<8x2x32xf32, #tpu.memory_space<vmem>>, %arg14: memref<8x2x32xf32, #tpu.memory_space<vmem>>, %arg15: memref<8x2x32xf32, #tpu.memory_space<vmem>>) attributes {dimension_semantics = [#tpu.dimension_semantics<arbitrary>], iteration_bounds = array<i64: 1>, scalar_prefetch = 0 : i64, scratch_operands = 5 : i64, tpu.core_type = #tpu.core_type<tc>, window_params = [{pipeline_mode = #tpu.pipeline_mode<synchronous>, transform_indices = @transform_0, window_bounds = array<i64: 8, 2, 16>}, {pipeline_mode = #tpu.pipeline_mode<synchronous>, transform_indices = @transform_1, window_bounds = array<i64: 16, 128>}, {pipeline_mode = #tpu.pipeline_mode<synchronous>, transform_indices = @transform_2, window_bounds = array<i64: 4, 32, 32>}, {pipeline_mode = #tpu.pipeline_mode<synchronous>, transform_indices = @transform_3, window_bounds = array<i64: 1, 128>}, {pipeline_mode = #tpu.pipeline_mode<synchronous>, transform_indices = @transform_4, window_bounds = array<i64: 32, 128>}, {pipeline_mode = #tpu.pipeline_mode<synchronous>, transform_indices = @transform_5, window_bounds = array<i64: 4, 32, 32>}, {pipeline_mode = #tpu.pipeline_mode<synchronous>, transform_indices = @transform_6, window_bounds = array<i64: 1, 128>}, {pipeline_mode = #tpu.pipeline_mode<synchronous>, transform_indices = @transform_7, window_bounds = array<i64: 32, 10>}, {pipeline_mode = #tpu.pipeline_mode<synchronous>, transform_indices = @transform_8, window_bounds = array<i64: 1, 10>}, {pipeline_mode = #tpu.pipeline_mode<synchronous>, transform_indices = @transform_9, window_bounds = array<i64: 2, 10>}]} {
    %c0_i32 = arith.constant 0 : i32
    %0 = arith.index_cast %c0_i32 : i32 to index
    %c0 = arith.constant 0 : index
    %c0_0 = arith.constant 0 : index
    %1 = vector.load %arg1[%0, %c0, %c0_0] : memref<8x2x16xf32, #tpu.memory_space<vmem>>, vector<1x2x16xf32>
    %2 = vector.shape_cast %1 : vector<1x2x16xf32> to vector<2x16xf32>
    %c0_1 = arith.constant 0 : index
    %c0_2 = arith.constant 0 : index
    %3 = vector.load %arg2[%c0_1, %c0_2] : memref<16x128xf32, #tpu.memory_space<vmem>>, vector<16x128xf32>
    %cst = arith.constant dense<0.000000e+00> : vector<2x128xf32>
    %4 = tpu.matmul %2, %3, %cst {dimension_numbers = #tpu.dot_dimension_numbers<[1], [0], [0], [1], [0, 0, 1, 1], [], []>} : vector<2x16xf32>, vector<16x128xf32>, vector<2x128xf32> -> vector<2x128xf32>
    %c0_3 = arith.constant 0 : index
    %c0_4 = arith.constant 0 : index
    %5 = vector.load %arg4[%c0_3, %c0_4] : memref<1x128xf32, #tpu.memory_space<vmem>>, vector<1x128xf32>
    %6 = vector.broadcast %5 : vector<1x128xf32> to vector<2x128xf32>
    %7 = arith.addf %4, %6 : vector<2x128xf32>
    %8 = vector.extract_strided_slice %7 {offsets = [0, 0], sizes = [2, 32], strides = [1, 1]} : vector<2x128xf32> to vector<2x32xf32>
    %9 = arith.index_cast %c0_i32 : i32 to index
    %c0_5 = arith.constant 0 : index
    %c0_6 = arith.constant 0 : index
    %10 = vector.load %arg11[%9, %c0_5, %c0_6] : memref<8x2x32xf32, #tpu.memory_space<vmem>>, vector<1x2x32xf32>
    %11 = vector.shape_cast %10 : vector<1x2x32xf32> to vector<2x32xf32>
    %12 = vector.shape_cast %8 : vector<2x32xf32> to vector<1x2x32xf32>
    tpu.vector_store %arg11[%9, %c0_5, %c0_6], %12 {strides = array<i32>} : memref<8x2x32xf32, #tpu.memory_space<vmem>>, vector<1x2x32xf32>,
    %13 = vector.extract_strided_slice %7 {offsets = [0, 32], sizes = [2, 32], strides = [1, 1]} : vector<2x128xf32> to vector<2x32xf32>
    %14 = arith.index_cast %c0_i32 : i32 to index
    %c0_7 = arith.constant 0 : index
    %c0_8 = arith.constant 0 : index
    %15 = vector.load %arg12[%14, %c0_7, %c0_8] : memref<8x2x32xf32, #tpu.memory_space<vmem>>, vector<1x2x32xf32>
    %16 = vector.shape_cast %15 : vector<1x2x32xf32> to vector<2x32xf32>
    %17 = vector.shape_cast %13 : vector<2x32xf32> to vector<1x2x32xf32>
    tpu.vector_store %arg12[%14, %c0_7, %c0_8], %17 {strides = array<i32>} : memref<8x2x32xf32, #tpu.memory_space<vmem>>, vector<1x2x32xf32>,
    %18 = vector.extract_strided_slice %7 {offsets = [0, 64], sizes = [2, 32], strides = [1, 1]} : vector<2x128xf32> to vector<2x32xf32>
    %19 = arith.index_cast %c0_i32 : i32 to index
    %c0_9 = arith.constant 0 : index
    %c0_10 = arith.constant 0 : index
    %20 = vector.load %arg13[%19, %c0_9, %c0_10] : memref<8x2x32xf32, #tpu.memory_space<vmem>>, vector<1x2x32xf32>
    %21 = vector.shape_cast %20 : vector<1x2x32xf32> to vector<2x32xf32>
    %22 = vector.shape_cast %18 : vector<2x32xf32> to vector<1x2x32xf32>
    tpu.vector_store %arg13[%19, %c0_9, %c0_10], %22 {strides = array<i32>} : memref<8x2x32xf32, #tpu.memory_space<vmem>>, vector<1x2x32xf32>,
    %23 = vector.extract_strided_slice %7 {offsets = [0, 96], sizes = [2, 32], strides = [1, 1]} : vector<2x128xf32> to vector<2x32xf32>
    %24 = arith.index_cast %c0_i32 : i32 to index
    %c0_11 = arith.constant 0 : index
    %c0_12 = arith.constant 0 : index
    %25 = vector.load %arg14[%24, %c0_11, %c0_12] : memref<8x2x32xf32, #tpu.memory_space<vmem>>, vector<1x2x32xf32>
    %26 = vector.shape_cast %25 : vector<1x2x32xf32> to vector<2x32xf32>
    %27 = vector.shape_cast %23 : vector<2x32xf32> to vector<1x2x32xf32>
    tpu.vector_store %arg14[%24, %c0_11, %c0_12], %27 {strides = array<i32>} : memref<8x2x32xf32, #tpu.memory_space<vmem>>, vector<1x2x32xf32>,
    %c1_i32 = arith.constant 1 : i32
    %28 = arith.index_cast %c1_i32 : i32 to index
    %c0_13 = arith.constant 0 : index
    %c0_14 = arith.constant 0 : index
    %29 = vector.load %arg1[%28, %c0_13, %c0_14] : memref<8x2x16xf32, #tpu.memory_space<vmem>>, vector<1x2x16xf32>
    %30 = vector.shape_cast %29 : vector<1x2x16xf32> to vector<2x16xf32>
    %c0_15 = arith.constant 0 : index
    %c0_16 = arith.constant 0 : index
    %31 = vector.load %arg2[%c0_15, %c0_16] : memref<16x128xf32, #tpu.memory_space<vmem>>, vector<16x128xf32>
    %cst_17 = arith.constant dense<0.000000e+00> : vector<2x128xf32>
    %32 = tpu.matmul %30, %31, %cst_17 {dimension_numbers = #tpu.dot_dimension_numbers<[1], [0], [0], [1], [0, 0, 1, 1], [], []>} : vector<2x16xf32>, vector<16x128xf32>, vector<2x128xf32> -> vector<2x128xf32>
    %c0_18 = arith.constant 0 : index
    %c0_19 = arith.constant 0 : index
    %33 = vector.load %arg4[%c0_18, %c0_19] : memref<1x128xf32, #tpu.memory_space<vmem>>, vector<1x128xf32>
    %34 = vector.broadcast %33 : vector<1x128xf32> to vector<2x128xf32>
    %35 = arith.addf %32, %34 : vector<2x128xf32>
    %36 = vector.extract_strided_slice %35 {offsets = [0, 0], sizes = [2, 32], strides = [1, 1]} : vector<2x128xf32> to vector<2x32xf32>
    %37 = arith.index_cast %c1_i32 : i32 to index
    %c0_20 = arith.constant 0 : index
    %c0_21 = arith.constant 0 : index
    %38 = vector.load %arg11[%37, %c0_20, %c0_21] : memref<8x2x32xf32, #tpu.memory_space<vmem>>, vector<1x2x32xf32>
    %39 = vector.shape_cast %38 : vector<1x2x32xf32> to vector<2x32xf32>
    %40 = vector.shape_cast %36 : vector<2x32xf32> to vector<1x2x32xf32>
    tpu.vector_store %arg11[%37, %c0_20, %c0_21], %40 {strides = array<i32>} : memref<8x2x32xf32, #tpu.memory_space<vmem>>, vector<1x2x32xf32>,
    %41 = vector.extract_strided_slice %35 {offsets = [0, 32], sizes = [2, 32], strides = [1, 1]} : vector<2x128xf32> to vector<2x32xf32>
    %42 = arith.index_cast %c1_i32 : i32 to index
    %c0_22 = arith.constant 0 : index
    %c0_23 = arith.constant 0 : index
    %43 = vector.load %arg12[%42, %c0_22, %c0_23] : memref<8x2x32xf32, #tpu.memory_space<vmem>>, vector<1x2x32xf32>
    %44 = vector.shape_cast %43 : vector<1x2x32xf32> to vector<2x32xf32>
    %45 = vector.shape_cast %41 : vector<2x32xf32> to vector<1x2x32xf32>
    tpu.vector_store %arg12[%42, %c0_22, %c0_23], %45 {strides = array<i32>} : memref<8x2x32xf32, #tpu.memory_space<vmem>>, vector<1x2x32xf32>,
    %46 = vector.extract_strided_slice %35 {offsets = [0, 64], sizes = [2, 32], strides = [1, 1]} : vector<2x128xf32> to vector<2x32xf32>
    %47 = arith.index_cast %c1_i32 : i32 to index
    %c0_24 = arith.constant 0 : index
    %c0_25 = arith.constant 0 : index
    %48 = vector.load %arg13[%47, %c0_24, %c0_25] : memref<8x2x32xf32, #tpu.memory_space<vmem>>, vector<1x2x32xf32>
    %49 = vector.shape_cast %48 : vector<1x2x32xf32> to vector<2x32xf32>
    %50 = vector.shape_cast %46 : vector<2x32xf32> to vector<1x2x32xf32>
    tpu.vector_store %arg13[%47, %c0_24, %c0_25], %50 {strides = array<i32>} : memref<8x2x32xf32, #tpu.memory_space<vmem>>, vector<1x2x32xf32>,
    %51 = vector.extract_strided_slice %35 {offsets = [0, 96], sizes = [2, 32], strides = [1, 1]} : vector<2x128xf32> to vector<2x32xf32>
    %52 = arith.index_cast %c1_i32 : i32 to index
    %c0_26 = arith.constant 0 : index
    %c0_27 = arith.constant 0 : index
    %53 = vector.load %arg14[%52, %c0_26, %c0_27] : memref<8x2x32xf32, #tpu.memory_space<vmem>>, vector<1x2x32xf32>
    %54 = vector.shape_cast %53 : vector<1x2x32xf32> to vector<2x32xf32>
    %55 = vector.shape_cast %51 : vector<2x32xf32> to vector<1x2x32xf32>
    tpu.vector_store %arg14[%52, %c0_26, %c0_27], %55 {strides = array<i32>} : memref<8x2x32xf32, #tpu.memory_space<vmem>>, vector<1x2x32xf32>,
    %c2_i32 = arith.constant 2 : i32
    %56 = arith.index_cast %c2_i32 : i32 to index
    %c0_28 = arith.constant 0 : index
    %c0_29 = arith.constant 0 : index
    %57 = vector.load %arg1[%56, %c0_28, %c0_29] : memref<8x2x16xf32, #tpu.memory_space<vmem>>, vector<1x2x16xf32>
    %58 = vector.shape_cast %57 : vector<1x2x16xf32> to vector<2x16xf32>
    %c0_30 = arith.constant 0 : index
    %c0_31 = arith.constant 0 : index
    %59 = vector.load %arg2[%c0_30, %c0_31] : memref<16x128xf32, #tpu.memory_space<vmem>>, vector<16x128xf32>
    %cst_32 = arith.constant dense<0.000000e+00> : vector<2x128xf32>
    %60 = tpu.matmul %58, %59, %cst_32 {dimension_numbers = #tpu.dot_dimension_numbers<[1], [0], [0], [1], [0, 0, 1, 1], [], []>} : vector<2x16xf32>, vector<16x128xf32>, vector<2x128xf32> -> vector<2x128xf32>
    %c0_33 = arith.constant 0 : index
    %c0_34 = arith.constant 0 : index
    %61 = vector.load %arg4[%c0_33, %c0_34] : memref<1x128xf32, #tpu.memory_space<vmem>>, vector<1x128xf32>
    %62 = vector.broadcast %61 : vector<1x128xf32> to vector<2x128xf32>
    %63 = arith.addf %60, %62 : vector<2x128xf32>
    %64 = vector.extract_strided_slice %63 {offsets = [0, 0], sizes = [2, 32], strides = [1, 1]} : vector<2x128xf32> to vector<2x32xf32>
    %65 = arith.index_cast %c2_i32 : i32 to index
    %c0_35 = arith.constant 0 : index
    %c0_36 = arith.constant 0 : index
    %66 = vector.load %arg11[%65, %c0_35, %c0_36] : memref<8x2x32xf32, #tpu.memory_space<vmem>>, vector<1x2x32xf32>
    %67 = vector.shape_cast %66 : vector<1x2x32xf32> to vector<2x32xf32>
    %68 = vector.shape_cast %64 : vector<2x32xf32> to vector<1x2x32xf32>
    tpu.vector_store %arg11[%65, %c0_35, %c0_36], %68 {strides = array<i32>} : memref<8x2x32xf32, #tpu.memory_space<vmem>>, vector<1x2x32xf32>,
    %69 = vector.extract_strided_slice %63 {offsets = [0, 32], sizes = [2, 32], strides = [1, 1]} : vector<2x128xf32> to vector<2x32xf32>
    %70 = arith.index_cast %c2_i32 : i32 to index
    %c0_37 = arith.constant 0 : index
    %c0_38 = arith.constant 0 : index
    %71 = vector.load %arg12[%70, %c0_37, %c0_38] : memref<8x2x32xf32, #tpu.memory_space<vmem>>, vector<1x2x32xf32>
    %72 = vector.shape_cast %71 : vector<1x2x32xf32> to vector<2x32xf32>
    %73 = vector.shape_cast %69 : vector<2x32xf32> to vector<1x2x32xf32>
    tpu.vector_store %arg12[%70, %c0_37, %c0_38], %73 {strides = array<i32>} : memref<8x2x32xf32, #tpu.memory_space<vmem>>, vector<1x2x32xf32>,
    %74 = vector.extract_strided_slice %63 {offsets = [0, 64], sizes = [2, 32], strides = [1, 1]} : vector<2x128xf32> to vector<2x32xf32>
    %75 = arith.index_cast %c2_i32 : i32 to index
    %c0_39 = arith.constant 0 : index
    %c0_40 = arith.constant 0 : index
    %76 = vector.load %arg13[%75, %c0_39, %c0_40] : memref<8x2x32xf32, #tpu.memory_space<vmem>>, vector<1x2x32xf32>
    %77 = vector.shape_cast %76 : vector<1x2x32xf32> to vector<2x32xf32>
    %78 = vector.shape_cast %74 : vector<2x32xf32> to vector<1x2x32xf32>
    tpu.vector_store %arg13[%75, %c0_39, %c0_40], %78 {strides = array<i32>} : memref<8x2x32xf32, #tpu.memory_space<vmem>>, vector<1x2x32xf32>,
    %79 = vector.extract_strided_slice %63 {offsets = [0, 96], sizes = [2, 32], strides = [1, 1]} : vector<2x128xf32> to vector<2x32xf32>
    %80 = arith.index_cast %c2_i32 : i32 to index
    %c0_41 = arith.constant 0 : index
    %c0_42 = arith.constant 0 : index
    %81 = vector.load %arg14[%80, %c0_41, %c0_42] : memref<8x2x32xf32, #tpu.memory_space<vmem>>, vector<1x2x32xf32>
    %82 = vector.shape_cast %81 : vector<1x2x32xf32> to vector<2x32xf32>
    %83 = vector.shape_cast %79 : vector<2x32xf32> to vector<1x2x32xf32>
    tpu.vector_store %arg14[%80, %c0_41, %c0_42], %83 {strides = array<i32>} : memref<8x2x32xf32, #tpu.memory_space<vmem>>, vector<1x2x32xf32>,
    %c3_i32 = arith.constant 3 : i32
    %84 = arith.index_cast %c3_i32 : i32 to index
    %c0_43 = arith.constant 0 : index
    %c0_44 = arith.constant 0 : index
    %85 = vector.load %arg1[%84, %c0_43, %c0_44] : memref<8x2x16xf32, #tpu.memory_space<vmem>>, vector<1x2x16xf32>
    %86 = vector.shape_cast %85 : vector<1x2x16xf32> to vector<2x16xf32>
    %c0_45 = arith.constant 0 : index
    %c0_46 = arith.constant 0 : index
    %87 = vector.load %arg2[%c0_45, %c0_46] : memref<16x128xf32, #tpu.memory_space<vmem>>, vector<16x128xf32>
    %cst_47 = arith.constant dense<0.000000e+00> : vector<2x128xf32>
    %88 = tpu.matmul %86, %87, %cst_47 {dimension_numbers = #tpu.dot_dimension_numbers<[1], [0], [0], [1], [0, 0, 1, 1], [], []>} : vector<2x16xf32>, vector<16x128xf32>, vector<2x128xf32> -> vector<2x128xf32>
    %c0_48 = arith.constant 0 : index
    %c0_49 = arith.constant 0 : index
    %89 = vector.load %arg4[%c0_48, %c0_49] : memref<1x128xf32, #tpu.memory_space<vmem>>, vector<1x128xf32>
    %90 = vector.broadcast %89 : vector<1x128xf32> to vector<2x128xf32>
    %91 = arith.addf %88, %90 : vector<2x128xf32>
    %92 = vector.extract_strided_slice %91 {offsets = [0, 0], sizes = [2, 32], strides = [1, 1]} : vector<2x128xf32> to vector<2x32xf32>
    %93 = arith.index_cast %c3_i32 : i32 to index
    %c0_50 = arith.constant 0 : index
    %c0_51 = arith.constant 0 : index
    %94 = vector.load %arg11[%93, %c0_50, %c0_51] : memref<8x2x32xf32, #tpu.memory_space<vmem>>, vector<1x2x32xf32>
    %95 = vector.shape_cast %94 : vector<1x2x32xf32> to vector<2x32xf32>
    %96 = vector.shape_cast %92 : vector<2x32xf32> to vector<1x2x32xf32>
    tpu.vector_store %arg11[%93, %c0_50, %c0_51], %96 {strides = array<i32>} : memref<8x2x32xf32, #tpu.memory_space<vmem>>, vector<1x2x32xf32>,
    %97 = vector.extract_strided_slice %91 {offsets = [0, 32], sizes = [2, 32], strides = [1, 1]} : vector<2x128xf32> to vector<2x32xf32>
    %98 = arith.index_cast %c3_i32 : i32 to index
    %c0_52 = arith.constant 0 : index
    %c0_53 = arith.constant 0 : index
    %99 = vector.load %arg12[%98, %c0_52, %c0_53] : memref<8x2x32xf32, #tpu.memory_space<vmem>>, vector<1x2x32xf32>
    %100 = vector.shape_cast %99 : vector<1x2x32xf32> to vector<2x32xf32>
    %101 = vector.shape_cast %97 : vector<2x32xf32> to vector<1x2x32xf32>
    tpu.vector_store %arg12[%98, %c0_52, %c0_53], %101 {strides = array<i32>} : memref<8x2x32xf32, #tpu.memory_space<vmem>>, vector<1x2x32xf32>,
    %102 = vector.extract_strided_slice %91 {offsets = [0, 64], sizes = [2, 32], strides = [1, 1]} : vector<2x128xf32> to vector<2x32xf32>
    %103 = arith.index_cast %c3_i32 : i32 to index
    %c0_54 = arith.constant 0 : index
    %c0_55 = arith.constant 0 : index
    %104 = vector.load %arg13[%103, %c0_54, %c0_55] : memref<8x2x32xf32, #tpu.memory_space<vmem>>, vector<1x2x32xf32>
    %105 = vector.shape_cast %104 : vector<1x2x32xf32> to vector<2x32xf32>
    %106 = vector.shape_cast %102 : vector<2x32xf32> to vector<1x2x32xf32>
    tpu.vector_store %arg13[%103, %c0_54, %c0_55], %106 {strides = array<i32>} : memref<8x2x32xf32, #tpu.memory_space<vmem>>, vector<1x2x32xf32>,
    %107 = vector.extract_strided_slice %91 {offsets = [0, 96], sizes = [2, 32], strides = [1, 1]} : vector<2x128xf32> to vector<2x32xf32>
    %108 = arith.index_cast %c3_i32 : i32 to index
    %c0_56 = arith.constant 0 : index
    %c0_57 = arith.constant 0 : index
    %109 = vector.load %arg14[%108, %c0_56, %c0_57] : memref<8x2x32xf32, #tpu.memory_space<vmem>>, vector<1x2x32xf32>
    %110 = vector.shape_cast %109 : vector<1x2x32xf32> to vector<2x32xf32>
    %111 = vector.shape_cast %107 : vector<2x32xf32> to vector<1x2x32xf32>
    tpu.vector_store %arg14[%108, %c0_56, %c0_57], %111 {strides = array<i32>} : memref<8x2x32xf32, #tpu.memory_space<vmem>>, vector<1x2x32xf32>,
    %c4_i32 = arith.constant 4 : i32
    %112 = arith.index_cast %c4_i32 : i32 to index
    %c0_58 = arith.constant 0 : index
    %c0_59 = arith.constant 0 : index
    %113 = vector.load %arg1[%112, %c0_58, %c0_59] : memref<8x2x16xf32, #tpu.memory_space<vmem>>, vector<1x2x16xf32>
    %114 = vector.shape_cast %113 : vector<1x2x16xf32> to vector<2x16xf32>
    %c0_60 = arith.constant 0 : index
    %c0_61 = arith.constant 0 : index
    %115 = vector.load %arg2[%c0_60, %c0_61] : memref<16x128xf32, #tpu.memory_space<vmem>>, vector<16x128xf32>
    %cst_62 = arith.constant dense<0.000000e+00> : vector<2x128xf32>
    %116 = tpu.matmul %114, %115, %cst_62 {dimension_numbers = #tpu.dot_dimension_numbers<[1], [0], [0], [1], [0, 0, 1, 1], [], []>} : vector<2x16xf32>, vector<16x128xf32>, vector<2x128xf32> -> vector<2x128xf32>
    %c0_63 = arith.constant 0 : index
    %c0_64 = arith.constant 0 : index
    %117 = vector.load %arg4[%c0_63, %c0_64] : memref<1x128xf32, #tpu.memory_space<vmem>>, vector<1x128xf32>
    %118 = vector.broadcast %117 : vector<1x128xf32> to vector<2x128xf32>
    %119 = arith.addf %116, %118 : vector<2x128xf32>
    %120 = vector.extract_strided_slice %119 {offsets = [0, 0], sizes = [2, 32], strides = [1, 1]} : vector<2x128xf32> to vector<2x32xf32>
    %121 = arith.index_cast %c4_i32 : i32 to index
    %c0_65 = arith.constant 0 : index
    %c0_66 = arith.constant 0 : index
    %122 = vector.load %arg11[%121, %c0_65, %c0_66] : memref<8x2x32xf32, #tpu.memory_space<vmem>>, vector<1x2x32xf32>
    %123 = vector.shape_cast %122 : vector<1x2x32xf32> to vector<2x32xf32>
    %124 = vector.shape_cast %120 : vector<2x32xf32> to vector<1x2x32xf32>
    tpu.vector_store %arg11[%121, %c0_65, %c0_66], %124 {strides = array<i32>} : memref<8x2x32xf32, #tpu.memory_space<vmem>>, vector<1x2x32xf32>,
    %125 = vector.extract_strided_slice %119 {offsets = [0, 32], sizes = [2, 32], strides = [1, 1]} : vector<2x128xf32> to vector<2x32xf32>
    %126 = arith.index_cast %c4_i32 : i32 to index
    %c0_67 = arith.constant 0 : index
    %c0_68 = arith.constant 0 : index
    %127 = vector.load %arg12[%126, %c0_67, %c0_68] : memref<8x2x32xf32, #tpu.memory_space<vmem>>, vector<1x2x32xf32>
    %128 = vector.shape_cast %127 : vector<1x2x32xf32> to vector<2x32xf32>
    %129 = vector.shape_cast %125 : vector<2x32xf32> to vector<1x2x32xf32>
    tpu.vector_store %arg12[%126, %c0_67, %c0_68], %129 {strides = array<i32>} : memref<8x2x32xf32, #tpu.memory_space<vmem>>, vector<1x2x32xf32>,
    %130 = vector.extract_strided_slice %119 {offsets = [0, 64], sizes = [2, 32], strides = [1, 1]} : vector<2x128xf32> to vector<2x32xf32>
    %131 = arith.index_cast %c4_i32 : i32 to index
    %c0_69 = arith.constant 0 : index
    %c0_70 = arith.constant 0 : index
    %132 = vector.load %arg13[%131, %c0_69, %c0_70] : memref<8x2x32xf32, #tpu.memory_space<vmem>>, vector<1x2x32xf32>
    %133 = vector.shape_cast %132 : vector<1x2x32xf32> to vector<2x32xf32>
    %134 = vector.shape_cast %130 : vector<2x32xf32> to vector<1x2x32xf32>
    tpu.vector_store %arg13[%131, %c0_69, %c0_70], %134 {strides = array<i32>} : memref<8x2x32xf32, #tpu.memory_space<vmem>>, vector<1x2x32xf32>,
    %135 = vector.extract_strided_slice %119 {offsets = [0, 96], sizes = [2, 32], strides = [1, 1]} : vector<2x128xf32> to vector<2x32xf32>
    %136 = arith.index_cast %c4_i32 : i32 to index
    %c0_71 = arith.constant 0 : index
    %c0_72 = arith.constant 0 : index
    %137 = vector.load %arg14[%136, %c0_71, %c0_72] : memref<8x2x32xf32, #tpu.memory_space<vmem>>, vector<1x2x32xf32>
    %138 = vector.shape_cast %137 : vector<1x2x32xf32> to vector<2x32xf32>
    %139 = vector.shape_cast %135 : vector<2x32xf32> to vector<1x2x32xf32>
    tpu.vector_store %arg14[%136, %c0_71, %c0_72], %139 {strides = array<i32>} : memref<8x2x32xf32, #tpu.memory_space<vmem>>, vector<1x2x32xf32>,
    %c5_i32 = arith.constant 5 : i32
    %140 = arith.index_cast %c5_i32 : i32 to index
    %c0_73 = arith.constant 0 : index
    %c0_74 = arith.constant 0 : index
    %141 = vector.load %arg1[%140, %c0_73, %c0_74] : memref<8x2x16xf32, #tpu.memory_space<vmem>>, vector<1x2x16xf32>
    %142 = vector.shape_cast %141 : vector<1x2x16xf32> to vector<2x16xf32>
    %c0_75 = arith.constant 0 : index
    %c0_76 = arith.constant 0 : index
    %143 = vector.load %arg2[%c0_75, %c0_76] : memref<16x128xf32, #tpu.memory_space<vmem>>, vector<16x128xf32>
    %cst_77 = arith.constant dense<0.000000e+00> : vector<2x128xf32>
    %144 = tpu.matmul %142, %143, %cst_77 {dimension_numbers = #tpu.dot_dimension_numbers<[1], [0], [0], [1], [0, 0, 1, 1], [], []>} : vector<2x16xf32>, vector<16x128xf32>, vector<2x128xf32> -> vector<2x128xf32>
    %c0_78 = arith.constant 0 : index
    %c0_79 = arith.constant 0 : index
    %145 = vector.load %arg4[%c0_78, %c0_79] : memref<1x128xf32, #tpu.memory_space<vmem>>, vector<1x128xf32>
    %146 = vector.broadcast %145 : vector<1x128xf32> to vector<2x128xf32>
    %147 = arith.addf %144, %146 : vector<2x128xf32>
    %148 = vector.extract_strided_slice %147 {offsets = [0, 0], sizes = [2, 32], strides = [1, 1]} : vector<2x128xf32> to vector<2x32xf32>
    %149 = arith.index_cast %c5_i32 : i32 to index
    %c0_80 = arith.constant 0 : index
    %c0_81 = arith.constant 0 : index
    %150 = vector.load %arg11[%149, %c0_80, %c0_81] : memref<8x2x32xf32, #tpu.memory_space<vmem>>, vector<1x2x32xf32>
    %151 = vector.shape_cast %150 : vector<1x2x32xf32> to vector<2x32xf32>
    %152 = vector.shape_cast %148 : vector<2x32xf32> to vector<1x2x32xf32>
    tpu.vector_store %arg11[%149, %c0_80, %c0_81], %152 {strides = array<i32>} : memref<8x2x32xf32, #tpu.memory_space<vmem>>, vector<1x2x32xf32>,
    %153 = vector.extract_strided_slice %147 {offsets = [0, 32], sizes = [2, 32], strides = [1, 1]} : vector<2x128xf32> to vector<2x32xf32>
    %154 = arith.index_cast %c5_i32 : i32 to index
    %c0_82 = arith.constant 0 : index
    %c0_83 = arith.constant 0 : index
    %155 = vector.load %arg12[%154, %c0_82, %c0_83] : memref<8x2x32xf32, #tpu.memory_space<vmem>>, vector<1x2x32xf32>
    %156 = vector.shape_cast %155 : vector<1x2x32xf32> to vector<2x32xf32>
    %157 = vector.shape_cast %153 : vector<2x32xf32> to vector<1x2x32xf32>
    tpu.vector_store %arg12[%154, %c0_82, %c0_83], %157 {strides = array<i32>} : memref<8x2x32xf32, #tpu.memory_space<vmem>>, vector<1x2x32xf32>,
    %158 = vector.extract_strided_slice %147 {offsets = [0, 64], sizes = [2, 32], strides = [1, 1]} : vector<2x128xf32> to vector<2x32xf32>
    %159 = arith.index_cast %c5_i32 : i32 to index
    %c0_84 = arith.constant 0 : index
    %c0_85 = arith.constant 0 : index
    %160 = vector.load %arg13[%159, %c0_84, %c0_85] : memref<8x2x32xf32, #tpu.memory_space<vmem>>, vector<1x2x32xf32>
    %161 = vector.shape_cast %160 : vector<1x2x32xf32> to vector<2x32xf32>
    %162 = vector.shape_cast %158 : vector<2x32xf32> to vector<1x2x32xf32>
    tpu.vector_store %arg13[%159, %c0_84, %c0_85], %162 {strides = array<i32>} : memref<8x2x32xf32, #tpu.memory_space<vmem>>, vector<1x2x32xf32>,
    %163 = vector.extract_strided_slice %147 {offsets = [0, 96], sizes = [2, 32], strides = [1, 1]} : vector<2x128xf32> to vector<2x32xf32>
    %164 = arith.index_cast %c5_i32 : i32 to index
    %c0_86 = arith.constant 0 : index
    %c0_87 = arith.constant 0 : index
    %165 = vector.load %arg14[%164, %c0_86, %c0_87] : memref<8x2x32xf32, #tpu.memory_space<vmem>>, vector<1x2x32xf32>
    %166 = vector.shape_cast %165 : vector<1x2x32xf32> to vector<2x32xf32>
    %167 = vector.shape_cast %163 : vector<2x32xf32> to vector<1x2x32xf32>
    tpu.vector_store %arg14[%164, %c0_86, %c0_87], %167 {strides = array<i32>} : memref<8x2x32xf32, #tpu.memory_space<vmem>>, vector<1x2x32xf32>,
    %c6_i32 = arith.constant 6 : i32
    %168 = arith.index_cast %c6_i32 : i32 to index
    %c0_88 = arith.constant 0 : index
    %c0_89 = arith.constant 0 : index
    %169 = vector.load %arg1[%168, %c0_88, %c0_89] : memref<8x2x16xf32, #tpu.memory_space<vmem>>, vector<1x2x16xf32>
    %170 = vector.shape_cast %169 : vector<1x2x16xf32> to vector<2x16xf32>
    %c0_90 = arith.constant 0 : index
    %c0_91 = arith.constant 0 : index
    %171 = vector.load %arg2[%c0_90, %c0_91] : memref<16x128xf32, #tpu.memory_space<vmem>>, vector<16x128xf32>
    %cst_92 = arith.constant dense<0.000000e+00> : vector<2x128xf32>
    %172 = tpu.matmul %170, %171, %cst_92 {dimension_numbers = #tpu.dot_dimension_numbers<[1], [0], [0], [1], [0, 0, 1, 1], [], []>} : vector<2x16xf32>, vector<16x128xf32>, vector<2x128xf32> -> vector<2x128xf32>
    %c0_93 = arith.constant 0 : index
    %c0_94 = arith.constant 0 : index
    %173 = vector.load %arg4[%c0_93, %c0_94] : memref<1x128xf32, #tpu.memory_space<vmem>>, vector<1x128xf32>
    %174 = vector.broadcast %173 : vector<1x128xf32> to vector<2x128xf32>
    %175 = arith.addf %172, %174 : vector<2x128xf32>
    %176 = vector.extract_strided_slice %175 {offsets = [0, 0], sizes = [2, 32], strides = [1, 1]} : vector<2x128xf32> to vector<2x32xf32>
    %177 = arith.index_cast %c6_i32 : i32 to index
    %c0_95 = arith.constant 0 : index
    %c0_96 = arith.constant 0 : index
    %178 = vector.load %arg11[%177, %c0_95, %c0_96] : memref<8x2x32xf32, #tpu.memory_space<vmem>>, vector<1x2x32xf32>
    %179 = vector.shape_cast %178 : vector<1x2x32xf32> to vector<2x32xf32>
    %180 = vector.shape_cast %176 : vector<2x32xf32> to vector<1x2x32xf32>
    tpu.vector_store %arg11[%177, %c0_95, %c0_96], %180 {strides = array<i32>} : memref<8x2x32xf32, #tpu.memory_space<vmem>>, vector<1x2x32xf32>,
    %181 = vector.extract_strided_slice %175 {offsets = [0, 32], sizes = [2, 32], strides = [1, 1]} : vector<2x128xf32> to vector<2x32xf32>
    %182 = arith.index_cast %c6_i32 : i32 to index
    %c0_97 = arith.constant 0 : index
    %c0_98 = arith.constant 0 : index
    %183 = vector.load %arg12[%182, %c0_97, %c0_98] : memref<8x2x32xf32, #tpu.memory_space<vmem>>, vector<1x2x32xf32>
    %184 = vector.shape_cast %183 : vector<1x2x32xf32> to vector<2x32xf32>
    %185 = vector.shape_cast %181 : vector<2x32xf32> to vector<1x2x32xf32>
    tpu.vector_store %arg12[%182, %c0_97, %c0_98], %185 {strides = array<i32>} : memref<8x2x32xf32, #tpu.memory_space<vmem>>, vector<1x2x32xf32>,
    %186 = vector.extract_strided_slice %175 {offsets = [0, 64], sizes = [2, 32], strides = [1, 1]} : vector<2x128xf32> to vector<2x32xf32>
    %187 = arith.index_cast %c6_i32 : i32 to index
    %c0_99 = arith.constant 0 : index
    %c0_100 = arith.constant 0 : index
    %188 = vector.load %arg13[%187, %c0_99, %c0_100] : memref<8x2x32xf32, #tpu.memory_space<vmem>>, vector<1x2x32xf32>
    %189 = vector.shape_cast %188 : vector<1x2x32xf32> to vector<2x32xf32>
    %190 = vector.shape_cast %186 : vector<2x32xf32> to vector<1x2x32xf32>
    tpu.vector_store %arg13[%187, %c0_99, %c0_100], %190 {strides = array<i32>} : memref<8x2x32xf32, #tpu.memory_space<vmem>>, vector<1x2x32xf32>,
    %191 = vector.extract_strided_slice %175 {offsets = [0, 96], sizes = [2, 32], strides = [1, 1]} : vector<2x128xf32> to vector<2x32xf32>
    %192 = arith.index_cast %c6_i32 : i32 to index
    %c0_101 = arith.constant 0 : index
    %c0_102 = arith.constant 0 : index
    %193 = vector.load %arg14[%192, %c0_101, %c0_102] : memref<8x2x32xf32, #tpu.memory_space<vmem>>, vector<1x2x32xf32>
    %194 = vector.shape_cast %193 : vector<1x2x32xf32> to vector<2x32xf32>
    %195 = vector.shape_cast %191 : vector<2x32xf32> to vector<1x2x32xf32>
    tpu.vector_store %arg14[%192, %c0_101, %c0_102], %195 {strides = array<i32>} : memref<8x2x32xf32, #tpu.memory_space<vmem>>, vector<1x2x32xf32>,
    %c7_i32 = arith.constant 7 : i32
    %196 = arith.index_cast %c7_i32 : i32 to index
    %c0_103 = arith.constant 0 : index
    %c0_104 = arith.constant 0 : index
    %197 = vector.load %arg1[%196, %c0_103, %c0_104] : memref<8x2x16xf32, #tpu.memory_space<vmem>>, vector<1x2x16xf32>
    %198 = vector.shape_cast %197 : vector<1x2x16xf32> to vector<2x16xf32>
    %c0_105 = arith.constant 0 : index
    %c0_106 = arith.constant 0 : index
    %199 = vector.load %arg2[%c0_105, %c0_106] : memref<16x128xf32, #tpu.memory_space<vmem>>, vector<16x128xf32>
    %cst_107 = arith.constant dense<0.000000e+00> : vector<2x128xf32>
    %200 = tpu.matmul %198, %199, %cst_107 {dimension_numbers = #tpu.dot_dimension_numbers<[1], [0], [0], [1], [0, 0, 1, 1], [], []>} : vector<2x16xf32>, vector<16x128xf32>, vector<2x128xf32> -> vector<2x128xf32>
    %c0_108 = arith.constant 0 : index
    %c0_109 = arith.constant 0 : index
    %201 = vector.load %arg4[%c0_108, %c0_109] : memref<1x128xf32, #tpu.memory_space<vmem>>, vector<1x128xf32>
    %202 = vector.broadcast %201 : vector<1x128xf32> to vector<2x128xf32>
    %203 = arith.addf %200, %202 : vector<2x128xf32>
    %204 = vector.extract_strided_slice %203 {offsets = [0, 0], sizes = [2, 32], strides = [1, 1]} : vector<2x128xf32> to vector<2x32xf32>
    %205 = arith.index_cast %c7_i32 : i32 to index
    %c0_110 = arith.constant 0 : index
    %c0_111 = arith.constant 0 : index
    %206 = vector.load %arg11[%205, %c0_110, %c0_111] : memref<8x2x32xf32, #tpu.memory_space<vmem>>, vector<1x2x32xf32>
    %207 = vector.shape_cast %206 : vector<1x2x32xf32> to vector<2x32xf32>
    %208 = vector.shape_cast %204 : vector<2x32xf32> to vector<1x2x32xf32>
    tpu.vector_store %arg11[%205, %c0_110, %c0_111], %208 {strides = array<i32>} : memref<8x2x32xf32, #tpu.memory_space<vmem>>, vector<1x2x32xf32>,
    %209 = vector.extract_strided_slice %203 {offsets = [0, 32], sizes = [2, 32], strides = [1, 1]} : vector<2x128xf32> to vector<2x32xf32>
    %210 = arith.index_cast %c7_i32 : i32 to index
    %c0_112 = arith.constant 0 : index
    %c0_113 = arith.constant 0 : index
    %211 = vector.load %arg12[%210, %c0_112, %c0_113] : memref<8x2x32xf32, #tpu.memory_space<vmem>>, vector<1x2x32xf32>
    %212 = vector.shape_cast %211 : vector<1x2x32xf32> to vector<2x32xf32>
    %213 = vector.shape_cast %209 : vector<2x32xf32> to vector<1x2x32xf32>
    tpu.vector_store %arg12[%210, %c0_112, %c0_113], %213 {strides = array<i32>} : memref<8x2x32xf32, #tpu.memory_space<vmem>>, vector<1x2x32xf32>,
    %214 = vector.extract_strided_slice %203 {offsets = [0, 64], sizes = [2, 32], strides = [1, 1]} : vector<2x128xf32> to vector<2x32xf32>
    %215 = arith.index_cast %c7_i32 : i32 to index
    %c0_114 = arith.constant 0 : index
    %c0_115 = arith.constant 0 : index
    %216 = vector.load %arg13[%215, %c0_114, %c0_115] : memref<8x2x32xf32, #tpu.memory_space<vmem>>, vector<1x2x32xf32>
    %217 = vector.shape_cast %216 : vector<1x2x32xf32> to vector<2x32xf32>
    %218 = vector.shape_cast %214 : vector<2x32xf32> to vector<1x2x32xf32>
    tpu.vector_store %arg13[%215, %c0_114, %c0_115], %218 {strides = array<i32>} : memref<8x2x32xf32, #tpu.memory_space<vmem>>, vector<1x2x32xf32>,
    %219 = vector.extract_strided_slice %203 {offsets = [0, 96], sizes = [2, 32], strides = [1, 1]} : vector<2x128xf32> to vector<2x32xf32>
    %220 = arith.index_cast %c7_i32 : i32 to index
    %c0_116 = arith.constant 0 : index
    %c0_117 = arith.constant 0 : index
    %221 = vector.load %arg14[%220, %c0_116, %c0_117] : memref<8x2x32xf32, #tpu.memory_space<vmem>>, vector<1x2x32xf32>
    %222 = vector.shape_cast %221 : vector<1x2x32xf32> to vector<2x32xf32>
    %223 = vector.shape_cast %219 : vector<2x32xf32> to vector<1x2x32xf32>
    tpu.vector_store %arg14[%220, %c0_116, %c0_117], %223 {strides = array<i32>} : memref<8x2x32xf32, #tpu.memory_space<vmem>>, vector<1x2x32xf32>,
    %c8_i32 = arith.constant 8 : i32
    %cst_118 = arith.constant 0.000000e+00 : f32
    %224 = vector.broadcast %cst_118 : f32 to vector<2x32xf32>
    %cst_119 = arith.constant 0.000000e+00 : f32
    %225 = vector.broadcast %cst_119 : f32 to vector<2x32xf32>
    %c0_i32_120 = arith.constant 0 : i32
    %226 = arith.index_cast %c0_i32_120 : i32 to index
    %c0_121 = arith.constant 0 : index
    %c0_122 = arith.constant 0 : index
    %227 = vector.load %arg11[%226, %c0_121, %c0_122] : memref<8x2x32xf32, #tpu.memory_space<vmem>>, vector<1x2x32xf32>
    %228 = vector.shape_cast %227 : vector<1x2x32xf32> to vector<2x32xf32>
    %c0_123 = arith.constant 0 : index
    %c0_124 = arith.constant 0 : index
    %c0_125 = arith.constant 0 : index
    %229 = vector.load %arg3[%c0_123, %c0_124, %c0_125] : memref<4x32x32xf32, #tpu.memory_space<vmem>>, vector<1x32x32xf32>
    %230 = vector.shape_cast %229 : vector<1x32x32xf32> to vector<32x32xf32>
    %cst_126 = arith.constant dense<0.000000e+00> : vector<2x32xf32>
    %231 = tpu.matmul %224, %230, %cst_126 {dimension_numbers = #tpu.dot_dimension_numbers<[1], [0], [0], [1], [0, 0, 1, 1], [], []>} : vector<2x32xf32>, vector<32x32xf32>, vector<2x32xf32> -> vector<2x32xf32>
    %232 = arith.addf %228, %231 : vector<2x32xf32>
    %233 = arith.index_cast %c0_i32_120 : i32 to index
    %c0_127 = arith.constant 0 : index
    %c0_128 = arith.constant 0 : index
    %234 = vector.load %arg12[%233, %c0_127, %c0_128] : memref<8x2x32xf32, #tpu.memory_space<vmem>>, vector<1x2x32xf32>
    %235 = vector.shape_cast %234 : vector<1x2x32xf32> to vector<2x32xf32>
    %c1 = arith.constant 1 : index
    %c0_129 = arith.constant 0 : index
    %c0_130 = arith.constant 0 : index
    %236 = vector.load %arg3[%c1, %c0_129, %c0_130] : memref<4x32x32xf32, #tpu.memory_space<vmem>>, vector<1x32x32xf32>
    %237 = vector.shape_cast %236 : vector<1x32x32xf32> to vector<32x32xf32>
    %cst_131 = arith.constant dense<0.000000e+00> : vector<2x32xf32>
    %238 = tpu.matmul %224, %237, %cst_131 {dimension_numbers = #tpu.dot_dimension_numbers<[1], [0], [0], [1], [0, 0, 1, 1], [], []>} : vector<2x32xf32>, vector<32x32xf32>, vector<2x32xf32> -> vector<2x32xf32>
    %239 = arith.addf %235, %238 : vector<2x32xf32>
    %240 = arith.index_cast %c0_i32_120 : i32 to index
    %c0_132 = arith.constant 0 : index
    %c0_133 = arith.constant 0 : index
    %241 = vector.load %arg13[%240, %c0_132, %c0_133] : memref<8x2x32xf32, #tpu.memory_space<vmem>>, vector<1x2x32xf32>
    %242 = vector.shape_cast %241 : vector<1x2x32xf32> to vector<2x32xf32>
    %c2 = arith.constant 2 : index
    %c0_134 = arith.constant 0 : index
    %c0_135 = arith.constant 0 : index
    %243 = vector.load %arg3[%c2, %c0_134, %c0_135] : memref<4x32x32xf32, #tpu.memory_space<vmem>>, vector<1x32x32xf32>
    %244 = vector.shape_cast %243 : vector<1x32x32xf32> to vector<32x32xf32>
    %cst_136 = arith.constant dense<0.000000e+00> : vector<2x32xf32>
    %245 = tpu.matmul %224, %244, %cst_136 {dimension_numbers = #tpu.dot_dimension_numbers<[1], [0], [0], [1], [0, 0, 1, 1], [], []>} : vector<2x32xf32>, vector<32x32xf32>, vector<2x32xf32> -> vector<2x32xf32>
    %246 = arith.addf %242, %245 : vector<2x32xf32>
    %247 = arith.index_cast %c0_i32_120 : i32 to index
    %c0_137 = arith.constant 0 : index
    %c0_138 = arith.constant 0 : index
    %248 = vector.load %arg14[%247, %c0_137, %c0_138] : memref<8x2x32xf32, #tpu.memory_space<vmem>>, vector<1x2x32xf32>
    %249 = vector.shape_cast %248 : vector<1x2x32xf32> to vector<2x32xf32>
    %c3 = arith.constant 3 : index
    %c0_139 = arith.constant 0 : index
    %c0_140 = arith.constant 0 : index
    %250 = vector.load %arg3[%c3, %c0_139, %c0_140] : memref<4x32x32xf32, #tpu.memory_space<vmem>>, vector<1x32x32xf32>
    %251 = vector.shape_cast %250 : vector<1x32x32xf32> to vector<32x32xf32>
    %cst_141 = arith.constant dense<0.000000e+00> : vector<2x32xf32>
    %252 = tpu.matmul %224, %251, %cst_141 {dimension_numbers = #tpu.dot_dimension_numbers<[1], [0], [0], [1], [0, 0, 1, 1], [], []>} : vector<2x32xf32>, vector<32x32xf32>, vector<2x32xf32> -> vector<2x32xf32>
    %253 = arith.addf %249, %252 : vector<2x32xf32>
    %254 = arith.negf %232 : vector<2x32xf32>
    %255 = math.exp %254 : vector<2x32xf32>
    %cst_142 = arith.constant 1.000000e+00 : f32
    %256 = vector.broadcast %cst_142 : f32 to vector<2x32xf32>
    %257 = arith.addf %256, %255 : vector<2x32xf32>
    %258 = arith.divf %256, %257 : vector<2x32xf32>
    %259 = arith.negf %239 : vector<2x32xf32>
    %260 = math.exp %259 : vector<2x32xf32>
    %cst_143 = arith.constant 1.000000e+00 : f32
    %261 = vector.broadcast %cst_143 : f32 to vector<2x32xf32>
    %262 = arith.addf %261, %260 : vector<2x32xf32>
    %263 = arith.divf %261, %262 : vector<2x32xf32>
    %264 = math.tanh %246 : vector<2x32xf32>
    %265 = arith.negf %253 : vector<2x32xf32>
    %266 = math.exp %265 : vector<2x32xf32>
    %cst_144 = arith.constant 1.000000e+00 : f32
    %267 = vector.broadcast %cst_144 : f32 to vector<2x32xf32>
    %268 = arith.addf %267, %266 : vector<2x32xf32>
    %269 = arith.divf %267, %268 : vector<2x32xf32>
    %270 = arith.mulf %263, %225 : vector<2x32xf32>
    %271 = arith.mulf %258, %264 : vector<2x32xf32>
    %272 = arith.addf %270, %271 : vector<2x32xf32>
    %273 = math.tanh %272 : vector<2x32xf32>
    %274 = arith.mulf %269, %273 : vector<2x32xf32>
    %275 = arith.index_cast %c0_i32_120 : i32 to index
    %c0_145 = arith.constant 0 : index
    %c0_146 = arith.constant 0 : index
    %276 = vector.load %arg15[%275, %c0_145, %c0_146] : memref<8x2x32xf32, #tpu.memory_space<vmem>>, vector<1x2x32xf32>
    %277 = vector.shape_cast %276 : vector<1x2x32xf32> to vector<2x32xf32>
    %278 = vector.shape_cast %274 : vector<2x32xf32> to vector<1x2x32xf32>
    tpu.vector_store %arg15[%275, %c0_145, %c0_146], %278 {strides = array<i32>} : memref<8x2x32xf32, #tpu.memory_space<vmem>>, vector<1x2x32xf32>,
    %c1_i32_147 = arith.constant 1 : i32
    %279 = arith.index_cast %c1_i32_147 : i32 to index
    %c0_148 = arith.constant 0 : index
    %c0_149 = arith.constant 0 : index
    %280 = vector.load %arg11[%279, %c0_148, %c0_149] : memref<8x2x32xf32, #tpu.memory_space<vmem>>, vector<1x2x32xf32>
    %281 = vector.shape_cast %280 : vector<1x2x32xf32> to vector<2x32xf32>
    %c0_150 = arith.constant 0 : index
    %c0_151 = arith.constant 0 : index
    %c0_152 = arith.constant 0 : index
    %282 = vector.load %arg3[%c0_150, %c0_151, %c0_152] : memref<4x32x32xf32, #tpu.memory_space<vmem>>, vector<1x32x32xf32>
    %283 = vector.shape_cast %282 : vector<1x32x32xf32> to vector<32x32xf32>
    %cst_153 = arith.constant dense<0.000000e+00> : vector<2x32xf32>
    %284 = tpu.matmul %274, %283, %cst_153 {dimension_numbers = #tpu.dot_dimension_numbers<[1], [0], [0], [1], [0, 0, 1, 1], [], []>} : vector<2x32xf32>, vector<32x32xf32>, vector<2x32xf32> -> vector<2x32xf32>
    %285 = arith.addf %281, %284 : vector<2x32xf32>
    %286 = arith.index_cast %c1_i32_147 : i32 to index
    %c0_154 = arith.constant 0 : index
    %c0_155 = arith.constant 0 : index
    %287 = vector.load %arg12[%286, %c0_154, %c0_155] : memref<8x2x32xf32, #tpu.memory_space<vmem>>, vector<1x2x32xf32>
    %288 = vector.shape_cast %287 : vector<1x2x32xf32> to vector<2x32xf32>
    %c1_156 = arith.constant 1 : index
    %c0_157 = arith.constant 0 : index
    %c0_158 = arith.constant 0 : index
    %289 = vector.load %arg3[%c1_156, %c0_157, %c0_158] : memref<4x32x32xf32, #tpu.memory_space<vmem>>, vector<1x32x32xf32>
    %290 = vector.shape_cast %289 : vector<1x32x32xf32> to vector<32x32xf32>
    %cst_159 = arith.constant dense<0.000000e+00> : vector<2x32xf32>
    %291 = tpu.matmul %274, %290, %cst_159 {dimension_numbers = #tpu.dot_dimension_numbers<[1], [0], [0], [1], [0, 0, 1, 1], [], []>} : vector<2x32xf32>, vector<32x32xf32>, vector<2x32xf32> -> vector<2x32xf32>
    %292 = arith.addf %288, %291 : vector<2x32xf32>
    %293 = arith.index_cast %c1_i32_147 : i32 to index
    %c0_160 = arith.constant 0 : index
    %c0_161 = arith.constant 0 : index
    %294 = vector.load %arg13[%293, %c0_160, %c0_161] : memref<8x2x32xf32, #tpu.memory_space<vmem>>, vector<1x2x32xf32>
    %295 = vector.shape_cast %294 : vector<1x2x32xf32> to vector<2x32xf32>
    %c2_162 = arith.constant 2 : index
    %c0_163 = arith.constant 0 : index
    %c0_164 = arith.constant 0 : index
    %296 = vector.load %arg3[%c2_162, %c0_163, %c0_164] : memref<4x32x32xf32, #tpu.memory_space<vmem>>, vector<1x32x32xf32>
    %297 = vector.shape_cast %296 : vector<1x32x32xf32> to vector<32x32xf32>
    %cst_165 = arith.constant dense<0.000000e+00> : vector<2x32xf32>
    %298 = tpu.matmul %274, %297, %cst_165 {dimension_numbers = #tpu.dot_dimension_numbers<[1], [0], [0], [1], [0, 0, 1, 1], [], []>} : vector<2x32xf32>, vector<32x32xf32>, vector<2x32xf32> -> vector<2x32xf32>
    %299 = arith.addf %295, %298 : vector<2x32xf32>
    %300 = arith.index_cast %c1_i32_147 : i32 to index
    %c0_166 = arith.constant 0 : index
    %c0_167 = arith.constant 0 : index
    %301 = vector.load %arg14[%300, %c0_166, %c0_167] : memref<8x2x32xf32, #tpu.memory_space<vmem>>, vector<1x2x32xf32>
    %302 = vector.shape_cast %301 : vector<1x2x32xf32> to vector<2x32xf32>
    %c3_168 = arith.constant 3 : index
    %c0_169 = arith.constant 0 : index
    %c0_170 = arith.constant 0 : index
    %303 = vector.load %arg3[%c3_168, %c0_169, %c0_170] : memref<4x32x32xf32, #tpu.memory_space<vmem>>, vector<1x32x32xf32>
    %304 = vector.shape_cast %303 : vector<1x32x32xf32> to vector<32x32xf32>
    %cst_171 = arith.constant dense<0.000000e+00> : vector<2x32xf32>
    %305 = tpu.matmul %274, %304, %cst_171 {dimension_numbers = #tpu.dot_dimension_numbers<[1], [0], [0], [1], [0, 0, 1, 1], [], []>} : vector<2x32xf32>, vector<32x32xf32>, vector<2x32xf32> -> vector<2x32xf32>
    %306 = arith.addf %302, %305 : vector<2x32xf32>
    %307 = arith.negf %285 : vector<2x32xf32>
    %308 = math.exp %307 : vector<2x32xf32>
    %cst_172 = arith.constant 1.000000e+00 : f32
    %309 = vector.broadcast %cst_172 : f32 to vector<2x32xf32>
    %310 = arith.addf %309, %308 : vector<2x32xf32>
    %311 = arith.divf %309, %310 : vector<2x32xf32>
    %312 = arith.negf %292 : vector<2x32xf32>
    %313 = math.exp %312 : vector<2x32xf32>
    %cst_173 = arith.constant 1.000000e+00 : f32
    %314 = vector.broadcast %cst_173 : f32 to vector<2x32xf32>
    %315 = arith.addf %314, %313 : vector<2x32xf32>
    %316 = arith.divf %314, %315 : vector<2x32xf32>
    %317 = math.tanh %299 : vector<2x32xf32>
    %318 = arith.negf %306 : vector<2x32xf32>
    %319 = math.exp %318 : vector<2x32xf32>
    %cst_174 = arith.constant 1.000000e+00 : f32
    %320 = vector.broadcast %cst_174 : f32 to vector<2x32xf32>
    %321 = arith.addf %320, %319 : vector<2x32xf32>
    %322 = arith.divf %320, %321 : vector<2x32xf32>
    %323 = arith.mulf %316, %272 : vector<2x32xf32>
    %324 = arith.mulf %311, %317 : vector<2x32xf32>
    %325 = arith.addf %323, %324 : vector<2x32xf32>
    %326 = math.tanh %325 : vector<2x32xf32>
    %327 = arith.mulf %322, %326 : vector<2x32xf32>
    %328 = arith.index_cast %c1_i32_147 : i32 to index
    %c0_175 = arith.constant 0 : index
    %c0_176 = arith.constant 0 : index
    %329 = vector.load %arg15[%328, %c0_175, %c0_176] : memref<8x2x32xf32, #tpu.memory_space<vmem>>, vector<1x2x32xf32>
    %330 = vector.shape_cast %329 : vector<1x2x32xf32> to vector<2x32xf32>
    %331 = vector.shape_cast %327 : vector<2x32xf32> to vector<1x2x32xf32>
    tpu.vector_store %arg15[%328, %c0_175, %c0_176], %331 {strides = array<i32>} : memref<8x2x32xf32, #tpu.memory_space<vmem>>, vector<1x2x32xf32>,
    %c2_i32_177 = arith.constant 2 : i32
    %332 = arith.index_cast %c2_i32_177 : i32 to index
    %c0_178 = arith.constant 0 : index
    %c0_179 = arith.constant 0 : index
    %333 = vector.load %arg11[%332, %c0_178, %c0_179] : memref<8x2x32xf32, #tpu.memory_space<vmem>>, vector<1x2x32xf32>
    %334 = vector.shape_cast %333 : vector<1x2x32xf32> to vector<2x32xf32>
    %c0_180 = arith.constant 0 : index
    %c0_181 = arith.constant 0 : index
    %c0_182 = arith.constant 0 : index
    %335 = vector.load %arg3[%c0_180, %c0_181, %c0_182] : memref<4x32x32xf32, #tpu.memory_space<vmem>>, vector<1x32x32xf32>
    %336 = vector.shape_cast %335 : vector<1x32x32xf32> to vector<32x32xf32>
    %cst_183 = arith.constant dense<0.000000e+00> : vector<2x32xf32>
    %337 = tpu.matmul %327, %336, %cst_183 {dimension_numbers = #tpu.dot_dimension_numbers<[1], [0], [0], [1], [0, 0, 1, 1], [], []>} : vector<2x32xf32>, vector<32x32xf32>, vector<2x32xf32> -> vector<2x32xf32>
    %338 = arith.addf %334, %337 : vector<2x32xf32>
    %339 = arith.index_cast %c2_i32_177 : i32 to index
    %c0_184 = arith.constant 0 : index
    %c0_185 = arith.constant 0 : index
    %340 = vector.load %arg12[%339, %c0_184, %c0_185] : memref<8x2x32xf32, #tpu.memory_space<vmem>>, vector<1x2x32xf32>
    %341 = vector.shape_cast %340 : vector<1x2x32xf32> to vector<2x32xf32>
    %c1_186 = arith.constant 1 : index
    %c0_187 = arith.constant 0 : index
    %c0_188 = arith.constant 0 : index
    %342 = vector.load %arg3[%c1_186, %c0_187, %c0_188] : memref<4x32x32xf32, #tpu.memory_space<vmem>>, vector<1x32x32xf32>
    %343 = vector.shape_cast %342 : vector<1x32x32xf32> to vector<32x32xf32>
    %cst_189 = arith.constant dense<0.000000e+00> : vector<2x32xf32>
    %344 = tpu.matmul %327, %343, %cst_189 {dimension_numbers = #tpu.dot_dimension_numbers<[1], [0], [0], [1], [0, 0, 1, 1], [], []>} : vector<2x32xf32>, vector<32x32xf32>, vector<2x32xf32> -> vector<2x32xf32>
    %345 = arith.addf %341, %344 : vector<2x32xf32>
    %346 = arith.index_cast %c2_i32_177 : i32 to index
    %c0_190 = arith.constant 0 : index
    %c0_191 = arith.constant 0 : index
    %347 = vector.load %arg13[%346, %c0_190, %c0_191] : memref<8x2x32xf32, #tpu.memory_space<vmem>>, vector<1x2x32xf32>
    %348 = vector.shape_cast %347 : vector<1x2x32xf32> to vector<2x32xf32>
    %c2_192 = arith.constant 2 : index
    %c0_193 = arith.constant 0 : index
    %c0_194 = arith.constant 0 : index
    %349 = vector.load %arg3[%c2_192, %c0_193, %c0_194] : memref<4x32x32xf32, #tpu.memory_space<vmem>>, vector<1x32x32xf32>
    %350 = vector.shape_cast %349 : vector<1x32x32xf32> to vector<32x32xf32>
    %cst_195 = arith.constant dense<0.000000e+00> : vector<2x32xf32>
    %351 = tpu.matmul %327, %350, %cst_195 {dimension_numbers = #tpu.dot_dimension_numbers<[1], [0], [0], [1], [0, 0, 1, 1], [], []>} : vector<2x32xf32>, vector<32x32xf32>, vector<2x32xf32> -> vector<2x32xf32>
    %352 = arith.addf %348, %351 : vector<2x32xf32>
    %353 = arith.index_cast %c2_i32_177 : i32 to index
    %c0_196 = arith.constant 0 : index
    %c0_197 = arith.constant 0 : index
    %354 = vector.load %arg14[%353, %c0_196, %c0_197] : memref<8x2x32xf32, #tpu.memory_space<vmem>>, vector<1x2x32xf32>
    %355 = vector.shape_cast %354 : vector<1x2x32xf32> to vector<2x32xf32>
    %c3_198 = arith.constant 3 : index
    %c0_199 = arith.constant 0 : index
    %c0_200 = arith.constant 0 : index
    %356 = vector.load %arg3[%c3_198, %c0_199, %c0_200] : memref<4x32x32xf32, #tpu.memory_space<vmem>>, vector<1x32x32xf32>
    %357 = vector.shape_cast %356 : vector<1x32x32xf32> to vector<32x32xf32>
    %cst_201 = arith.constant dense<0.000000e+00> : vector<2x32xf32>
    %358 = tpu.matmul %327, %357, %cst_201 {dimension_numbers = #tpu.dot_dimension_numbers<[1], [0], [0], [1], [0, 0, 1, 1], [], []>} : vector<2x32xf32>, vector<32x32xf32>, vector<2x32xf32> -> vector<2x32xf32>
    %359 = arith.addf %355, %358 : vector<2x32xf32>
    %360 = arith.negf %338 : vector<2x32xf32>
    %361 = math.exp %360 : vector<2x32xf32>
    %cst_202 = arith.constant 1.000000e+00 : f32
    %362 = vector.broadcast %cst_202 : f32 to vector<2x32xf32>
    %363 = arith.addf %362, %361 : vector<2x32xf32>
    %364 = arith.divf %362, %363 : vector<2x32xf32>
    %365 = arith.negf %345 : vector<2x32xf32>
    %366 = math.exp %365 : vector<2x32xf32>
    %cst_203 = arith.constant 1.000000e+00 : f32
    %367 = vector.broadcast %cst_203 : f32 to vector<2x32xf32>
    %368 = arith.addf %367, %366 : vector<2x32xf32>
    %369 = arith.divf %367, %368 : vector<2x32xf32>
    %370 = math.tanh %352 : vector<2x32xf32>
    %371 = arith.negf %359 : vector<2x32xf32>
    %372 = math.exp %371 : vector<2x32xf32>
    %cst_204 = arith.constant 1.000000e+00 : f32
    %373 = vector.broadcast %cst_204 : f32 to vector<2x32xf32>
    %374 = arith.addf %373, %372 : vector<2x32xf32>
    %375 = arith.divf %373, %374 : vector<2x32xf32>
    %376 = arith.mulf %369, %325 : vector<2x32xf32>
    %377 = arith.mulf %364, %370 : vector<2x32xf32>
    %378 = arith.addf %376, %377 : vector<2x32xf32>
    %379 = math.tanh %378 : vector<2x32xf32>
    %380 = arith.mulf %375, %379 : vector<2x32xf32>
    %381 = arith.index_cast %c2_i32_177 : i32 to index
    %c0_205 = arith.constant 0 : index
    %c0_206 = arith.constant 0 : index
    %382 = vector.load %arg15[%381, %c0_205, %c0_206] : memref<8x2x32xf32, #tpu.memory_space<vmem>>, vector<1x2x32xf32>
    %383 = vector.shape_cast %382 : vector<1x2x32xf32> to vector<2x32xf32>
    %384 = vector.shape_cast %380 : vector<2x32xf32> to vector<1x2x32xf32>
    tpu.vector_store %arg15[%381, %c0_205, %c0_206], %384 {strides = array<i32>} : memref<8x2x32xf32, #tpu.memory_space<vmem>>, vector<1x2x32xf32>,
    %c3_i32_207 = arith.constant 3 : i32
    %385 = arith.index_cast %c3_i32_207 : i32 to index
    %c0_208 = arith.constant 0 : index
    %c0_209 = arith.constant 0 : index
    %386 = vector.load %arg11[%385, %c0_208, %c0_209] : memref<8x2x32xf32, #tpu.memory_space<vmem>>, vector<1x2x32xf32>
    %387 = vector.shape_cast %386 : vector<1x2x32xf32> to vector<2x32xf32>
    %c0_210 = arith.constant 0 : index
    %c0_211 = arith.constant 0 : index
    %c0_212 = arith.constant 0 : index
    %388 = vector.load %arg3[%c0_210, %c0_211, %c0_212] : memref<4x32x32xf32, #tpu.memory_space<vmem>>, vector<1x32x32xf32>
    %389 = vector.shape_cast %388 : vector<1x32x32xf32> to vector<32x32xf32>
    %cst_213 = arith.constant dense<0.000000e+00> : vector<2x32xf32>
    %390 = tpu.matmul %380, %389, %cst_213 {dimension_numbers = #tpu.dot_dimension_numbers<[1], [0], [0], [1], [0, 0, 1, 1], [], []>} : vector<2x32xf32>, vector<32x32xf32>, vector<2x32xf32> -> vector<2x32xf32>
    %391 = arith.addf %387, %390 : vector<2x32xf32>
    %392 = arith.index_cast %c3_i32_207 : i32 to index
    %c0_214 = arith.constant 0 : index
    %c0_215 = arith.constant 0 : index
    %393 = vector.load %arg12[%392, %c0_214, %c0_215] : memref<8x2x32xf32, #tpu.memory_space<vmem>>, vector<1x2x32xf32>
    %394 = vector.shape_cast %393 : vector<1x2x32xf32> to vector<2x32xf32>
    %c1_216 = arith.constant 1 : index
    %c0_217 = arith.constant 0 : index
    %c0_218 = arith.constant 0 : index
    %395 = vector.load %arg3[%c1_216, %c0_217, %c0_218] : memref<4x32x32xf32, #tpu.memory_space<vmem>>, vector<1x32x32xf32>
    %396 = vector.shape_cast %395 : vector<1x32x32xf32> to vector<32x32xf32>
    %cst_219 = arith.constant dense<0.000000e+00> : vector<2x32xf32>
    %397 = tpu.matmul %380, %396, %cst_219 {dimension_numbers = #tpu.dot_dimension_numbers<[1], [0], [0], [1], [0, 0, 1, 1], [], []>} : vector<2x32xf32>, vector<32x32xf32>, vector<2x32xf32> -> vector<2x32xf32>
    %398 = arith.addf %394, %397 : vector<2x32xf32>
    %399 = arith.index_cast %c3_i32_207 : i32 to index
    %c0_220 = arith.constant 0 : index
    %c0_221 = arith.constant 0 : index
    %400 = vector.load %arg13[%399, %c0_220, %c0_221] : memref<8x2x32xf32, #tpu.memory_space<vmem>>, vector<1x2x32xf32>
    %401 = vector.shape_cast %400 : vector<1x2x32xf32> to vector<2x32xf32>
    %c2_222 = arith.constant 2 : index
    %c0_223 = arith.constant 0 : index
    %c0_224 = arith.constant 0 : index
    %402 = vector.load %arg3[%c2_222, %c0_223, %c0_224] : memref<4x32x32xf32, #tpu.memory_space<vmem>>, vector<1x32x32xf32>
    %403 = vector.shape_cast %402 : vector<1x32x32xf32> to vector<32x32xf32>
    %cst_225 = arith.constant dense<0.000000e+00> : vector<2x32xf32>
    %404 = tpu.matmul %380, %403, %cst_225 {dimension_numbers = #tpu.dot_dimension_numbers<[1], [0], [0], [1], [0, 0, 1, 1], [], []>} : vector<2x32xf32>, vector<32x32xf32>, vector<2x32xf32> -> vector<2x32xf32>
    %405 = arith.addf %401, %404 : vector<2x32xf32>
    %406 = arith.index_cast %c3_i32_207 : i32 to index
    %c0_226 = arith.constant 0 : index
    %c0_227 = arith.constant 0 : index
    %407 = vector.load %arg14[%406, %c0_226, %c0_227] : memref<8x2x32xf32, #tpu.memory_space<vmem>>, vector<1x2x32xf32>
    %408 = vector.shape_cast %407 : vector<1x2x32xf32> to vector<2x32xf32>
    %c3_228 = arith.constant 3 : index
    %c0_229 = arith.constant 0 : index
    %c0_230 = arith.constant 0 : index
    %409 = vector.load %arg3[%c3_228, %c0_229, %c0_230] : memref<4x32x32xf32, #tpu.memory_space<vmem>>, vector<1x32x32xf32>
    %410 = vector.shape_cast %409 : vector<1x32x32xf32> to vector<32x32xf32>
    %cst_231 = arith.constant dense<0.000000e+00> : vector<2x32xf32>
    %411 = tpu.matmul %380, %410, %cst_231 {dimension_numbers = #tpu.dot_dimension_numbers<[1], [0], [0], [1], [0, 0, 1, 1], [], []>} : vector<2x32xf32>, vector<32x32xf32>, vector<2x32xf32> -> vector<2x32xf32>
    %412 = arith.addf %408, %411 : vector<2x32xf32>
    %413 = arith.negf %391 : vector<2x32xf32>
    %414 = math.exp %413 : vector<2x32xf32>
    %cst_232 = arith.constant 1.000000e+00 : f32
    %415 = vector.broadcast %cst_232 : f32 to vector<2x32xf32>
    %416 = arith.addf %415, %414 : vector<2x32xf32>
    %417 = arith.divf %415, %416 : vector<2x32xf32>
    %418 = arith.negf %398 : vector<2x32xf32>
    %419 = math.exp %418 : vector<2x32xf32>
    %cst_233 = arith.constant 1.000000e+00 : f32
    %420 = vector.broadcast %cst_233 : f32 to vector<2x32xf32>
    %421 = arith.addf %420, %419 : vector<2x32xf32>
    %422 = arith.divf %420, %421 : vector<2x32xf32>
    %423 = math.tanh %405 : vector<2x32xf32>
    %424 = arith.negf %412 : vector<2x32xf32>
    %425 = math.exp %424 : vector<2x32xf32>
    %cst_234 = arith.constant 1.000000e+00 : f32
    %426 = vector.broadcast %cst_234 : f32 to vector<2x32xf32>
    %427 = arith.addf %426, %425 : vector<2x32xf32>
    %428 = arith.divf %426, %427 : vector<2x32xf32>
    %429 = arith.mulf %422, %378 : vector<2x32xf32>
    %430 = arith.mulf %417, %423 : vector<2x32xf32>
    %431 = arith.addf %429, %430 : vector<2x32xf32>
    %432 = math.tanh %431 : vector<2x32xf32>
    %433 = arith.mulf %428, %432 : vector<2x32xf32>
    %434 = arith.index_cast %c3_i32_207 : i32 to index
    %c0_235 = arith.constant 0 : index
    %c0_236 = arith.constant 0 : index
    %435 = vector.load %arg15[%434, %c0_235, %c0_236] : memref<8x2x32xf32, #tpu.memory_space<vmem>>, vector<1x2x32xf32>
    %436 = vector.shape_cast %435 : vector<1x2x32xf32> to vector<2x32xf32>
    %437 = vector.shape_cast %433 : vector<2x32xf32> to vector<1x2x32xf32>
    tpu.vector_store %arg15[%434, %c0_235, %c0_236], %437 {strides = array<i32>} : memref<8x2x32xf32, #tpu.memory_space<vmem>>, vector<1x2x32xf32>,
    %c4_i32_237 = arith.constant 4 : i32
    %438 = arith.index_cast %c4_i32_237 : i32 to index
    %c0_238 = arith.constant 0 : index
    %c0_239 = arith.constant 0 : index
    %439 = vector.load %arg11[%438, %c0_238, %c0_239] : memref<8x2x32xf32, #tpu.memory_space<vmem>>, vector<1x2x32xf32>
    %440 = vector.shape_cast %439 : vector<1x2x32xf32> to vector<2x32xf32>
    %c0_240 = arith.constant 0 : index
    %c0_241 = arith.constant 0 : index
    %c0_242 = arith.constant 0 : index
    %441 = vector.load %arg3[%c0_240, %c0_241, %c0_242] : memref<4x32x32xf32, #tpu.memory_space<vmem>>, vector<1x32x32xf32>
    %442 = vector.shape_cast %441 : vector<1x32x32xf32> to vector<32x32xf32>
    %cst_243 = arith.constant dense<0.000000e+00> : vector<2x32xf32>
    %443 = tpu.matmul %433, %442, %cst_243 {dimension_numbers = #tpu.dot_dimension_numbers<[1], [0], [0], [1], [0, 0, 1, 1], [], []>} : vector<2x32xf32>, vector<32x32xf32>, vector<2x32xf32> -> vector<2x32xf32>
    %444 = arith.addf %440, %443 : vector<2x32xf32>
    %445 = arith.index_cast %c4_i32_237 : i32 to index
    %c0_244 = arith.constant 0 : index
    %c0_245 = arith.constant 0 : index
    %446 = vector.load %arg12[%445, %c0_244, %c0_245] : memref<8x2x32xf32, #tpu.memory_space<vmem>>, vector<1x2x32xf32>
    %447 = vector.shape_cast %446 : vector<1x2x32xf32> to vector<2x32xf32>
    %c1_246 = arith.constant 1 : index
    %c0_247 = arith.constant 0 : index
    %c0_248 = arith.constant 0 : index
    %448 = vector.load %arg3[%c1_246, %c0_247, %c0_248] : memref<4x32x32xf32, #tpu.memory_space<vmem>>, vector<1x32x32xf32>
    %449 = vector.shape_cast %448 : vector<1x32x32xf32> to vector<32x32xf32>
    %cst_249 = arith.constant dense<0.000000e+00> : vector<2x32xf32>
    %450 = tpu.matmul %433, %449, %cst_249 {dimension_numbers = #tpu.dot_dimension_numbers<[1], [0], [0], [1], [0, 0, 1, 1], [], []>} : vector<2x32xf32>, vector<32x32xf32>, vector<2x32xf32> -> vector<2x32xf32>
    %451 = arith.addf %447, %450 : vector<2x32xf32>
    %452 = arith.index_cast %c4_i32_237 : i32 to index
    %c0_250 = arith.constant 0 : index
    %c0_251 = arith.constant 0 : index
    %453 = vector.load %arg13[%452, %c0_250, %c0_251] : memref<8x2x32xf32, #tpu.memory_space<vmem>>, vector<1x2x32xf32>
    %454 = vector.shape_cast %453 : vector<1x2x32xf32> to vector<2x32xf32>
    %c2_252 = arith.constant 2 : index
    %c0_253 = arith.constant 0 : index
    %c0_254 = arith.constant 0 : index
    %455 = vector.load %arg3[%c2_252, %c0_253, %c0_254] : memref<4x32x32xf32, #tpu.memory_space<vmem>>, vector<1x32x32xf32>
    %456 = vector.shape_cast %455 : vector<1x32x32xf32> to vector<32x32xf32>
    %cst_255 = arith.constant dense<0.000000e+00> : vector<2x32xf32>
    %457 = tpu.matmul %433, %456, %cst_255 {dimension_numbers = #tpu.dot_dimension_numbers<[1], [0], [0], [1], [0, 0, 1, 1], [], []>} : vector<2x32xf32>, vector<32x32xf32>, vector<2x32xf32> -> vector<2x32xf32>
    %458 = arith.addf %454, %457 : vector<2x32xf32>
    %459 = arith.index_cast %c4_i32_237 : i32 to index
    %c0_256 = arith.constant 0 : index
    %c0_257 = arith.constant 0 : index
    %460 = vector.load %arg14[%459, %c0_256, %c0_257] : memref<8x2x32xf32, #tpu.memory_space<vmem>>, vector<1x2x32xf32>
    %461 = vector.shape_cast %460 : vector<1x2x32xf32> to vector<2x32xf32>
    %c3_258 = arith.constant 3 : index
    %c0_259 = arith.constant 0 : index
    %c0_260 = arith.constant 0 : index
    %462 = vector.load %arg3[%c3_258, %c0_259, %c0_260] : memref<4x32x32xf32, #tpu.memory_space<vmem>>, vector<1x32x32xf32>
    %463 = vector.shape_cast %462 : vector<1x32x32xf32> to vector<32x32xf32>
    %cst_261 = arith.constant dense<0.000000e+00> : vector<2x32xf32>
    %464 = tpu.matmul %433, %463, %cst_261 {dimension_numbers = #tpu.dot_dimension_numbers<[1], [0], [0], [1], [0, 0, 1, 1], [], []>} : vector<2x32xf32>, vector<32x32xf32>, vector<2x32xf32> -> vector<2x32xf32>
    %465 = arith.addf %461, %464 : vector<2x32xf32>
    %466 = arith.negf %444 : vector<2x32xf32>
    %467 = math.exp %466 : vector<2x32xf32>
    %cst_262 = arith.constant 1.000000e+00 : f32
    %468 = vector.broadcast %cst_262 : f32 to vector<2x32xf32>
    %469 = arith.addf %468, %467 : vector<2x32xf32>
    %470 = arith.divf %468, %469 : vector<2x32xf32>
    %471 = arith.negf %451 : vector<2x32xf32>
    %472 = math.exp %471 : vector<2x32xf32>
    %cst_263 = arith.constant 1.000000e+00 : f32
    %473 = vector.broadcast %cst_263 : f32 to vector<2x32xf32>
    %474 = arith.addf %473, %472 : vector<2x32xf32>
    %475 = arith.divf %473, %474 : vector<2x32xf32>
    %476 = math.tanh %458 : vector<2x32xf32>
    %477 = arith.negf %465 : vector<2x32xf32>
    %478 = math.exp %477 : vector<2x32xf32>
    %cst_264 = arith.constant 1.000000e+00 : f32
    %479 = vector.broadcast %cst_264 : f32 to vector<2x32xf32>
    %480 = arith.addf %479, %478 : vector<2x32xf32>
    %481 = arith.divf %479, %480 : vector<2x32xf32>
    %482 = arith.mulf %475, %431 : vector<2x32xf32>
    %483 = arith.mulf %470, %476 : vector<2x32xf32>
    %484 = arith.addf %482, %483 : vector<2x32xf32>
    %485 = math.tanh %484 : vector<2x32xf32>
    %486 = arith.mulf %481, %485 : vector<2x32xf32>
    %487 = arith.index_cast %c4_i32_237 : i32 to index
    %c0_265 = arith.constant 0 : index
    %c0_266 = arith.constant 0 : index
    %488 = vector.load %arg15[%487, %c0_265, %c0_266] : memref<8x2x32xf32, #tpu.memory_space<vmem>>, vector<1x2x32xf32>
    %489 = vector.shape_cast %488 : vector<1x2x32xf32> to vector<2x32xf32>
    %490 = vector.shape_cast %486 : vector<2x32xf32> to vector<1x2x32xf32>
    tpu.vector_store %arg15[%487, %c0_265, %c0_266], %490 {strides = array<i32>} : memref<8x2x32xf32, #tpu.memory_space<vmem>>, vector<1x2x32xf32>,
    %c5_i32_267 = arith.constant 5 : i32
    %491 = arith.index_cast %c5_i32_267 : i32 to index
    %c0_268 = arith.constant 0 : index
    %c0_269 = arith.constant 0 : index
    %492 = vector.load %arg11[%491, %c0_268, %c0_269] : memref<8x2x32xf32, #tpu.memory_space<vmem>>, vector<1x2x32xf32>
    %493 = vector.shape_cast %492 : vector<1x2x32xf32> to vector<2x32xf32>
    %c0_270 = arith.constant 0 : index
    %c0_271 = arith.constant 0 : index
    %c0_272 = arith.constant 0 : index
    %494 = vector.load %arg3[%c0_270, %c0_271, %c0_272] : memref<4x32x32xf32, #tpu.memory_space<vmem>>, vector<1x32x32xf32>
    %495 = vector.shape_cast %494 : vector<1x32x32xf32> to vector<32x32xf32>
    %cst_273 = arith.constant dense<0.000000e+00> : vector<2x32xf32>
    %496 = tpu.matmul %486, %495, %cst_273 {dimension_numbers = #tpu.dot_dimension_numbers<[1], [0], [0], [1], [0, 0, 1, 1], [], []>} : vector<2x32xf32>, vector<32x32xf32>, vector<2x32xf32> -> vector<2x32xf32>
    %497 = arith.addf %493, %496 : vector<2x32xf32>
    %498 = arith.index_cast %c5_i32_267 : i32 to index
    %c0_274 = arith.constant 0 : index
    %c0_275 = arith.constant 0 : index
    %499 = vector.load %arg12[%498, %c0_274, %c0_275] : memref<8x2x32xf32, #tpu.memory_space<vmem>>, vector<1x2x32xf32>
    %500 = vector.shape_cast %499 : vector<1x2x32xf32> to vector<2x32xf32>
    %c1_276 = arith.constant 1 : index
    %c0_277 = arith.constant 0 : index
    %c0_278 = arith.constant 0 : index
    %501 = vector.load %arg3[%c1_276, %c0_277, %c0_278] : memref<4x32x32xf32, #tpu.memory_space<vmem>>, vector<1x32x32xf32>
    %502 = vector.shape_cast %501 : vector<1x32x32xf32> to vector<32x32xf32>
    %cst_279 = arith.constant dense<0.000000e+00> : vector<2x32xf32>
    %503 = tpu.matmul %486, %502, %cst_279 {dimension_numbers = #tpu.dot_dimension_numbers<[1], [0], [0], [1], [0, 0, 1, 1], [], []>} : vector<2x32xf32>, vector<32x32xf32>, vector<2x32xf32> -> vector<2x32xf32>
    %504 = arith.addf %500, %503 : vector<2x32xf32>
    %505 = arith.index_cast %c5_i32_267 : i32 to index
    %c0_280 = arith.constant 0 : index
    %c0_281 = arith.constant 0 : index
    %506 = vector.load %arg13[%505, %c0_280, %c0_281] : memref<8x2x32xf32, #tpu.memory_space<vmem>>, vector<1x2x32xf32>
    %507 = vector.shape_cast %506 : vector<1x2x32xf32> to vector<2x32xf32>
    %c2_282 = arith.constant 2 : index
    %c0_283 = arith.constant 0 : index
    %c0_284 = arith.constant 0 : index
    %508 = vector.load %arg3[%c2_282, %c0_283, %c0_284] : memref<4x32x32xf32, #tpu.memory_space<vmem>>, vector<1x32x32xf32>
    %509 = vector.shape_cast %508 : vector<1x32x32xf32> to vector<32x32xf32>
    %cst_285 = arith.constant dense<0.000000e+00> : vector<2x32xf32>
    %510 = tpu.matmul %486, %509, %cst_285 {dimension_numbers = #tpu.dot_dimension_numbers<[1], [0], [0], [1], [0, 0, 1, 1], [], []>} : vector<2x32xf32>, vector<32x32xf32>, vector<2x32xf32> -> vector<2x32xf32>
    %511 = arith.addf %507, %510 : vector<2x32xf32>
    %512 = arith.index_cast %c5_i32_267 : i32 to index
    %c0_286 = arith.constant 0 : index
    %c0_287 = arith.constant 0 : index
    %513 = vector.load %arg14[%512, %c0_286, %c0_287] : memref<8x2x32xf32, #tpu.memory_space<vmem>>, vector<1x2x32xf32>
    %514 = vector.shape_cast %513 : vector<1x2x32xf32> to vector<2x32xf32>
    %c3_288 = arith.constant 3 : index
    %c0_289 = arith.constant 0 : index
    %c0_290 = arith.constant 0 : index
    %515 = vector.load %arg3[%c3_288, %c0_289, %c0_290] : memref<4x32x32xf32, #tpu.memory_space<vmem>>, vector<1x32x32xf32>
    %516 = vector.shape_cast %515 : vector<1x32x32xf32> to vector<32x32xf32>
    %cst_291 = arith.constant dense<0.000000e+00> : vector<2x32xf32>
    %517 = tpu.matmul %486, %516, %cst_291 {dimension_numbers = #tpu.dot_dimension_numbers<[1], [0], [0], [1], [0, 0, 1, 1], [], []>} : vector<2x32xf32>, vector<32x32xf32>, vector<2x32xf32> -> vector<2x32xf32>
    %518 = arith.addf %514, %517 : vector<2x32xf32>
    %519 = arith.negf %497 : vector<2x32xf32>
    %520 = math.exp %519 : vector<2x32xf32>
    %cst_292 = arith.constant 1.000000e+00 : f32
    %521 = vector.broadcast %cst_292 : f32 to vector<2x32xf32>
    %522 = arith.addf %521, %520 : vector<2x32xf32>
    %523 = arith.divf %521, %522 : vector<2x32xf32>
    %524 = arith.negf %504 : vector<2x32xf32>
    %525 = math.exp %524 : vector<2x32xf32>
    %cst_293 = arith.constant 1.000000e+00 : f32
    %526 = vector.broadcast %cst_293 : f32 to vector<2x32xf32>
    %527 = arith.addf %526, %525 : vector<2x32xf32>
    %528 = arith.divf %526, %527 : vector<2x32xf32>
    %529 = math.tanh %511 : vector<2x32xf32>
    %530 = arith.negf %518 : vector<2x32xf32>
    %531 = math.exp %530 : vector<2x32xf32>
    %cst_294 = arith.constant 1.000000e+00 : f32
    %532 = vector.broadcast %cst_294 : f32 to vector<2x32xf32>
    %533 = arith.addf %532, %531 : vector<2x32xf32>
    %534 = arith.divf %532, %533 : vector<2x32xf32>
    %535 = arith.mulf %528, %484 : vector<2x32xf32>
    %536 = arith.mulf %523, %529 : vector<2x32xf32>
    %537 = arith.addf %535, %536 : vector<2x32xf32>
    %538 = math.tanh %537 : vector<2x32xf32>
    %539 = arith.mulf %534, %538 : vector<2x32xf32>
    %540 = arith.index_cast %c5_i32_267 : i32 to index
    %c0_295 = arith.constant 0 : index
    %c0_296 = arith.constant 0 : index
    %541 = vector.load %arg15[%540, %c0_295, %c0_296] : memref<8x2x32xf32, #tpu.memory_space<vmem>>, vector<1x2x32xf32>
    %542 = vector.shape_cast %541 : vector<1x2x32xf32> to vector<2x32xf32>
    %543 = vector.shape_cast %539 : vector<2x32xf32> to vector<1x2x32xf32>
    tpu.vector_store %arg15[%540, %c0_295, %c0_296], %543 {strides = array<i32>} : memref<8x2x32xf32, #tpu.memory_space<vmem>>, vector<1x2x32xf32>,
    %c6_i32_297 = arith.constant 6 : i32
    %544 = arith.index_cast %c6_i32_297 : i32 to index
    %c0_298 = arith.constant 0 : index
    %c0_299 = arith.constant 0 : index
    %545 = vector.load %arg11[%544, %c0_298, %c0_299] : memref<8x2x32xf32, #tpu.memory_space<vmem>>, vector<1x2x32xf32>
    %546 = vector.shape_cast %545 : vector<1x2x32xf32> to vector<2x32xf32>
    %c0_300 = arith.constant 0 : index
    %c0_301 = arith.constant 0 : index
    %c0_302 = arith.constant 0 : index
    %547 = vector.load %arg3[%c0_300, %c0_301, %c0_302] : memref<4x32x32xf32, #tpu.memory_space<vmem>>, vector<1x32x32xf32>
    %548 = vector.shape_cast %547 : vector<1x32x32xf32> to vector<32x32xf32>
    %cst_303 = arith.constant dense<0.000000e+00> : vector<2x32xf32>
    %549 = tpu.matmul %539, %548, %cst_303 {dimension_numbers = #tpu.dot_dimension_numbers<[1], [0], [0], [1], [0, 0, 1, 1], [], []>} : vector<2x32xf32>, vector<32x32xf32>, vector<2x32xf32> -> vector<2x32xf32>
    %550 = arith.addf %546, %549 : vector<2x32xf32>
    %551 = arith.index_cast %c6_i32_297 : i32 to index
    %c0_304 = arith.constant 0 : index
    %c0_305 = arith.constant 0 : index
    %552 = vector.load %arg12[%551, %c0_304, %c0_305] : memref<8x2x32xf32, #tpu.memory_space<vmem>>, vector<1x2x32xf32>
    %553 = vector.shape_cast %552 : vector<1x2x32xf32> to vector<2x32xf32>
    %c1_306 = arith.constant 1 : index
    %c0_307 = arith.constant 0 : index
    %c0_308 = arith.constant 0 : index
    %554 = vector.load %arg3[%c1_306, %c0_307, %c0_308] : memref<4x32x32xf32, #tpu.memory_space<vmem>>, vector<1x32x32xf32>
    %555 = vector.shape_cast %554 : vector<1x32x32xf32> to vector<32x32xf32>
    %cst_309 = arith.constant dense<0.000000e+00> : vector<2x32xf32>
    %556 = tpu.matmul %539, %555, %cst_309 {dimension_numbers = #tpu.dot_dimension_numbers<[1], [0], [0], [1], [0, 0, 1, 1], [], []>} : vector<2x32xf32>, vector<32x32xf32>, vector<2x32xf32> -> vector<2x32xf32>
    %557 = arith.addf %553, %556 : vector<2x32xf32>
    %558 = arith.index_cast %c6_i32_297 : i32 to index
    %c0_310 = arith.constant 0 : index
    %c0_311 = arith.constant 0 : index
    %559 = vector.load %arg13[%558, %c0_310, %c0_311] : memref<8x2x32xf32, #tpu.memory_space<vmem>>, vector<1x2x32xf32>
    %560 = vector.shape_cast %559 : vector<1x2x32xf32> to vector<2x32xf32>
    %c2_312 = arith.constant 2 : index
    %c0_313 = arith.constant 0 : index
    %c0_314 = arith.constant 0 : index
    %561 = vector.load %arg3[%c2_312, %c0_313, %c0_314] : memref<4x32x32xf32, #tpu.memory_space<vmem>>, vector<1x32x32xf32>
    %562 = vector.shape_cast %561 : vector<1x32x32xf32> to vector<32x32xf32>
    %cst_315 = arith.constant dense<0.000000e+00> : vector<2x32xf32>
    %563 = tpu.matmul %539, %562, %cst_315 {dimension_numbers = #tpu.dot_dimension_numbers<[1], [0], [0], [1], [0, 0, 1, 1], [], []>} : vector<2x32xf32>, vector<32x32xf32>, vector<2x32xf32> -> vector<2x32xf32>
    %564 = arith.addf %560, %563 : vector<2x32xf32>
    %565 = arith.index_cast %c6_i32_297 : i32 to index
    %c0_316 = arith.constant 0 : index
    %c0_317 = arith.constant 0 : index
    %566 = vector.load %arg14[%565, %c0_316, %c0_317] : memref<8x2x32xf32, #tpu.memory_space<vmem>>, vector<1x2x32xf32>
    %567 = vector.shape_cast %566 : vector<1x2x32xf32> to vector<2x32xf32>
    %c3_318 = arith.constant 3 : index
    %c0_319 = arith.constant 0 : index
    %c0_320 = arith.constant 0 : index
    %568 = vector.load %arg3[%c3_318, %c0_319, %c0_320] : memref<4x32x32xf32, #tpu.memory_space<vmem>>, vector<1x32x32xf32>
    %569 = vector.shape_cast %568 : vector<1x32x32xf32> to vector<32x32xf32>
    %cst_321 = arith.constant dense<0.000000e+00> : vector<2x32xf32>
    %570 = tpu.matmul %539, %569, %cst_321 {dimension_numbers = #tpu.dot_dimension_numbers<[1], [0], [0], [1], [0, 0, 1, 1], [], []>} : vector<2x32xf32>, vector<32x32xf32>, vector<2x32xf32> -> vector<2x32xf32>
    %571 = arith.addf %567, %570 : vector<2x32xf32>
    %572 = arith.negf %550 : vector<2x32xf32>
    %573 = math.exp %572 : vector<2x32xf32>
    %cst_322 = arith.constant 1.000000e+00 : f32
    %574 = vector.broadcast %cst_322 : f32 to vector<2x32xf32>
    %575 = arith.addf %574, %573 : vector<2x32xf32>
    %576 = arith.divf %574, %575 : vector<2x32xf32>
    %577 = arith.negf %557 : vector<2x32xf32>
    %578 = math.exp %577 : vector<2x32xf32>
    %cst_323 = arith.constant 1.000000e+00 : f32
    %579 = vector.broadcast %cst_323 : f32 to vector<2x32xf32>
    %580 = arith.addf %579, %578 : vector<2x32xf32>
    %581 = arith.divf %579, %580 : vector<2x32xf32>
    %582 = math.tanh %564 : vector<2x32xf32>
    %583 = arith.negf %571 : vector<2x32xf32>
    %584 = math.exp %583 : vector<2x32xf32>
    %cst_324 = arith.constant 1.000000e+00 : f32
    %585 = vector.broadcast %cst_324 : f32 to vector<2x32xf32>
    %586 = arith.addf %585, %584 : vector<2x32xf32>
    %587 = arith.divf %585, %586 : vector<2x32xf32>
    %588 = arith.mulf %581, %537 : vector<2x32xf32>
    %589 = arith.mulf %576, %582 : vector<2x32xf32>
    %590 = arith.addf %588, %589 : vector<2x32xf32>
    %591 = math.tanh %590 : vector<2x32xf32>
    %592 = arith.mulf %587, %591 : vector<2x32xf32>
    %593 = arith.index_cast %c6_i32_297 : i32 to index
    %c0_325 = arith.constant 0 : index
    %c0_326 = arith.constant 0 : index
    %594 = vector.load %arg15[%593, %c0_325, %c0_326] : memref<8x2x32xf32, #tpu.memory_space<vmem>>, vector<1x2x32xf32>
    %595 = vector.shape_cast %594 : vector<1x2x32xf32> to vector<2x32xf32>
    %596 = vector.shape_cast %592 : vector<2x32xf32> to vector<1x2x32xf32>
    tpu.vector_store %arg15[%593, %c0_325, %c0_326], %596 {strides = array<i32>} : memref<8x2x32xf32, #tpu.memory_space<vmem>>, vector<1x2x32xf32>,
    %c7_i32_327 = arith.constant 7 : i32
    %597 = arith.index_cast %c7_i32_327 : i32 to index
    %c0_328 = arith.constant 0 : index
    %c0_329 = arith.constant 0 : index
    %598 = vector.load %arg11[%597, %c0_328, %c0_329] : memref<8x2x32xf32, #tpu.memory_space<vmem>>, vector<1x2x32xf32>
    %599 = vector.shape_cast %598 : vector<1x2x32xf32> to vector<2x32xf32>
    %c0_330 = arith.constant 0 : index
    %c0_331 = arith.constant 0 : index
    %c0_332 = arith.constant 0 : index
    %600 = vector.load %arg3[%c0_330, %c0_331, %c0_332] : memref<4x32x32xf32, #tpu.memory_space<vmem>>, vector<1x32x32xf32>
    %601 = vector.shape_cast %600 : vector<1x32x32xf32> to vector<32x32xf32>
    %cst_333 = arith.constant dense<0.000000e+00> : vector<2x32xf32>
    %602 = tpu.matmul %592, %601, %cst_333 {dimension_numbers = #tpu.dot_dimension_numbers<[1], [0], [0], [1], [0, 0, 1, 1], [], []>} : vector<2x32xf32>, vector<32x32xf32>, vector<2x32xf32> -> vector<2x32xf32>
    %603 = arith.addf %599, %602 : vector<2x32xf32>
    %604 = arith.index_cast %c7_i32_327 : i32 to index
    %c0_334 = arith.constant 0 : index
    %c0_335 = arith.constant 0 : index
    %605 = vector.load %arg12[%604, %c0_334, %c0_335] : memref<8x2x32xf32, #tpu.memory_space<vmem>>, vector<1x2x32xf32>
    %606 = vector.shape_cast %605 : vector<1x2x32xf32> to vector<2x32xf32>
    %c1_336 = arith.constant 1 : index
    %c0_337 = arith.constant 0 : index
    %c0_338 = arith.constant 0 : index
    %607 = vector.load %arg3[%c1_336, %c0_337, %c0_338] : memref<4x32x32xf32, #tpu.memory_space<vmem>>, vector<1x32x32xf32>
    %608 = vector.shape_cast %607 : vector<1x32x32xf32> to vector<32x32xf32>
    %cst_339 = arith.constant dense<0.000000e+00> : vector<2x32xf32>
    %609 = tpu.matmul %592, %608, %cst_339 {dimension_numbers = #tpu.dot_dimension_numbers<[1], [0], [0], [1], [0, 0, 1, 1], [], []>} : vector<2x32xf32>, vector<32x32xf32>, vector<2x32xf32> -> vector<2x32xf32>
    %610 = arith.addf %606, %609 : vector<2x32xf32>
    %611 = arith.index_cast %c7_i32_327 : i32 to index
    %c0_340 = arith.constant 0 : index
    %c0_341 = arith.constant 0 : index
    %612 = vector.load %arg13[%611, %c0_340, %c0_341] : memref<8x2x32xf32, #tpu.memory_space<vmem>>, vector<1x2x32xf32>
    %613 = vector.shape_cast %612 : vector<1x2x32xf32> to vector<2x32xf32>
    %c2_342 = arith.constant 2 : index
    %c0_343 = arith.constant 0 : index
    %c0_344 = arith.constant 0 : index
    %614 = vector.load %arg3[%c2_342, %c0_343, %c0_344] : memref<4x32x32xf32, #tpu.memory_space<vmem>>, vector<1x32x32xf32>
    %615 = vector.shape_cast %614 : vector<1x32x32xf32> to vector<32x32xf32>
    %cst_345 = arith.constant dense<0.000000e+00> : vector<2x32xf32>
    %616 = tpu.matmul %592, %615, %cst_345 {dimension_numbers = #tpu.dot_dimension_numbers<[1], [0], [0], [1], [0, 0, 1, 1], [], []>} : vector<2x32xf32>, vector<32x32xf32>, vector<2x32xf32> -> vector<2x32xf32>
    %617 = arith.addf %613, %616 : vector<2x32xf32>
    %618 = arith.index_cast %c7_i32_327 : i32 to index
    %c0_346 = arith.constant 0 : index
    %c0_347 = arith.constant 0 : index
    %619 = vector.load %arg14[%618, %c0_346, %c0_347] : memref<8x2x32xf32, #tpu.memory_space<vmem>>, vector<1x2x32xf32>
    %620 = vector.shape_cast %619 : vector<1x2x32xf32> to vector<2x32xf32>
    %c3_348 = arith.constant 3 : index
    %c0_349 = arith.constant 0 : index
    %c0_350 = arith.constant 0 : index
    %621 = vector.load %arg3[%c3_348, %c0_349, %c0_350] : memref<4x32x32xf32, #tpu.memory_space<vmem>>, vector<1x32x32xf32>
    %622 = vector.shape_cast %621 : vector<1x32x32xf32> to vector<32x32xf32>
    %cst_351 = arith.constant dense<0.000000e+00> : vector<2x32xf32>
    %623 = tpu.matmul %592, %622, %cst_351 {dimension_numbers = #tpu.dot_dimension_numbers<[1], [0], [0], [1], [0, 0, 1, 1], [], []>} : vector<2x32xf32>, vector<32x32xf32>, vector<2x32xf32> -> vector<2x32xf32>
    %624 = arith.addf %620, %623 : vector<2x32xf32>
    %625 = arith.negf %603 : vector<2x32xf32>
    %626 = math.exp %625 : vector<2x32xf32>
    %cst_352 = arith.constant 1.000000e+00 : f32
    %627 = vector.broadcast %cst_352 : f32 to vector<2x32xf32>
    %628 = arith.addf %627, %626 : vector<2x32xf32>
    %629 = arith.divf %627, %628 : vector<2x32xf32>
    %630 = arith.negf %610 : vector<2x32xf32>
    %631 = math.exp %630 : vector<2x32xf32>
    %cst_353 = arith.constant 1.000000e+00 : f32
    %632 = vector.broadcast %cst_353 : f32 to vector<2x32xf32>
    %633 = arith.addf %632, %631 : vector<2x32xf32>
    %634 = arith.divf %632, %633 : vector<2x32xf32>
    %635 = math.tanh %617 : vector<2x32xf32>
    %636 = arith.negf %624 : vector<2x32xf32>
    %637 = math.exp %636 : vector<2x32xf32>
    %cst_354 = arith.constant 1.000000e+00 : f32
    %638 = vector.broadcast %cst_354 : f32 to vector<2x32xf32>
    %639 = arith.addf %638, %637 : vector<2x32xf32>
    %640 = arith.divf %638, %639 : vector<2x32xf32>
    %641 = arith.mulf %634, %590 : vector<2x32xf32>
    %642 = arith.mulf %629, %635 : vector<2x32xf32>
    %643 = arith.addf %641, %642 : vector<2x32xf32>
    %644 = math.tanh %643 : vector<2x32xf32>
    %645 = arith.mulf %640, %644 : vector<2x32xf32>
    %646 = arith.index_cast %c7_i32_327 : i32 to index
    %c0_355 = arith.constant 0 : index
    %c0_356 = arith.constant 0 : index
    %647 = vector.load %arg15[%646, %c0_355, %c0_356] : memref<8x2x32xf32, #tpu.memory_space<vmem>>, vector<1x2x32xf32>
    %648 = vector.shape_cast %647 : vector<1x2x32xf32> to vector<2x32xf32>
    %649 = vector.shape_cast %645 : vector<2x32xf32> to vector<1x2x32xf32>
    tpu.vector_store %arg15[%646, %c0_355, %c0_356], %649 {strides = array<i32>} : memref<8x2x32xf32, #tpu.memory_space<vmem>>, vector<1x2x32xf32>,
    %c8_i32_357 = arith.constant 8 : i32
    %c0_i32_358 = arith.constant 0 : i32
    %650 = arith.index_cast %c0_i32_358 : i32 to index
    %c0_359 = arith.constant 0 : index
    %c0_360 = arith.constant 0 : index
    %651 = vector.load %arg15[%650, %c0_359, %c0_360] : memref<8x2x32xf32, #tpu.memory_space<vmem>>, vector<1x2x32xf32>
    %652 = vector.shape_cast %651 : vector<1x2x32xf32> to vector<2x32xf32>
    %c0_361 = arith.constant 0 : index
    %c0_362 = arith.constant 0 : index
    %653 = vector.load %arg5[%c0_361, %c0_362] : memref<32x128xf32, #tpu.memory_space<vmem>>, vector<32x128xf32>
    %cst_363 = arith.constant dense<0.000000e+00> : vector<2x128xf32>
    %654 = tpu.matmul %652, %653, %cst_363 {dimension_numbers = #tpu.dot_dimension_numbers<[1], [0], [0], [1], [0, 0, 1, 1], [], []>} : vector<2x32xf32>, vector<32x128xf32>, vector<2x128xf32> -> vector<2x128xf32>
    %c0_364 = arith.constant 0 : index
    %c0_365 = arith.constant 0 : index
    %655 = vector.load %arg7[%c0_364, %c0_365] : memref<1x128xf32, #tpu.memory_space<vmem>>, vector<1x128xf32>
    %656 = vector.broadcast %655 : vector<1x128xf32> to vector<2x128xf32>
    %657 = arith.addf %654, %656 : vector<2x128xf32>
    %658 = vector.extract_strided_slice %657 {offsets = [0, 0], sizes = [2, 32], strides = [1, 1]} : vector<2x128xf32> to vector<2x32xf32>
    %659 = arith.index_cast %c0_i32_358 : i32 to index
    %c0_366 = arith.constant 0 : index
    %c0_367 = arith.constant 0 : index
    %660 = vector.load %arg11[%659, %c0_366, %c0_367] : memref<8x2x32xf32, #tpu.memory_space<vmem>>, vector<1x2x32xf32>
    %661 = vector.shape_cast %660 : vector<1x2x32xf32> to vector<2x32xf32>
    %662 = vector.shape_cast %658 : vector<2x32xf32> to vector<1x2x32xf32>
    tpu.vector_store %arg11[%659, %c0_366, %c0_367], %662 {strides = array<i32>} : memref<8x2x32xf32, #tpu.memory_space<vmem>>, vector<1x2x32xf32>,
    %663 = vector.extract_strided_slice %657 {offsets = [0, 32], sizes = [2, 32], strides = [1, 1]} : vector<2x128xf32> to vector<2x32xf32>
    %664 = arith.index_cast %c0_i32_358 : i32 to index
    %c0_368 = arith.constant 0 : index
    %c0_369 = arith.constant 0 : index
    %665 = vector.load %arg12[%664, %c0_368, %c0_369] : memref<8x2x32xf32, #tpu.memory_space<vmem>>, vector<1x2x32xf32>
    %666 = vector.shape_cast %665 : vector<1x2x32xf32> to vector<2x32xf32>
    %667 = vector.shape_cast %663 : vector<2x32xf32> to vector<1x2x32xf32>
    tpu.vector_store %arg12[%664, %c0_368, %c0_369], %667 {strides = array<i32>} : memref<8x2x32xf32, #tpu.memory_space<vmem>>, vector<1x2x32xf32>,
    %668 = vector.extract_strided_slice %657 {offsets = [0, 64], sizes = [2, 32], strides = [1, 1]} : vector<2x128xf32> to vector<2x32xf32>
    %669 = arith.index_cast %c0_i32_358 : i32 to index
    %c0_370 = arith.constant 0 : index
    %c0_371 = arith.constant 0 : index
    %670 = vector.load %arg13[%669, %c0_370, %c0_371] : memref<8x2x32xf32, #tpu.memory_space<vmem>>, vector<1x2x32xf32>
    %671 = vector.shape_cast %670 : vector<1x2x32xf32> to vector<2x32xf32>
    %672 = vector.shape_cast %668 : vector<2x32xf32> to vector<1x2x32xf32>
    tpu.vector_store %arg13[%669, %c0_370, %c0_371], %672 {strides = array<i32>} : memref<8x2x32xf32, #tpu.memory_space<vmem>>, vector<1x2x32xf32>,
    %673 = vector.extract_strided_slice %657 {offsets = [0, 96], sizes = [2, 32], strides = [1, 1]} : vector<2x128xf32> to vector<2x32xf32>
    %674 = arith.index_cast %c0_i32_358 : i32 to index
    %c0_372 = arith.constant 0 : index
    %c0_373 = arith.constant 0 : index
    %675 = vector.load %arg14[%674, %c0_372, %c0_373] : memref<8x2x32xf32, #tpu.memory_space<vmem>>, vector<1x2x32xf32>
    %676 = vector.shape_cast %675 : vector<1x2x32xf32> to vector<2x32xf32>
    %677 = vector.shape_cast %673 : vector<2x32xf32> to vector<1x2x32xf32>
    tpu.vector_store %arg14[%674, %c0_372, %c0_373], %677 {strides = array<i32>} : memref<8x2x32xf32, #tpu.memory_space<vmem>>, vector<1x2x32xf32>,
    %c1_i32_374 = arith.constant 1 : i32
    %678 = arith.index_cast %c1_i32_374 : i32 to index
    %c0_375 = arith.constant 0 : index
    %c0_376 = arith.constant 0 : index
    %679 = vector.load %arg15[%678, %c0_375, %c0_376] : memref<8x2x32xf32, #tpu.memory_space<vmem>>, vector<1x2x32xf32>
    %680 = vector.shape_cast %679 : vector<1x2x32xf32> to vector<2x32xf32>
    %c0_377 = arith.constant 0 : index
    %c0_378 = arith.constant 0 : index
    %681 = vector.load %arg5[%c0_377, %c0_378] : memref<32x128xf32, #tpu.memory_space<vmem>>, vector<32x128xf32>
    %cst_379 = arith.constant dense<0.000000e+00> : vector<2x128xf32>
    %682 = tpu.matmul %680, %681, %cst_379 {dimension_numbers = #tpu.dot_dimension_numbers<[1], [0], [0], [1], [0, 0, 1, 1], [], []>} : vector<2x32xf32>, vector<32x128xf32>, vector<2x128xf32> -> vector<2x128xf32>
    %c0_380 = arith.constant 0 : index
    %c0_381 = arith.constant 0 : index
    %683 = vector.load %arg7[%c0_380, %c0_381] : memref<1x128xf32, #tpu.memory_space<vmem>>, vector<1x128xf32>
    %684 = vector.broadcast %683 : vector<1x128xf32> to vector<2x128xf32>
    %685 = arith.addf %682, %684 : vector<2x128xf32>
    %686 = vector.extract_strided_slice %685 {offsets = [0, 0], sizes = [2, 32], strides = [1, 1]} : vector<2x128xf32> to vector<2x32xf32>
    %687 = arith.index_cast %c1_i32_374 : i32 to index
    %c0_382 = arith.constant 0 : index
    %c0_383 = arith.constant 0 : index
    %688 = vector.load %arg11[%687, %c0_382, %c0_383] : memref<8x2x32xf32, #tpu.memory_space<vmem>>, vector<1x2x32xf32>
    %689 = vector.shape_cast %688 : vector<1x2x32xf32> to vector<2x32xf32>
    %690 = vector.shape_cast %686 : vector<2x32xf32> to vector<1x2x32xf32>
    tpu.vector_store %arg11[%687, %c0_382, %c0_383], %690 {strides = array<i32>} : memref<8x2x32xf32, #tpu.memory_space<vmem>>, vector<1x2x32xf32>,
    %691 = vector.extract_strided_slice %685 {offsets = [0, 32], sizes = [2, 32], strides = [1, 1]} : vector<2x128xf32> to vector<2x32xf32>
    %692 = arith.index_cast %c1_i32_374 : i32 to index
    %c0_384 = arith.constant 0 : index
    %c0_385 = arith.constant 0 : index
    %693 = vector.load %arg12[%692, %c0_384, %c0_385] : memref<8x2x32xf32, #tpu.memory_space<vmem>>, vector<1x2x32xf32>
    %694 = vector.shape_cast %693 : vector<1x2x32xf32> to vector<2x32xf32>
    %695 = vector.shape_cast %691 : vector<2x32xf32> to vector<1x2x32xf32>
    tpu.vector_store %arg12[%692, %c0_384, %c0_385], %695 {strides = array<i32>} : memref<8x2x32xf32, #tpu.memory_space<vmem>>, vector<1x2x32xf32>,
    %696 = vector.extract_strided_slice %685 {offsets = [0, 64], sizes = [2, 32], strides = [1, 1]} : vector<2x128xf32> to vector<2x32xf32>
    %697 = arith.index_cast %c1_i32_374 : i32 to index
    %c0_386 = arith.constant 0 : index
    %c0_387 = arith.constant 0 : index
    %698 = vector.load %arg13[%697, %c0_386, %c0_387] : memref<8x2x32xf32, #tpu.memory_space<vmem>>, vector<1x2x32xf32>
    %699 = vector.shape_cast %698 : vector<1x2x32xf32> to vector<2x32xf32>
    %700 = vector.shape_cast %696 : vector<2x32xf32> to vector<1x2x32xf32>
    tpu.vector_store %arg13[%697, %c0_386, %c0_387], %700 {strides = array<i32>} : memref<8x2x32xf32, #tpu.memory_space<vmem>>, vector<1x2x32xf32>,
    %701 = vector.extract_strided_slice %685 {offsets = [0, 96], sizes = [2, 32], strides = [1, 1]} : vector<2x128xf32> to vector<2x32xf32>
    %702 = arith.index_cast %c1_i32_374 : i32 to index
    %c0_388 = arith.constant 0 : index
    %c0_389 = arith.constant 0 : index
    %703 = vector.load %arg14[%702, %c0_388, %c0_389] : memref<8x2x32xf32, #tpu.memory_space<vmem>>, vector<1x2x32xf32>
    %704 = vector.shape_cast %703 : vector<1x2x32xf32> to vector<2x32xf32>
    %705 = vector.shape_cast %701 : vector<2x32xf32> to vector<1x2x32xf32>
    tpu.vector_store %arg14[%702, %c0_388, %c0_389], %705 {strides = array<i32>} : memref<8x2x32xf32, #tpu.memory_space<vmem>>, vector<1x2x32xf32>,
    %c2_i32_390 = arith.constant 2 : i32
    %706 = arith.index_cast %c2_i32_390 : i32 to index
    %c0_391 = arith.constant 0 : index
    %c0_392 = arith.constant 0 : index
    %707 = vector.load %arg15[%706, %c0_391, %c0_392] : memref<8x2x32xf32, #tpu.memory_space<vmem>>, vector<1x2x32xf32>
    %708 = vector.shape_cast %707 : vector<1x2x32xf32> to vector<2x32xf32>
    %c0_393 = arith.constant 0 : index
    %c0_394 = arith.constant 0 : index
    %709 = vector.load %arg5[%c0_393, %c0_394] : memref<32x128xf32, #tpu.memory_space<vmem>>, vector<32x128xf32>
    %cst_395 = arith.constant dense<0.000000e+00> : vector<2x128xf32>
    %710 = tpu.matmul %708, %709, %cst_395 {dimension_numbers = #tpu.dot_dimension_numbers<[1], [0], [0], [1], [0, 0, 1, 1], [], []>} : vector<2x32xf32>, vector<32x128xf32>, vector<2x128xf32> -> vector<2x128xf32>
    %c0_396 = arith.constant 0 : index
    %c0_397 = arith.constant 0 : index
    %711 = vector.load %arg7[%c0_396, %c0_397] : memref<1x128xf32, #tpu.memory_space<vmem>>, vector<1x128xf32>
    %712 = vector.broadcast %711 : vector<1x128xf32> to vector<2x128xf32>
    %713 = arith.addf %710, %712 : vector<2x128xf32>
    %714 = vector.extract_strided_slice %713 {offsets = [0, 0], sizes = [2, 32], strides = [1, 1]} : vector<2x128xf32> to vector<2x32xf32>
    %715 = arith.index_cast %c2_i32_390 : i32 to index
    %c0_398 = arith.constant 0 : index
    %c0_399 = arith.constant 0 : index
    %716 = vector.load %arg11[%715, %c0_398, %c0_399] : memref<8x2x32xf32, #tpu.memory_space<vmem>>, vector<1x2x32xf32>
    %717 = vector.shape_cast %716 : vector<1x2x32xf32> to vector<2x32xf32>
    %718 = vector.shape_cast %714 : vector<2x32xf32> to vector<1x2x32xf32>
    tpu.vector_store %arg11[%715, %c0_398, %c0_399], %718 {strides = array<i32>} : memref<8x2x32xf32, #tpu.memory_space<vmem>>, vector<1x2x32xf32>,
    %719 = vector.extract_strided_slice %713 {offsets = [0, 32], sizes = [2, 32], strides = [1, 1]} : vector<2x128xf32> to vector<2x32xf32>
    %720 = arith.index_cast %c2_i32_390 : i32 to index
    %c0_400 = arith.constant 0 : index
    %c0_401 = arith.constant 0 : index
    %721 = vector.load %arg12[%720, %c0_400, %c0_401] : memref<8x2x32xf32, #tpu.memory_space<vmem>>, vector<1x2x32xf32>
    %722 = vector.shape_cast %721 : vector<1x2x32xf32> to vector<2x32xf32>
    %723 = vector.shape_cast %719 : vector<2x32xf32> to vector<1x2x32xf32>
    tpu.vector_store %arg12[%720, %c0_400, %c0_401], %723 {strides = array<i32>} : memref<8x2x32xf32, #tpu.memory_space<vmem>>, vector<1x2x32xf32>,
    %724 = vector.extract_strided_slice %713 {offsets = [0, 64], sizes = [2, 32], strides = [1, 1]} : vector<2x128xf32> to vector<2x32xf32>
    %725 = arith.index_cast %c2_i32_390 : i32 to index
    %c0_402 = arith.constant 0 : index
    %c0_403 = arith.constant 0 : index
    %726 = vector.load %arg13[%725, %c0_402, %c0_403] : memref<8x2x32xf32, #tpu.memory_space<vmem>>, vector<1x2x32xf32>
    %727 = vector.shape_cast %726 : vector<1x2x32xf32> to vector<2x32xf32>
    %728 = vector.shape_cast %724 : vector<2x32xf32> to vector<1x2x32xf32>
    tpu.vector_store %arg13[%725, %c0_402, %c0_403], %728 {strides = array<i32>} : memref<8x2x32xf32, #tpu.memory_space<vmem>>, vector<1x2x32xf32>,
    %729 = vector.extract_strided_slice %713 {offsets = [0, 96], sizes = [2, 32], strides = [1, 1]} : vector<2x128xf32> to vector<2x32xf32>
    %730 = arith.index_cast %c2_i32_390 : i32 to index
    %c0_404 = arith.constant 0 : index
    %c0_405 = arith.constant 0 : index
    %731 = vector.load %arg14[%730, %c0_404, %c0_405] : memref<8x2x32xf32, #tpu.memory_space<vmem>>, vector<1x2x32xf32>
    %732 = vector.shape_cast %731 : vector<1x2x32xf32> to vector<2x32xf32>
    %733 = vector.shape_cast %729 : vector<2x32xf32> to vector<1x2x32xf32>
    tpu.vector_store %arg14[%730, %c0_404, %c0_405], %733 {strides = array<i32>} : memref<8x2x32xf32, #tpu.memory_space<vmem>>, vector<1x2x32xf32>,
    %c3_i32_406 = arith.constant 3 : i32
    %734 = arith.index_cast %c3_i32_406 : i32 to index
    %c0_407 = arith.constant 0 : index
    %c0_408 = arith.constant 0 : index
    %735 = vector.load %arg15[%734, %c0_407, %c0_408] : memref<8x2x32xf32, #tpu.memory_space<vmem>>, vector<1x2x32xf32>
    %736 = vector.shape_cast %735 : vector<1x2x32xf32> to vector<2x32xf32>
    %c0_409 = arith.constant 0 : index
    %c0_410 = arith.constant 0 : index
    %737 = vector.load %arg5[%c0_409, %c0_410] : memref<32x128xf32, #tpu.memory_space<vmem>>, vector<32x128xf32>
    %cst_411 = arith.constant dense<0.000000e+00> : vector<2x128xf32>
    %738 = tpu.matmul %736, %737, %cst_411 {dimension_numbers = #tpu.dot_dimension_numbers<[1], [0], [0], [1], [0, 0, 1, 1], [], []>} : vector<2x32xf32>, vector<32x128xf32>, vector<2x128xf32> -> vector<2x128xf32>
    %c0_412 = arith.constant 0 : index
    %c0_413 = arith.constant 0 : index
    %739 = vector.load %arg7[%c0_412, %c0_413] : memref<1x128xf32, #tpu.memory_space<vmem>>, vector<1x128xf32>
    %740 = vector.broadcast %739 : vector<1x128xf32> to vector<2x128xf32>
    %741 = arith.addf %738, %740 : vector<2x128xf32>
    %742 = vector.extract_strided_slice %741 {offsets = [0, 0], sizes = [2, 32], strides = [1, 1]} : vector<2x128xf32> to vector<2x32xf32>
    %743 = arith.index_cast %c3_i32_406 : i32 to index
    %c0_414 = arith.constant 0 : index
    %c0_415 = arith.constant 0 : index
    %744 = vector.load %arg11[%743, %c0_414, %c0_415] : memref<8x2x32xf32, #tpu.memory_space<vmem>>, vector<1x2x32xf32>
    %745 = vector.shape_cast %744 : vector<1x2x32xf32> to vector<2x32xf32>
    %746 = vector.shape_cast %742 : vector<2x32xf32> to vector<1x2x32xf32>
    tpu.vector_store %arg11[%743, %c0_414, %c0_415], %746 {strides = array<i32>} : memref<8x2x32xf32, #tpu.memory_space<vmem>>, vector<1x2x32xf32>,
    %747 = vector.extract_strided_slice %741 {offsets = [0, 32], sizes = [2, 32], strides = [1, 1]} : vector<2x128xf32> to vector<2x32xf32>
    %748 = arith.index_cast %c3_i32_406 : i32 to index
    %c0_416 = arith.constant 0 : index
    %c0_417 = arith.constant 0 : index
    %749 = vector.load %arg12[%748, %c0_416, %c0_417] : memref<8x2x32xf32, #tpu.memory_space<vmem>>, vector<1x2x32xf32>
    %750 = vector.shape_cast %749 : vector<1x2x32xf32> to vector<2x32xf32>
    %751 = vector.shape_cast %747 : vector<2x32xf32> to vector<1x2x32xf32>
    tpu.vector_store %arg12[%748, %c0_416, %c0_417], %751 {strides = array<i32>} : memref<8x2x32xf32, #tpu.memory_space<vmem>>, vector<1x2x32xf32>,
    %752 = vector.extract_strided_slice %741 {offsets = [0, 64], sizes = [2, 32], strides = [1, 1]} : vector<2x128xf32> to vector<2x32xf32>
    %753 = arith.index_cast %c3_i32_406 : i32 to index
    %c0_418 = arith.constant 0 : index
    %c0_419 = arith.constant 0 : index
    %754 = vector.load %arg13[%753, %c0_418, %c0_419] : memref<8x2x32xf32, #tpu.memory_space<vmem>>, vector<1x2x32xf32>
    %755 = vector.shape_cast %754 : vector<1x2x32xf32> to vector<2x32xf32>
    %756 = vector.shape_cast %752 : vector<2x32xf32> to vector<1x2x32xf32>
    tpu.vector_store %arg13[%753, %c0_418, %c0_419], %756 {strides = array<i32>} : memref<8x2x32xf32, #tpu.memory_space<vmem>>, vector<1x2x32xf32>,
    %757 = vector.extract_strided_slice %741 {offsets = [0, 96], sizes = [2, 32], strides = [1, 1]} : vector<2x128xf32> to vector<2x32xf32>
    %758 = arith.index_cast %c3_i32_406 : i32 to index
    %c0_420 = arith.constant 0 : index
    %c0_421 = arith.constant 0 : index
    %759 = vector.load %arg14[%758, %c0_420, %c0_421] : memref<8x2x32xf32, #tpu.memory_space<vmem>>, vector<1x2x32xf32>
    %760 = vector.shape_cast %759 : vector<1x2x32xf32> to vector<2x32xf32>
    %761 = vector.shape_cast %757 : vector<2x32xf32> to vector<1x2x32xf32>
    tpu.vector_store %arg14[%758, %c0_420, %c0_421], %761 {strides = array<i32>} : memref<8x2x32xf32, #tpu.memory_space<vmem>>, vector<1x2x32xf32>,
    %c4_i32_422 = arith.constant 4 : i32
    %762 = arith.index_cast %c4_i32_422 : i32 to index
    %c0_423 = arith.constant 0 : index
    %c0_424 = arith.constant 0 : index
    %763 = vector.load %arg15[%762, %c0_423, %c0_424] : memref<8x2x32xf32, #tpu.memory_space<vmem>>, vector<1x2x32xf32>
    %764 = vector.shape_cast %763 : vector<1x2x32xf32> to vector<2x32xf32>
    %c0_425 = arith.constant 0 : index
    %c0_426 = arith.constant 0 : index
    %765 = vector.load %arg5[%c0_425, %c0_426] : memref<32x128xf32, #tpu.memory_space<vmem>>, vector<32x128xf32>
    %cst_427 = arith.constant dense<0.000000e+00> : vector<2x128xf32>
    %766 = tpu.matmul %764, %765, %cst_427 {dimension_numbers = #tpu.dot_dimension_numbers<[1], [0], [0], [1], [0, 0, 1, 1], [], []>} : vector<2x32xf32>, vector<32x128xf32>, vector<2x128xf32> -> vector<2x128xf32>
    %c0_428 = arith.constant 0 : index
    %c0_429 = arith.constant 0 : index
    %767 = vector.load %arg7[%c0_428, %c0_429] : memref<1x128xf32, #tpu.memory_space<vmem>>, vector<1x128xf32>
    %768 = vector.broadcast %767 : vector<1x128xf32> to vector<2x128xf32>
    %769 = arith.addf %766, %768 : vector<2x128xf32>
    %770 = vector.extract_strided_slice %769 {offsets = [0, 0], sizes = [2, 32], strides = [1, 1]} : vector<2x128xf32> to vector<2x32xf32>
    %771 = arith.index_cast %c4_i32_422 : i32 to index
    %c0_430 = arith.constant 0 : index
    %c0_431 = arith.constant 0 : index
    %772 = vector.load %arg11[%771, %c0_430, %c0_431] : memref<8x2x32xf32, #tpu.memory_space<vmem>>, vector<1x2x32xf32>
    %773 = vector.shape_cast %772 : vector<1x2x32xf32> to vector<2x32xf32>
    %774 = vector.shape_cast %770 : vector<2x32xf32> to vector<1x2x32xf32>
    tpu.vector_store %arg11[%771, %c0_430, %c0_431], %774 {strides = array<i32>} : memref<8x2x32xf32, #tpu.memory_space<vmem>>, vector<1x2x32xf32>,
    %775 = vector.extract_strided_slice %769 {offsets = [0, 32], sizes = [2, 32], strides = [1, 1]} : vector<2x128xf32> to vector<2x32xf32>
    %776 = arith.index_cast %c4_i32_422 : i32 to index
    %c0_432 = arith.constant 0 : index
    %c0_433 = arith.constant 0 : index
    %777 = vector.load %arg12[%776, %c0_432, %c0_433] : memref<8x2x32xf32, #tpu.memory_space<vmem>>, vector<1x2x32xf32>
    %778 = vector.shape_cast %777 : vector<1x2x32xf32> to vector<2x32xf32>
    %779 = vector.shape_cast %775 : vector<2x32xf32> to vector<1x2x32xf32>
    tpu.vector_store %arg12[%776, %c0_432, %c0_433], %779 {strides = array<i32>} : memref<8x2x32xf32, #tpu.memory_space<vmem>>, vector<1x2x32xf32>,
    %780 = vector.extract_strided_slice %769 {offsets = [0, 64], sizes = [2, 32], strides = [1, 1]} : vector<2x128xf32> to vector<2x32xf32>
    %781 = arith.index_cast %c4_i32_422 : i32 to index
    %c0_434 = arith.constant 0 : index
    %c0_435 = arith.constant 0 : index
    %782 = vector.load %arg13[%781, %c0_434, %c0_435] : memref<8x2x32xf32, #tpu.memory_space<vmem>>, vector<1x2x32xf32>
    %783 = vector.shape_cast %782 : vector<1x2x32xf32> to vector<2x32xf32>
    %784 = vector.shape_cast %780 : vector<2x32xf32> to vector<1x2x32xf32>
    tpu.vector_store %arg13[%781, %c0_434, %c0_435], %784 {strides = array<i32>} : memref<8x2x32xf32, #tpu.memory_space<vmem>>, vector<1x2x32xf32>,
    %785 = vector.extract_strided_slice %769 {offsets = [0, 96], sizes = [2, 32], strides = [1, 1]} : vector<2x128xf32> to vector<2x32xf32>
    %786 = arith.index_cast %c4_i32_422 : i32 to index
    %c0_436 = arith.constant 0 : index
    %c0_437 = arith.constant 0 : index
    %787 = vector.load %arg14[%786, %c0_436, %c0_437] : memref<8x2x32xf32, #tpu.memory_space<vmem>>, vector<1x2x32xf32>
    %788 = vector.shape_cast %787 : vector<1x2x32xf32> to vector<2x32xf32>
    %789 = vector.shape_cast %785 : vector<2x32xf32> to vector<1x2x32xf32>
    tpu.vector_store %arg14[%786, %c0_436, %c0_437], %789 {strides = array<i32>} : memref<8x2x32xf32, #tpu.memory_space<vmem>>, vector<1x2x32xf32>,
    %c5_i32_438 = arith.constant 5 : i32
    %790 = arith.index_cast %c5_i32_438 : i32 to index
    %c0_439 = arith.constant 0 : index
    %c0_440 = arith.constant 0 : index
    %791 = vector.load %arg15[%790, %c0_439, %c0_440] : memref<8x2x32xf32, #tpu.memory_space<vmem>>, vector<1x2x32xf32>
    %792 = vector.shape_cast %791 : vector<1x2x32xf32> to vector<2x32xf32>
    %c0_441 = arith.constant 0 : index
    %c0_442 = arith.constant 0 : index
    %793 = vector.load %arg5[%c0_441, %c0_442] : memref<32x128xf32, #tpu.memory_space<vmem>>, vector<32x128xf32>
    %cst_443 = arith.constant dense<0.000000e+00> : vector<2x128xf32>
    %794 = tpu.matmul %792, %793, %cst_443 {dimension_numbers = #tpu.dot_dimension_numbers<[1], [0], [0], [1], [0, 0, 1, 1], [], []>} : vector<2x32xf32>, vector<32x128xf32>, vector<2x128xf32> -> vector<2x128xf32>
    %c0_444 = arith.constant 0 : index
    %c0_445 = arith.constant 0 : index
    %795 = vector.load %arg7[%c0_444, %c0_445] : memref<1x128xf32, #tpu.memory_space<vmem>>, vector<1x128xf32>
    %796 = vector.broadcast %795 : vector<1x128xf32> to vector<2x128xf32>
    %797 = arith.addf %794, %796 : vector<2x128xf32>
    %798 = vector.extract_strided_slice %797 {offsets = [0, 0], sizes = [2, 32], strides = [1, 1]} : vector<2x128xf32> to vector<2x32xf32>
    %799 = arith.index_cast %c5_i32_438 : i32 to index
    %c0_446 = arith.constant 0 : index
    %c0_447 = arith.constant 0 : index
    %800 = vector.load %arg11[%799, %c0_446, %c0_447] : memref<8x2x32xf32, #tpu.memory_space<vmem>>, vector<1x2x32xf32>
    %801 = vector.shape_cast %800 : vector<1x2x32xf32> to vector<2x32xf32>
    %802 = vector.shape_cast %798 : vector<2x32xf32> to vector<1x2x32xf32>
    tpu.vector_store %arg11[%799, %c0_446, %c0_447], %802 {strides = array<i32>} : memref<8x2x32xf32, #tpu.memory_space<vmem>>, vector<1x2x32xf32>,
    %803 = vector.extract_strided_slice %797 {offsets = [0, 32], sizes = [2, 32], strides = [1, 1]} : vector<2x128xf32> to vector<2x32xf32>
    %804 = arith.index_cast %c5_i32_438 : i32 to index
    %c0_448 = arith.constant 0 : index
    %c0_449 = arith.constant 0 : index
    %805 = vector.load %arg12[%804, %c0_448, %c0_449] : memref<8x2x32xf32, #tpu.memory_space<vmem>>, vector<1x2x32xf32>
    %806 = vector.shape_cast %805 : vector<1x2x32xf32> to vector<2x32xf32>
    %807 = vector.shape_cast %803 : vector<2x32xf32> to vector<1x2x32xf32>
    tpu.vector_store %arg12[%804, %c0_448, %c0_449], %807 {strides = array<i32>} : memref<8x2x32xf32, #tpu.memory_space<vmem>>, vector<1x2x32xf32>,
    %808 = vector.extract_strided_slice %797 {offsets = [0, 64], sizes = [2, 32], strides = [1, 1]} : vector<2x128xf32> to vector<2x32xf32>
    %809 = arith.index_cast %c5_i32_438 : i32 to index
    %c0_450 = arith.constant 0 : index
    %c0_451 = arith.constant 0 : index
    %810 = vector.load %arg13[%809, %c0_450, %c0_451] : memref<8x2x32xf32, #tpu.memory_space<vmem>>, vector<1x2x32xf32>
    %811 = vector.shape_cast %810 : vector<1x2x32xf32> to vector<2x32xf32>
    %812 = vector.shape_cast %808 : vector<2x32xf32> to vector<1x2x32xf32>
    tpu.vector_store %arg13[%809, %c0_450, %c0_451], %812 {strides = array<i32>} : memref<8x2x32xf32, #tpu.memory_space<vmem>>, vector<1x2x32xf32>,
    %813 = vector.extract_strided_slice %797 {offsets = [0, 96], sizes = [2, 32], strides = [1, 1]} : vector<2x128xf32> to vector<2x32xf32>
    %814 = arith.index_cast %c5_i32_438 : i32 to index
    %c0_452 = arith.constant 0 : index
    %c0_453 = arith.constant 0 : index
    %815 = vector.load %arg14[%814, %c0_452, %c0_453] : memref<8x2x32xf32, #tpu.memory_space<vmem>>, vector<1x2x32xf32>
    %816 = vector.shape_cast %815 : vector<1x2x32xf32> to vector<2x32xf32>
    %817 = vector.shape_cast %813 : vector<2x32xf32> to vector<1x2x32xf32>
    tpu.vector_store %arg14[%814, %c0_452, %c0_453], %817 {strides = array<i32>} : memref<8x2x32xf32, #tpu.memory_space<vmem>>, vector<1x2x32xf32>,
    %c6_i32_454 = arith.constant 6 : i32
    %818 = arith.index_cast %c6_i32_454 : i32 to index
    %c0_455 = arith.constant 0 : index
    %c0_456 = arith.constant 0 : index
    %819 = vector.load %arg15[%818, %c0_455, %c0_456] : memref<8x2x32xf32, #tpu.memory_space<vmem>>, vector<1x2x32xf32>
    %820 = vector.shape_cast %819 : vector<1x2x32xf32> to vector<2x32xf32>
    %c0_457 = arith.constant 0 : index
    %c0_458 = arith.constant 0 : index
    %821 = vector.load %arg5[%c0_457, %c0_458] : memref<32x128xf32, #tpu.memory_space<vmem>>, vector<32x128xf32>
    %cst_459 = arith.constant dense<0.000000e+00> : vector<2x128xf32>
    %822 = tpu.matmul %820, %821, %cst_459 {dimension_numbers = #tpu.dot_dimension_numbers<[1], [0], [0], [1], [0, 0, 1, 1], [], []>} : vector<2x32xf32>, vector<32x128xf32>, vector<2x128xf32> -> vector<2x128xf32>
    %c0_460 = arith.constant 0 : index
    %c0_461 = arith.constant 0 : index
    %823 = vector.load %arg7[%c0_460, %c0_461] : memref<1x128xf32, #tpu.memory_space<vmem>>, vector<1x128xf32>
    %824 = vector.broadcast %823 : vector<1x128xf32> to vector<2x128xf32>
    %825 = arith.addf %822, %824 : vector<2x128xf32>
    %826 = vector.extract_strided_slice %825 {offsets = [0, 0], sizes = [2, 32], strides = [1, 1]} : vector<2x128xf32> to vector<2x32xf32>
    %827 = arith.index_cast %c6_i32_454 : i32 to index
    %c0_462 = arith.constant 0 : index
    %c0_463 = arith.constant 0 : index
    %828 = vector.load %arg11[%827, %c0_462, %c0_463] : memref<8x2x32xf32, #tpu.memory_space<vmem>>, vector<1x2x32xf32>
    %829 = vector.shape_cast %828 : vector<1x2x32xf32> to vector<2x32xf32>
    %830 = vector.shape_cast %826 : vector<2x32xf32> to vector<1x2x32xf32>
    tpu.vector_store %arg11[%827, %c0_462, %c0_463], %830 {strides = array<i32>} : memref<8x2x32xf32, #tpu.memory_space<vmem>>, vector<1x2x32xf32>,
    %831 = vector.extract_strided_slice %825 {offsets = [0, 32], sizes = [2, 32], strides = [1, 1]} : vector<2x128xf32> to vector<2x32xf32>
    %832 = arith.index_cast %c6_i32_454 : i32 to index
    %c0_464 = arith.constant 0 : index
    %c0_465 = arith.constant 0 : index
    %833 = vector.load %arg12[%832, %c0_464, %c0_465] : memref<8x2x32xf32, #tpu.memory_space<vmem>>, vector<1x2x32xf32>
    %834 = vector.shape_cast %833 : vector<1x2x32xf32> to vector<2x32xf32>
    %835 = vector.shape_cast %831 : vector<2x32xf32> to vector<1x2x32xf32>
    tpu.vector_store %arg12[%832, %c0_464, %c0_465], %835 {strides = array<i32>} : memref<8x2x32xf32, #tpu.memory_space<vmem>>, vector<1x2x32xf32>,
    %836 = vector.extract_strided_slice %825 {offsets = [0, 64], sizes = [2, 32], strides = [1, 1]} : vector<2x128xf32> to vector<2x32xf32>
    %837 = arith.index_cast %c6_i32_454 : i32 to index
    %c0_466 = arith.constant 0 : index
    %c0_467 = arith.constant 0 : index
    %838 = vector.load %arg13[%837, %c0_466, %c0_467] : memref<8x2x32xf32, #tpu.memory_space<vmem>>, vector<1x2x32xf32>
    %839 = vector.shape_cast %838 : vector<1x2x32xf32> to vector<2x32xf32>
    %840 = vector.shape_cast %836 : vector<2x32xf32> to vector<1x2x32xf32>
    tpu.vector_store %arg13[%837, %c0_466, %c0_467], %840 {strides = array<i32>} : memref<8x2x32xf32, #tpu.memory_space<vmem>>, vector<1x2x32xf32>,
    %841 = vector.extract_strided_slice %825 {offsets = [0, 96], sizes = [2, 32], strides = [1, 1]} : vector<2x128xf32> to vector<2x32xf32>
    %842 = arith.index_cast %c6_i32_454 : i32 to index
    %c0_468 = arith.constant 0 : index
    %c0_469 = arith.constant 0 : index
    %843 = vector.load %arg14[%842, %c0_468, %c0_469] : memref<8x2x32xf32, #tpu.memory_space<vmem>>, vector<1x2x32xf32>
    %844 = vector.shape_cast %843 : vector<1x2x32xf32> to vector<2x32xf32>
    %845 = vector.shape_cast %841 : vector<2x32xf32> to vector<1x2x32xf32>
    tpu.vector_store %arg14[%842, %c0_468, %c0_469], %845 {strides = array<i32>} : memref<8x2x32xf32, #tpu.memory_space<vmem>>, vector<1x2x32xf32>,
    %c7_i32_470 = arith.constant 7 : i32
    %846 = arith.index_cast %c7_i32_470 : i32 to index
    %c0_471 = arith.constant 0 : index
    %c0_472 = arith.constant 0 : index
    %847 = vector.load %arg15[%846, %c0_471, %c0_472] : memref<8x2x32xf32, #tpu.memory_space<vmem>>, vector<1x2x32xf32>
    %848 = vector.shape_cast %847 : vector<1x2x32xf32> to vector<2x32xf32>
    %c0_473 = arith.constant 0 : index
    %c0_474 = arith.constant 0 : index
    %849 = vector.load %arg5[%c0_473, %c0_474] : memref<32x128xf32, #tpu.memory_space<vmem>>, vector<32x128xf32>
    %cst_475 = arith.constant dense<0.000000e+00> : vector<2x128xf32>
    %850 = tpu.matmul %848, %849, %cst_475 {dimension_numbers = #tpu.dot_dimension_numbers<[1], [0], [0], [1], [0, 0, 1, 1], [], []>} : vector<2x32xf32>, vector<32x128xf32>, vector<2x128xf32> -> vector<2x128xf32>
    %c0_476 = arith.constant 0 : index
    %c0_477 = arith.constant 0 : index
    %851 = vector.load %arg7[%c0_476, %c0_477] : memref<1x128xf32, #tpu.memory_space<vmem>>, vector<1x128xf32>
    %852 = vector.broadcast %851 : vector<1x128xf32> to vector<2x128xf32>
    %853 = arith.addf %850, %852 : vector<2x128xf32>
    %854 = vector.extract_strided_slice %853 {offsets = [0, 0], sizes = [2, 32], strides = [1, 1]} : vector<2x128xf32> to vector<2x32xf32>
    %855 = arith.index_cast %c7_i32_470 : i32 to index
    %c0_478 = arith.constant 0 : index
    %c0_479 = arith.constant 0 : index
    %856 = vector.load %arg11[%855, %c0_478, %c0_479] : memref<8x2x32xf32, #tpu.memory_space<vmem>>, vector<1x2x32xf32>
    %857 = vector.shape_cast %856 : vector<1x2x32xf32> to vector<2x32xf32>
    %858 = vector.shape_cast %854 : vector<2x32xf32> to vector<1x2x32xf32>
    tpu.vector_store %arg11[%855, %c0_478, %c0_479], %858 {strides = array<i32>} : memref<8x2x32xf32, #tpu.memory_space<vmem>>, vector<1x2x32xf32>,
    %859 = vector.extract_strided_slice %853 {offsets = [0, 32], sizes = [2, 32], strides = [1, 1]} : vector<2x128xf32> to vector<2x32xf32>
    %860 = arith.index_cast %c7_i32_470 : i32 to index
    %c0_480 = arith.constant 0 : index
    %c0_481 = arith.constant 0 : index
    %861 = vector.load %arg12[%860, %c0_480, %c0_481] : memref<8x2x32xf32, #tpu.memory_space<vmem>>, vector<1x2x32xf32>
    %862 = vector.shape_cast %861 : vector<1x2x32xf32> to vector<2x32xf32>
    %863 = vector.shape_cast %859 : vector<2x32xf32> to vector<1x2x32xf32>
    tpu.vector_store %arg12[%860, %c0_480, %c0_481], %863 {strides = array<i32>} : memref<8x2x32xf32, #tpu.memory_space<vmem>>, vector<1x2x32xf32>,
    %864 = vector.extract_strided_slice %853 {offsets = [0, 64], sizes = [2, 32], strides = [1, 1]} : vector<2x128xf32> to vector<2x32xf32>
    %865 = arith.index_cast %c7_i32_470 : i32 to index
    %c0_482 = arith.constant 0 : index
    %c0_483 = arith.constant 0 : index
    %866 = vector.load %arg13[%865, %c0_482, %c0_483] : memref<8x2x32xf32, #tpu.memory_space<vmem>>, vector<1x2x32xf32>
    %867 = vector.shape_cast %866 : vector<1x2x32xf32> to vector<2x32xf32>
    %868 = vector.shape_cast %864 : vector<2x32xf32> to vector<1x2x32xf32>
    tpu.vector_store %arg13[%865, %c0_482, %c0_483], %868 {strides = array<i32>} : memref<8x2x32xf32, #tpu.memory_space<vmem>>, vector<1x2x32xf32>,
    %869 = vector.extract_strided_slice %853 {offsets = [0, 96], sizes = [2, 32], strides = [1, 1]} : vector<2x128xf32> to vector<2x32xf32>
    %870 = arith.index_cast %c7_i32_470 : i32 to index
    %c0_484 = arith.constant 0 : index
    %c0_485 = arith.constant 0 : index
    %871 = vector.load %arg14[%870, %c0_484, %c0_485] : memref<8x2x32xf32, #tpu.memory_space<vmem>>, vector<1x2x32xf32>
    %872 = vector.shape_cast %871 : vector<1x2x32xf32> to vector<2x32xf32>
    %873 = vector.shape_cast %869 : vector<2x32xf32> to vector<1x2x32xf32>
    tpu.vector_store %arg14[%870, %c0_484, %c0_485], %873 {strides = array<i32>} : memref<8x2x32xf32, #tpu.memory_space<vmem>>, vector<1x2x32xf32>,
    %c8_i32_486 = arith.constant 8 : i32
    %cst_487 = arith.constant 0.000000e+00 : f32
    %874 = vector.broadcast %cst_487 : f32 to vector<2x32xf32>
    %cst_488 = arith.constant 0.000000e+00 : f32
    %875 = vector.broadcast %cst_488 : f32 to vector<2x32xf32>
    %c0_i32_489 = arith.constant 0 : i32
    %876 = arith.index_cast %c0_i32_489 : i32 to index
    %c0_490 = arith.constant 0 : index
    %c0_491 = arith.constant 0 : index
    %877 = vector.load %arg11[%876, %c0_490, %c0_491] : memref<8x2x32xf32, #tpu.memory_space<vmem>>, vector<1x2x32xf32>
    %878 = vector.shape_cast %877 : vector<1x2x32xf32> to vector<2x32xf32>
    %c0_492 = arith.constant 0 : index
    %c0_493 = arith.constant 0 : index
    %c0_494 = arith.constant 0 : index
    %879 = vector.load %arg6[%c0_492, %c0_493, %c0_494] : memref<4x32x32xf32, #tpu.memory_space<vmem>>, vector<1x32x32xf32>
    %880 = vector.shape_cast %879 : vector<1x32x32xf32> to vector<32x32xf32>
    %cst_495 = arith.constant dense<0.000000e+00> : vector<2x32xf32>
    %881 = tpu.matmul %874, %880, %cst_495 {dimension_numbers = #tpu.dot_dimension_numbers<[1], [0], [0], [1], [0, 0, 1, 1], [], []>} : vector<2x32xf32>, vector<32x32xf32>, vector<2x32xf32> -> vector<2x32xf32>
    %882 = arith.addf %878, %881 : vector<2x32xf32>
    %883 = arith.index_cast %c0_i32_489 : i32 to index
    %c0_496 = arith.constant 0 : index
    %c0_497 = arith.constant 0 : index
    %884 = vector.load %arg12[%883, %c0_496, %c0_497] : memref<8x2x32xf32, #tpu.memory_space<vmem>>, vector<1x2x32xf32>
    %885 = vector.shape_cast %884 : vector<1x2x32xf32> to vector<2x32xf32>
    %c1_498 = arith.constant 1 : index
    %c0_499 = arith.constant 0 : index
    %c0_500 = arith.constant 0 : index
    %886 = vector.load %arg6[%c1_498, %c0_499, %c0_500] : memref<4x32x32xf32, #tpu.memory_space<vmem>>, vector<1x32x32xf32>
    %887 = vector.shape_cast %886 : vector<1x32x32xf32> to vector<32x32xf32>
    %cst_501 = arith.constant dense<0.000000e+00> : vector<2x32xf32>
    %888 = tpu.matmul %874, %887, %cst_501 {dimension_numbers = #tpu.dot_dimension_numbers<[1], [0], [0], [1], [0, 0, 1, 1], [], []>} : vector<2x32xf32>, vector<32x32xf32>, vector<2x32xf32> -> vector<2x32xf32>
    %889 = arith.addf %885, %888 : vector<2x32xf32>
    %890 = arith.index_cast %c0_i32_489 : i32 to index
    %c0_502 = arith.constant 0 : index
    %c0_503 = arith.constant 0 : index
    %891 = vector.load %arg13[%890, %c0_502, %c0_503] : memref<8x2x32xf32, #tpu.memory_space<vmem>>, vector<1x2x32xf32>
    %892 = vector.shape_cast %891 : vector<1x2x32xf32> to vector<2x32xf32>
    %c2_504 = arith.constant 2 : index
    %c0_505 = arith.constant 0 : index
    %c0_506 = arith.constant 0 : index
    %893 = vector.load %arg6[%c2_504, %c0_505, %c0_506] : memref<4x32x32xf32, #tpu.memory_space<vmem>>, vector<1x32x32xf32>
    %894 = vector.shape_cast %893 : vector<1x32x32xf32> to vector<32x32xf32>
    %cst_507 = arith.constant dense<0.000000e+00> : vector<2x32xf32>
    %895 = tpu.matmul %874, %894, %cst_507 {dimension_numbers = #tpu.dot_dimension_numbers<[1], [0], [0], [1], [0, 0, 1, 1], [], []>} : vector<2x32xf32>, vector<32x32xf32>, vector<2x32xf32> -> vector<2x32xf32>
    %896 = arith.addf %892, %895 : vector<2x32xf32>
    %897 = arith.index_cast %c0_i32_489 : i32 to index
    %c0_508 = arith.constant 0 : index
    %c0_509 = arith.constant 0 : index
    %898 = vector.load %arg14[%897, %c0_508, %c0_509] : memref<8x2x32xf32, #tpu.memory_space<vmem>>, vector<1x2x32xf32>
    %899 = vector.shape_cast %898 : vector<1x2x32xf32> to vector<2x32xf32>
    %c3_510 = arith.constant 3 : index
    %c0_511 = arith.constant 0 : index
    %c0_512 = arith.constant 0 : index
    %900 = vector.load %arg6[%c3_510, %c0_511, %c0_512] : memref<4x32x32xf32, #tpu.memory_space<vmem>>, vector<1x32x32xf32>
    %901 = vector.shape_cast %900 : vector<1x32x32xf32> to vector<32x32xf32>
    %cst_513 = arith.constant dense<0.000000e+00> : vector<2x32xf32>
    %902 = tpu.matmul %874, %901, %cst_513 {dimension_numbers = #tpu.dot_dimension_numbers<[1], [0], [0], [1], [0, 0, 1, 1], [], []>} : vector<2x32xf32>, vector<32x32xf32>, vector<2x32xf32> -> vector<2x32xf32>
    %903 = arith.addf %899, %902 : vector<2x32xf32>
    %904 = arith.negf %882 : vector<2x32xf32>
    %905 = math.exp %904 : vector<2x32xf32>
    %cst_514 = arith.constant 1.000000e+00 : f32
    %906 = vector.broadcast %cst_514 : f32 to vector<2x32xf32>
    %907 = arith.addf %906, %905 : vector<2x32xf32>
    %908 = arith.divf %906, %907 : vector<2x32xf32>
    %909 = arith.negf %889 : vector<2x32xf32>
    %910 = math.exp %909 : vector<2x32xf32>
    %cst_515 = arith.constant 1.000000e+00 : f32
    %911 = vector.broadcast %cst_515 : f32 to vector<2x32xf32>
    %912 = arith.addf %911, %910 : vector<2x32xf32>
    %913 = arith.divf %911, %912 : vector<2x32xf32>
    %914 = math.tanh %896 : vector<2x32xf32>
    %915 = arith.negf %903 : vector<2x32xf32>
    %916 = math.exp %915 : vector<2x32xf32>
    %cst_516 = arith.constant 1.000000e+00 : f32
    %917 = vector.broadcast %cst_516 : f32 to vector<2x32xf32>
    %918 = arith.addf %917, %916 : vector<2x32xf32>
    %919 = arith.divf %917, %918 : vector<2x32xf32>
    %920 = arith.mulf %913, %875 : vector<2x32xf32>
    %921 = arith.mulf %908, %914 : vector<2x32xf32>
    %922 = arith.addf %920, %921 : vector<2x32xf32>
    %923 = math.tanh %922 : vector<2x32xf32>
    %924 = arith.mulf %919, %923 : vector<2x32xf32>
    %c1_i32_517 = arith.constant 1 : i32
    %925 = arith.index_cast %c1_i32_517 : i32 to index
    %c0_518 = arith.constant 0 : index
    %c0_519 = arith.constant 0 : index
    %926 = vector.load %arg11[%925, %c0_518, %c0_519] : memref<8x2x32xf32, #tpu.memory_space<vmem>>, vector<1x2x32xf32>
    %927 = vector.shape_cast %926 : vector<1x2x32xf32> to vector<2x32xf32>
    %c0_520 = arith.constant 0 : index
    %c0_521 = arith.constant 0 : index
    %c0_522 = arith.constant 0 : index
    %928 = vector.load %arg6[%c0_520, %c0_521, %c0_522] : memref<4x32x32xf32, #tpu.memory_space<vmem>>, vector<1x32x32xf32>
    %929 = vector.shape_cast %928 : vector<1x32x32xf32> to vector<32x32xf32>
    %cst_523 = arith.constant dense<0.000000e+00> : vector<2x32xf32>
    %930 = tpu.matmul %924, %929, %cst_523 {dimension_numbers = #tpu.dot_dimension_numbers<[1], [0], [0], [1], [0, 0, 1, 1], [], []>} : vector<2x32xf32>, vector<32x32xf32>, vector<2x32xf32> -> vector<2x32xf32>
    %931 = arith.addf %927, %930 : vector<2x32xf32>
    %932 = arith.index_cast %c1_i32_517 : i32 to index
    %c0_524 = arith.constant 0 : index
    %c0_525 = arith.constant 0 : index
    %933 = vector.load %arg12[%932, %c0_524, %c0_525] : memref<8x2x32xf32, #tpu.memory_space<vmem>>, vector<1x2x32xf32>
    %934 = vector.shape_cast %933 : vector<1x2x32xf32> to vector<2x32xf32>
    %c1_526 = arith.constant 1 : index
    %c0_527 = arith.constant 0 : index
    %c0_528 = arith.constant 0 : index
    %935 = vector.load %arg6[%c1_526, %c0_527, %c0_528] : memref<4x32x32xf32, #tpu.memory_space<vmem>>, vector<1x32x32xf32>
    %936 = vector.shape_cast %935 : vector<1x32x32xf32> to vector<32x32xf32>
    %cst_529 = arith.constant dense<0.000000e+00> : vector<2x32xf32>
    %937 = tpu.matmul %924, %936, %cst_529 {dimension_numbers = #tpu.dot_dimension_numbers<[1], [0], [0], [1], [0, 0, 1, 1], [], []>} : vector<2x32xf32>, vector<32x32xf32>, vector<2x32xf32> -> vector<2x32xf32>
    %938 = arith.addf %934, %937 : vector<2x32xf32>
    %939 = arith.index_cast %c1_i32_517 : i32 to index
    %c0_530 = arith.constant 0 : index
    %c0_531 = arith.constant 0 : index
    %940 = vector.load %arg13[%939, %c0_530, %c0_531] : memref<8x2x32xf32, #tpu.memory_space<vmem>>, vector<1x2x32xf32>
    %941 = vector.shape_cast %940 : vector<1x2x32xf32> to vector<2x32xf32>
    %c2_532 = arith.constant 2 : index
    %c0_533 = arith.constant 0 : index
    %c0_534 = arith.constant 0 : index
    %942 = vector.load %arg6[%c2_532, %c0_533, %c0_534] : memref<4x32x32xf32, #tpu.memory_space<vmem>>, vector<1x32x32xf32>
    %943 = vector.shape_cast %942 : vector<1x32x32xf32> to vector<32x32xf32>
    %cst_535 = arith.constant dense<0.000000e+00> : vector<2x32xf32>
    %944 = tpu.matmul %924, %943, %cst_535 {dimension_numbers = #tpu.dot_dimension_numbers<[1], [0], [0], [1], [0, 0, 1, 1], [], []>} : vector<2x32xf32>, vector<32x32xf32>, vector<2x32xf32> -> vector<2x32xf32>
    %945 = arith.addf %941, %944 : vector<2x32xf32>
    %946 = arith.index_cast %c1_i32_517 : i32 to index
    %c0_536 = arith.constant 0 : index
    %c0_537 = arith.constant 0 : index
    %947 = vector.load %arg14[%946, %c0_536, %c0_537] : memref<8x2x32xf32, #tpu.memory_space<vmem>>, vector<1x2x32xf32>
    %948 = vector.shape_cast %947 : vector<1x2x32xf32> to vector<2x32xf32>
    %c3_538 = arith.constant 3 : index
    %c0_539 = arith.constant 0 : index
    %c0_540 = arith.constant 0 : index
    %949 = vector.load %arg6[%c3_538, %c0_539, %c0_540] : memref<4x32x32xf32, #tpu.memory_space<vmem>>, vector<1x32x32xf32>
    %950 = vector.shape_cast %949 : vector<1x32x32xf32> to vector<32x32xf32>
    %cst_541 = arith.constant dense<0.000000e+00> : vector<2x32xf32>
    %951 = tpu.matmul %924, %950, %cst_541 {dimension_numbers = #tpu.dot_dimension_numbers<[1], [0], [0], [1], [0, 0, 1, 1], [], []>} : vector<2x32xf32>, vector<32x32xf32>, vector<2x32xf32> -> vector<2x32xf32>
    %952 = arith.addf %948, %951 : vector<2x32xf32>
    %953 = arith.negf %931 : vector<2x32xf32>
    %954 = math.exp %953 : vector<2x32xf32>
    %cst_542 = arith.constant 1.000000e+00 : f32
    %955 = vector.broadcast %cst_542 : f32 to vector<2x32xf32>
    %956 = arith.addf %955, %954 : vector<2x32xf32>
    %957 = arith.divf %955, %956 : vector<2x32xf32>
    %958 = arith.negf %938 : vector<2x32xf32>
    %959 = math.exp %958 : vector<2x32xf32>
    %cst_543 = arith.constant 1.000000e+00 : f32
    %960 = vector.broadcast %cst_543 : f32 to vector<2x32xf32>
    %961 = arith.addf %960, %959 : vector<2x32xf32>
    %962 = arith.divf %960, %961 : vector<2x32xf32>
    %963 = math.tanh %945 : vector<2x32xf32>
    %964 = arith.negf %952 : vector<2x32xf32>
    %965 = math.exp %964 : vector<2x32xf32>
    %cst_544 = arith.constant 1.000000e+00 : f32
    %966 = vector.broadcast %cst_544 : f32 to vector<2x32xf32>
    %967 = arith.addf %966, %965 : vector<2x32xf32>
    %968 = arith.divf %966, %967 : vector<2x32xf32>
    %969 = arith.mulf %962, %922 : vector<2x32xf32>
    %970 = arith.mulf %957, %963 : vector<2x32xf32>
    %971 = arith.addf %969, %970 : vector<2x32xf32>
    %972 = math.tanh %971 : vector<2x32xf32>
    %973 = arith.mulf %968, %972 : vector<2x32xf32>
    %c2_i32_545 = arith.constant 2 : i32
    %974 = arith.index_cast %c2_i32_545 : i32 to index
    %c0_546 = arith.constant 0 : index
    %c0_547 = arith.constant 0 : index
    %975 = vector.load %arg11[%974, %c0_546, %c0_547] : memref<8x2x32xf32, #tpu.memory_space<vmem>>, vector<1x2x32xf32>
    %976 = vector.shape_cast %975 : vector<1x2x32xf32> to vector<2x32xf32>
    %c0_548 = arith.constant 0 : index
    %c0_549 = arith.constant 0 : index
    %c0_550 = arith.constant 0 : index
    %977 = vector.load %arg6[%c0_548, %c0_549, %c0_550] : memref<4x32x32xf32, #tpu.memory_space<vmem>>, vector<1x32x32xf32>
    %978 = vector.shape_cast %977 : vector<1x32x32xf32> to vector<32x32xf32>
    %cst_551 = arith.constant dense<0.000000e+00> : vector<2x32xf32>
    %979 = tpu.matmul %973, %978, %cst_551 {dimension_numbers = #tpu.dot_dimension_numbers<[1], [0], [0], [1], [0, 0, 1, 1], [], []>} : vector<2x32xf32>, vector<32x32xf32>, vector<2x32xf32> -> vector<2x32xf32>
    %980 = arith.addf %976, %979 : vector<2x32xf32>
    %981 = arith.index_cast %c2_i32_545 : i32 to index
    %c0_552 = arith.constant 0 : index
    %c0_553 = arith.constant 0 : index
    %982 = vector.load %arg12[%981, %c0_552, %c0_553] : memref<8x2x32xf32, #tpu.memory_space<vmem>>, vector<1x2x32xf32>
    %983 = vector.shape_cast %982 : vector<1x2x32xf32> to vector<2x32xf32>
    %c1_554 = arith.constant 1 : index
    %c0_555 = arith.constant 0 : index
    %c0_556 = arith.constant 0 : index
    %984 = vector.load %arg6[%c1_554, %c0_555, %c0_556] : memref<4x32x32xf32, #tpu.memory_space<vmem>>, vector<1x32x32xf32>
    %985 = vector.shape_cast %984 : vector<1x32x32xf32> to vector<32x32xf32>
    %cst_557 = arith.constant dense<0.000000e+00> : vector<2x32xf32>
    %986 = tpu.matmul %973, %985, %cst_557 {dimension_numbers = #tpu.dot_dimension_numbers<[1], [0], [0], [1], [0, 0, 1, 1], [], []>} : vector<2x32xf32>, vector<32x32xf32>, vector<2x32xf32> -> vector<2x32xf32>
    %987 = arith.addf %983, %986 : vector<2x32xf32>
    %988 = arith.index_cast %c2_i32_545 : i32 to index
    %c0_558 = arith.constant 0 : index
    %c0_559 = arith.constant 0 : index
    %989 = vector.load %arg13[%988, %c0_558, %c0_559] : memref<8x2x32xf32, #tpu.memory_space<vmem>>, vector<1x2x32xf32>
    %990 = vector.shape_cast %989 : vector<1x2x32xf32> to vector<2x32xf32>
    %c2_560 = arith.constant 2 : index
    %c0_561 = arith.constant 0 : index
    %c0_562 = arith.constant 0 : index
    %991 = vector.load %arg6[%c2_560, %c0_561, %c0_562] : memref<4x32x32xf32, #tpu.memory_space<vmem>>, vector<1x32x32xf32>
    %992 = vector.shape_cast %991 : vector<1x32x32xf32> to vector<32x32xf32>
    %cst_563 = arith.constant dense<0.000000e+00> : vector<2x32xf32>
    %993 = tpu.matmul %973, %992, %cst_563 {dimension_numbers = #tpu.dot_dimension_numbers<[1], [0], [0], [1], [0, 0, 1, 1], [], []>} : vector<2x32xf32>, vector<32x32xf32>, vector<2x32xf32> -> vector<2x32xf32>
    %994 = arith.addf %990, %993 : vector<2x32xf32>
    %995 = arith.index_cast %c2_i32_545 : i32 to index
    %c0_564 = arith.constant 0 : index
    %c0_565 = arith.constant 0 : index
    %996 = vector.load %arg14[%995, %c0_564, %c0_565] : memref<8x2x32xf32, #tpu.memory_space<vmem>>, vector<1x2x32xf32>
    %997 = vector.shape_cast %996 : vector<1x2x32xf32> to vector<2x32xf32>
    %c3_566 = arith.constant 3 : index
    %c0_567 = arith.constant 0 : index
    %c0_568 = arith.constant 0 : index
    %998 = vector.load %arg6[%c3_566, %c0_567, %c0_568] : memref<4x32x32xf32, #tpu.memory_space<vmem>>, vector<1x32x32xf32>
    %999 = vector.shape_cast %998 : vector<1x32x32xf32> to vector<32x32xf32>
    %cst_569 = arith.constant dense<0.000000e+00> : vector<2x32xf32>
    %1000 = tpu.matmul %973, %999, %cst_569 {dimension_numbers = #tpu.dot_dimension_numbers<[1], [0], [0], [1], [0, 0, 1, 1], [], []>} : vector<2x32xf32>, vector<32x32xf32>, vector<2x32xf32> -> vector<2x32xf32>
    %1001 = arith.addf %997, %1000 : vector<2x32xf32>
    %1002 = arith.negf %980 : vector<2x32xf32>
    %1003 = math.exp %1002 : vector<2x32xf32>
    %cst_570 = arith.constant 1.000000e+00 : f32
    %1004 = vector.broadcast %cst_570 : f32 to vector<2x32xf32>
    %1005 = arith.addf %1004, %1003 : vector<2x32xf32>
    %1006 = arith.divf %1004, %1005 : vector<2x32xf32>
    %1007 = arith.negf %987 : vector<2x32xf32>
    %1008 = math.exp %1007 : vector<2x32xf32>
    %cst_571 = arith.constant 1.000000e+00 : f32
    %1009 = vector.broadcast %cst_571 : f32 to vector<2x32xf32>
    %1010 = arith.addf %1009, %1008 : vector<2x32xf32>
    %1011 = arith.divf %1009, %1010 : vector<2x32xf32>
    %1012 = math.tanh %994 : vector<2x32xf32>
    %1013 = arith.negf %1001 : vector<2x32xf32>
    %1014 = math.exp %1013 : vector<2x32xf32>
    %cst_572 = arith.constant 1.000000e+00 : f32
    %1015 = vector.broadcast %cst_572 : f32 to vector<2x32xf32>
    %1016 = arith.addf %1015, %1014 : vector<2x32xf32>
    %1017 = arith.divf %1015, %1016 : vector<2x32xf32>
    %1018 = arith.mulf %1011, %971 : vector<2x32xf32>
    %1019 = arith.mulf %1006, %1012 : vector<2x32xf32>
    %1020 = arith.addf %1018, %1019 : vector<2x32xf32>
    %1021 = math.tanh %1020 : vector<2x32xf32>
    %1022 = arith.mulf %1017, %1021 : vector<2x32xf32>
    %c3_i32_573 = arith.constant 3 : i32
    %1023 = arith.index_cast %c3_i32_573 : i32 to index
    %c0_574 = arith.constant 0 : index
    %c0_575 = arith.constant 0 : index
    %1024 = vector.load %arg11[%1023, %c0_574, %c0_575] : memref<8x2x32xf32, #tpu.memory_space<vmem>>, vector<1x2x32xf32>
    %1025 = vector.shape_cast %1024 : vector<1x2x32xf32> to vector<2x32xf32>
    %c0_576 = arith.constant 0 : index
    %c0_577 = arith.constant 0 : index
    %c0_578 = arith.constant 0 : index
    %1026 = vector.load %arg6[%c0_576, %c0_577, %c0_578] : memref<4x32x32xf32, #tpu.memory_space<vmem>>, vector<1x32x32xf32>
    %1027 = vector.shape_cast %1026 : vector<1x32x32xf32> to vector<32x32xf32>
    %cst_579 = arith.constant dense<0.000000e+00> : vector<2x32xf32>
    %1028 = tpu.matmul %1022, %1027, %cst_579 {dimension_numbers = #tpu.dot_dimension_numbers<[1], [0], [0], [1], [0, 0, 1, 1], [], []>} : vector<2x32xf32>, vector<32x32xf32>, vector<2x32xf32> -> vector<2x32xf32>
    %1029 = arith.addf %1025, %1028 : vector<2x32xf32>
    %1030 = arith.index_cast %c3_i32_573 : i32 to index
    %c0_580 = arith.constant 0 : index
    %c0_581 = arith.constant 0 : index
    %1031 = vector.load %arg12[%1030, %c0_580, %c0_581] : memref<8x2x32xf32, #tpu.memory_space<vmem>>, vector<1x2x32xf32>
    %1032 = vector.shape_cast %1031 : vector<1x2x32xf32> to vector<2x32xf32>
    %c1_582 = arith.constant 1 : index
    %c0_583 = arith.constant 0 : index
    %c0_584 = arith.constant 0 : index
    %1033 = vector.load %arg6[%c1_582, %c0_583, %c0_584] : memref<4x32x32xf32, #tpu.memory_space<vmem>>, vector<1x32x32xf32>
    %1034 = vector.shape_cast %1033 : vector<1x32x32xf32> to vector<32x32xf32>
    %cst_585 = arith.constant dense<0.000000e+00> : vector<2x32xf32>
    %1035 = tpu.matmul %1022, %1034, %cst_585 {dimension_numbers = #tpu.dot_dimension_numbers<[1], [0], [0], [1], [0, 0, 1, 1], [], []>} : vector<2x32xf32>, vector<32x32xf32>, vector<2x32xf32> -> vector<2x32xf32>
    %1036 = arith.addf %1032, %1035 : vector<2x32xf32>
    %1037 = arith.index_cast %c3_i32_573 : i32 to index
    %c0_586 = arith.constant 0 : index
    %c0_587 = arith.constant 0 : index
    %1038 = vector.load %arg13[%1037, %c0_586, %c0_587] : memref<8x2x32xf32, #tpu.memory_space<vmem>>, vector<1x2x32xf32>
    %1039 = vector.shape_cast %1038 : vector<1x2x32xf32> to vector<2x32xf32>
    %c2_588 = arith.constant 2 : index
    %c0_589 = arith.constant 0 : index
    %c0_590 = arith.constant 0 : index
    %1040 = vector.load %arg6[%c2_588, %c0_589, %c0_590] : memref<4x32x32xf32, #tpu.memory_space<vmem>>, vector<1x32x32xf32>
    %1041 = vector.shape_cast %1040 : vector<1x32x32xf32> to vector<32x32xf32>
    %cst_591 = arith.constant dense<0.000000e+00> : vector<2x32xf32>
    %1042 = tpu.matmul %1022, %1041, %cst_591 {dimension_numbers = #tpu.dot_dimension_numbers<[1], [0], [0], [1], [0, 0, 1, 1], [], []>} : vector<2x32xf32>, vector<32x32xf32>, vector<2x32xf32> -> vector<2x32xf32>
    %1043 = arith.addf %1039, %1042 : vector<2x32xf32>
    %1044 = arith.index_cast %c3_i32_573 : i32 to index
    %c0_592 = arith.constant 0 : index
    %c0_593 = arith.constant 0 : index
    %1045 = vector.load %arg14[%1044, %c0_592, %c0_593] : memref<8x2x32xf32, #tpu.memory_space<vmem>>, vector<1x2x32xf32>
    %1046 = vector.shape_cast %1045 : vector<1x2x32xf32> to vector<2x32xf32>
    %c3_594 = arith.constant 3 : index
    %c0_595 = arith.constant 0 : index
    %c0_596 = arith.constant 0 : index
    %1047 = vector.load %arg6[%c3_594, %c0_595, %c0_596] : memref<4x32x32xf32, #tpu.memory_space<vmem>>, vector<1x32x32xf32>
    %1048 = vector.shape_cast %1047 : vector<1x32x32xf32> to vector<32x32xf32>
    %cst_597 = arith.constant dense<0.000000e+00> : vector<2x32xf32>
    %1049 = tpu.matmul %1022, %1048, %cst_597 {dimension_numbers = #tpu.dot_dimension_numbers<[1], [0], [0], [1], [0, 0, 1, 1], [], []>} : vector<2x32xf32>, vector<32x32xf32>, vector<2x32xf32> -> vector<2x32xf32>
    %1050 = arith.addf %1046, %1049 : vector<2x32xf32>
    %1051 = arith.negf %1029 : vector<2x32xf32>
    %1052 = math.exp %1051 : vector<2x32xf32>
    %cst_598 = arith.constant 1.000000e+00 : f32
    %1053 = vector.broadcast %cst_598 : f32 to vector<2x32xf32>
    %1054 = arith.addf %1053, %1052 : vector<2x32xf32>
    %1055 = arith.divf %1053, %1054 : vector<2x32xf32>
    %1056 = arith.negf %1036 : vector<2x32xf32>
    %1057 = math.exp %1056 : vector<2x32xf32>
    %cst_599 = arith.constant 1.000000e+00 : f32
    %1058 = vector.broadcast %cst_599 : f32 to vector<2x32xf32>
    %1059 = arith.addf %1058, %1057 : vector<2x32xf32>
    %1060 = arith.divf %1058, %1059 : vector<2x32xf32>
    %1061 = math.tanh %1043 : vector<2x32xf32>
    %1062 = arith.negf %1050 : vector<2x32xf32>
    %1063 = math.exp %1062 : vector<2x32xf32>
    %cst_600 = arith.constant 1.000000e+00 : f32
    %1064 = vector.broadcast %cst_600 : f32 to vector<2x32xf32>
    %1065 = arith.addf %1064, %1063 : vector<2x32xf32>
    %1066 = arith.divf %1064, %1065 : vector<2x32xf32>
    %1067 = arith.mulf %1060, %1020 : vector<2x32xf32>
    %1068 = arith.mulf %1055, %1061 : vector<2x32xf32>
    %1069 = arith.addf %1067, %1068 : vector<2x32xf32>
    %1070 = math.tanh %1069 : vector<2x32xf32>
    %1071 = arith.mulf %1066, %1070 : vector<2x32xf32>
    %c4_i32_601 = arith.constant 4 : i32
    %1072 = arith.index_cast %c4_i32_601 : i32 to index
    %c0_602 = arith.constant 0 : index
    %c0_603 = arith.constant 0 : index
    %1073 = vector.load %arg11[%1072, %c0_602, %c0_603] : memref<8x2x32xf32, #tpu.memory_space<vmem>>, vector<1x2x32xf32>
    %1074 = vector.shape_cast %1073 : vector<1x2x32xf32> to vector<2x32xf32>
    %c0_604 = arith.constant 0 : index
    %c0_605 = arith.constant 0 : index
    %c0_606 = arith.constant 0 : index
    %1075 = vector.load %arg6[%c0_604, %c0_605, %c0_606] : memref<4x32x32xf32, #tpu.memory_space<vmem>>, vector<1x32x32xf32>
    %1076 = vector.shape_cast %1075 : vector<1x32x32xf32> to vector<32x32xf32>
    %cst_607 = arith.constant dense<0.000000e+00> : vector<2x32xf32>
    %1077 = tpu.matmul %1071, %1076, %cst_607 {dimension_numbers = #tpu.dot_dimension_numbers<[1], [0], [0], [1], [0, 0, 1, 1], [], []>} : vector<2x32xf32>, vector<32x32xf32>, vector<2x32xf32> -> vector<2x32xf32>
    %1078 = arith.addf %1074, %1077 : vector<2x32xf32>
    %1079 = arith.index_cast %c4_i32_601 : i32 to index
    %c0_608 = arith.constant 0 : index
    %c0_609 = arith.constant 0 : index
    %1080 = vector.load %arg12[%1079, %c0_608, %c0_609] : memref<8x2x32xf32, #tpu.memory_space<vmem>>, vector<1x2x32xf32>
    %1081 = vector.shape_cast %1080 : vector<1x2x32xf32> to vector<2x32xf32>
    %c1_610 = arith.constant 1 : index
    %c0_611 = arith.constant 0 : index
    %c0_612 = arith.constant 0 : index
    %1082 = vector.load %arg6[%c1_610, %c0_611, %c0_612] : memref<4x32x32xf32, #tpu.memory_space<vmem>>, vector<1x32x32xf32>
    %1083 = vector.shape_cast %1082 : vector<1x32x32xf32> to vector<32x32xf32>
    %cst_613 = arith.constant dense<0.000000e+00> : vector<2x32xf32>
    %1084 = tpu.matmul %1071, %1083, %cst_613 {dimension_numbers = #tpu.dot_dimension_numbers<[1], [0], [0], [1], [0, 0, 1, 1], [], []>} : vector<2x32xf32>, vector<32x32xf32>, vector<2x32xf32> -> vector<2x32xf32>
    %1085 = arith.addf %1081, %1084 : vector<2x32xf32>
    %1086 = arith.index_cast %c4_i32_601 : i32 to index
    %c0_614 = arith.constant 0 : index
    %c0_615 = arith.constant 0 : index
    %1087 = vector.load %arg13[%1086, %c0_614, %c0_615] : memref<8x2x32xf32, #tpu.memory_space<vmem>>, vector<1x2x32xf32>
    %1088 = vector.shape_cast %1087 : vector<1x2x32xf32> to vector<2x32xf32>
    %c2_616 = arith.constant 2 : index
    %c0_617 = arith.constant 0 : index
    %c0_618 = arith.constant 0 : index
    %1089 = vector.load %arg6[%c2_616, %c0_617, %c0_618] : memref<4x32x32xf32, #tpu.memory_space<vmem>>, vector<1x32x32xf32>
    %1090 = vector.shape_cast %1089 : vector<1x32x32xf32> to vector<32x32xf32>
    %cst_619 = arith.constant dense<0.000000e+00> : vector<2x32xf32>
    %1091 = tpu.matmul %1071, %1090, %cst_619 {dimension_numbers = #tpu.dot_dimension_numbers<[1], [0], [0], [1], [0, 0, 1, 1], [], []>} : vector<2x32xf32>, vector<32x32xf32>, vector<2x32xf32> -> vector<2x32xf32>
    %1092 = arith.addf %1088, %1091 : vector<2x32xf32>
    %1093 = arith.index_cast %c4_i32_601 : i32 to index
    %c0_620 = arith.constant 0 : index
    %c0_621 = arith.constant 0 : index
    %1094 = vector.load %arg14[%1093, %c0_620, %c0_621] : memref<8x2x32xf32, #tpu.memory_space<vmem>>, vector<1x2x32xf32>
    %1095 = vector.shape_cast %1094 : vector<1x2x32xf32> to vector<2x32xf32>
    %c3_622 = arith.constant 3 : index
    %c0_623 = arith.constant 0 : index
    %c0_624 = arith.constant 0 : index
    %1096 = vector.load %arg6[%c3_622, %c0_623, %c0_624] : memref<4x32x32xf32, #tpu.memory_space<vmem>>, vector<1x32x32xf32>
    %1097 = vector.shape_cast %1096 : vector<1x32x32xf32> to vector<32x32xf32>
    %cst_625 = arith.constant dense<0.000000e+00> : vector<2x32xf32>
    %1098 = tpu.matmul %1071, %1097, %cst_625 {dimension_numbers = #tpu.dot_dimension_numbers<[1], [0], [0], [1], [0, 0, 1, 1], [], []>} : vector<2x32xf32>, vector<32x32xf32>, vector<2x32xf32> -> vector<2x32xf32>
    %1099 = arith.addf %1095, %1098 : vector<2x32xf32>
    %1100 = arith.negf %1078 : vector<2x32xf32>
    %1101 = math.exp %1100 : vector<2x32xf32>
    %cst_626 = arith.constant 1.000000e+00 : f32
    %1102 = vector.broadcast %cst_626 : f32 to vector<2x32xf32>
    %1103 = arith.addf %1102, %1101 : vector<2x32xf32>
    %1104 = arith.divf %1102, %1103 : vector<2x32xf32>
    %1105 = arith.negf %1085 : vector<2x32xf32>
    %1106 = math.exp %1105 : vector<2x32xf32>
    %cst_627 = arith.constant 1.000000e+00 : f32
    %1107 = vector.broadcast %cst_627 : f32 to vector<2x32xf32>
    %1108 = arith.addf %1107, %1106 : vector<2x32xf32>
    %1109 = arith.divf %1107, %1108 : vector<2x32xf32>
    %1110 = math.tanh %1092 : vector<2x32xf32>
    %1111 = arith.negf %1099 : vector<2x32xf32>
    %1112 = math.exp %1111 : vector<2x32xf32>
    %cst_628 = arith.constant 1.000000e+00 : f32
    %1113 = vector.broadcast %cst_628 : f32 to vector<2x32xf32>
    %1114 = arith.addf %1113, %1112 : vector<2x32xf32>
    %1115 = arith.divf %1113, %1114 : vector<2x32xf32>
    %1116 = arith.mulf %1109, %1069 : vector<2x32xf32>
    %1117 = arith.mulf %1104, %1110 : vector<2x32xf32>
    %1118 = arith.addf %1116, %1117 : vector<2x32xf32>
    %1119 = math.tanh %1118 : vector<2x32xf32>
    %1120 = arith.mulf %1115, %1119 : vector<2x32xf32>
    %c5_i32_629 = arith.constant 5 : i32
    %1121 = arith.index_cast %c5_i32_629 : i32 to index
    %c0_630 = arith.constant 0 : index
    %c0_631 = arith.constant 0 : index
    %1122 = vector.load %arg11[%1121, %c0_630, %c0_631] : memref<8x2x32xf32, #tpu.memory_space<vmem>>, vector<1x2x32xf32>
    %1123 = vector.shape_cast %1122 : vector<1x2x32xf32> to vector<2x32xf32>
    %c0_632 = arith.constant 0 : index
    %c0_633 = arith.constant 0 : index
    %c0_634 = arith.constant 0 : index
    %1124 = vector.load %arg6[%c0_632, %c0_633, %c0_634] : memref<4x32x32xf32, #tpu.memory_space<vmem>>, vector<1x32x32xf32>
    %1125 = vector.shape_cast %1124 : vector<1x32x32xf32> to vector<32x32xf32>
    %cst_635 = arith.constant dense<0.000000e+00> : vector<2x32xf32>
    %1126 = tpu.matmul %1120, %1125, %cst_635 {dimension_numbers = #tpu.dot_dimension_numbers<[1], [0], [0], [1], [0, 0, 1, 1], [], []>} : vector<2x32xf32>, vector<32x32xf32>, vector<2x32xf32> -> vector<2x32xf32>
    %1127 = arith.addf %1123, %1126 : vector<2x32xf32>
    %1128 = arith.index_cast %c5_i32_629 : i32 to index
    %c0_636 = arith.constant 0 : index
    %c0_637 = arith.constant 0 : index
    %1129 = vector.load %arg12[%1128, %c0_636, %c0_637] : memref<8x2x32xf32, #tpu.memory_space<vmem>>, vector<1x2x32xf32>
    %1130 = vector.shape_cast %1129 : vector<1x2x32xf32> to vector<2x32xf32>
    %c1_638 = arith.constant 1 : index
    %c0_639 = arith.constant 0 : index
    %c0_640 = arith.constant 0 : index
    %1131 = vector.load %arg6[%c1_638, %c0_639, %c0_640] : memref<4x32x32xf32, #tpu.memory_space<vmem>>, vector<1x32x32xf32>
    %1132 = vector.shape_cast %1131 : vector<1x32x32xf32> to vector<32x32xf32>
    %cst_641 = arith.constant dense<0.000000e+00> : vector<2x32xf32>
    %1133 = tpu.matmul %1120, %1132, %cst_641 {dimension_numbers = #tpu.dot_dimension_numbers<[1], [0], [0], [1], [0, 0, 1, 1], [], []>} : vector<2x32xf32>, vector<32x32xf32>, vector<2x32xf32> -> vector<2x32xf32>
    %1134 = arith.addf %1130, %1133 : vector<2x32xf32>
    %1135 = arith.index_cast %c5_i32_629 : i32 to index
    %c0_642 = arith.constant 0 : index
    %c0_643 = arith.constant 0 : index
    %1136 = vector.load %arg13[%1135, %c0_642, %c0_643] : memref<8x2x32xf32, #tpu.memory_space<vmem>>, vector<1x2x32xf32>
    %1137 = vector.shape_cast %1136 : vector<1x2x32xf32> to vector<2x32xf32>
    %c2_644 = arith.constant 2 : index
    %c0_645 = arith.constant 0 : index
    %c0_646 = arith.constant 0 : index
    %1138 = vector.load %arg6[%c2_644, %c0_645, %c0_646] : memref<4x32x32xf32, #tpu.memory_space<vmem>>, vector<1x32x32xf32>
    %1139 = vector.shape_cast %1138 : vector<1x32x32xf32> to vector<32x32xf32>
    %cst_647 = arith.constant dense<0.000000e+00> : vector<2x32xf32>
    %1140 = tpu.matmul %1120, %1139, %cst_647 {dimension_numbers = #tpu.dot_dimension_numbers<[1], [0], [0], [1], [0, 0, 1, 1], [], []>} : vector<2x32xf32>, vector<32x32xf32>, vector<2x32xf32> -> vector<2x32xf32>
    %1141 = arith.addf %1137, %1140 : vector<2x32xf32>
    %1142 = arith.index_cast %c5_i32_629 : i32 to index
    %c0_648 = arith.constant 0 : index
    %c0_649 = arith.constant 0 : index
    %1143 = vector.load %arg14[%1142, %c0_648, %c0_649] : memref<8x2x32xf32, #tpu.memory_space<vmem>>, vector<1x2x32xf32>
    %1144 = vector.shape_cast %1143 : vector<1x2x32xf32> to vector<2x32xf32>
    %c3_650 = arith.constant 3 : index
    %c0_651 = arith.constant 0 : index
    %c0_652 = arith.constant 0 : index
    %1145 = vector.load %arg6[%c3_650, %c0_651, %c0_652] : memref<4x32x32xf32, #tpu.memory_space<vmem>>, vector<1x32x32xf32>
    %1146 = vector.shape_cast %1145 : vector<1x32x32xf32> to vector<32x32xf32>
    %cst_653 = arith.constant dense<0.000000e+00> : vector<2x32xf32>
    %1147 = tpu.matmul %1120, %1146, %cst_653 {dimension_numbers = #tpu.dot_dimension_numbers<[1], [0], [0], [1], [0, 0, 1, 1], [], []>} : vector<2x32xf32>, vector<32x32xf32>, vector<2x32xf32> -> vector<2x32xf32>
    %1148 = arith.addf %1144, %1147 : vector<2x32xf32>
    %1149 = arith.negf %1127 : vector<2x32xf32>
    %1150 = math.exp %1149 : vector<2x32xf32>
    %cst_654 = arith.constant 1.000000e+00 : f32
    %1151 = vector.broadcast %cst_654 : f32 to vector<2x32xf32>
    %1152 = arith.addf %1151, %1150 : vector<2x32xf32>
    %1153 = arith.divf %1151, %1152 : vector<2x32xf32>
    %1154 = arith.negf %1134 : vector<2x32xf32>
    %1155 = math.exp %1154 : vector<2x32xf32>
    %cst_655 = arith.constant 1.000000e+00 : f32
    %1156 = vector.broadcast %cst_655 : f32 to vector<2x32xf32>
    %1157 = arith.addf %1156, %1155 : vector<2x32xf32>
    %1158 = arith.divf %1156, %1157 : vector<2x32xf32>
    %1159 = math.tanh %1141 : vector<2x32xf32>
    %1160 = arith.negf %1148 : vector<2x32xf32>
    %1161 = math.exp %1160 : vector<2x32xf32>
    %cst_656 = arith.constant 1.000000e+00 : f32
    %1162 = vector.broadcast %cst_656 : f32 to vector<2x32xf32>
    %1163 = arith.addf %1162, %1161 : vector<2x32xf32>
    %1164 = arith.divf %1162, %1163 : vector<2x32xf32>
    %1165 = arith.mulf %1158, %1118 : vector<2x32xf32>
    %1166 = arith.mulf %1153, %1159 : vector<2x32xf32>
    %1167 = arith.addf %1165, %1166 : vector<2x32xf32>
    %1168 = math.tanh %1167 : vector<2x32xf32>
    %1169 = arith.mulf %1164, %1168 : vector<2x32xf32>
    %c6_i32_657 = arith.constant 6 : i32
    %1170 = arith.index_cast %c6_i32_657 : i32 to index
    %c0_658 = arith.constant 0 : index
    %c0_659 = arith.constant 0 : index
    %1171 = vector.load %arg11[%1170, %c0_658, %c0_659] : memref<8x2x32xf32, #tpu.memory_space<vmem>>, vector<1x2x32xf32>
    %1172 = vector.shape_cast %1171 : vector<1x2x32xf32> to vector<2x32xf32>
    %c0_660 = arith.constant 0 : index
    %c0_661 = arith.constant 0 : index
    %c0_662 = arith.constant 0 : index
    %1173 = vector.load %arg6[%c0_660, %c0_661, %c0_662] : memref<4x32x32xf32, #tpu.memory_space<vmem>>, vector<1x32x32xf32>
    %1174 = vector.shape_cast %1173 : vector<1x32x32xf32> to vector<32x32xf32>
    %cst_663 = arith.constant dense<0.000000e+00> : vector<2x32xf32>
    %1175 = tpu.matmul %1169, %1174, %cst_663 {dimension_numbers = #tpu.dot_dimension_numbers<[1], [0], [0], [1], [0, 0, 1, 1], [], []>} : vector<2x32xf32>, vector<32x32xf32>, vector<2x32xf32> -> vector<2x32xf32>
    %1176 = arith.addf %1172, %1175 : vector<2x32xf32>
    %1177 = arith.index_cast %c6_i32_657 : i32 to index
    %c0_664 = arith.constant 0 : index
    %c0_665 = arith.constant 0 : index
    %1178 = vector.load %arg12[%1177, %c0_664, %c0_665] : memref<8x2x32xf32, #tpu.memory_space<vmem>>, vector<1x2x32xf32>
    %1179 = vector.shape_cast %1178 : vector<1x2x32xf32> to vector<2x32xf32>
    %c1_666 = arith.constant 1 : index
    %c0_667 = arith.constant 0 : index
    %c0_668 = arith.constant 0 : index
    %1180 = vector.load %arg6[%c1_666, %c0_667, %c0_668] : memref<4x32x32xf32, #tpu.memory_space<vmem>>, vector<1x32x32xf32>
    %1181 = vector.shape_cast %1180 : vector<1x32x32xf32> to vector<32x32xf32>
    %cst_669 = arith.constant dense<0.000000e+00> : vector<2x32xf32>
    %1182 = tpu.matmul %1169, %1181, %cst_669 {dimension_numbers = #tpu.dot_dimension_numbers<[1], [0], [0], [1], [0, 0, 1, 1], [], []>} : vector<2x32xf32>, vector<32x32xf32>, vector<2x32xf32> -> vector<2x32xf32>
    %1183 = arith.addf %1179, %1182 : vector<2x32xf32>
    %1184 = arith.index_cast %c6_i32_657 : i32 to index
    %c0_670 = arith.constant 0 : index
    %c0_671 = arith.constant 0 : index
    %1185 = vector.load %arg13[%1184, %c0_670, %c0_671] : memref<8x2x32xf32, #tpu.memory_space<vmem>>, vector<1x2x32xf32>
    %1186 = vector.shape_cast %1185 : vector<1x2x32xf32> to vector<2x32xf32>
    %c2_672 = arith.constant 2 : index
    %c0_673 = arith.constant 0 : index
    %c0_674 = arith.constant 0 : index
    %1187 = vector.load %arg6[%c2_672, %c0_673, %c0_674] : memref<4x32x32xf32, #tpu.memory_space<vmem>>, vector<1x32x32xf32>
    %1188 = vector.shape_cast %1187 : vector<1x32x32xf32> to vector<32x32xf32>
    %cst_675 = arith.constant dense<0.000000e+00> : vector<2x32xf32>
    %1189 = tpu.matmul %1169, %1188, %cst_675 {dimension_numbers = #tpu.dot_dimension_numbers<[1], [0], [0], [1], [0, 0, 1, 1], [], []>} : vector<2x32xf32>, vector<32x32xf32>, vector<2x32xf32> -> vector<2x32xf32>
    %1190 = arith.addf %1186, %1189 : vector<2x32xf32>
    %1191 = arith.index_cast %c6_i32_657 : i32 to index
    %c0_676 = arith.constant 0 : index
    %c0_677 = arith.constant 0 : index
    %1192 = vector.load %arg14[%1191, %c0_676, %c0_677] : memref<8x2x32xf32, #tpu.memory_space<vmem>>, vector<1x2x32xf32>
    %1193 = vector.shape_cast %1192 : vector<1x2x32xf32> to vector<2x32xf32>
    %c3_678 = arith.constant 3 : index
    %c0_679 = arith.constant 0 : index
    %c0_680 = arith.constant 0 : index
    %1194 = vector.load %arg6[%c3_678, %c0_679, %c0_680] : memref<4x32x32xf32, #tpu.memory_space<vmem>>, vector<1x32x32xf32>
    %1195 = vector.shape_cast %1194 : vector<1x32x32xf32> to vector<32x32xf32>
    %cst_681 = arith.constant dense<0.000000e+00> : vector<2x32xf32>
    %1196 = tpu.matmul %1169, %1195, %cst_681 {dimension_numbers = #tpu.dot_dimension_numbers<[1], [0], [0], [1], [0, 0, 1, 1], [], []>} : vector<2x32xf32>, vector<32x32xf32>, vector<2x32xf32> -> vector<2x32xf32>
    %1197 = arith.addf %1193, %1196 : vector<2x32xf32>
    %1198 = arith.negf %1176 : vector<2x32xf32>
    %1199 = math.exp %1198 : vector<2x32xf32>
    %cst_682 = arith.constant 1.000000e+00 : f32
    %1200 = vector.broadcast %cst_682 : f32 to vector<2x32xf32>
    %1201 = arith.addf %1200, %1199 : vector<2x32xf32>
    %1202 = arith.divf %1200, %1201 : vector<2x32xf32>
    %1203 = arith.negf %1183 : vector<2x32xf32>
    %1204 = math.exp %1203 : vector<2x32xf32>
    %cst_683 = arith.constant 1.000000e+00 : f32
    %1205 = vector.broadcast %cst_683 : f32 to vector<2x32xf32>
    %1206 = arith.addf %1205, %1204 : vector<2x32xf32>
    %1207 = arith.divf %1205, %1206 : vector<2x32xf32>
    %1208 = math.tanh %1190 : vector<2x32xf32>
    %1209 = arith.negf %1197 : vector<2x32xf32>
    %1210 = math.exp %1209 : vector<2x32xf32>
    %cst_684 = arith.constant 1.000000e+00 : f32
    %1211 = vector.broadcast %cst_684 : f32 to vector<2x32xf32>
    %1212 = arith.addf %1211, %1210 : vector<2x32xf32>
    %1213 = arith.divf %1211, %1212 : vector<2x32xf32>
    %1214 = arith.mulf %1207, %1167 : vector<2x32xf32>
    %1215 = arith.mulf %1202, %1208 : vector<2x32xf32>
    %1216 = arith.addf %1214, %1215 : vector<2x32xf32>
    %1217 = math.tanh %1216 : vector<2x32xf32>
    %1218 = arith.mulf %1213, %1217 : vector<2x32xf32>
    %c7_i32_685 = arith.constant 7 : i32
    %1219 = arith.index_cast %c7_i32_685 : i32 to index
    %c0_686 = arith.constant 0 : index
    %c0_687 = arith.constant 0 : index
    %1220 = vector.load %arg11[%1219, %c0_686, %c0_687] : memref<8x2x32xf32, #tpu.memory_space<vmem>>, vector<1x2x32xf32>
    %1221 = vector.shape_cast %1220 : vector<1x2x32xf32> to vector<2x32xf32>
    %c0_688 = arith.constant 0 : index
    %c0_689 = arith.constant 0 : index
    %c0_690 = arith.constant 0 : index
    %1222 = vector.load %arg6[%c0_688, %c0_689, %c0_690] : memref<4x32x32xf32, #tpu.memory_space<vmem>>, vector<1x32x32xf32>
    %1223 = vector.shape_cast %1222 : vector<1x32x32xf32> to vector<32x32xf32>
    %cst_691 = arith.constant dense<0.000000e+00> : vector<2x32xf32>
    %1224 = tpu.matmul %1218, %1223, %cst_691 {dimension_numbers = #tpu.dot_dimension_numbers<[1], [0], [0], [1], [0, 0, 1, 1], [], []>} : vector<2x32xf32>, vector<32x32xf32>, vector<2x32xf32> -> vector<2x32xf32>
    %1225 = arith.addf %1221, %1224 : vector<2x32xf32>
    %1226 = arith.index_cast %c7_i32_685 : i32 to index
    %c0_692 = arith.constant 0 : index
    %c0_693 = arith.constant 0 : index
    %1227 = vector.load %arg12[%1226, %c0_692, %c0_693] : memref<8x2x32xf32, #tpu.memory_space<vmem>>, vector<1x2x32xf32>
    %1228 = vector.shape_cast %1227 : vector<1x2x32xf32> to vector<2x32xf32>
    %c1_694 = arith.constant 1 : index
    %c0_695 = arith.constant 0 : index
    %c0_696 = arith.constant 0 : index
    %1229 = vector.load %arg6[%c1_694, %c0_695, %c0_696] : memref<4x32x32xf32, #tpu.memory_space<vmem>>, vector<1x32x32xf32>
    %1230 = vector.shape_cast %1229 : vector<1x32x32xf32> to vector<32x32xf32>
    %cst_697 = arith.constant dense<0.000000e+00> : vector<2x32xf32>
    %1231 = tpu.matmul %1218, %1230, %cst_697 {dimension_numbers = #tpu.dot_dimension_numbers<[1], [0], [0], [1], [0, 0, 1, 1], [], []>} : vector<2x32xf32>, vector<32x32xf32>, vector<2x32xf32> -> vector<2x32xf32>
    %1232 = arith.addf %1228, %1231 : vector<2x32xf32>
    %1233 = arith.index_cast %c7_i32_685 : i32 to index
    %c0_698 = arith.constant 0 : index
    %c0_699 = arith.constant 0 : index
    %1234 = vector.load %arg13[%1233, %c0_698, %c0_699] : memref<8x2x32xf32, #tpu.memory_space<vmem>>, vector<1x2x32xf32>
    %1235 = vector.shape_cast %1234 : vector<1x2x32xf32> to vector<2x32xf32>
    %c2_700 = arith.constant 2 : index
    %c0_701 = arith.constant 0 : index
    %c0_702 = arith.constant 0 : index
    %1236 = vector.load %arg6[%c2_700, %c0_701, %c0_702] : memref<4x32x32xf32, #tpu.memory_space<vmem>>, vector<1x32x32xf32>
    %1237 = vector.shape_cast %1236 : vector<1x32x32xf32> to vector<32x32xf32>
    %cst_703 = arith.constant dense<0.000000e+00> : vector<2x32xf32>
    %1238 = tpu.matmul %1218, %1237, %cst_703 {dimension_numbers = #tpu.dot_dimension_numbers<[1], [0], [0], [1], [0, 0, 1, 1], [], []>} : vector<2x32xf32>, vector<32x32xf32>, vector<2x32xf32> -> vector<2x32xf32>
    %1239 = arith.addf %1235, %1238 : vector<2x32xf32>
    %1240 = arith.index_cast %c7_i32_685 : i32 to index
    %c0_704 = arith.constant 0 : index
    %c0_705 = arith.constant 0 : index
    %1241 = vector.load %arg14[%1240, %c0_704, %c0_705] : memref<8x2x32xf32, #tpu.memory_space<vmem>>, vector<1x2x32xf32>
    %1242 = vector.shape_cast %1241 : vector<1x2x32xf32> to vector<2x32xf32>
    %c3_706 = arith.constant 3 : index
    %c0_707 = arith.constant 0 : index
    %c0_708 = arith.constant 0 : index
    %1243 = vector.load %arg6[%c3_706, %c0_707, %c0_708] : memref<4x32x32xf32, #tpu.memory_space<vmem>>, vector<1x32x32xf32>
    %1244 = vector.shape_cast %1243 : vector<1x32x32xf32> to vector<32x32xf32>
    %cst_709 = arith.constant dense<0.000000e+00> : vector<2x32xf32>
    %1245 = tpu.matmul %1218, %1244, %cst_709 {dimension_numbers = #tpu.dot_dimension_numbers<[1], [0], [0], [1], [0, 0, 1, 1], [], []>} : vector<2x32xf32>, vector<32x32xf32>, vector<2x32xf32> -> vector<2x32xf32>
    %1246 = arith.addf %1242, %1245 : vector<2x32xf32>
    %1247 = arith.negf %1225 : vector<2x32xf32>
    %1248 = math.exp %1247 : vector<2x32xf32>
    %cst_710 = arith.constant 1.000000e+00 : f32
    %1249 = vector.broadcast %cst_710 : f32 to vector<2x32xf32>
    %1250 = arith.addf %1249, %1248 : vector<2x32xf32>
    %1251 = arith.divf %1249, %1250 : vector<2x32xf32>
    %1252 = arith.negf %1232 : vector<2x32xf32>
    %1253 = math.exp %1252 : vector<2x32xf32>
    %cst_711 = arith.constant 1.000000e+00 : f32
    %1254 = vector.broadcast %cst_711 : f32 to vector<2x32xf32>
    %1255 = arith.addf %1254, %1253 : vector<2x32xf32>
    %1256 = arith.divf %1254, %1255 : vector<2x32xf32>
    %1257 = math.tanh %1239 : vector<2x32xf32>
    %1258 = arith.negf %1246 : vector<2x32xf32>
    %1259 = math.exp %1258 : vector<2x32xf32>
    %cst_712 = arith.constant 1.000000e+00 : f32
    %1260 = vector.broadcast %cst_712 : f32 to vector<2x32xf32>
    %1261 = arith.addf %1260, %1259 : vector<2x32xf32>
    %1262 = arith.divf %1260, %1261 : vector<2x32xf32>
    %1263 = arith.mulf %1256, %1216 : vector<2x32xf32>
    %1264 = arith.mulf %1251, %1257 : vector<2x32xf32>
    %1265 = arith.addf %1263, %1264 : vector<2x32xf32>
    %1266 = math.tanh %1265 : vector<2x32xf32>
    %1267 = arith.mulf %1262, %1266 : vector<2x32xf32>
    %c8_i32_713 = arith.constant 8 : i32
    %c0_714 = arith.constant 0 : index
    %c0_715 = arith.constant 0 : index
    %1268 = vector.load %arg8[%c0_714, %c0_715] : memref<32x10xf32, #tpu.memory_space<vmem>>, vector<32x10xf32>
    %cst_716 = arith.constant dense<0.000000e+00> : vector<2x10xf32>
    %1269 = tpu.matmul %1267, %1268, %cst_716 {dimension_numbers = #tpu.dot_dimension_numbers<[1], [0], [0], [1], [0, 0, 1, 1], [], []>} : vector<2x32xf32>, vector<32x10xf32>, vector<2x10xf32> -> vector<2x10xf32>
    %c0_717 = arith.constant 0 : index
    %c0_718 = arith.constant 0 : index
    %1270 = vector.load %arg9[%c0_717, %c0_718] : memref<1x10xf32, #tpu.memory_space<vmem>>, vector<1x10xf32>
    %1271 = vector.broadcast %1270 : vector<1x10xf32> to vector<2x10xf32>
    %1272 = arith.addf %1269, %1271 : vector<2x10xf32>
    %c0_719 = arith.constant 0 : index
    %c0_720 = arith.constant 0 : index
    %1273 = vector.load %arg10[%c0_719, %c0_720] : memref<2x10xf32, #tpu.memory_space<vmem>>, vector<2x10xf32>
    tpu.vector_store %arg10[%c0_719, %c0_720], %1272 {strides = array<i32>} : memref<2x10xf32, #tpu.memory_space<vmem>>, vector<2x10xf32>,
    return
  }
  func.func @transform_0(%arg0: i32) -> (i32, i32, i32) {
    %c0_i32 = arith.constant 0 : i32
    %c0_i32_0 = arith.constant 0 : i32
    %c0_i32_1 = arith.constant 0 : i32
    %c0_i32_2 = arith.constant 0 : i32
    return %c0_i32, %c0_i32_0, %c0_i32_1 : i32, i32, i32
  }
  func.func @transform_1(%arg0: i32) -> (i32, i32) {
    %c0_i32 = arith.constant 0 : i32
    %c0_i32_0 = arith.constant 0 : i32
    %c0_i32_1 = arith.constant 0 : i32
    return %c0_i32, %c0_i32_0 : i32, i32
  }
  func.func @transform_2(%arg0: i32) -> (i32, i32, i32) {
    %c0_i32 = arith.constant 0 : i32
    %c0_i32_0 = arith.constant 0 : i32
    %c0_i32_1 = arith.constant 0 : i32
    %c0_i32_2 = arith.constant 0 : i32
    return %c0_i32, %c0_i32_0, %c0_i32_1 : i32, i32, i32
  }
  func.func @transform_3(%arg0: i32) -> (i32, i32) {
    %c0_i32 = arith.constant 0 : i32
    %c0_i32_0 = arith.constant 0 : i32
    %c0_i32_1 = arith.constant 0 : i32
    return %c0_i32, %c0_i32_0 : i32, i32
  }
  func.func @transform_4(%arg0: i32) -> (i32, i32) {
    %c0_i32 = arith.constant 0 : i32
    %c0_i32_0 = arith.constant 0 : i32
    %c0_i32_1 = arith.constant 0 : i32
    return %c0_i32, %c0_i32_0 : i32, i32
  }
  func.func @transform_5(%arg0: i32) -> (i32, i32, i32) {
    %c0_i32 = arith.constant 0 : i32
    %c0_i32_0 = arith.constant 0 : i32
    %c0_i32_1 = arith.constant 0 : i32
    %c0_i32_2 = arith.constant 0 : i32
    return %c0_i32, %c0_i32_0, %c0_i32_1 : i32, i32, i32
  }
  func.func @transform_6(%arg0: i32) -> (i32, i32) {
    %c0_i32 = arith.constant 0 : i32
    %c0_i32_0 = arith.constant 0 : i32
    %c0_i32_1 = arith.constant 0 : i32
    return %c0_i32, %c0_i32_0 : i32, i32
  }
  func.func @transform_7(%arg0: i32) -> (i32, i32) {
    %c0_i32 = arith.constant 0 : i32
    %c0_i32_0 = arith.constant 0 : i32
    %c0_i32_1 = arith.constant 0 : i32
    return %c0_i32, %c0_i32_0 : i32, i32
  }
  func.func @transform_8(%arg0: i32) -> (i32, i32) {
    %c0_i32 = arith.constant 0 : i32
    %c0_i32_0 = arith.constant 0 : i32
    %c0_i32_1 = arith.constant 0 : i32
    return %c0_i32, %c0_i32_0 : i32, i32
  }
  func.func @transform_9(%arg0: i32) -> (i32, i32) {
    %c0_i32 = arith.constant 0 : i32
    %c0_i32_0 = arith.constant 0 : i32
    %c0_i32_1 = arith.constant 0 : i32
    return %c0_i32, %c0_i32_0 : i32, i32
  }
}

</mosaic_0001>

<llo_original>
// kernel: tpu_custom_call.1
$region0: #{tpu_custom_call.1}
  #allocation0 [shape = 'u32[]', space=smem, size = 0x4, offset = 0x4, fixed_abs, tag = 'smem constant byte address 0x4 - core index']
  #allocation1 [shape = 'u32[72,128]{1,0:T(1,128)}', space=vmem, size = 0x9000, scoped, tag = 'internal scratch']
  #allocation2 [shape = 'f32[8,2,32]{2,1,0:T(2,128)}', space=vmem, size = 0x2000, scoped, tag = 'scratch operand']
  #allocation3 [shape = 'f32[8,2,32]{2,1,0:T(2,128)}', space=vmem, size = 0x2000, scoped, tag = 'scratch operand']
  #allocation4 [shape = 'f32[8,2,32]{2,1,0:T(2,128)}', space=vmem, size = 0x2000, scoped, tag = 'scratch operand']
  #allocation5 [shape = 'f32[8,2,32]{2,1,0:T(2,128)}', space=vmem, size = 0x2000, scoped, tag = 'scratch operand']
  #allocation6 [shape = 'f32[8,2,32]{2,1,0:T(2,128)}', space=vmem, size = 0x2000, scoped, tag = 'scratch operand']
  %s0 = inlined_call_operand.vmem [shape: f32[8,2,16], index: 0, kind: input, shape index: {}]
  %s1 = inlined_call_operand.hbm [shape: f32[16,128], index: 1, kind: input, shape index: {}]
  %s2 = inlined_call_operand.hbm [shape: f32[4,32,32], index: 2, kind: input, shape index: {}]
  %s3 = inlined_call_operand.vmem [shape: f32[1,128], index: 3, kind: input, shape index: {}]
  %s4 = inlined_call_operand.vmem [shape: f32[32,128], index: 4, kind: input, shape index: {}]
  %s5 = inlined_call_operand.hbm [shape: f32[4,32,32], index: 5, kind: input, shape index: {}]
  %s6 = inlined_call_operand.vmem [shape: f32[1,128], index: 6, kind: input, shape index: {}]
  %s7 = inlined_call_operand.vmem [shape: f32[32,10], index: 7, kind: input, shape index: {}]
  %s8 = inlined_call_operand.vmem [shape: f32[1,10], index: 8, kind: input, shape index: {}]
  %s9 = inlined_call_operand.hbm [shape: f32[2,10], index: 9, kind: output, shape index: {}]
  %s10 = sld [smem:[#allocation0]]
  $region58: #{tpu_custom_call.1} parent=0
    _
  %s12 = ssub.s32 1, %s10
  %s13 = scalar_select 0, %s12, %s10
  $region1: #{tpu_custom_call.1} parent=0
    #allocation7 [shape = 'u8[8192]{0}', space=vmem, size = 0x2000, scoped, tag = 'input window, operand 1, single buffered']
    #allocation8 [shape = 's32[1]{0}', space=sflag, size = 0x4, scoped, tag = 'scoped memory for tpu_custom_call.1']
    #allocation9 [shape = 's32[1]{0}', space=sflag, size = 0x4, scoped, tag = 'scoped memory for tpu_custom_call.1']
    #allocation10 [shape = 'u8[65536]{0}', space=vmem, size = 0x10000, scoped, tag = 'input window, operand 2, single buffered']
    #allocation11 [shape = 's32[1]{0}', space=sflag, size = 0x4, scoped, tag = 'scoped memory for tpu_custom_call.1']
    #allocation12 [shape = 'u8[65536]{0}', space=vmem, size = 0x10000, scoped, tag = 'input window, operand 5, single buffered']
    #allocation13 [shape = 'u8[1024]{0}', space=vmem, size = 0x400, scoped, tag = 'output window, operand 0, single buffered']
    %14 = vsyncpa [#allocation8], 0
    %15 = vsyncpa [#allocation11], 0
    %16 = vsyncpa [#allocation9], 0
    // Predicated region
    $region2: #{tpu_custom_call.1} parent=1 // pred_check
      _
    $region3: #{tpu_custom_call.1} parent=1 // pred_check_branch
      %18 = sbr.rel (0) target = $region5
    $region4: #{tpu_custom_call.1} parent=1 // pred_region
      _
    $region5: #{tpu_custom_call.1} parent=1 // pred_fallthru
      _
    // Predicated region
    $region6: #{tpu_custom_call.1} parent=1 // pred_check
      _
    $region7: #{tpu_custom_call.1} parent=1 // pred_check_branch
      %20 = sbr.rel (0) target = $region9
    $region8: #{tpu_custom_call.1} parent=1 // pred_region
      %22 = vsyncadd [#allocation8], 0
      %s23 = sshll.u32 %s1, 4
      %s24 = int_to_ptr.hbm [resolvable:$true] %s23
      %s25 = sshll.u32 [#allocation7], 4
      %s26 = int_to_ptr.vmem [resolvable:$true] %s25
      %31 = dma.hbm_to_vmem [thread:$0]  %s24, 256, %s26, [#allocation8], 128, 128, 8
    $region9: #{tpu_custom_call.1} parent=1 // pred_fallthru
      _
    // Predicated region
    $region10: #{tpu_custom_call.1} parent=1 // pred_check
      _
    $region11: #{tpu_custom_call.1} parent=1 // pred_check_branch
      %33 = sbr.rel (0) target = $region13
    $region12: #{tpu_custom_call.1} parent=1 // pred_region
      %35 = vsyncadd [#allocation11], 0
      %s36 = sshll.u32 %s2, 4
      %s37 = int_to_ptr.hbm [resolvable:$true] %s36
      %s38 = sshll.u32 [#allocation10], 4
      %s39 = int_to_ptr.vmem [resolvable:$true] %s38
      %44 = dma.hbm_to_vmem [thread:$0]  %s37, 2048, %s39, [#allocation11], 128, 128, 8
    $region13: #{tpu_custom_call.1} parent=1 // pred_fallthru
      _
    // Predicated region
    $region14: #{tpu_custom_call.1} parent=1 // pred_check
      _
    $region15: #{tpu_custom_call.1} parent=1 // pred_check_branch
      %46 = sbr.rel (0) target = $region17
    $region16: #{tpu_custom_call.1} parent=1 // pred_region
      _
    $region17: #{tpu_custom_call.1} parent=1 // pred_fallthru
      _
    // Predicated region
    $region18: #{tpu_custom_call.1} parent=1 // pred_check
      _
    $region19: #{tpu_custom_call.1} parent=1 // pred_check_branch
      %48 = sbr.rel (0) target = $region21
    $region20: #{tpu_custom_call.1} parent=1 // pred_region
      _
    $region21: #{tpu_custom_call.1} parent=1 // pred_fallthru
      _
    // Predicated region
    $region22: #{tpu_custom_call.1} parent=1 // pred_check
      _
    $region23: #{tpu_custom_call.1} parent=1 // pred_check_branch
      %50 = sbr.rel (0) target = $region25
    $region24: #{tpu_custom_call.1} parent=1 // pred_region
      %52 = vsyncadd [#allocation11], 0
      %s53 = sshll.u32 %s5, 4
      %s54 = int_to_ptr.hbm [resolvable:$true] %s53
      %s55 = sshll.u32 [#allocation12], 4
      %s56 = int_to_ptr.vmem [resolvable:$true] %s55
      %61 = dma.hbm_to_vmem [thread:$0]  %s54, 2048, %s56, [#allocation11], 128, 128, 8
    $region25: #{tpu_custom_call.1} parent=1 // pred_fallthru
      _
    // Predicated region
    $region26: #{tpu_custom_call.1} parent=1 // pred_check
      _
    $region27: #{tpu_custom_call.1} parent=1 // pred_check_branch
      %63 = sbr.rel (0) target = $region29
    $region28: #{tpu_custom_call.1} parent=1 // pred_region
      _
    $region29: #{tpu_custom_call.1} parent=1 // pred_fallthru
      _
    // Predicated region
    $region30: #{tpu_custom_call.1} parent=1 // pred_check
      _
    $region31: #{tpu_custom_call.1} parent=1 // pred_check_branch
      %65 = sbr.rel (0) target = $region33
    $region32: #{tpu_custom_call.1} parent=1 // pred_region
      _
    $region33: #{tpu_custom_call.1} parent=1 // pred_fallthru
      _
    // Predicated region
    $region34: #{tpu_custom_call.1} parent=1 // pred_check
      _
    $region35: #{tpu_custom_call.1} parent=1 // pred_check_branch
      %67 = sbr.rel (0) target = $region37
    $region36: #{tpu_custom_call.1} parent=1 // pred_region
      _
    $region37: #{tpu_custom_call.1} parent=1 // pred_fallthru
      _
    // Predicated region
    $region38: #{tpu_custom_call.1} parent=1 // pred_check
      _
    $region39: #{tpu_custom_call.1} parent=1 // pred_check_branch
      %69 = sbr.rel (0) target = $region41
    $region40: #{tpu_custom_call.1} parent=1 // pred_region
      %71 = dma.done [#allocation8], 256
    $region41: #{tpu_custom_call.1} parent=1 // pred_fallthru
      _
    // Predicated region
    $region42: #{tpu_custom_call.1} parent=1 // pred_check
      _
    $region43: #{tpu_custom_call.1} parent=1 // pred_check_branch
      %73 = sbr.rel (0) target = $region45
    $region44: #{tpu_custom_call.1} parent=1 // pred_region
      %75 = dma.done [#allocation11], 2048
    $region45: #{tpu_custom_call.1} parent=1 // pred_fallthru
      _
    // Predicated region
    $region46: #{tpu_custom_call.1} parent=1 // pred_check
      _
    $region47: #{tpu_custom_call.1} parent=1 // pred_check_branch
      %77 = sbr.rel (0) target = $region49
    $region48: #{tpu_custom_call.1} parent=1 // pred_region
      %79 = dma.done [#allocation11], 2048
    $region49: #{tpu_custom_call.1} parent=1 // pred_fallthru
      _
    %v80 = vld [vmem:[%s0] sm:$0x3]
    %v81 = vld [vmem:[#allocation7] sm:$0xff]
    %v82 = vld [vmem:[#allocation7 + $0x8] sm:$0xff]
    %v83 = vld [vmem:[%s3] sm:$0x1]
    %v85 = vperm.slane %v83, 0
    %vm87 = vcmask 130048
    %v89 = vsel %vm87, %v80, 0
    %91 = vmatpush.msra.mxu0 0.0
    %92 = vmatpush.msra.mxu0 0.0
    %93 = vmatpush.msra.mxu0 0.0
    %94 = vmatpush.msra.mxu0 0.0
    %95 = vmatpush.msra.mxu0 0.0
    %96 = vmatpush.msra.mxu0 0.0
    %97 = vmatpush.msra.mxu0 0.0
    %98 = vmatpush.msra.mxu0 0.0
    %99 = vmatpush.msra.mxu0 0.0
    %100 = vmatpush.msra.mxu0 0.0
    %101 = vmatpush.msra.mxu0 0.0
    %102 = vmatpush.msra.mxu0 0.0
    %103 = vmatpush.msra.mxu0 0.0
    %104 = vmatpush.msra.mxu0 0.0
    %105 = vmatpush.msra.mxu0 %v82
    %106 = vmatpush.msra.mxu0 %v81
    %107 = vmatmul.f32.gmra.mxu0 %v89
    %v108 = vpop.f32.mrf.mxu0
    %v109 = vadd.f32 %v85, %v108
    %110 = vdwg.mxu0
    %vm111 = vcmask 254976
    %112 = vst.msk [vmem:[#allocation2] sm:$0x3] %vm111, %v109
    %114 = vrot.lane.b32.xlu0 %v109, 96
    %v115 = vpop.permute.xlu0 %114
    %117 = vst.msk [vmem:[#allocation3] sm:$0x3] %vm111, %v115
    %118 = vrot.lane.b32.xlu0 %v109, 64
    %v119 = vpop.permute.xlu0 %118
    %121 = vst.msk [vmem:[#allocation4] sm:$0x3] %vm111, %v119
    %122 = vrot.lane.b32.xlu0 %v109, 32
    %v123 = vpop.permute.xlu0 %122
    %125 = vst.msk [vmem:[#allocation5] sm:$0x3] %vm111, %v123
    %s126 = scalar_lea.vmem %s0, 2
    %v127 = vld [vmem:[%s126] sm:$0x3]
    %v128 = vld [vmem:[#allocation7] sm:$0xff]
    %v129 = vld [vmem:[#allocation7 + $0x8] sm:$0xff]
    %v130 = vld [vmem:[%s3] sm:$0x1]
    %v132 = vperm.slane %v130, 0
    %v135 = vsel %vm87, %v127, 0
    %137 = vmatpush.msra.mxu0 0.0
    %138 = vmatpush.msra.mxu0 0.0
    %139 = vmatpush.msra.mxu0 0.0
    %140 = vmatpush.msra.mxu0 0.0
    %141 = vmatpush.msra.mxu0 0.0
    %142 = vmatpush.msra.mxu0 0.0
    %143 = vmatpush.msra.mxu0 0.0
    %144 = vmatpush.msra.mxu0 0.0
    %145 = vmatpush.msra.mxu0 0.0
    %146 = vmatpush.msra.mxu0 0.0
    %147 = vmatpush.msra.mxu0 0.0
    %148 = vmatpush.msra.mxu0 0.0
    %149 = vmatpush.msra.mxu0 0.0
    %150 = vmatpush.msra.mxu0 0.0
    %151 = vmatpush.msra.mxu0 %v129
    %152 = vmatpush.msra.mxu0 %v128
    %153 = vmatmul.f32.gmra.mxu0 %v135
    %v154 = vpop.f32.mrf.mxu0
    %v155 = vadd.f32 %v132, %v154
    %156 = vdwg.mxu0
    %s157 = scalar_lea.vmem [#allocation2], 2
    %158 = vst.msk [vmem:[%s157] sm:$0x3] %vm111, %v155
    %160 = vrot.lane.b32.xlu0 %v155, 96
    %v161 = vpop.permute.xlu0 %160
    %s163 = scalar_lea.vmem [#allocation3], 2
    %164 = vst.msk [vmem:[%s163] sm:$0x3] %vm111, %v161
    %165 = vrot.lane.b32.xlu0 %v155, 64
    %v166 = vpop.permute.xlu0 %165
    %s168 = scalar_lea.vmem [#allocation4], 2
    %169 = vst.msk [vmem:[%s168] sm:$0x3] %vm111, %v166
    %170 = vrot.lane.b32.xlu0 %v155, 32
    %v171 = vpop.permute.xlu0 %170
    %s173 = scalar_lea.vmem [#allocation5], 2
    %174 = vst.msk [vmem:[%s173] sm:$0x3] %vm111, %v171
    %s175 = scalar_lea.vmem %s0, 4
    %v176 = vld [vmem:[%s175] sm:$0x3]
    %v177 = vld [vmem:[#allocation7] sm:$0xff]
    %v178 = vld [vmem:[#allocation7 + $0x8] sm:$0xff]
    %v179 = vld [vmem:[%s3] sm:$0x1]
    %v181 = vperm.slane %v179, 0
    %v184 = vsel %vm87, %v176, 0
    %186 = vmatpush.msra.mxu0 0.0
    %187 = vmatpush.msra.mxu0 0.0
    %188 = vmatpush.msra.mxu0 0.0
    %189 = vmatpush.msra.mxu0 0.0
    %190 = vmatpush.msra.mxu0 0.0
    %191 = vmatpush.msra.mxu0 0.0
    %192 = vmatpush.msra.mxu0 0.0
    %193 = vmatpush.msra.mxu0 0.0
    %194 = vmatpush.msra.mxu0 0.0
    %195 = vmatpush.msra.mxu0 0.0
    %196 = vmatpush.msra.mxu0 0.0
    %197 = vmatpush.msra.mxu0 0.0
    %198 = vmatpush.msra.mxu0 0.0
    %199 = vmatpush.msra.mxu0 0.0
    %200 = vmatpush.msra.mxu0 %v178
    %201 = vmatpush.msra.mxu0 %v177
    %202 = vmatmul.f32.gmra.mxu0 %v184
    %v203 = vpop.f32.mrf.mxu0
    %v204 = vadd.f32 %v181, %v203
    %205 = vdwg.mxu0
    %s206 = scalar_lea.vmem [#allocation2], 4
    %207 = vst.msk [vmem:[%s206] sm:$0x3] %vm111, %v204
    %209 = vrot.lane.b32.xlu0 %v204, 96
    %v210 = vpop.permute.xlu0 %209
    %s212 = scalar_lea.vmem [#allocation3], 4
    %213 = vst.msk [vmem:[%s212] sm:$0x3] %vm111, %v210
    %214 = vrot.lane.b32.xlu0 %v204, 64
    %v215 = vpop.permute.xlu0 %214
    %s217 = scalar_lea.vmem [#allocation4], 4
    %218 = vst.msk [vmem:[%s217] sm:$0x3] %vm111, %v215
    %219 = vrot.lane.b32.xlu0 %v204, 32
    %v220 = vpop.permute.xlu0 %219
    %s222 = scalar_lea.vmem [#allocation5], 4
    %223 = vst.msk [vmem:[%s222] sm:$0x3] %vm111, %v220
    %s224 = scalar_lea.vmem %s0, 6
    %v225 = vld [vmem:[%s224] sm:$0x3]
    %v226 = vld [vmem:[#allocation7] sm:$0xff]
    %v227 = vld [vmem:[#allocation7 + $0x8] sm:$0xff]
    %v228 = vld [vmem:[%s3] sm:$0x1]
    %v230 = vperm.slane %v228, 0
    %v233 = vsel %vm87, %v225, 0
    %235 = vmatpush.msra.mxu0 0.0
    %236 = vmatpush.msra.mxu0 0.0
    %237 = vmatpush.msra.mxu0 0.0
    %238 = vmatpush.msra.mxu0 0.0
    %239 = vmatpush.msra.mxu0 0.0
    %240 = vmatpush.msra.mxu0 0.0
    %241 = vmatpush.msra.mxu0 0.0
    %242 = vmatpush.msra.mxu0 0.0
    %243 = vmatpush.msra.mxu0 0.0
    %244 = vmatpush.msra.mxu0 0.0
    %245 = vmatpush.msra.mxu0 0.0
    %246 = vmatpush.msra.mxu0 0.0
    %247 = vmatpush.msra.mxu0 0.0
    %248 = vmatpush.msra.mxu0 0.0
    %249 = vmatpush.msra.mxu0 %v227
    %250 = vmatpush.msra.mxu0 %v226
    %251 = vmatmul.f32.gmra.mxu0 %v233
    %v252 = vpop.f32.mrf.mxu0
    %v253 = vadd.f32 %v230, %v252
    %254 = vdwg.mxu0
    %s255 = scalar_lea.vmem [#allocation2], 6
    %256 = vst.msk [vmem:[%s255] sm:$0x3] %vm111, %v253
    %258 = vrot.lane.b32.xlu0 %v253, 96
    %v259 = vpop.permute.xlu0 %258
    %s261 = scalar_lea.vmem [#allocation3], 6
    %262 = vst.msk [vmem:[%s261] sm:$0x3] %vm111, %v259
    %263 = vrot.lane.b32.xlu0 %v253, 64
    %v264 = vpop.permute.xlu0 %263
    %s266 = scalar_lea.vmem [#allocation4], 6
    %267 = vst.msk [vmem:[%s266] sm:$0x3] %vm111, %v264
    %268 = vrot.lane.b32.xlu0 %v253, 32
    %v269 = vpop.permute.xlu0 %268
    %s271 = scalar_lea.vmem [#allocation5], 6
    %272 = vst.msk [vmem:[%s271] sm:$0x3] %vm111, %v269
    %s273 = scalar_lea.vmem %s0, 8
    %v274 = vld [vmem:[%s273] sm:$0x3]
    %v275 = vld [vmem:[#allocation7] sm:$0xff]
    %v276 = vld [vmem:[#allocation7 + $0x8] sm:$0xff]
    %v277 = vld [vmem:[%s3] sm:$0x1]
    %v279 = vperm.slane %v277, 0
    %v282 = vsel %vm87, %v274, 0
    %284 = vmatpush.msra.mxu0 0.0
    %285 = vmatpush.msra.mxu0 0.0
    %286 = vmatpush.msra.mxu0 0.0
    %287 = vmatpush.msra.mxu0 0.0
    %288 = vmatpush.msra.mxu0 0.0
    %289 = vmatpush.msra.mxu0 0.0
    %290 = vmatpush.msra.mxu0 0.0
    %291 = vmatpush.msra.mxu0 0.0
    %292 = vmatpush.msra.mxu0 0.0
    %293 = vmatpush.msra.mxu0 0.0
    %294 = vmatpush.msra.mxu0 0.0
    %295 = vmatpush.msra.mxu0 0.0
    %296 = vmatpush.msra.mxu0 0.0
    %297 = vmatpush.msra.mxu0 0.0
    %298 = vmatpush.msra.mxu0 %v276
    %299 = vmatpush.msra.mxu0 %v275
    %300 = vmatmul.f32.gmra.mxu0 %v282
    %v301 = vpop.f32.mrf.mxu0
    %v302 = vadd.f32 %v279, %v301
    %303 = vdwg.mxu0
    %s304 = scalar_lea.vmem [#allocation2], 8
    %305 = vst.msk [vmem:[%s304] sm:$0x3] %vm111, %v302
    %307 = vrot.lane.b32.xlu0 %v302, 96
    %v308 = vpop.permute.xlu0 %307
    %s310 = scalar_lea.vmem [#allocation3], 8
    %311 = vst.msk [vmem:[%s310] sm:$0x3] %vm111, %v308
    %312 = vrot.lane.b32.xlu0 %v302, 64
    %v313 = vpop.permute.xlu0 %312
    %s315 = scalar_lea.vmem [#allocation4], 8
    %316 = vst.msk [vmem:[%s315] sm:$0x3] %vm111, %v313
    %317 = vrot.lane.b32.xlu0 %v302, 32
    %v318 = vpop.permute.xlu0 %317
    %s320 = scalar_lea.vmem [#allocation5], 8
    %321 = vst.msk [vmem:[%s320] sm:$0x3] %vm111, %v318
    %s322 = scalar_lea.vmem %s0, 10
    %v323 = vld [vmem:[%s322] sm:$0x3]
    %v324 = vld [vmem:[#allocation7] sm:$0xff]
    %v325 = vld [vmem:[#allocation7 + $0x8] sm:$0xff]
    %v326 = vld [vmem:[%s3] sm:$0x1]
    %v328 = vperm.slane %v326, 0
    %v331 = vsel %vm87, %v323, 0
    %333 = vmatpush.msra.mxu0 0.0
    %334 = vmatpush.msra.mxu0 0.0
    %335 = vmatpush.msra.mxu0 0.0
    %336 = vmatpush.msra.mxu0 0.0
    %337 = vmatpush.msra.mxu0 0.0
    %338 = vmatpush.msra.mxu0 0.0
    %339 = vmatpush.msra.mxu0 0.0
    %340 = vmatpush.msra.mxu0 0.0
    %341 = vmatpush.msra.mxu0 0.0
    %342 = vmatpush.msra.mxu0 0.0
    %343 = vmatpush.msra.mxu0 0.0
    %344 = vmatpush.msra.mxu0 0.0
    %345 = vmatpush.msra.mxu0 0.0
    %346 = vmatpush.msra.mxu0 0.0
    %347 = vmatpush.msra.mxu0 %v325
    %348 = vmatpush.msra.mxu0 %v324
    %349 = vmatmul.f32.gmra.mxu0 %v331
    %v350 = vpop.f32.mrf.mxu0
    %v351 = vadd.f32 %v328, %v350
    %352 = vdwg.mxu0
    %s353 = scalar_lea.vmem [#allocation2], 10
    %354 = vst.msk [vmem:[%s353] sm:$0x3] %vm111, %v351
    %356 = vrot.lane.b32.xlu0 %v351, 96
    %v357 = vpop.permute.xlu0 %356
    %s359 = scalar_lea.vmem [#allocation3], 10
    %360 = vst.msk [vmem:[%s359] sm:$0x3] %vm111, %v357
    %361 = vrot.lane.b32.xlu0 %v351, 64
    %v362 = vpop.permute.xlu0 %361
    %s364 = scalar_lea.vmem [#allocation4], 10
    %365 = vst.msk [vmem:[%s364] sm:$0x3] %vm111, %v362
    %366 = vrot.lane.b32.xlu0 %v351, 32
    %v367 = vpop.permute.xlu0 %366
    %s369 = scalar_lea.vmem [#allocation5], 10
    %370 = vst.msk [vmem:[%s369] sm:$0x3] %vm111, %v367
    %s371 = scalar_lea.vmem %s0, 12
    %v372 = vld [vmem:[%s371] sm:$0x3]
    %v373 = vld [vmem:[#allocation7] sm:$0xff]
    %v374 = vld [vmem:[#allocation7 + $0x8] sm:$0xff]
    %v375 = vld [vmem:[%s3] sm:$0x1]
    %v377 = vperm.slane %v375, 0
    %v380 = vsel %vm87, %v372, 0
    %382 = vmatpush.msra.mxu0 0.0
    %383 = vmatpush.msra.mxu0 0.0
    %384 = vmatpush.msra.mxu0 0.0
    %385 = vmatpush.msra.mxu0 0.0
    %386 = vmatpush.msra.mxu0 0.0
    %387 = vmatpush.msra.mxu0 0.0
    %388 = vmatpush.msra.mxu0 0.0
    %389 = vmatpush.msra.mxu0 0.0
    %390 = vmatpush.msra.mxu0 0.0
    %391 = vmatpush.msra.mxu0 0.0
    %392 = vmatpush.msra.mxu0 0.0
    %393 = vmatpush.msra.mxu0 0.0
    %394 = vmatpush.msra.mxu0 0.0
    %395 = vmatpush.msra.mxu0 0.0
    %396 = vmatpush.msra.mxu0 %v374
    %397 = vmatpush.msra.mxu0 %v373
    %398 = vmatmul.f32.gmra.mxu0 %v380
    %v399 = vpop.f32.mrf.mxu0
    %v400 = vadd.f32 %v377, %v399
    %401 = vdwg.mxu0
    %s402 = scalar_lea.vmem [#allocation2], 12
    %403 = vst.msk [vmem:[%s402] sm:$0x3] %vm111, %v400
    %405 = vrot.lane.b32.xlu0 %v400, 96
    %v406 = vpop.permute.xlu0 %405
    %s408 = scalar_lea.vmem [#allocation3], 12
    %409 = vst.msk [vmem:[%s408] sm:$0x3] %vm111, %v406
    %410 = vrot.lane.b32.xlu0 %v400, 64
    %v411 = vpop.permute.xlu0 %410
    %s413 = scalar_lea.vmem [#allocation4], 12
    %414 = vst.msk [vmem:[%s413] sm:$0x3] %vm111, %v411
    %415 = vrot.lane.b32.xlu0 %v400, 32
    %v416 = vpop.permute.xlu0 %415
    %s418 = scalar_lea.vmem [#allocation5], 12
    %419 = vst.msk [vmem:[%s418] sm:$0x3] %vm111, %v416
    %s420 = scalar_lea.vmem %s0, 14
    %v421 = vld [vmem:[%s420] sm:$0x3]
    %v422 = vld [vmem:[#allocation7] sm:$0xff]
    %v423 = vld [vmem:[#allocation7 + $0x8] sm:$0xff]
    %v424 = vld [vmem:[%s3] sm:$0x1]
    %v426 = vperm.slane %v424, 0
    %v429 = vsel %vm87, %v421, 0
    %431 = vmatpush.msra.mxu0 0.0
    %432 = vmatpush.msra.mxu0 0.0
    %433 = vmatpush.msra.mxu0 0.0
    %434 = vmatpush.msra.mxu0 0.0
    %435 = vmatpush.msra.mxu0 0.0
    %436 = vmatpush.msra.mxu0 0.0
    %437 = vmatpush.msra.mxu0 0.0
    %438 = vmatpush.msra.mxu0 0.0
    %439 = vmatpush.msra.mxu0 0.0
    %440 = vmatpush.msra.mxu0 0.0
    %441 = vmatpush.msra.mxu0 0.0
    %442 = vmatpush.msra.mxu0 0.0
    %443 = vmatpush.msra.mxu0 0.0
    %444 = vmatpush.msra.mxu0 0.0
    %445 = vmatpush.msra.mxu0 %v423
    %446 = vmatpush.msra.mxu0 %v422
    %447 = vmatmul.f32.gmra.mxu0 %v429
    %v448 = vpop.f32.mrf.mxu0
    %v449 = vadd.f32 %v426, %v448
    %450 = vdwg.mxu0
    %s451 = scalar_lea.vmem [#allocation2], 14
    %452 = vst.msk [vmem:[%s451] sm:$0x3] %vm111, %v449
    %454 = vrot.lane.b32.xlu0 %v449, 96
    %v455 = vpop.permute.xlu0 %454
    %s457 = scalar_lea.vmem [#allocation3], 14
    %458 = vst.msk [vmem:[%s457] sm:$0x3] %vm111, %v455
    %459 = vrot.lane.b32.xlu0 %v449, 64
    %v460 = vpop.permute.xlu0 %459
    %s462 = scalar_lea.vmem [#allocation4], 14
    %463 = vst.msk [vmem:[%s462] sm:$0x3] %vm111, %v460
    %464 = vrot.lane.b32.xlu0 %v449, 32
    %v465 = vpop.permute.xlu0 %464
    %s467 = scalar_lea.vmem [#allocation5], 14
    %468 = vst.msk [vmem:[%s467] sm:$0x3] %vm111, %v465
    %v469 = vld [vmem:[#allocation2] sm:$0x3]
    %v470 = vld [vmem:[#allocation10] sm:$0xff]
    %v471 = vld [vmem:[#allocation10 + $0x8] sm:$0xff]
    %v472 = vld [vmem:[#allocation10 + $0x10] sm:$0xff]
    %v473 = vld [vmem:[#allocation10 + $0x18] sm:$0xff]
    %vm474 = vcmask 261120
    %v476 = vsel %vm474, 0.0, 0
    %478 = vmatpush.msra.mxu0 0.0
    %479 = vmatpush.msra.mxu0 0.0
    %480 = vmatpush.msra.mxu0 0.0
    %481 = vmatpush.msra.mxu0 0.0
    %482 = vmatpush.msra.mxu0 0.0
    %483 = vmatpush.msra.mxu0 0.0
    %484 = vmatpush.msra.mxu0 0.0
    %485 = vmatpush.msra.mxu0 0.0
    %486 = vmatpush.msra.mxu0 0.0
    %487 = vmatpush.msra.mxu0 0.0
    %488 = vmatpush.msra.mxu0 0.0
    %489 = vmatpush.msra.mxu0 0.0
    %490 = vmatpush.msra.mxu0 %v473
    %491 = vmatpush.msra.mxu0 %v472
    %492 = vmatpush.msra.mxu0 %v471
    %493 = vmatpush.msra.mxu0 %v470
    %494 = vmatmul.f32.gmra.mxu0 %v476
    %v495 = vpop.f32.mrf.mxu0
    %v496 = vadd.f32 0.0, %v495
    %497 = vdwg.mxu0
    %v498 = vadd.f32 %v469, %v496
    %v499 = vld [vmem:[#allocation3] sm:$0x3]
    %s500 = scalar_lea.vmem [#allocation10], 32
    %v501 = vld [vmem:[%s500] sm:$0xff]
    %v502 = vld [vmem:[%s500 + $0x8] sm:$0xff]
    %v503 = vld [vmem:[%s500 + $0x10] sm:$0xff]
    %v504 = vld [vmem:[%s500 + $0x18] sm:$0xff]
    %505 = vmatpush.msra.mxu0 0.0
    %506 = vmatpush.msra.mxu0 0.0
    %507 = vmatpush.msra.mxu0 0.0
    %508 = vmatpush.msra.mxu0 0.0
    %509 = vmatpush.msra.mxu0 0.0
    %510 = vmatpush.msra.mxu0 0.0
    %511 = vmatpush.msra.mxu0 0.0
    %512 = vmatpush.msra.mxu0 0.0
    %513 = vmatpush.msra.mxu0 0.0
    %514 = vmatpush.msra.mxu0 0.0
    %515 = vmatpush.msra.mxu0 0.0
    %516 = vmatpush.msra.mxu0 0.0
    %517 = vmatpush.msra.mxu0 %v504
    %518 = vmatpush.msra.mxu0 %v503
    %519 = vmatpush.msra.mxu0 %v502
    %520 = vmatpush.msra.mxu0 %v501
    %521 = vmatmul.f32.gmra.mxu0 %v476
    %v522 = vpop.f32.mrf.mxu0
    %v523 = vadd.f32 0.0, %v522
    %524 = vdwg.mxu0
    %v525 = vadd.f32 %v499, %v523
    %v526 = vld [vmem:[#allocation4] sm:$0x3]
    %s527 = scalar_lea.vmem [#allocation10], 64
    %v528 = vld [vmem:[%s527] sm:$0xff]
    %v529 = vld [vmem:[%s527 + $0x8] sm:$0xff]
    %v530 = vld [vmem:[%s527 + $0x10] sm:$0xff]
    %v531 = vld [vmem:[%s527 + $0x18] sm:$0xff]
    %532 = vmatpush.msra.mxu0 0.0
    %533 = vmatpush.msra.mxu0 0.0
    %534 = vmatpush.msra.mxu0 0.0
    %535 = vmatpush.msra.mxu0 0.0
    %536 = vmatpush.msra.mxu0 0.0
    %537 = vmatpush.msra.mxu0 0.0
    %538 = vmatpush.msra.mxu0 0.0
    %539 = vmatpush.msra.mxu0 0.0
    %540 = vmatpush.msra.mxu0 0.0
    %541 = vmatpush.msra.mxu0 0.0
    %542 = vmatpush.msra.mxu0 0.0
    %543 = vmatpush.msra.mxu0 0.0
    %544 = vmatpush.msra.mxu0 %v531
    %545 = vmatpush.msra.mxu0 %v530
    %546 = vmatpush.msra.mxu0 %v529
    %547 = vmatpush.msra.mxu0 %v528
    %548 = vmatmul.f32.gmra.mxu0 %v476
    %v549 = vpop.f32.mrf.mxu0
    %v550 = vadd.f32 0.0, %v549
    %551 = vdwg.mxu0
    %v552 = vadd.f32 %v526, %v550
    %v553 = vld [vmem:[#allocation5] sm:$0x3]
    %s554 = scalar_lea.vmem [#allocation10], 96
    %v555 = vld [vmem:[%s554] sm:$0xff]
    %v556 = vld [vmem:[%s554 + $0x8] sm:$0xff]
    %v557 = vld [vmem:[%s554 + $0x10] sm:$0xff]
    %v558 = vld [vmem:[%s554 + $0x18] sm:$0xff]
    %559 = vmatpush.msra.mxu0 0.0
    %560 = vmatpush.msra.mxu0 0.0
    %561 = vmatpush.msra.mxu0 0.0
    %562 = vmatpush.msra.mxu0 0.0
    %563 = vmatpush.msra.mxu0 0.0
    %564 = vmatpush.msra.mxu0 0.0
    %565 = vmatpush.msra.mxu0 0.0
    %566 = vmatpush.msra.mxu0 0.0
    %567 = vmatpush.msra.mxu0 0.0
    %568 = vmatpush.msra.mxu0 0.0
    %569 = vmatpush.msra.mxu0 0.0
    %570 = vmatpush.msra.mxu0 0.0
    %571 = vmatpush.msra.mxu0 %v558
    %572 = vmatpush.msra.mxu0 %v557
    %573 = vmatpush.msra.mxu0 %v556
    %574 = vmatpush.msra.mxu0 %v555
    %575 = vmatmul.f32.gmra.mxu0 %v476
    %v576 = vpop.f32.mrf.mxu0
    %v577 = vadd.f32 0.0, %v576
    %578 = vdwg.mxu0
    %v579 = vadd.f32 %v553, %v577
    %v580 = vxor.u32 %v498, 2147483648
    %v581 = vmul.f32 %v580, 1.442695
    %v582 = vpow.pop %v581
    %v583 = vadd.f32 %v582, 1.0
    %v584 = vrcp.pop %v583
    %v585 = vmul.f32 %v583, %v584
    %v586 = vsub.f32 1.0, %v585
    %v587 = vmul.f32 %v584, %v586
    %v588 = vadd.f32 %v584, %v587
    %vm589 = vweird.f32 %v583
    %vm590 = vweird.f32 %v584
    %vm591 = vmor %vm589, %vm590
    %v592 = vsel %vm591, %v584, %v588
    %v593 = vand.u32 2147483647, %v583
    %vm594 = vcmp.eq.f32.partialorder %v593, 8.507059e+37
    %v595 = vand.u32 %v583, 2147483648
    %v596 = vor.u32 1.1754944e-38, %v595
    %v597 = vsel %vm594, %v596, %v592
    %v598 = vmul.f32 1.0, %v597
    %v599 = vxor.u32 %v525, 2147483648
    %v600 = vmul.f32 %v599, 1.442695
    %v601 = vpow.pop %v600
    %v602 = vadd.f32 %v601, 1.0
    %v603 = vrcp.pop %v602
    %v604 = vmul.f32 %v602, %v603
    %v605 = vsub.f32 1.0, %v604
    %v606 = vmul.f32 %v603, %v605
    %v607 = vadd.f32 %v603, %v606
    %vm608 = vweird.f32 %v602
    %vm609 = vweird.f32 %v603
    %vm610 = vmor %vm608, %vm609
    %v611 = vsel %vm610, %v603, %v607
    %v612 = vand.u32 2147483647, %v602
    %vm613 = vcmp.eq.f32.partialorder %v612, 8.507059e+37
    %v614 = vand.u32 %v602, 2147483648
    %v615 = vor.u32 1.1754944e-38, %v614
    %v616 = vsel %vm613, %v615, %v611
    %v617 = vmul.f32 1.0, %v616
    %v618 = vtanh.pop %v552
    %v619 = vxor.u32 %v579, 2147483648
    %v620 = vmul.f32 %v619, 1.442695
    %v621 = vpow.pop %v620
    %v622 = vadd.f32 %v621, 1.0
    %v623 = vrcp.pop %v622
    %v624 = vmul.f32 %v622, %v623
    %v625 = vsub.f32 1.0, %v624
    %v626 = vmul.f32 %v623, %v625
    %v627 = vadd.f32 %v623, %v626
    %vm628 = vweird.f32 %v622
    %vm629 = vweird.f32 %v623
    %vm630 = vmor %vm628, %vm629
    %v631 = vsel %vm630, %v623, %v627
    %v632 = vand.u32 2147483647, %v622
    %vm633 = vcmp.eq.f32.partialorder %v632, 8.507059e+37
    %v634 = vand.u32 %v622, 2147483648
    %v635 = vor.u32 1.1754944e-38, %v634
    %v636 = vsel %vm633, %v635, %v631
    %v637 = vmul.f32 1.0, %v636
    %v638 = vmul.f32 %v617, 0.0
    %v639 = vmul.f32 %v598, %v618
    %v640 = vadd.f32 %v638, %v639
    %v641 = vtanh.pop %v640
    %v642 = vmul.f32 %v637, %v641
    %643 = vst.msk [vmem:[#allocation6] sm:$0x3] %vm111, %v642
    %v644 = vld [vmem:[%s157] sm:$0x3]
    %v645 = vld [vmem:[#allocation10] sm:$0xff]
    %v646 = vld [vmem:[#allocation10 + $0x8] sm:$0xff]
    %v647 = vld [vmem:[#allocation10 + $0x10] sm:$0xff]
    %v648 = vld [vmem:[#allocation10 + $0x18] sm:$0xff]
    %v650 = vsel %vm474, %v642, 0
    %652 = vmatpush.msra.mxu0 0.0
    %653 = vmatpush.msra.mxu0 0.0
    %654 = vmatpush.msra.mxu0 0.0
    %655 = vmatpush.msra.mxu0 0.0
    %656 = vmatpush.msra.mxu0 0.0
    %657 = vmatpush.msra.mxu0 0.0
    %658 = vmatpush.msra.mxu0 0.0
    %659 = vmatpush.msra.mxu0 0.0
    %660 = vmatpush.msra.mxu0 0.0
    %661 = vmatpush.msra.mxu0 0.0
    %662 = vmatpush.msra.mxu0 0.0
    %663 = vmatpush.msra.mxu0 0.0
    %664 = vmatpush.msra.mxu0 %v648
    %665 = vmatpush.msra.mxu0 %v647
    %666 = vmatpush.msra.mxu0 %v646
    %667 = vmatpush.msra.mxu0 %v645
    %668 = vmatmul.f32.gmra.mxu0 %v650
    %v669 = vpop.f32.mrf.mxu0
    %v670 = vadd.f32 0.0, %v669
    %671 = vdwg.mxu0
    %v672 = vadd.f32 %v644, %v670
    %v673 = vld [vmem:[%s163] sm:$0x3]
    %v674 = vld [vmem:[%s500] sm:$0xff]
    %v675 = vld [vmem:[%s500 + $0x8] sm:$0xff]
    %v676 = vld [vmem:[%s500 + $0x10] sm:$0xff]
    %v677 = vld [vmem:[%s500 + $0x18] sm:$0xff]
    %678 = vmatpush.msra.mxu0 0.0
    %679 = vmatpush.msra.mxu0 0.0
    %680 = vmatpush.msra.mxu0 0.0
    %681 = vmatpush.msra.mxu0 0.0
    %682 = vmatpush.msra.mxu0 0.0
    %683 = vmatpush.msra.mxu0 0.0
    %684 = vmatpush.msra.mxu0 0.0
    %685 = vmatpush.msra.mxu0 0.0
    %686 = vmatpush.msra.mxu0 0.0
    %687 = vmatpush.msra.mxu0 0.0
    %688 = vmatpush.msra.mxu0 0.0
    %689 = vmatpush.msra.mxu0 0.0
    %690 = vmatpush.msra.mxu0 %v677
    %691 = vmatpush.msra.mxu0 %v676
    %692 = vmatpush.msra.mxu0 %v675
    %693 = vmatpush.msra.mxu0 %v674
    %694 = vmatmul.f32.gmra.mxu0 %v650
    %v695 = vpop.f32.mrf.mxu0
    %v696 = vadd.f32 0.0, %v695
    %697 = vdwg.mxu0
    %v698 = vadd.f32 %v673, %v696
    %v699 = vld [vmem:[%s168] sm:$0x3]
    %v700 = vld [vmem:[%s527] sm:$0xff]
    %v701 = vld [vmem:[%s527 + $0x8] sm:$0xff]
    %v702 = vld [vmem:[%s527 + $0x10] sm:$0xff]
    %v703 = vld [vmem:[%s527 + $0x18] sm:$0xff]
    %704 = vmatpush.msra.mxu0 0.0
    %705 = vmatpush.msra.mxu0 0.0
    %706 = vmatpush.msra.mxu0 0.0
    %707 = vmatpush.msra.mxu0 0.0
    %708 = vmatpush.msra.mxu0 0.0
    %709 = vmatpush.msra.mxu0 0.0
    %710 = vmatpush.msra.mxu0 0.0
    %711 = vmatpush.msra.mxu0 0.0
    %712 = vmatpush.msra.mxu0 0.0
    %713 = vmatpush.msra.mxu0 0.0
    %714 = vmatpush.msra.mxu0 0.0
    %715 = vmatpush.msra.mxu0 0.0
    %716 = vmatpush.msra.mxu0 %v703
    %717 = vmatpush.msra.mxu0 %v702
    %718 = vmatpush.msra.mxu0 %v701
    %719 = vmatpush.msra.mxu0 %v700
    %720 = vmatmul.f32.gmra.mxu0 %v650
    %v721 = vpop.f32.mrf.mxu0
    %v722 = vadd.f32 0.0, %v721
    %723 = vdwg.mxu0
    %v724 = vadd.f32 %v699, %v722
    %v725 = vld [vmem:[%s173] sm:$0x3]
    %v726 = vld [vmem:[%s554] sm:$0xff]
    %v727 = vld [vmem:[%s554 + $0x8] sm:$0xff]
    %v728 = vld [vmem:[%s554 + $0x10] sm:$0xff]
    %v729 = vld [vmem:[%s554 + $0x18] sm:$0xff]
    %730 = vmatpush.msra.mxu0 0.0
    %731 = vmatpush.msra.mxu0 0.0
    %732 = vmatpush.msra.mxu0 0.0
    %733 = vmatpush.msra.mxu0 0.0
    %734 = vmatpush.msra.mxu0 0.0
    %735 = vmatpush.msra.mxu0 0.0
    %736 = vmatpush.msra.mxu0 0.0
    %737 = vmatpush.msra.mxu0 0.0
    %738 = vmatpush.msra.mxu0 0.0
    %739 = vmatpush.msra.mxu0 0.0
    %740 = vmatpush.msra.mxu0 0.0
    %741 = vmatpush.msra.mxu0 0.0
    %742 = vmatpush.msra.mxu0 %v729
    %743 = vmatpush.msra.mxu0 %v728
    %744 = vmatpush.msra.mxu0 %v727
    %745 = vmatpush.msra.mxu0 %v726
    %746 = vmatmul.f32.gmra.mxu0 %v650
    %v747 = vpop.f32.mrf.mxu0
    %v748 = vadd.f32 0.0, %v747
    %749 = vdwg.mxu0
    %v750 = vadd.f32 %v725, %v748
    %v751 = vxor.u32 %v672, 2147483648
    %v752 = vmul.f32 %v751, 1.442695
    %v753 = vpow.pop %v752
    %v754 = vadd.f32 %v753, 1.0
    %v755 = vrcp.pop %v754
    %v756 = vmul.f32 %v754, %v755
    %v757 = vsub.f32 1.0, %v756
    %v758 = vmul.f32 %v755, %v757
    %v759 = vadd.f32 %v755, %v758
    %vm760 = vweird.f32 %v754
    %vm761 = vweird.f32 %v755
    %vm762 = vmor %vm760, %vm761
    %v763 = vsel %vm762, %v755, %v759
    %v764 = vand.u32 2147483647, %v754
    %vm765 = vcmp.eq.f32.partialorder %v764, 8.507059e+37
    %v766 = vand.u32 %v754, 2147483648
    %v767 = vor.u32 1.1754944e-38, %v766
    %v768 = vsel %vm765, %v767, %v763
    %v769 = vmul.f32 1.0, %v768
    %v770 = vxor.u32 %v698, 2147483648
    %v771 = vmul.f32 %v770, 1.442695
    %v772 = vpow.pop %v771
    %v773 = vadd.f32 %v772, 1.0
    %v774 = vrcp.pop %v773
    %v775 = vmul.f32 %v773, %v774
    %v776 = vsub.f32 1.0, %v775
    %v777 = vmul.f32 %v774, %v776
    %v778 = vadd.f32 %v774, %v777
    %vm779 = vweird.f32 %v773
    %vm780 = vweird.f32 %v774
    %vm781 = vmor %vm779, %vm780
    %v782 = vsel %vm781, %v774, %v778
    %v783 = vand.u32 2147483647, %v773
    %vm784 = vcmp.eq.f32.partialorder %v783, 8.507059e+37
    %v785 = vand.u32 %v773, 2147483648
    %v786 = vor.u32 1.1754944e-38, %v785
    %v787 = vsel %vm784, %v786, %v782
    %v788 = vmul.f32 1.0, %v787
    %v789 = vtanh.pop %v724
    %v790 = vxor.u32 %v750, 2147483648
    %v791 = vmul.f32 %v790, 1.442695
    %v792 = vpow.pop %v791
    %v793 = vadd.f32 %v792, 1.0
    %v794 = vrcp.pop %v793
    %v795 = vmul.f32 %v793, %v794
    %v796 = vsub.f32 1.0, %v795
    %v797 = vmul.f32 %v794, %v796
    %v798 = vadd.f32 %v794, %v797
    %vm799 = vweird.f32 %v793
    %vm800 = vweird.f32 %v794
    %vm801 = vmor %vm799, %vm800
    %v802 = vsel %vm801, %v794, %v798
    %v803 = vand.u32 2147483647, %v793
    %vm804 = vcmp.eq.f32.partialorder %v803, 8.507059e+37
    %v805 = vand.u32 %v793, 2147483648
    %v806 = vor.u32 1.1754944e-38, %v805
    %v807 = vsel %vm804, %v806, %v802
    %v808 = vmul.f32 1.0, %v807
    %v809 = vmul.f32 %v788, %v640
    %v810 = vmul.f32 %v769, %v789
    %v811 = vadd.f32 %v809, %v810
    %v812 = vtanh.pop %v811
    %v813 = vmul.f32 %v808, %v812
    %s814 = scalar_lea.vmem [#allocation6], 2
    %815 = vst.msk [vmem:[%s814] sm:$0x3] %vm111, %v813
    %v816 = vld [vmem:[%s206] sm:$0x3]
    %v817 = vld [vmem:[#allocation10] sm:$0xff]
    %v818 = vld [vmem:[#allocation10 + $0x8] sm:$0xff]
    %v819 = vld [vmem:[#allocation10 + $0x10] sm:$0xff]
    %v820 = vld [vmem:[#allocation10 + $0x18] sm:$0xff]
    %v822 = vsel %vm474, %v813, 0
    %824 = vmatpush.msra.mxu0 0.0
    %825 = vmatpush.msra.mxu0 0.0
    %826 = vmatpush.msra.mxu0 0.0
    %827 = vmatpush.msra.mxu0 0.0
    %828 = vmatpush.msra.mxu0 0.0
    %829 = vmatpush.msra.mxu0 0.0
    %830 = vmatpush.msra.mxu0 0.0
    %831 = vmatpush.msra.mxu0 0.0
    %832 = vmatpush.msra.mxu0 0.0
    %833 = vmatpush.msra.mxu0 0.0
    %834 = vmatpush.msra.mxu0 0.0
    %835 = vmatpush.msra.mxu0 0.0
    %836 = vmatpush.msra.mxu0 %v820
    %837 = vmatpush.msra.mxu0 %v819
    %838 = vmatpush.msra.mxu0 %v818
    %839 = vmatpush.msra.mxu0 %v817
    %840 = vmatmul.f32.gmra.mxu0 %v822
    %v841 = vpop.f32.mrf.mxu0
    %v842 = vadd.f32 0.0, %v841
    %843 = vdwg.mxu0
    %v844 = vadd.f32 %v816, %v842
    %v845 = vld [vmem:[%s212] sm:$0x3]
    %v846 = vld [vmem:[%s500] sm:$0xff]
    %v847 = vld [vmem:[%s500 + $0x8] sm:$0xff]
    %v848 = vld [vmem:[%s500 + $0x10] sm:$0xff]
    %v849 = vld [vmem:[%s500 + $0x18] sm:$0xff]
    %850 = vmatpush.msra.mxu0 0.0
    %851 = vmatpush.msra.mxu0 0.0
    %852 = vmatpush.msra.mxu0 0.0
    %853 = vmatpush.msra.mxu0 0.0
    %854 = vmatpush.msra.mxu0 0.0
    %855 = vmatpush.msra.mxu0 0.0
    %856 = vmatpush.msra.mxu0 0.0
    %857 = vmatpush.msra.mxu0 0.0
    %858 = vmatpush.msra.mxu0 0.0
    %859 = vmatpush.msra.mxu0 0.0
    %860 = vmatpush.msra.mxu0 0.0
    %861 = vmatpush.msra.mxu0 0.0
    %862 = vmatpush.msra.mxu0 %v849
    %863 = vmatpush.msra.mxu0 %v848
    %864 = vmatpush.msra.mxu0 %v847
    %865 = vmatpush.msra.mxu0 %v846
    %866 = vmatmul.f32.gmra.mxu0 %v822
    %v867 = vpop.f32.mrf.mxu0
    %v868 = vadd.f32 0.0, %v867
    %869 = vdwg.mxu0
    %v870 = vadd.f32 %v845, %v868
    %v871 = vld [vmem:[%s217] sm:$0x3]
    %v872 = vld [vmem:[%s527] sm:$0xff]
    %v873 = vld [vmem:[%s527 + $0x8] sm:$0xff]
    %v874 = vld [vmem:[%s527 + $0x10] sm:$0xff]
    %v875 = vld [vmem:[%s527 + $0x18] sm:$0xff]
    %876 = vmatpush.msra.mxu0 0.0
    %877 = vmatpush.msra.mxu0 0.0
    %878 = vmatpush.msra.mxu0 0.0
    %879 = vmatpush.msra.mxu0 0.0
    %880 = vmatpush.msra.mxu0 0.0
    %881 = vmatpush.msra.mxu0 0.0
    %882 = vmatpush.msra.mxu0 0.0
    %883 = vmatpush.msra.mxu0 0.0
    %884 = vmatpush.msra.mxu0 0.0
    %885 = vmatpush.msra.mxu0 0.0
    %886 = vmatpush.msra.mxu0 0.0
    %887 = vmatpush.msra.mxu0 0.0
    %888 = vmatpush.msra.mxu0 %v875
    %889 = vmatpush.msra.mxu0 %v874
    %890 = vmatpush.msra.mxu0 %v873
    %891 = vmatpush.msra.mxu0 %v872
    %892 = vmatmul.f32.gmra.mxu0 %v822
    %v893 = vpop.f32.mrf.mxu0
    %v894 = vadd.f32 0.0, %v893
    %895 = vdwg.mxu0
    %v896 = vadd.f32 %v871, %v894
    %v897 = vld [vmem:[%s222] sm:$0x3]
    %v898 = vld [vmem:[%s554] sm:$0xff]
    %v899 = vld [vmem:[%s554 + $0x8] sm:$0xff]
    %v900 = vld [vmem:[%s554 + $0x10] sm:$0xff]
    %v901 = vld [vmem:[%s554 + $0x18] sm:$0xff]
    %902 = vmatpush.msra.mxu0 0.0
    %903 = vmatpush.msra.mxu0 0.0
    %904 = vmatpush.msra.mxu0 0.0
    %905 = vmatpush.msra.mxu0 0.0
    %906 = vmatpush.msra.mxu0 0.0
    %907 = vmatpush.msra.mxu0 0.0
    %908 = vmatpush.msra.mxu0 0.0
    %909 = vmatpush.msra.mxu0 0.0
    %910 = vmatpush.msra.mxu0 0.0
    %911 = vmatpush.msra.mxu0 0.0
    %912 = vmatpush.msra.mxu0 0.0
    %913 = vmatpush.msra.mxu0 0.0
    %914 = vmatpush.msra.mxu0 %v901
    %915 = vmatpush.msra.mxu0 %v900
    %916 = vmatpush.msra.mxu0 %v899
    %917 = vmatpush.msra.mxu0 %v898
    %918 = vmatmul.f32.gmra.mxu0 %v822
    %v919 = vpop.f32.mrf.mxu0
    %v920 = vadd.f32 0.0, %v919
    %921 = vdwg.mxu0
    %v922 = vadd.f32 %v897, %v920
    %v923 = vxor.u32 %v844, 2147483648
    %v924 = vmul.f32 %v923, 1.442695
    %v925 = vpow.pop %v924
    %v926 = vadd.f32 %v925, 1.0
    %v927 = vrcp.pop %v926
    %v928 = vmul.f32 %v926, %v927
    %v929 = vsub.f32 1.0, %v928
    %v930 = vmul.f32 %v927, %v929
    %v931 = vadd.f32 %v927, %v930
    %vm932 = vweird.f32 %v926
    %vm933 = vweird.f32 %v927
    %vm934 = vmor %vm932, %vm933
    %v935 = vsel %vm934, %v927, %v931
    %v936 = vand.u32 2147483647, %v926
    %vm937 = vcmp.eq.f32.partialorder %v936, 8.507059e+37
    %v938 = vand.u32 %v926, 2147483648
    %v939 = vor.u32 1.1754944e-38, %v938
    %v940 = vsel %vm937, %v939, %v935
    %v941 = vmul.f32 1.0, %v940
    %v942 = vxor.u32 %v870, 2147483648
    %v943 = vmul.f32 %v942, 1.442695
    %v944 = vpow.pop %v943
    %v945 = vadd.f32 %v944, 1.0
    %v946 = vrcp.pop %v945
    %v947 = vmul.f32 %v945, %v946
    %v948 = vsub.f32 1.0, %v947
    %v949 = vmul.f32 %v946, %v948
    %v950 = vadd.f32 %v946, %v949
    %vm951 = vweird.f32 %v945
    %vm952 = vweird.f32 %v946
    %vm953 = vmor %vm951, %vm952
    %v954 = vsel %vm953, %v946, %v950
    %v955 = vand.u32 2147483647, %v945
    %vm956 = vcmp.eq.f32.partialorder %v955, 8.507059e+37
    %v957 = vand.u32 %v945, 2147483648
    %v958 = vor.u32 1.1754944e-38, %v957
    %v959 = vsel %vm956, %v958, %v954
    %v960 = vmul.f32 1.0, %v959
    %v961 = vtanh.pop %v896
    %v962 = vxor.u32 %v922, 2147483648
    %v963 = vmul.f32 %v962, 1.442695
    %v964 = vpow.pop %v963
    %v965 = vadd.f32 %v964, 1.0
    %v966 = vrcp.pop %v965
    %v967 = vmul.f32 %v965, %v966
    %v968 = vsub.f32 1.0, %v967
    %v969 = vmul.f32 %v966, %v968
    %v970 = vadd.f32 %v966, %v969
    %vm971 = vweird.f32 %v965
    %vm972 = vweird.f32 %v966
    %vm973 = vmor %vm971, %vm972
    %v974 = vsel %vm973, %v966, %v970
    %v975 = vand.u32 2147483647, %v965
    %vm976 = vcmp.eq.f32.partialorder %v975, 8.507059e+37
    %v977 = vand.u32 %v965, 2147483648
    %v978 = vor.u32 1.1754944e-38, %v977
    %v979 = vsel %vm976, %v978, %v974
    %v980 = vmul.f32 1.0, %v979
    %v981 = vmul.f32 %v960, %v811
    %v982 = vmul.f32 %v941, %v961
    %v983 = vadd.f32 %v981, %v982
    %v984 = vtanh.pop %v983
    %v985 = vmul.f32 %v980, %v984
    %s986 = scalar_lea.vmem [#allocation6], 4
    %987 = vst.msk [vmem:[%s986] sm:$0x3] %vm111, %v985
    %v988 = vld [vmem:[%s255] sm:$0x3]
    %v989 = vld [vmem:[#allocation10] sm:$0xff]
    %v990 = vld [vmem:[#allocation10 + $0x8] sm:$0xff]
    %v991 = vld [vmem:[#allocation10 + $0x10] sm:$0xff]
    %v992 = vld [vmem:[#allocation10 + $0x18] sm:$0xff]
    %v994 = vsel %vm474, %v985, 0
    %996 = vmatpush.msra.mxu0 0.0
    %997 = vmatpush.msra.mxu0 0.0
    %998 = vmatpush.msra.mxu0 0.0
    %999 = vmatpush.msra.mxu0 0.0
    %1000 = vmatpush.msra.mxu0 0.0
    %1001 = vmatpush.msra.mxu0 0.0
    %1002 = vmatpush.msra.mxu0 0.0
    %1003 = vmatpush.msra.mxu0 0.0
    %1004 = vmatpush.msra.mxu0 0.0
    %1005 = vmatpush.msra.mxu0 0.0
    %1006 = vmatpush.msra.mxu0 0.0
    %1007 = vmatpush.msra.mxu0 0.0
    %1008 = vmatpush.msra.mxu0 %v992
    %1009 = vmatpush.msra.mxu0 %v991
    %1010 = vmatpush.msra.mxu0 %v990
    %1011 = vmatpush.msra.mxu0 %v989
    %1012 = vmatmul.f32.gmra.mxu0 %v994
    %v1013 = vpop.f32.mrf.mxu0
    %v1014 = vadd.f32 0.0, %v1013
    %1015 = vdwg.mxu0
    %v1016 = vadd.f32 %v988, %v1014
    %v1017 = vld [vmem:[%s261] sm:$0x3]
    %v1018 = vld [vmem:[%s500] sm:$0xff]
    %v1019 = vld [vmem:[%s500 + $0x8] sm:$0xff]
    %v1020 = vld [vmem:[%s500 + $0x10] sm:$0xff]
    %v1021 = vld [vmem:[%s500 + $0x18] sm:$0xff]
    %1022 = vmatpush.msra.mxu0 0.0
    %1023 = vmatpush.msra.mxu0 0.0
    %1024 = vmatpush.msra.mxu0 0.0
    %1025 = vmatpush.msra.mxu0 0.0
    %1026 = vmatpush.msra.mxu0 0.0
    %1027 = vmatpush.msra.mxu0 0.0
    %1028 = vmatpush.msra.mxu0 0.0
    %1029 = vmatpush.msra.mxu0 0.0
    %1030 = vmatpush.msra.mxu0 0.0
    %1031 = vmatpush.msra.mxu0 0.0
    %1032 = vmatpush.msra.mxu0 0.0
    %1033 = vmatpush.msra.mxu0 0.0
    %1034 = vmatpush.msra.mxu0 %v1021
    %1035 = vmatpush.msra.mxu0 %v1020
    %1036 = vmatpush.msra.mxu0 %v1019
    %1037 = vmatpush.msra.mxu0 %v1018
    %1038 = vmatmul.f32.gmra.mxu0 %v994
    %v1039 = vpop.f32.mrf.mxu0
    %v1040 = vadd.f32 0.0, %v1039
    %1041 = vdwg.mxu0
    %v1042 = vadd.f32 %v1017, %v1040
    %v1043 = vld [vmem:[%s266] sm:$0x3]
    %v1044 = vld [vmem:[%s527] sm:$0xff]
    %v1045 = vld [vmem:[%s527 + $0x8] sm:$0xff]
    %v1046 = vld [vmem:[%s527 + $0x10] sm:$0xff]
    %v1047 = vld [vmem:[%s527 + $0x18] sm:$0xff]
    %1048 = vmatpush.msra.mxu0 0.0
    %1049 = vmatpush.msra.mxu0 0.0
    %1050 = vmatpush.msra.mxu0 0.0
    %1051 = vmatpush.msra.mxu0 0.0
    %1052 = vmatpush.msra.mxu0 0.0
    %1053 = vmatpush.msra.mxu0 0.0
    %1054 = vmatpush.msra.mxu0 0.0
    %1055 = vmatpush.msra.mxu0 0.0
    %1056 = vmatpush.msra.mxu0 0.0
    %1057 = vmatpush.msra.mxu0 0.0
    %1058 = vmatpush.msra.mxu0 0.0
    %1059 = vmatpush.msra.mxu0 0.0
    %1060 = vmatpush.msra.mxu0 %v1047
    %1061 = vmatpush.msra.mxu0 %v1046
    %1062 = vmatpush.msra.mxu0 %v1045
    %1063 = vmatpush.msra.mxu0 %v1044
    %1064 = vmatmul.f32.gmra.mxu0 %v994
    %v1065 = vpop.f32.mrf.mxu0
    %v1066 = vadd.f32 0.0, %v1065
    %1067 = vdwg.mxu0
    %v1068 = vadd.f32 %v1043, %v1066
    %v1069 = vld [vmem:[%s271] sm:$0x3]
    %v1070 = vld [vmem:[%s554] sm:$0xff]
    %v1071 = vld [vmem:[%s554 + $0x8] sm:$0xff]
    %v1072 = vld [vmem:[%s554 + $0x10] sm:$0xff]
    %v1073 = vld [vmem:[%s554 + $0x18] sm:$0xff]
    %1074 = vmatpush.msra.mxu0 0.0
    %1075 = vmatpush.msra.mxu0 0.0
    %1076 = vmatpush.msra.mxu0 0.0
    %1077 = vmatpush.msra.mxu0 0.0
    %1078 = vmatpush.msra.mxu0 0.0
    %1079 = vmatpush.msra.mxu0 0.0
    %1080 = vmatpush.msra.mxu0 0.0
    %1081 = vmatpush.msra.mxu0 0.0
    %1082 = vmatpush.msra.mxu0 0.0
    %1083 = vmatpush.msra.mxu0 0.0
    %1084 = vmatpush.msra.mxu0 0.0
    %1085 = vmatpush.msra.mxu0 0.0
    %1086 = vmatpush.msra.mxu0 %v1073
    %1087 = vmatpush.msra.mxu0 %v1072
    %1088 = vmatpush.msra.mxu0 %v1071
    %1089 = vmatpush.msra.mxu0 %v1070
    %1090 = vmatmul.f32.gmra.mxu0 %v994
    %v1091 = vpop.f32.mrf.mxu0
    %v1092 = vadd.f32 0.0, %v1091
    %1093 = vdwg.mxu0
    %v1094 = vadd.f32 %v1069, %v1092
    %v1095 = vxor.u32 %v1016, 2147483648
    %v1096 = vmul.f32 %v1095, 1.442695
    %v1097 = vpow.pop %v1096
    %v1098 = vadd.f32 %v1097, 1.0
    %v1099 = vrcp.pop %v1098
    %v1100 = vmul.f32 %v1098, %v1099
    %v1101 = vsub.f32 1.0, %v1100
    %v1102 = vmul.f32 %v1099, %v1101
    %v1103 = vadd.f32 %v1099, %v1102
    %vm1104 = vweird.f32 %v1098
    %vm1105 = vweird.f32 %v1099
    %vm1106 = vmor %vm1104, %vm1105
    %v1107 = vsel %vm1106, %v1099, %v1103
    %v1108 = vand.u32 2147483647, %v1098
    %vm1109 = vcmp.eq.f32.partialorder %v1108, 8.507059e+37
    %v1110 = vand.u32 %v1098, 2147483648
    %v1111 = vor.u32 1.1754944e-38, %v1110
    %v1112 = vsel %vm1109, %v1111, %v1107
    %v1113 = vmul.f32 1.0, %v1112
    %v1114 = vxor.u32 %v1042, 2147483648
    %v1115 = vmul.f32 %v1114, 1.442695
    %v1116 = vpow.pop %v1115
    %v1117 = vadd.f32 %v1116, 1.0
    %v1118 = vrcp.pop %v1117
    %v1119 = vmul.f32 %v1117, %v1118
    %v1120 = vsub.f32 1.0, %v1119
    %v1121 = vmul.f32 %v1118, %v1120
    %v1122 = vadd.f32 %v1118, %v1121
    %vm1123 = vweird.f32 %v1117
    %vm1124 = vweird.f32 %v1118
    %vm1125 = vmor %vm1123, %vm1124
    %v1126 = vsel %vm1125, %v1118, %v1122
    %v1127 = vand.u32 2147483647, %v1117
    %vm1128 = vcmp.eq.f32.partialorder %v1127, 8.507059e+37
    %v1129 = vand.u32 %v1117, 2147483648
    %v1130 = vor.u32 1.1754944e-38, %v1129
    %v1131 = vsel %vm1128, %v1130, %v1126
    %v1132 = vmul.f32 1.0, %v1131
    %v1133 = vtanh.pop %v1068
    %v1134 = vxor.u32 %v1094, 2147483648
    %v1135 = vmul.f32 %v1134, 1.442695
    %v1136 = vpow.pop %v1135
    %v1137 = vadd.f32 %v1136, 1.0
    %v1138 = vrcp.pop %v1137
    %v1139 = vmul.f32 %v1137, %v1138
    %v1140 = vsub.f32 1.0, %v1139
    %v1141 = vmul.f32 %v1138, %v1140
    %v1142 = vadd.f32 %v1138, %v1141
    %vm1143 = vweird.f32 %v1137
    %vm1144 = vweird.f32 %v1138
    %vm1145 = vmor %vm1143, %vm1144
    %v1146 = vsel %vm1145, %v1138, %v1142
    %v1147 = vand.u32 2147483647, %v1137
    %vm1148 = vcmp.eq.f32.partialorder %v1147, 8.507059e+37
    %v1149 = vand.u32 %v1137, 2147483648
    %v1150 = vor.u32 1.1754944e-38, %v1149
    %v1151 = vsel %vm1148, %v1150, %v1146
    %v1152 = vmul.f32 1.0, %v1151
    %v1153 = vmul.f32 %v1132, %v983
    %v1154 = vmul.f32 %v1113, %v1133
    %v1155 = vadd.f32 %v1153, %v1154
    %v1156 = vtanh.pop %v1155
    %v1157 = vmul.f32 %v1152, %v1156
    %s1158 = scalar_lea.vmem [#allocation6], 6
    %1159 = vst.msk [vmem:[%s1158] sm:$0x3] %vm111, %v1157
    %v1160 = vld [vmem:[%s304] sm:$0x3]
    %v1161 = vld [vmem:[#allocation10] sm:$0xff]
    %v1162 = vld [vmem:[#allocation10 + $0x8] sm:$0xff]
    %v1163 = vld [vmem:[#allocation10 + $0x10] sm:$0xff]
    %v1164 = vld [vmem:[#allocation10 + $0x18] sm:$0xff]
    %v1166 = vsel %vm474, %v1157, 0
    %1168 = vmatpush.msra.mxu0 0.0
    %1169 = vmatpush.msra.mxu0 0.0
    %1170 = vmatpush.msra.mxu0 0.0
    %1171 = vmatpush.msra.mxu0 0.0
    %1172 = vmatpush.msra.mxu0 0.0
    %1173 = vmatpush.msra.mxu0 0.0
    %1174 = vmatpush.msra.mxu0 0.0
    %1175 = vmatpush.msra.mxu0 0.0
    %1176 = vmatpush.msra.mxu0 0.0
    %1177 = vmatpush.msra.mxu0 0.0
    %1178 = vmatpush.msra.mxu0 0.0
    %1179 = vmatpush.msra.mxu0 0.0
    %1180 = vmatpush.msra.mxu0 %v1164
    %1181 = vmatpush.msra.mxu0 %v1163
    %1182 = vmatpush.msra.mxu0 %v1162
    %1183 = vmatpush.msra.mxu0 %v1161
    %1184 = vmatmul.f32.gmra.mxu0 %v1166
    %v1185 = vpop.f32.mrf.mxu0
    %v1186 = vadd.f32 0.0, %v1185
    %1187 = vdwg.mxu0
    %v1188 = vadd.f32 %v1160, %v1186
    %v1189 = vld [vmem:[%s310] sm:$0x3]
    %v1190 = vld [vmem:[%s500] sm:$0xff]
    %v1191 = vld [vmem:[%s500 + $0x8] sm:$0xff]
    %v1192 = vld [vmem:[%s500 + $0x10] sm:$0xff]
    %v1193 = vld [vmem:[%s500 + $0x18] sm:$0xff]
    %1194 = vmatpush.msra.mxu0 0.0
    %1195 = vmatpush.msra.mxu0 0.0
    %1196 = vmatpush.msra.mxu0 0.0
    %1197 = vmatpush.msra.mxu0 0.0
    %1198 = vmatpush.msra.mxu0 0.0
    %1199 = vmatpush.msra.mxu0 0.0
    %1200 = vmatpush.msra.mxu0 0.0
    %1201 = vmatpush.msra.mxu0 0.0
    %1202 = vmatpush.msra.mxu0 0.0
    %1203 = vmatpush.msra.mxu0 0.0
    %1204 = vmatpush.msra.mxu0 0.0
    %1205 = vmatpush.msra.mxu0 0.0
    %1206 = vmatpush.msra.mxu0 %v1193
    %1207 = vmatpush.msra.mxu0 %v1192
    %1208 = vmatpush.msra.mxu0 %v1191
    %1209 = vmatpush.msra.mxu0 %v1190
    %1210 = vmatmul.f32.gmra.mxu0 %v1166
    %v1211 = vpop.f32.mrf.mxu0
    %v1212 = vadd.f32 0.0, %v1211
    %1213 = vdwg.mxu0
    %v1214 = vadd.f32 %v1189, %v1212
    %v1215 = vld [vmem:[%s315] sm:$0x3]
    %v1216 = vld [vmem:[%s527] sm:$0xff]
    %v1217 = vld [vmem:[%s527 + $0x8] sm:$0xff]
    %v1218 = vld [vmem:[%s527 + $0x10] sm:$0xff]
    %v1219 = vld [vmem:[%s527 + $0x18] sm:$0xff]
    %1220 = vmatpush.msra.mxu0 0.0
    %1221 = vmatpush.msra.mxu0 0.0
    %1222 = vmatpush.msra.mxu0 0.0
    %1223 = vmatpush.msra.mxu0 0.0
    %1224 = vmatpush.msra.mxu0 0.0
    %1225 = vmatpush.msra.mxu0 0.0
    %1226 = vmatpush.msra.mxu0 0.0
    %1227 = vmatpush.msra.mxu0 0.0
    %1228 = vmatpush.msra.mxu0 0.0
    %1229 = vmatpush.msra.mxu0 0.0
    %1230 = vmatpush.msra.mxu0 0.0
    %1231 = vmatpush.msra.mxu0 0.0
    %1232 = vmatpush.msra.mxu0 %v1219
    %1233 = vmatpush.msra.mxu0 %v1218
    %1234 = vmatpush.msra.mxu0 %v1217
    %1235 = vmatpush.msra.mxu0 %v1216
    %1236 = vmatmul.f32.gmra.mxu0 %v1166
    %v1237 = vpop.f32.mrf.mxu0
    %v1238 = vadd.f32 0.0, %v1237
    %1239 = vdwg.mxu0
    %v1240 = vadd.f32 %v1215, %v1238
    %v1241 = vld [vmem:[%s320] sm:$0x3]
    %v1242 = vld [vmem:[%s554] sm:$0xff]
    %v1243 = vld [vmem:[%s554 + $0x8] sm:$0xff]
    %v1244 = vld [vmem:[%s554 + $0x10] sm:$0xff]
    %v1245 = vld [vmem:[%s554 + $0x18] sm:$0xff]
    %1246 = vmatpush.msra.mxu0 0.0
    %1247 = vmatpush.msra.mxu0 0.0
    %1248 = vmatpush.msra.mxu0 0.0
    %1249 = vmatpush.msra.mxu0 0.0
    %1250 = vmatpush.msra.mxu0 0.0
    %1251 = vmatpush.msra.mxu0 0.0
    %1252 = vmatpush.msra.mxu0 0.0
    %1253 = vmatpush.msra.mxu0 0.0
    %1254 = vmatpush.msra.mxu0 0.0
    %1255 = vmatpush.msra.mxu0 0.0
    %1256 = vmatpush.msra.mxu0 0.0
    %1257 = vmatpush.msra.mxu0 0.0
    %1258 = vmatpush.msra.mxu0 %v1245
    %1259 = vmatpush.msra.mxu0 %v1244
    %1260 = vmatpush.msra.mxu0 %v1243
    %1261 = vmatpush.msra.mxu0 %v1242
    %1262 = vmatmul.f32.gmra.mxu0 %v1166
    %v1263 = vpop.f32.mrf.mxu0
    %v1264 = vadd.f32 0.0, %v1263
    %1265 = vdwg.mxu0
    %v1266 = vadd.f32 %v1241, %v1264
    %v1267 = vxor.u32 %v1188, 2147483648
    %v1268 = vmul.f32 %v1267, 1.442695
    %v1269 = vpow.pop %v1268
    %v1270 = vadd.f32 %v1269, 1.0
    %v1271 = vrcp.pop %v1270
    %v1272 = vmul.f32 %v1270, %v1271
    %v1273 = vsub.f32 1.0, %v1272
    %v1274 = vmul.f32 %v1271, %v1273
    %v1275 = vadd.f32 %v1271, %v1274
    %vm1276 = vweird.f32 %v1270
    %vm1277 = vweird.f32 %v1271
    %vm1278 = vmor %vm1276, %vm1277
    %v1279 = vsel %vm1278, %v1271, %v1275
    %v1280 = vand.u32 2147483647, %v1270
    %vm1281 = vcmp.eq.f32.partialorder %v1280, 8.507059e+37
    %v1282 = vand.u32 %v1270, 2147483648
    %v1283 = vor.u32 1.1754944e-38, %v1282
    %v1284 = vsel %vm1281, %v1283, %v1279
    %v1285 = vmul.f32 1.0, %v1284
    %v1286 = vxor.u32 %v1214, 2147483648
    %v1287 = vmul.f32 %v1286, 1.442695
    %v1288 = vpow.pop %v1287
    %v1289 = vadd.f32 %v1288, 1.0
    %v1290 = vrcp.pop %v1289
    %v1291 = vmul.f32 %v1289, %v1290
    %v1292 = vsub.f32 1.0, %v1291
    %v1293 = vmul.f32 %v1290, %v1292
    %v1294 = vadd.f32 %v1290, %v1293
    %vm1295 = vweird.f32 %v1289
    %vm1296 = vweird.f32 %v1290
    %vm1297 = vmor %vm1295, %vm1296
    %v1298 = vsel %vm1297, %v1290, %v1294
    %v1299 = vand.u32 2147483647, %v1289
    %vm1300 = vcmp.eq.f32.partialorder %v1299, 8.507059e+37
    %v1301 = vand.u32 %v1289, 2147483648
    %v1302 = vor.u32 1.1754944e-38, %v1301
    %v1303 = vsel %vm1300, %v1302, %v1298
    %v1304 = vmul.f32 1.0, %v1303
    %v1305 = vtanh.pop %v1240
    %v1306 = vxor.u32 %v1266, 2147483648
    %v1307 = vmul.f32 %v1306, 1.442695
    %v1308 = vpow.pop %v1307
    %v1309 = vadd.f32 %v1308, 1.0
    %v1310 = vrcp.pop %v1309
    %v1311 = vmul.f32 %v1309, %v1310
    %v1312 = vsub.f32 1.0, %v1311
    %v1313 = vmul.f32 %v1310, %v1312
    %v1314 = vadd.f32 %v1310, %v1313
    %vm1315 = vweird.f32 %v1309
    %vm1316 = vweird.f32 %v1310
    %vm1317 = vmor %vm1315, %vm1316
    %v1318 = vsel %vm1317, %v1310, %v1314
    %v1319 = vand.u32 2147483647, %v1309
    %vm1320 = vcmp.eq.f32.partialorder %v1319, 8.507059e+37
    %v1321 = vand.u32 %v1309, 2147483648
    %v1322 = vor.u32 1.1754944e-38, %v1321
    %v1323 = vsel %vm1320, %v1322, %v1318
    %v1324 = vmul.f32 1.0, %v1323
    %v1325 = vmul.f32 %v1304, %v1155
    %v1326 = vmul.f32 %v1285, %v1305
    %v1327 = vadd.f32 %v1325, %v1326
    %v1328 = vtanh.pop %v1327
    %v1329 = vmul.f32 %v1324, %v1328
    %s1330 = scalar_lea.vmem [#allocation6], 8
    %1331 = vst.msk [vmem:[%s1330] sm:$0x3] %vm111, %v1329
    %v1332 = vld [vmem:[%s353] sm:$0x3]
    %v1333 = vld [vmem:[#allocation10] sm:$0xff]
    %v1334 = vld [vmem:[#allocation10 + $0x8] sm:$0xff]
    %v1335 = vld [vmem:[#allocation10 + $0x10] sm:$0xff]
    %v1336 = vld [vmem:[#allocation10 + $0x18] sm:$0xff]
    %v1338 = vsel %vm474, %v1329, 0
    %1340 = vmatpush.msra.mxu0 0.0
    %1341 = vmatpush.msra.mxu0 0.0
    %1342 = vmatpush.msra.mxu0 0.0
    %1343 = vmatpush.msra.mxu0 0.0
    %1344 = vmatpush.msra.mxu0 0.0
    %1345 = vmatpush.msra.mxu0 0.0
    %1346 = vmatpush.msra.mxu0 0.0
    %1347 = vmatpush.msra.mxu0 0.0
    %1348 = vmatpush.msra.mxu0 0.0
    %1349 = vmatpush.msra.mxu0 0.0
    %1350 = vmatpush.msra.mxu0 0.0
    %1351 = vmatpush.msra.mxu0 0.0
    %1352 = vmatpush.msra.mxu0 %v1336
    %1353 = vmatpush.msra.mxu0 %v1335
    %1354 = vmatpush.msra.mxu0 %v1334
    %1355 = vmatpush.msra.mxu0 %v1333
    %1356 = vmatmul.f32.gmra.mxu0 %v1338
    %v1357 = vpop.f32.mrf.mxu0
    %v1358 = vadd.f32 0.0, %v1357
    %1359 = vdwg.mxu0
    %v1360 = vadd.f32 %v1332, %v1358
    %v1361 = vld [vmem:[%s359] sm:$0x3]
    %v1362 = vld [vmem:[%s500] sm:$0xff]
    %v1363 = vld [vmem:[%s500 + $0x8] sm:$0xff]
    %v1364 = vld [vmem:[%s500 + $0x10] sm:$0xff]
    %v1365 = vld [vmem:[%s500 + $0x18] sm:$0xff]
    %1366 = vmatpush.msra.mxu0 0.0
    %1367 = vmatpush.msra.mxu0 0.0
    %1368 = vmatpush.msra.mxu0 0.0
    %1369 = vmatpush.msra.mxu0 0.0
    %1370 = vmatpush.msra.mxu0 0.0
    %1371 = vmatpush.msra.mxu0 0.0
    %1372 = vmatpush.msra.mxu0 0.0
    %1373 = vmatpush.msra.mxu0 0.0
    %1374 = vmatpush.msra.mxu0 0.0
    %1375 = vmatpush.msra.mxu0 0.0
    %1376 = vmatpush.msra.mxu0 0.0
    %1377 = vmatpush.msra.mxu0 0.0
    %1378 = vmatpush.msra.mxu0 %v1365
    %1379 = vmatpush.msra.mxu0 %v1364
    %1380 = vmatpush.msra.mxu0 %v1363
    %1381 = vmatpush.msra.mxu0 %v1362
    %1382 = vmatmul.f32.gmra.mxu0 %v1338
    %v1383 = vpop.f32.mrf.mxu0
    %v1384 = vadd.f32 0.0, %v1383
    %1385 = vdwg.mxu0
    %v1386 = vadd.f32 %v1361, %v1384
    %v1387 = vld [vmem:[%s364] sm:$0x3]
    %v1388 = vld [vmem:[%s527] sm:$0xff]
    %v1389 = vld [vmem:[%s527 + $0x8] sm:$0xff]
    %v1390 = vld [vmem:[%s527 + $0x10] sm:$0xff]
    %v1391 = vld [vmem:[%s527 + $0x18] sm:$0xff]
    %1392 = vmatpush.msra.mxu0 0.0
    %1393 = vmatpush.msra.mxu0 0.0
    %1394 = vmatpush.msra.mxu0 0.0
    %1395 = vmatpush.msra.mxu0 0.0
    %1396 = vmatpush.msra.mxu0 0.0
    %1397 = vmatpush.msra.mxu0 0.0
    %1398 = vmatpush.msra.mxu0 0.0
    %1399 = vmatpush.msra.mxu0 0.0
    %1400 = vmatpush.msra.mxu0 0.0
    %1401 = vmatpush.msra.mxu0 0.0
    %1402 = vmatpush.msra.mxu0 0.0
    %1403 = vmatpush.msra.mxu0 0.0
    %1404 = vmatpush.msra.mxu0 %v1391
    %1405 = vmatpush.msra.mxu0 %v1390
    %1406 = vmatpush.msra.mxu0 %v1389
    %1407 = vmatpush.msra.mxu0 %v1388
    %1408 = vmatmul.f32.gmra.mxu0 %v1338
    %v1409 = vpop.f32.mrf.mxu0
    %v1410 = vadd.f32 0.0, %v1409
    %1411 = vdwg.mxu0
    %v1412 = vadd.f32 %v1387, %v1410
    %v1413 = vld [vmem:[%s369] sm:$0x3]
    %v1414 = vld [vmem:[%s554] sm:$0xff]
    %v1415 = vld [vmem:[%s554 + $0x8] sm:$0xff]
    %v1416 = vld [vmem:[%s554 + $0x10] sm:$0xff]
    %v1417 = vld [vmem:[%s554 + $0x18] sm:$0xff]
    %1418 = vmatpush.msra.mxu0 0.0
    %1419 = vmatpush.msra.mxu0 0.0
    %1420 = vmatpush.msra.mxu0 0.0
    %1421 = vmatpush.msra.mxu0 0.0
    %1422 = vmatpush.msra.mxu0 0.0
    %1423 = vmatpush.msra.mxu0 0.0
    %1424 = vmatpush.msra.mxu0 0.0
    %1425 = vmatpush.msra.mxu0 0.0
    %1426 = vmatpush.msra.mxu0 0.0
    %1427 = vmatpush.msra.mxu0 0.0
    %1428 = vmatpush.msra.mxu0 0.0
    %1429 = vmatpush.msra.mxu0 0.0
    %1430 = vmatpush.msra.mxu0 %v1417
    %1431 = vmatpush.msra.mxu0 %v1416
    %1432 = vmatpush.msra.mxu0 %v1415
    %1433 = vmatpush.msra.mxu0 %v1414
    %1434 = vmatmul.f32.gmra.mxu0 %v1338
    %v1435 = vpop.f32.mrf.mxu0
    %v1436 = vadd.f32 0.0, %v1435
    %1437 = vdwg.mxu0
    %v1438 = vadd.f32 %v1413, %v1436
    %v1439 = vxor.u32 %v1360, 2147483648
    %v1440 = vmul.f32 %v1439, 1.442695
    %v1441 = vpow.pop %v1440
    %v1442 = vadd.f32 %v1441, 1.0
    %v1443 = vrcp.pop %v1442
    %v1444 = vmul.f32 %v1442, %v1443
    %v1445 = vsub.f32 1.0, %v1444
    %v1446 = vmul.f32 %v1443, %v1445
    %v1447 = vadd.f32 %v1443, %v1446
    %vm1448 = vweird.f32 %v1442
    %vm1449 = vweird.f32 %v1443
    %vm1450 = vmor %vm1448, %vm1449
    %v1451 = vsel %vm1450, %v1443, %v1447
    %v1452 = vand.u32 2147483647, %v1442
    %vm1453 = vcmp.eq.f32.partialorder %v1452, 8.507059e+37
    %v1454 = vand.u32 %v1442, 2147483648
    %v1455 = vor.u32 1.1754944e-38, %v1454
    %v1456 = vsel %vm1453, %v1455, %v1451
    %v1457 = vmul.f32 1.0, %v1456
    %v1458 = vxor.u32 %v1386, 2147483648
    %v1459 = vmul.f32 %v1458, 1.442695
    %v1460 = vpow.pop %v1459
    %v1461 = vadd.f32 %v1460, 1.0
    %v1462 = vrcp.pop %v1461
    %v1463 = vmul.f32 %v1461, %v1462
    %v1464 = vsub.f32 1.0, %v1463
    %v1465 = vmul.f32 %v1462, %v1464
    %v1466 = vadd.f32 %v1462, %v1465
    %vm1467 = vweird.f32 %v1461
    %vm1468 = vweird.f32 %v1462
    %vm1469 = vmor %vm1467, %vm1468
    %v1470 = vsel %vm1469, %v1462, %v1466
    %v1471 = vand.u32 2147483647, %v1461
    %vm1472 = vcmp.eq.f32.partialorder %v1471, 8.507059e+37
    %v1473 = vand.u32 %v1461, 2147483648
    %v1474 = vor.u32 1.1754944e-38, %v1473
    %v1475 = vsel %vm1472, %v1474, %v1470
    %v1476 = vmul.f32 1.0, %v1475
    %v1477 = vtanh.pop %v1412
    %v1478 = vxor.u32 %v1438, 2147483648
    %v1479 = vmul.f32 %v1478, 1.442695
    %v1480 = vpow.pop %v1479
    %v1481 = vadd.f32 %v1480, 1.0
    %v1482 = vrcp.pop %v1481
    %v1483 = vmul.f32 %v1481, %v1482
    %v1484 = vsub.f32 1.0, %v1483
    %v1485 = vmul.f32 %v1482, %v1484
    %v1486 = vadd.f32 %v1482, %v1485
    %vm1487 = vweird.f32 %v1481
    %vm1488 = vweird.f32 %v1482
    %vm1489 = vmor %vm1487, %vm1488
    %v1490 = vsel %vm1489, %v1482, %v1486
    %v1491 = vand.u32 2147483647, %v1481
    %vm1492 = vcmp.eq.f32.partialorder %v1491, 8.507059e+37
    %v1493 = vand.u32 %v1481, 2147483648
    %v1494 = vor.u32 1.1754944e-38, %v1493
    %v1495 = vsel %vm1492, %v1494, %v1490
    %v1496 = vmul.f32 1.0, %v1495
    %v1497 = vmul.f32 %v1476, %v1327
    %v1498 = vmul.f32 %v1457, %v1477
    %v1499 = vadd.f32 %v1497, %v1498
    %v1500 = vtanh.pop %v1499
    %v1501 = vmul.f32 %v1496, %v1500
    %s1502 = scalar_lea.vmem [#allocation6], 10
    %1503 = vst.msk [vmem:[%s1502] sm:$0x3] %vm111, %v1501
    %v1504 = vld [vmem:[%s402] sm:$0x3]
    %v1505 = vld [vmem:[#allocation10] sm:$0xff]
    %v1506 = vld [vmem:[#allocation10 + $0x8] sm:$0xff]
    %v1507 = vld [vmem:[#allocation10 + $0x10] sm:$0xff]
    %v1508 = vld [vmem:[#allocation10 + $0x18] sm:$0xff]
    %v1510 = vsel %vm474, %v1501, 0
    %1512 = vmatpush.msra.mxu0 0.0
    %1513 = vmatpush.msra.mxu0 0.0
    %1514 = vmatpush.msra.mxu0 0.0
    %1515 = vmatpush.msra.mxu0 0.0
    %1516 = vmatpush.msra.mxu0 0.0
    %1517 = vmatpush.msra.mxu0 0.0
    %1518 = vmatpush.msra.mxu0 0.0
    %1519 = vmatpush.msra.mxu0 0.0
    %1520 = vmatpush.msra.mxu0 0.0
    %1521 = vmatpush.msra.mxu0 0.0
    %1522 = vmatpush.msra.mxu0 0.0
    %1523 = vmatpush.msra.mxu0 0.0
    %1524 = vmatpush.msra.mxu0 %v1508
    %1525 = vmatpush.msra.mxu0 %v1507
    %1526 = vmatpush.msra.mxu0 %v1506
    %1527 = vmatpush.msra.mxu0 %v1505
    %1528 = vmatmul.f32.gmra.mxu0 %v1510
    %v1529 = vpop.f32.mrf.mxu0
    %v1530 = vadd.f32 0.0, %v1529
    %1531 = vdwg.mxu0
    %v1532 = vadd.f32 %v1504, %v1530
    %v1533 = vld [vmem:[%s408] sm:$0x3]
    %v1534 = vld [vmem:[%s500] sm:$0xff]
    %v1535 = vld [vmem:[%s500 + $0x8] sm:$0xff]
    %v1536 = vld [vmem:[%s500 + $0x10] sm:$0xff]
    %v1537 = vld [vmem:[%s500 + $0x18] sm:$0xff]
    %1538 = vmatpush.msra.mxu0 0.0
    %1539 = vmatpush.msra.mxu0 0.0
    %1540 = vmatpush.msra.mxu0 0.0
    %1541 = vmatpush.msra.mxu0 0.0
    %1542 = vmatpush.msra.mxu0 0.0
    %1543 = vmatpush.msra.mxu0 0.0
    %1544 = vmatpush.msra.mxu0 0.0
    %1545 = vmatpush.msra.mxu0 0.0
    %1546 = vmatpush.msra.mxu0 0.0
    %1547 = vmatpush.msra.mxu0 0.0
    %1548 = vmatpush.msra.mxu0 0.0
    %1549 = vmatpush.msra.mxu0 0.0
    %1550 = vmatpush.msra.mxu0 %v1537
    %1551 = vmatpush.msra.mxu0 %v1536
    %1552 = vmatpush.msra.mxu0 %v1535
    %1553 = vmatpush.msra.mxu0 %v1534
    %1554 = vmatmul.f32.gmra.mxu0 %v1510
    %v1555 = vpop.f32.mrf.mxu0
    %v1556 = vadd.f32 0.0, %v1555
    %1557 = vdwg.mxu0
    %v1558 = vadd.f32 %v1533, %v1556
    %v1559 = vld [vmem:[%s413] sm:$0x3]
    %v1560 = vld [vmem:[%s527] sm:$0xff]
    %v1561 = vld [vmem:[%s527 + $0x8] sm:$0xff]
    %v1562 = vld [vmem:[%s527 + $0x10] sm:$0xff]
    %v1563 = vld [vmem:[%s527 + $0x18] sm:$0xff]
    %1564 = vmatpush.msra.mxu0 0.0
    %1565 = vmatpush.msra.mxu0 0.0
    %1566 = vmatpush.msra.mxu0 0.0
    %1567 = vmatpush.msra.mxu0 0.0
    %1568 = vmatpush.msra.mxu0 0.0
    %1569 = vmatpush.msra.mxu0 0.0
    %1570 = vmatpush.msra.mxu0 0.0
    %1571 = vmatpush.msra.mxu0 0.0
    %1572 = vmatpush.msra.mxu0 0.0
    %1573 = vmatpush.msra.mxu0 0.0
    %1574 = vmatpush.msra.mxu0 0.0
    %1575 = vmatpush.msra.mxu0 0.0
    %1576 = vmatpush.msra.mxu0 %v1563
    %1577 = vmatpush.msra.mxu0 %v1562
    %1578 = vmatpush.msra.mxu0 %v1561
    %1579 = vmatpush.msra.mxu0 %v1560
    %1580 = vmatmul.f32.gmra.mxu0 %v1510
    %v1581 = vpop.f32.mrf.mxu0
    %v1582 = vadd.f32 0.0, %v1581
    %1583 = vdwg.mxu0
    %v1584 = vadd.f32 %v1559, %v1582
    %v1585 = vld [vmem:[%s418] sm:$0x3]
    %v1586 = vld [vmem:[%s554] sm:$0xff]
    %v1587 = vld [vmem:[%s554 + $0x8] sm:$0xff]
    %v1588 = vld [vmem:[%s554 + $0x10] sm:$0xff]
    %v1589 = vld [vmem:[%s554 + $0x18] sm:$0xff]
    %1590 = vmatpush.msra.mxu0 0.0
    %1591 = vmatpush.msra.mxu0 0.0
    %1592 = vmatpush.msra.mxu0 0.0
    %1593 = vmatpush.msra.mxu0 0.0
    %1594 = vmatpush.msra.mxu0 0.0
    %1595 = vmatpush.msra.mxu0 0.0
    %1596 = vmatpush.msra.mxu0 0.0
    %1597 = vmatpush.msra.mxu0 0.0
    %1598 = vmatpush.msra.mxu0 0.0
    %1599 = vmatpush.msra.mxu0 0.0
    %1600 = vmatpush.msra.mxu0 0.0
    %1601 = vmatpush.msra.mxu0 0.0
    %1602 = vmatpush.msra.mxu0 %v1589
    %1603 = vmatpush.msra.mxu0 %v1588
    %1604 = vmatpush.msra.mxu0 %v1587
    %1605 = vmatpush.msra.mxu0 %v1586
    %1606 = vmatmul.f32.gmra.mxu0 %v1510
    %v1607 = vpop.f32.mrf.mxu0
    %v1608 = vadd.f32 0.0, %v1607
    %1609 = vdwg.mxu0
    %v1610 = vadd.f32 %v1585, %v1608
    %v1611 = vxor.u32 %v1532, 2147483648
    %v1612 = vmul.f32 %v1611, 1.442695
    %v1613 = vpow.pop %v1612
    %v1614 = vadd.f32 %v1613, 1.0
    %v1615 = vrcp.pop %v1614
    %v1616 = vmul.f32 %v1614, %v1615
    %v1617 = vsub.f32 1.0, %v1616
    %v1618 = vmul.f32 %v1615, %v1617
    %v1619 = vadd.f32 %v1615, %v1618
    %vm1620 = vweird.f32 %v1614
    %vm1621 = vweird.f32 %v1615
    %vm1622 = vmor %vm1620, %vm1621
    %v1623 = vsel %vm1622, %v1615, %v1619
    %v1624 = vand.u32 2147483647, %v1614
    %vm1625 = vcmp.eq.f32.partialorder %v1624, 8.507059e+37
    %v1626 = vand.u32 %v1614, 2147483648
    %v1627 = vor.u32 1.1754944e-38, %v1626
    %v1628 = vsel %vm1625, %v1627, %v1623
    %v1629 = vmul.f32 1.0, %v1628
    %v1630 = vxor.u32 %v1558, 2147483648
    %v1631 = vmul.f32 %v1630, 1.442695
    %v1632 = vpow.pop %v1631
    %v1633 = vadd.f32 %v1632, 1.0
    %v1634 = vrcp.pop %v1633
    %v1635 = vmul.f32 %v1633, %v1634
    %v1636 = vsub.f32 1.0, %v1635
    %v1637 = vmul.f32 %v1634, %v1636
    %v1638 = vadd.f32 %v1634, %v1637
    %vm1639 = vweird.f32 %v1633
    %vm1640 = vweird.f32 %v1634
    %vm1641 = vmor %vm1639, %vm1640
    %v1642 = vsel %vm1641, %v1634, %v1638
    %v1643 = vand.u32 2147483647, %v1633
    %vm1644 = vcmp.eq.f32.partialorder %v1643, 8.507059e+37
    %v1645 = vand.u32 %v1633, 2147483648
    %v1646 = vor.u32 1.1754944e-38, %v1645
    %v1647 = vsel %vm1644, %v1646, %v1642
    %v1648 = vmul.f32 1.0, %v1647
    %v1649 = vtanh.pop %v1584
    %v1650 = vxor.u32 %v1610, 2147483648
    %v1651 = vmul.f32 %v1650, 1.442695
    %v1652 = vpow.pop %v1651
    %v1653 = vadd.f32 %v1652, 1.0
    %v1654 = vrcp.pop %v1653
    %v1655 = vmul.f32 %v1653, %v1654
    %v1656 = vsub.f32 1.0, %v1655
    %v1657 = vmul.f32 %v1654, %v1656
    %v1658 = vadd.f32 %v1654, %v1657
    %vm1659 = vweird.f32 %v1653
    %vm1660 = vweird.f32 %v1654
    %vm1661 = vmor %vm1659, %vm1660
    %v1662 = vsel %vm1661, %v1654, %v1658
    %v1663 = vand.u32 2147483647, %v1653
    %vm1664 = vcmp.eq.f32.partialorder %v1663, 8.507059e+37
    %v1665 = vand.u32 %v1653, 2147483648
    %v1666 = vor.u32 1.1754944e-38, %v1665
    %v1667 = vsel %vm1664, %v1666, %v1662
    %v1668 = vmul.f32 1.0, %v1667
    %v1669 = vmul.f32 %v1648, %v1499
    %v1670 = vmul.f32 %v1629, %v1649
    %v1671 = vadd.f32 %v1669, %v1670
    %v1672 = vtanh.pop %v1671
    %v1673 = vmul.f32 %v1668, %v1672
    %s1674 = scalar_lea.vmem [#allocation6], 12
    %1675 = vst.msk [vmem:[%s1674] sm:$0x3] %vm111, %v1673
    %v1676 = vld [vmem:[%s451] sm:$0x3]
    %v1677 = vld [vmem:[#allocation10] sm:$0xff]
    %v1678 = vld [vmem:[#allocation10 + $0x8] sm:$0xff]
    %v1679 = vld [vmem:[#allocation10 + $0x10] sm:$0xff]
    %v1680 = vld [vmem:[#allocation10 + $0x18] sm:$0xff]
    %v1682 = vsel %vm474, %v1673, 0
    %1684 = vmatpush.msra.mxu0 0.0
    %1685 = vmatpush.msra.mxu0 0.0
    %1686 = vmatpush.msra.mxu0 0.0
    %1687 = vmatpush.msra.mxu0 0.0
    %1688 = vmatpush.msra.mxu0 0.0
    %1689 = vmatpush.msra.mxu0 0.0
    %1690 = vmatpush.msra.mxu0 0.0
    %1691 = vmatpush.msra.mxu0 0.0
    %1692 = vmatpush.msra.mxu0 0.0
    %1693 = vmatpush.msra.mxu0 0.0
    %1694 = vmatpush.msra.mxu0 0.0
    %1695 = vmatpush.msra.mxu0 0.0
    %1696 = vmatpush.msra.mxu0 %v1680
    %1697 = vmatpush.msra.mxu0 %v1679
    %1698 = vmatpush.msra.mxu0 %v1678
    %1699 = vmatpush.msra.mxu0 %v1677
    %1700 = vmatmul.f32.gmra.mxu0 %v1682
    %v1701 = vpop.f32.mrf.mxu0
    %v1702 = vadd.f32 0.0, %v1701
    %1703 = vdwg.mxu0
    %v1704 = vadd.f32 %v1676, %v1702
    %v1705 = vld [vmem:[%s457] sm:$0x3]
    %v1706 = vld [vmem:[%s500] sm:$0xff]
    %v1707 = vld [vmem:[%s500 + $0x8] sm:$0xff]
    %v1708 = vld [vmem:[%s500 + $0x10] sm:$0xff]
    %v1709 = vld [vmem:[%s500 + $0x18] sm:$0xff]
    %1710 = vmatpush.msra.mxu0 0.0
    %1711 = vmatpush.msra.mxu0 0.0
    %1712 = vmatpush.msra.mxu0 0.0
    %1713 = vmatpush.msra.mxu0 0.0
    %1714 = vmatpush.msra.mxu0 0.0
    %1715 = vmatpush.msra.mxu0 0.0
    %1716 = vmatpush.msra.mxu0 0.0
    %1717 = vmatpush.msra.mxu0 0.0
    %1718 = vmatpush.msra.mxu0 0.0
    %1719 = vmatpush.msra.mxu0 0.0
    %1720 = vmatpush.msra.mxu0 0.0
    %1721 = vmatpush.msra.mxu0 0.0
    %1722 = vmatpush.msra.mxu0 %v1709
    %1723 = vmatpush.msra.mxu0 %v1708
    %1724 = vmatpush.msra.mxu0 %v1707
    %1725 = vmatpush.msra.mxu0 %v1706
    %1726 = vmatmul.f32.gmra.mxu0 %v1682
    %v1727 = vpop.f32.mrf.mxu0
    %v1728 = vadd.f32 0.0, %v1727
    %1729 = vdwg.mxu0
    %v1730 = vadd.f32 %v1705, %v1728
    %v1731 = vld [vmem:[%s462] sm:$0x3]
    %v1732 = vld [vmem:[%s527] sm:$0xff]
    %v1733 = vld [vmem:[%s527 + $0x8] sm:$0xff]
    %v1734 = vld [vmem:[%s527 + $0x10] sm:$0xff]
    %v1735 = vld [vmem:[%s527 + $0x18] sm:$0xff]
    %1736 = vmatpush.msra.mxu0 0.0
    %1737 = vmatpush.msra.mxu0 0.0
    %1738 = vmatpush.msra.mxu0 0.0
    %1739 = vmatpush.msra.mxu0 0.0
    %1740 = vmatpush.msra.mxu0 0.0
    %1741 = vmatpush.msra.mxu0 0.0
    %1742 = vmatpush.msra.mxu0 0.0
    %1743 = vmatpush.msra.mxu0 0.0
    %1744 = vmatpush.msra.mxu0 0.0
    %1745 = vmatpush.msra.mxu0 0.0
    %1746 = vmatpush.msra.mxu0 0.0
    %1747 = vmatpush.msra.mxu0 0.0
    %1748 = vmatpush.msra.mxu0 %v1735
    %1749 = vmatpush.msra.mxu0 %v1734
    %1750 = vmatpush.msra.mxu0 %v1733
    %1751 = vmatpush.msra.mxu0 %v1732
    %1752 = vmatmul.f32.gmra.mxu0 %v1682
    %v1753 = vpop.f32.mrf.mxu0
    %v1754 = vadd.f32 0.0, %v1753
    %1755 = vdwg.mxu0
    %v1756 = vadd.f32 %v1731, %v1754
    %v1757 = vld [vmem:[%s467] sm:$0x3]
    %v1758 = vld [vmem:[%s554] sm:$0xff]
    %v1759 = vld [vmem:[%s554 + $0x8] sm:$0xff]
    %v1760 = vld [vmem:[%s554 + $0x10] sm:$0xff]
    %v1761 = vld [vmem:[%s554 + $0x18] sm:$0xff]
    %1762 = vmatpush.msra.mxu0 0.0
    %1763 = vmatpush.msra.mxu0 0.0
    %1764 = vmatpush.msra.mxu0 0.0
    %1765 = vmatpush.msra.mxu0 0.0
    %1766 = vmatpush.msra.mxu0 0.0
    %1767 = vmatpush.msra.mxu0 0.0
    %1768 = vmatpush.msra.mxu0 0.0
    %1769 = vmatpush.msra.mxu0 0.0
    %1770 = vmatpush.msra.mxu0 0.0
    %1771 = vmatpush.msra.mxu0 0.0
    %1772 = vmatpush.msra.mxu0 0.0
    %1773 = vmatpush.msra.mxu0 0.0
    %1774 = vmatpush.msra.mxu0 %v1761
    %1775 = vmatpush.msra.mxu0 %v1760
    %1776 = vmatpush.msra.mxu0 %v1759
    %1777 = vmatpush.msra.mxu0 %v1758
    %1778 = vmatmul.f32.gmra.mxu0 %v1682
    %v1779 = vpop.f32.mrf.mxu0
    %v1780 = vadd.f32 0.0, %v1779
    %1781 = vdwg.mxu0
    %v1782 = vadd.f32 %v1757, %v1780
    %v1783 = vxor.u32 %v1704, 2147483648
    %v1784 = vmul.f32 %v1783, 1.442695
    %v1785 = vpow.pop %v1784
    %v1786 = vadd.f32 %v1785, 1.0
    %v1787 = vrcp.pop %v1786
    %v1788 = vmul.f32 %v1786, %v1787
    %v1789 = vsub.f32 1.0, %v1788
    %v1790 = vmul.f32 %v1787, %v1789
    %v1791 = vadd.f32 %v1787, %v1790
    %vm1792 = vweird.f32 %v1786
    %vm1793 = vweird.f32 %v1787
    %vm1794 = vmor %vm1792, %vm1793
    %v1795 = vsel %vm1794, %v1787, %v1791
    %v1796 = vand.u32 2147483647, %v1786
    %vm1797 = vcmp.eq.f32.partialorder %v1796, 8.507059e+37
    %v1798 = vand.u32 %v1786, 2147483648
    %v1799 = vor.u32 1.1754944e-38, %v1798
    %v1800 = vsel %vm1797, %v1799, %v1795
    %v1801 = vmul.f32 1.0, %v1800
    %v1802 = vxor.u32 %v1730, 2147483648
    %v1803 = vmul.f32 %v1802, 1.442695
    %v1804 = vpow.pop %v1803
    %v1805 = vadd.f32 %v1804, 1.0
    %v1806 = vrcp.pop %v1805
    %v1807 = vmul.f32 %v1805, %v1806
    %v1808 = vsub.f32 1.0, %v1807
    %v1809 = vmul.f32 %v1806, %v1808
    %v1810 = vadd.f32 %v1806, %v1809
    %vm1811 = vweird.f32 %v1805
    %vm1812 = vweird.f32 %v1806
    %vm1813 = vmor %vm1811, %vm1812
    %v1814 = vsel %vm1813, %v1806, %v1810
    %v1815 = vand.u32 2147483647, %v1805
    %vm1816 = vcmp.eq.f32.partialorder %v1815, 8.507059e+37
    %v1817 = vand.u32 %v1805, 2147483648
    %v1818 = vor.u32 1.1754944e-38, %v1817
    %v1819 = vsel %vm1816, %v1818, %v1814
    %v1820 = vmul.f32 1.0, %v1819
    %v1821 = vtanh.pop %v1756
    %v1822 = vxor.u32 %v1782, 2147483648
    %v1823 = vmul.f32 %v1822, 1.442695
    %v1824 = vpow.pop %v1823
    %v1825 = vadd.f32 %v1824, 1.0
    %v1826 = vrcp.pop %v1825
    %v1827 = vmul.f32 %v1825, %v1826
    %v1828 = vsub.f32 1.0, %v1827
    %v1829 = vmul.f32 %v1826, %v1828
    %v1830 = vadd.f32 %v1826, %v1829
    %vm1831 = vweird.f32 %v1825
    %vm1832 = vweird.f32 %v1826
    %vm1833 = vmor %vm1831, %vm1832
    %v1834 = vsel %vm1833, %v1826, %v1830
    %v1835 = vand.u32 2147483647, %v1825
    %vm1836 = vcmp.eq.f32.partialorder %v1835, 8.507059e+37
    %v1837 = vand.u32 %v1825, 2147483648
    %v1838 = vor.u32 1.1754944e-38, %v1837
    %v1839 = vsel %vm1836, %v1838, %v1834
    %v1840 = vmul.f32 1.0, %v1839
    %v1841 = vmul.f32 %v1820, %v1671
    %v1842 = vmul.f32 %v1801, %v1821
    %v1843 = vadd.f32 %v1841, %v1842
    %v1844 = vtanh.pop %v1843
    %v1845 = vmul.f32 %v1840, %v1844
    %s1846 = scalar_lea.vmem [#allocation6], 14
    %1847 = vst.msk [vmem:[%s1846] sm:$0x3] %vm111, %v1845
    %v1848 = vld [vmem:[#allocation6] sm:$0x3]
    %v1849 = vld [vmem:[%s4] sm:$0xff]
    %v1850 = vld [vmem:[%s4 + $0x8] sm:$0xff]
    %v1851 = vld [vmem:[%s4 + $0x10] sm:$0xff]
    %v1852 = vld [vmem:[%s4 + $0x18] sm:$0xff]
    %v1853 = vld [vmem:[%s6] sm:$0x1]
    %v1855 = vperm.slane %v1853, 0
    %v1858 = vsel %vm474, %v1848, 0
    %1860 = vmatpush.msra.mxu0 0.0
    %1861 = vmatpush.msra.mxu0 0.0
    %1862 = vmatpush.msra.mxu0 0.0
    %1863 = vmatpush.msra.mxu0 0.0
    %1864 = vmatpush.msra.mxu0 0.0
    %1865 = vmatpush.msra.mxu0 0.0
    %1866 = vmatpush.msra.mxu0 0.0
    %1867 = vmatpush.msra.mxu0 0.0
    %1868 = vmatpush.msra.mxu0 0.0
    %1869 = vmatpush.msra.mxu0 0.0
    %1870 = vmatpush.msra.mxu0 0.0
    %1871 = vmatpush.msra.mxu0 0.0
    %1872 = vmatpush.msra.mxu0 %v1852
    %1873 = vmatpush.msra.mxu0 %v1851
    %1874 = vmatpush.msra.mxu0 %v1850
    %1875 = vmatpush.msra.mxu0 %v1849
    %1876 = vmatmul.f32.gmra.mxu0 %v1858
    %v1877 = vpop.f32.mrf.mxu0
    %v1878 = vadd.f32 %v1855, %v1877
    %1879 = vdwg.mxu0
    %1880 = vst.msk [vmem:[#allocation2] sm:$0x3] %vm111, %v1878
    %1882 = vrot.lane.b32.xlu0 %v1878, 96
    %v1883 = vpop.permute.xlu0 %1882
    %1885 = vst.msk [vmem:[#allocation3] sm:$0x3] %vm111, %v1883
    %1886 = vrot.lane.b32.xlu0 %v1878, 64
    %v1887 = vpop.permute.xlu0 %1886
    %1889 = vst.msk [vmem:[#allocation4] sm:$0x3] %vm111, %v1887
    %1890 = vrot.lane.b32.xlu0 %v1878, 32
    %v1891 = vpop.permute.xlu0 %1890
    %1893 = vst.msk [vmem:[#allocation5] sm:$0x3] %vm111, %v1891
    %v1894 = vld [vmem:[%s814] sm:$0x3]
    %v1895 = vld [vmem:[%s4] sm:$0xff]
    %v1896 = vld [vmem:[%s4 + $0x8] sm:$0xff]
    %v1897 = vld [vmem:[%s4 + $0x10] sm:$0xff]
    %v1898 = vld [vmem:[%s4 + $0x18] sm:$0xff]
    %v1899 = vld [vmem:[%s6] sm:$0x1]
    %v1901 = vperm.slane %v1899, 0
    %v1904 = vsel %vm474, %v1894, 0
    %1906 = vmatpush.msra.mxu0 0.0
    %1907 = vmatpush.msra.mxu0 0.0
    %1908 = vmatpush.msra.mxu0 0.0
    %1909 = vmatpush.msra.mxu0 0.0
    %1910 = vmatpush.msra.mxu0 0.0
    %1911 = vmatpush.msra.mxu0 0.0
    %1912 = vmatpush.msra.mxu0 0.0
    %1913 = vmatpush.msra.mxu0 0.0
    %1914 = vmatpush.msra.mxu0 0.0
    %1915 = vmatpush.msra.mxu0 0.0
    %1916 = vmatpush.msra.mxu0 0.0
    %1917 = vmatpush.msra.mxu0 0.0
    %1918 = vmatpush.msra.mxu0 %v1898
    %1919 = vmatpush.msra.mxu0 %v1897
    %1920 = vmatpush.msra.mxu0 %v1896
    %1921 = vmatpush.msra.mxu0 %v1895
    %1922 = vmatmul.f32.gmra.mxu0 %v1904
    %v1923 = vpop.f32.mrf.mxu0
    %v1924 = vadd.f32 %v1901, %v1923
    %1925 = vdwg.mxu0
    %1926 = vst.msk [vmem:[%s157] sm:$0x3] %vm111, %v1924
    %1928 = vrot.lane.b32.xlu0 %v1924, 96
    %v1929 = vpop.permute.xlu0 %1928
    %1931 = vst.msk [vmem:[%s163] sm:$0x3] %vm111, %v1929
    %1932 = vrot.lane.b32.xlu0 %v1924, 64
    %v1933 = vpop.permute.xlu0 %1932
    %1935 = vst.msk [vmem:[%s168] sm:$0x3] %vm111, %v1933
    %1936 = vrot.lane.b32.xlu0 %v1924, 32
    %v1937 = vpop.permute.xlu0 %1936
    %1939 = vst.msk [vmem:[%s173] sm:$0x3] %vm111, %v1937
    %v1940 = vld [vmem:[%s986] sm:$0x3]
    %v1941 = vld [vmem:[%s4] sm:$0xff]
    %v1942 = vld [vmem:[%s4 + $0x8] sm:$0xff]
    %v1943 = vld [vmem:[%s4 + $0x10] sm:$0xff]
    %v1944 = vld [vmem:[%s4 + $0x18] sm:$0xff]
    %v1945 = vld [vmem:[%s6] sm:$0x1]
    %v1947 = vperm.slane %v1945, 0
    %v1950 = vsel %vm474, %v1940, 0
    %1952 = vmatpush.msra.mxu0 0.0
    %1953 = vmatpush.msra.mxu0 0.0
    %1954 = vmatpush.msra.mxu0 0.0
    %1955 = vmatpush.msra.mxu0 0.0
    %1956 = vmatpush.msra.mxu0 0.0
    %1957 = vmatpush.msra.mxu0 0.0
    %1958 = vmatpush.msra.mxu0 0.0
    %1959 = vmatpush.msra.mxu0 0.0
    %1960 = vmatpush.msra.mxu0 0.0
    %1961 = vmatpush.msra.mxu0 0.0
    %1962 = vmatpush.msra.mxu0 0.0
    %1963 = vmatpush.msra.mxu0 0.0
    %1964 = vmatpush.msra.mxu0 %v1944
    %1965 = vmatpush.msra.mxu0 %v1943
    %1966 = vmatpush.msra.mxu0 %v1942
    %1967 = vmatpush.msra.mxu0 %v1941
    %1968 = vmatmul.f32.gmra.mxu0 %v1950
    %v1969 = vpop.f32.mrf.mxu0
    %v1970 = vadd.f32 %v1947, %v1969
    %1971 = vdwg.mxu0
    %1972 = vst.msk [vmem:[%s206] sm:$0x3] %vm111, %v1970
    %1974 = vrot.lane.b32.xlu0 %v1970, 96
    %v1975 = vpop.permute.xlu0 %1974
    %1977 = vst.msk [vmem:[%s212] sm:$0x3] %vm111, %v1975
    %1978 = vrot.lane.b32.xlu0 %v1970, 64
    %v1979 = vpop.permute.xlu0 %1978
    %1981 = vst.msk [vmem:[%s217] sm:$0x3] %vm111, %v1979
    %1982 = vrot.lane.b32.xlu0 %v1970, 32
    %v1983 = vpop.permute.xlu0 %1982
    %1985 = vst.msk [vmem:[%s222] sm:$0x3] %vm111, %v1983
    %v1986 = vld [vmem:[%s1158] sm:$0x3]
    %v1987 = vld [vmem:[%s4] sm:$0xff]
    %v1988 = vld [vmem:[%s4 + $0x8] sm:$0xff]
    %v1989 = vld [vmem:[%s4 + $0x10] sm:$0xff]
    %v1990 = vld [vmem:[%s4 + $0x18] sm:$0xff]
    %v1991 = vld [vmem:[%s6] sm:$0x1]
    %v1993 = vperm.slane %v1991, 0
    %v1996 = vsel %vm474, %v1986, 0
    %1998 = vmatpush.msra.mxu0 0.0
    %1999 = vmatpush.msra.mxu0 0.0
    %2000 = vmatpush.msra.mxu0 0.0
    %2001 = vmatpush.msra.mxu0 0.0
    %2002 = vmatpush.msra.mxu0 0.0
    %2003 = vmatpush.msra.mxu0 0.0
    %2004 = vmatpush.msra.mxu0 0.0
    %2005 = vmatpush.msra.mxu0 0.0
    %2006 = vmatpush.msra.mxu0 0.0
    %2007 = vmatpush.msra.mxu0 0.0
    %2008 = vmatpush.msra.mxu0 0.0
    %2009 = vmatpush.msra.mxu0 0.0
    %2010 = vmatpush.msra.mxu0 %v1990
    %2011 = vmatpush.msra.mxu0 %v1989
    %2012 = vmatpush.msra.mxu0 %v1988
    %2013 = vmatpush.msra.mxu0 %v1987
    %2014 = vmatmul.f32.gmra.mxu0 %v1996
    %v2015 = vpop.f32.mrf.mxu0
    %v2016 = vadd.f32 %v1993, %v2015
    %2017 = vdwg.mxu0
    %2018 = vst.msk [vmem:[%s255] sm:$0x3] %vm111, %v2016
    %2020 = vrot.lane.b32.xlu0 %v2016, 96
    %v2021 = vpop.permute.xlu0 %2020
    %2023 = vst.msk [vmem:[%s261] sm:$0x3] %vm111, %v2021
    %2024 = vrot.lane.b32.xlu0 %v2016, 64
    %v2025 = vpop.permute.xlu0 %2024
    %2027 = vst.msk [vmem:[%s266] sm:$0x3] %vm111, %v2025
    %2028 = vrot.lane.b32.xlu0 %v2016, 32
    %v2029 = vpop.permute.xlu0 %2028
    %2031 = vst.msk [vmem:[%s271] sm:$0x3] %vm111, %v2029
    %v2032 = vld [vmem:[%s1330] sm:$0x3]
    %v2033 = vld [vmem:[%s4] sm:$0xff]
    %v2034 = vld [vmem:[%s4 + $0x8] sm:$0xff]
    %v2035 = vld [vmem:[%s4 + $0x10] sm:$0xff]
    %v2036 = vld [vmem:[%s4 + $0x18] sm:$0xff]
    %v2037 = vld [vmem:[%s6] sm:$0x1]
    %v2039 = vperm.slane %v2037, 0
    %v2042 = vsel %vm474, %v2032, 0
    %2044 = vmatpush.msra.mxu0 0.0
    %2045 = vmatpush.msra.mxu0 0.0
    %2046 = vmatpush.msra.mxu0 0.0
    %2047 = vmatpush.msra.mxu0 0.0
    %2048 = vmatpush.msra.mxu0 0.0
    %2049 = vmatpush.msra.mxu0 0.0
    %2050 = vmatpush.msra.mxu0 0.0
    %2051 = vmatpush.msra.mxu0 0.0
    %2052 = vmatpush.msra.mxu0 0.0
    %2053 = vmatpush.msra.mxu0 0.0
    %2054 = vmatpush.msra.mxu0 0.0
    %2055 = vmatpush.msra.mxu0 0.0
    %2056 = vmatpush.msra.mxu0 %v2036
    %2057 = vmatpush.msra.mxu0 %v2035
    %2058 = vmatpush.msra.mxu0 %v2034
    %2059 = vmatpush.msra.mxu0 %v2033
    %2060 = vmatmul.f32.gmra.mxu0 %v2042
    %v2061 = vpop.f32.mrf.mxu0
    %v2062 = vadd.f32 %v2039, %v2061
    %2063 = vdwg.mxu0
    %2064 = vst.msk [vmem:[%s304] sm:$0x3] %vm111, %v2062
    %2066 = vrot.lane.b32.xlu0 %v2062, 96
    %v2067 = vpop.permute.xlu0 %2066
    %2069 = vst.msk [vmem:[%s310] sm:$0x3] %vm111, %v2067
    %2070 = vrot.lane.b32.xlu0 %v2062, 64
    %v2071 = vpop.permute.xlu0 %2070
    %2073 = vst.msk [vmem:[%s315] sm:$0x3] %vm111, %v2071
    %2074 = vrot.lane.b32.xlu0 %v2062, 32
    %v2075 = vpop.permute.xlu0 %2074
    %2077 = vst.msk [vmem:[%s320] sm:$0x3] %vm111, %v2075
    %v2078 = vld [vmem:[%s1502] sm:$0x3]
    %v2079 = vld [vmem:[%s4] sm:$0xff]
    %v2080 = vld [vmem:[%s4 + $0x8] sm:$0xff]
    %v2081 = vld [vmem:[%s4 + $0x10] sm:$0xff]
    %v2082 = vld [vmem:[%s4 + $0x18] sm:$0xff]
    %v2083 = vld [vmem:[%s6] sm:$0x1]
    %v2085 = vperm.slane %v2083, 0
    %v2088 = vsel %vm474, %v2078, 0
    %2090 = vmatpush.msra.mxu0 0.0
    %2091 = vmatpush.msra.mxu0 0.0
    %2092 = vmatpush.msra.mxu0 0.0
    %2093 = vmatpush.msra.mxu0 0.0
    %2094 = vmatpush.msra.mxu0 0.0
    %2095 = vmatpush.msra.mxu0 0.0
    %2096 = vmatpush.msra.mxu0 0.0
    %2097 = vmatpush.msra.mxu0 0.0
    %2098 = vmatpush.msra.mxu0 0.0
    %2099 = vmatpush.msra.mxu0 0.0
    %2100 = vmatpush.msra.mxu0 0.0
    %2101 = vmatpush.msra.mxu0 0.0
    %2102 = vmatpush.msra.mxu0 %v2082
    %2103 = vmatpush.msra.mxu0 %v2081
    %2104 = vmatpush.msra.mxu0 %v2080
    %2105 = vmatpush.msra.mxu0 %v2079
    %2106 = vmatmul.f32.gmra.mxu0 %v2088
    %v2107 = vpop.f32.mrf.mxu0
    %v2108 = vadd.f32 %v2085, %v2107
    %2109 = vdwg.mxu0
    %2110 = vst.msk [vmem:[%s353] sm:$0x3] %vm111, %v2108
    %2112 = vrot.lane.b32.xlu0 %v2108, 96
    %v2113 = vpop.permute.xlu0 %2112
    %2115 = vst.msk [vmem:[%s359] sm:$0x3] %vm111, %v2113
    %2116 = vrot.lane.b32.xlu0 %v2108, 64
    %v2117 = vpop.permute.xlu0 %2116
    %2119 = vst.msk [vmem:[%s364] sm:$0x3] %vm111, %v2117
    %2120 = vrot.lane.b32.xlu0 %v2108, 32
    %v2121 = vpop.permute.xlu0 %2120
    %2123 = vst.msk [vmem:[%s369] sm:$0x3] %vm111, %v2121
    %v2124 = vld [vmem:[%s1674] sm:$0x3]
    %v2125 = vld [vmem:[%s4] sm:$0xff]
    %v2126 = vld [vmem:[%s4 + $0x8] sm:$0xff]
    %v2127 = vld [vmem:[%s4 + $0x10] sm:$0xff]
    %v2128 = vld [vmem:[%s4 + $0x18] sm:$0xff]
    %v2129 = vld [vmem:[%s6] sm:$0x1]
    %v2131 = vperm.slane %v2129, 0
    %v2134 = vsel %vm474, %v2124, 0
    %2136 = vmatpush.msra.mxu0 0.0
    %2137 = vmatpush.msra.mxu0 0.0
    %2138 = vmatpush.msra.mxu0 0.0
    %2139 = vmatpush.msra.mxu0 0.0
    %2140 = vmatpush.msra.mxu0 0.0
    %2141 = vmatpush.msra.mxu0 0.0
    %2142 = vmatpush.msra.mxu0 0.0
    %2143 = vmatpush.msra.mxu0 0.0
    %2144 = vmatpush.msra.mxu0 0.0
    %2145 = vmatpush.msra.mxu0 0.0
    %2146 = vmatpush.msra.mxu0 0.0
    %2147 = vmatpush.msra.mxu0 0.0
    %2148 = vmatpush.msra.mxu0 %v2128
    %2149 = vmatpush.msra.mxu0 %v2127
    %2150 = vmatpush.msra.mxu0 %v2126
    %2151 = vmatpush.msra.mxu0 %v2125
    %2152 = vmatmul.f32.gmra.mxu0 %v2134
    %v2153 = vpop.f32.mrf.mxu0
    %v2154 = vadd.f32 %v2131, %v2153
    %2155 = vdwg.mxu0
    %2156 = vst.msk [vmem:[%s402] sm:$0x3] %vm111, %v2154
    %2158 = vrot.lane.b32.xlu0 %v2154, 96
    %v2159 = vpop.permute.xlu0 %2158
    %2161 = vst.msk [vmem:[%s408] sm:$0x3] %vm111, %v2159
    %2162 = vrot.lane.b32.xlu0 %v2154, 64
    %v2163 = vpop.permute.xlu0 %2162
    %2165 = vst.msk [vmem:[%s413] sm:$0x3] %vm111, %v2163
    %2166 = vrot.lane.b32.xlu0 %v2154, 32
    %v2167 = vpop.permute.xlu0 %2166
    %2169 = vst.msk [vmem:[%s418] sm:$0x3] %vm111, %v2167
    %v2170 = vld [vmem:[%s1846] sm:$0x3]
    %v2171 = vld [vmem:[%s4] sm:$0xff]
    %v2172 = vld [vmem:[%s4 + $0x8] sm:$0xff]
    %v2173 = vld [vmem:[%s4 + $0x10] sm:$0xff]
    %v2174 = vld [vmem:[%s4 + $0x18] sm:$0xff]
    %v2175 = vld [vmem:[%s6] sm:$0x1]
    %v2177 = vperm.slane %v2175, 0
    %v2180 = vsel %vm474, %v2170, 0
    %2182 = vmatpush.msra.mxu0 0.0
    %2183 = vmatpush.msra.mxu0 0.0
    %2184 = vmatpush.msra.mxu0 0.0
    %2185 = vmatpush.msra.mxu0 0.0
    %2186 = vmatpush.msra.mxu0 0.0
    %2187 = vmatpush.msra.mxu0 0.0
    %2188 = vmatpush.msra.mxu0 0.0
    %2189 = vmatpush.msra.mxu0 0.0
    %2190 = vmatpush.msra.mxu0 0.0
    %2191 = vmatpush.msra.mxu0 0.0
    %2192 = vmatpush.msra.mxu0 0.0
    %2193 = vmatpush.msra.mxu0 0.0
    %2194 = vmatpush.msra.mxu0 %v2174
    %2195 = vmatpush.msra.mxu0 %v2173
    %2196 = vmatpush.msra.mxu0 %v2172
    %2197 = vmatpush.msra.mxu0 %v2171
    %2198 = vmatmul.f32.gmra.mxu0 %v2180
    %v2199 = vpop.f32.mrf.mxu0
    %v2200 = vadd.f32 %v2177, %v2199
    %2201 = vdwg.mxu0
    %2202 = vst.msk [vmem:[%s451] sm:$0x3] %vm111, %v2200
    %2204 = vrot.lane.b32.xlu0 %v2200, 96
    %v2205 = vpop.permute.xlu0 %2204
    %2207 = vst.msk [vmem:[%s457] sm:$0x3] %vm111, %v2205
    %2208 = vrot.lane.b32.xlu0 %v2200, 64
    %v2209 = vpop.permute.xlu0 %2208
    %2211 = vst.msk [vmem:[%s462] sm:$0x3] %vm111, %v2209
    %2212 = vrot.lane.b32.xlu0 %v2200, 32
    %v2213 = vpop.permute.xlu0 %2212
    %2215 = vst.msk [vmem:[%s467] sm:$0x3] %vm111, %v2213
    %v2216 = vld [vmem:[#allocation2] sm:$0x3]
    %v2217 = vld [vmem:[#allocation12] sm:$0xff]
    %v2218 = vld [vmem:[#allocation12 + $0x8] sm:$0xff]
    %v2219 = vld [vmem:[#allocation12 + $0x10] sm:$0xff]
    %v2220 = vld [vmem:[#allocation12 + $0x18] sm:$0xff]
    %2221 = vmatpush.msra.mxu0 0.0
    %2222 = vmatpush.msra.mxu0 0.0
    %2223 = vmatpush.msra.mxu0 0.0
    %2224 = vmatpush.msra.mxu0 0.0
    %2225 = vmatpush.msra.mxu0 0.0
    %2226 = vmatpush.msra.mxu0 0.0
    %2227 = vmatpush.msra.mxu0 0.0
    %2228 = vmatpush.msra.mxu0 0.0
    %2229 = vmatpush.msra.mxu0 0.0
    %2230 = vmatpush.msra.mxu0 0.0
    %2231 = vmatpush.msra.mxu0 0.0
    %2232 = vmatpush.msra.mxu0 0.0
    %2233 = vmatpush.msra.mxu0 %v2220
    %2234 = vmatpush.msra.mxu0 %v2219
    %2235 = vmatpush.msra.mxu0 %v2218
    %2236 = vmatpush.msra.mxu0 %v2217
    %2237 = vmatmul.f32.gmra.mxu0 %v476
    %v2238 = vpop.f32.mrf.mxu0
    %v2239 = vadd.f32 0.0, %v2238
    %2240 = vdwg.mxu0
    %v2241 = vadd.f32 %v2216, %v2239
    %v2242 = vld [vmem:[#allocation3] sm:$0x3]
    %s2243 = scalar_lea.vmem [#allocation12], 32
    %v2244 = vld [vmem:[%s2243] sm:$0xff]
    %v2245 = vld [vmem:[%s2243 + $0x8] sm:$0xff]
    %v2246 = vld [vmem:[%s2243 + $0x10] sm:$0xff]
    %v2247 = vld [vmem:[%s2243 + $0x18] sm:$0xff]
    %2248 = vmatpush.msra.mxu0 0.0
    %2249 = vmatpush.msra.mxu0 0.0
    %2250 = vmatpush.msra.mxu0 0.0
    %2251 = vmatpush.msra.mxu0 0.0
    %2252 = vmatpush.msra.mxu0 0.0
    %2253 = vmatpush.msra.mxu0 0.0
    %2254 = vmatpush.msra.mxu0 0.0
    %2255 = vmatpush.msra.mxu0 0.0
    %2256 = vmatpush.msra.mxu0 0.0
    %2257 = vmatpush.msra.mxu0 0.0
    %2258 = vmatpush.msra.mxu0 0.0
    %2259 = vmatpush.msra.mxu0 0.0
    %2260 = vmatpush.msra.mxu0 %v2247
    %2261 = vmatpush.msra.mxu0 %v2246
    %2262 = vmatpush.msra.mxu0 %v2245
    %2263 = vmatpush.msra.mxu0 %v2244
    %2264 = vmatmul.f32.gmra.mxu0 %v476
    %v2265 = vpop.f32.mrf.mxu0
    %v2266 = vadd.f32 0.0, %v2265
    %2267 = vdwg.mxu0
    %v2268 = vadd.f32 %v2242, %v2266
    %v2269 = vld [vmem:[#allocation4] sm:$0x3]
    %s2270 = scalar_lea.vmem [#allocation12], 64
    %v2271 = vld [vmem:[%s2270] sm:$0xff]
    %v2272 = vld [vmem:[%s2270 + $0x8] sm:$0xff]
    %v2273 = vld [vmem:[%s2270 + $0x10] sm:$0xff]
    %v2274 = vld [vmem:[%s2270 + $0x18] sm:$0xff]
    %2275 = vmatpush.msra.mxu0 0.0
    %2276 = vmatpush.msra.mxu0 0.0
    %2277 = vmatpush.msra.mxu0 0.0
    %2278 = vmatpush.msra.mxu0 0.0
    %2279 = vmatpush.msra.mxu0 0.0
    %2280 = vmatpush.msra.mxu0 0.0
    %2281 = vmatpush.msra.mxu0 0.0
    %2282 = vmatpush.msra.mxu0 0.0
    %2283 = vmatpush.msra.mxu0 0.0
    %2284 = vmatpush.msra.mxu0 0.0
    %2285 = vmatpush.msra.mxu0 0.0
    %2286 = vmatpush.msra.mxu0 0.0
    %2287 = vmatpush.msra.mxu0 %v2274
    %2288 = vmatpush.msra.mxu0 %v2273
    %2289 = vmatpush.msra.mxu0 %v2272
    %2290 = vmatpush.msra.mxu0 %v2271
    %2291 = vmatmul.f32.gmra.mxu0 %v476
    %v2292 = vpop.f32.mrf.mxu0
    %v2293 = vadd.f32 0.0, %v2292
    %2294 = vdwg.mxu0
    %v2295 = vadd.f32 %v2269, %v2293
    %v2296 = vld [vmem:[#allocation5] sm:$0x3]
    %s2297 = scalar_lea.vmem [#allocation12], 96
    %v2298 = vld [vmem:[%s2297] sm:$0xff]
    %v2299 = vld [vmem:[%s2297 + $0x8] sm:$0xff]
    %v2300 = vld [vmem:[%s2297 + $0x10] sm:$0xff]
    %v2301 = vld [vmem:[%s2297 + $0x18] sm:$0xff]
    %2302 = vmatpush.msra.mxu0 0.0
    %2303 = vmatpush.msra.mxu0 0.0
    %2304 = vmatpush.msra.mxu0 0.0
    %2305 = vmatpush.msra.mxu0 0.0
    %2306 = vmatpush.msra.mxu0 0.0
    %2307 = vmatpush.msra.mxu0 0.0
    %2308 = vmatpush.msra.mxu0 0.0
    %2309 = vmatpush.msra.mxu0 0.0
    %2310 = vmatpush.msra.mxu0 0.0
    %2311 = vmatpush.msra.mxu0 0.0
    %2312 = vmatpush.msra.mxu0 0.0
    %2313 = vmatpush.msra.mxu0 0.0
    %2314 = vmatpush.msra.mxu0 %v2301
    %2315 = vmatpush.msra.mxu0 %v2300
    %2316 = vmatpush.msra.mxu0 %v2299
    %2317 = vmatpush.msra.mxu0 %v2298
    %2318 = vmatmul.f32.gmra.mxu0 %v476
    %v2319 = vpop.f32.mrf.mxu0
    %v2320 = vadd.f32 0.0, %v2319
    %2321 = vdwg.mxu0
    %v2322 = vadd.f32 %v2296, %v2320
    %v2323 = vxor.u32 %v2241, 2147483648
    %v2324 = vmul.f32 %v2323, 1.442695
    %v2325 = vpow.pop %v2324
    %v2326 = vadd.f32 %v2325, 1.0
    %v2327 = vrcp.pop %v2326
    %v2328 = vmul.f32 %v2326, %v2327
    %v2329 = vsub.f32 1.0, %v2328
    %v2330 = vmul.f32 %v2327, %v2329
    %v2331 = vadd.f32 %v2327, %v2330
    %vm2332 = vweird.f32 %v2326
    %vm2333 = vweird.f32 %v2327
    %vm2334 = vmor %vm2332, %vm2333
    %v2335 = vsel %vm2334, %v2327, %v2331
    %v2336 = vand.u32 2147483647, %v2326
    %vm2337 = vcmp.eq.f32.partialorder %v2336, 8.507059e+37
    %v2338 = vand.u32 %v2326, 2147483648
    %v2339 = vor.u32 1.1754944e-38, %v2338
    %v2340 = vsel %vm2337, %v2339, %v2335
    %v2341 = vmul.f32 1.0, %v2340
    %v2342 = vxor.u32 %v2268, 2147483648
    %v2343 = vmul.f32 %v2342, 1.442695
    %v2344 = vpow.pop %v2343
    %v2345 = vadd.f32 %v2344, 1.0
    %v2346 = vrcp.pop %v2345
    %v2347 = vmul.f32 %v2345, %v2346
    %v2348 = vsub.f32 1.0, %v2347
    %v2349 = vmul.f32 %v2346, %v2348
    %v2350 = vadd.f32 %v2346, %v2349
    %vm2351 = vweird.f32 %v2345
    %vm2352 = vweird.f32 %v2346
    %vm2353 = vmor %vm2351, %vm2352
    %v2354 = vsel %vm2353, %v2346, %v2350
    %v2355 = vand.u32 2147483647, %v2345
    %vm2356 = vcmp.eq.f32.partialorder %v2355, 8.507059e+37
    %v2357 = vand.u32 %v2345, 2147483648
    %v2358 = vor.u32 1.1754944e-38, %v2357
    %v2359 = vsel %vm2356, %v2358, %v2354
    %v2360 = vmul.f32 1.0, %v2359
    %v2361 = vtanh.pop %v2295
    %v2362 = vxor.u32 %v2322, 2147483648
    %v2363 = vmul.f32 %v2362, 1.442695
    %v2364 = vpow.pop %v2363
    %v2365 = vadd.f32 %v2364, 1.0
    %v2366 = vrcp.pop %v2365
    %v2367 = vmul.f32 %v2365, %v2366
    %v2368 = vsub.f32 1.0, %v2367
    %v2369 = vmul.f32 %v2366, %v2368
    %v2370 = vadd.f32 %v2366, %v2369
    %vm2371 = vweird.f32 %v2365
    %vm2372 = vweird.f32 %v2366
    %vm2373 = vmor %vm2371, %vm2372
    %v2374 = vsel %vm2373, %v2366, %v2370
    %v2375 = vand.u32 2147483647, %v2365
    %vm2376 = vcmp.eq.f32.partialorder %v2375, 8.507059e+37
    %v2377 = vand.u32 %v2365, 2147483648
    %v2378 = vor.u32 1.1754944e-38, %v2377
    %v2379 = vsel %vm2376, %v2378, %v2374
    %v2380 = vmul.f32 1.0, %v2379
    %v2381 = vmul.f32 %v2360, 0.0
    %v2382 = vmul.f32 %v2341, %v2361
    %v2383 = vadd.f32 %v2381, %v2382
    %v2384 = vtanh.pop %v2383
    %v2385 = vmul.f32 %v2380, %v2384
    %v2386 = vld [vmem:[%s157] sm:$0x3]
    %v2388 = vsel %vm474, %v2385, 0
    %2390 = vmatpush.msra.mxu0 0.0
    %2391 = vmatpush.msra.mxu0 0.0
    %2392 = vmatpush.msra.mxu0 0.0
    %2393 = vmatpush.msra.mxu0 0.0
    %2394 = vmatpush.msra.mxu0 0.0
    %2395 = vmatpush.msra.mxu0 0.0
    %2396 = vmatpush.msra.mxu0 0.0
    %2397 = vmatpush.msra.mxu0 0.0
    %2398 = vmatpush.msra.mxu0 0.0
    %2399 = vmatpush.msra.mxu0 0.0
    %2400 = vmatpush.msra.mxu0 0.0
    %2401 = vmatpush.msra.mxu0 0.0
    %2402 = vmatpush.msra.mxu0 %v2220
    %2403 = vmatpush.msra.mxu0 %v2219
    %2404 = vmatpush.msra.mxu0 %v2218
    %2405 = vmatpush.msra.mxu0 %v2217
    %2406 = vmatmul.f32.gmra.mxu0 %v2388
    %v2407 = vpop.f32.mrf.mxu0
    %v2408 = vadd.f32 0.0, %v2407
    %2409 = vdwg.mxu0
    %v2410 = vadd.f32 %v2386, %v2408
    %v2411 = vld [vmem:[%s163] sm:$0x3]
    %2412 = vmatpush.msra.mxu0 0.0
    %2413 = vmatpush.msra.mxu0 0.0
    %2414 = vmatpush.msra.mxu0 0.0
    %2415 = vmatpush.msra.mxu0 0.0
    %2416 = vmatpush.msra.mxu0 0.0
    %2417 = vmatpush.msra.mxu0 0.0
    %2418 = vmatpush.msra.mxu0 0.0
    %2419 = vmatpush.msra.mxu0 0.0
    %2420 = vmatpush.msra.mxu0 0.0
    %2421 = vmatpush.msra.mxu0 0.0
    %2422 = vmatpush.msra.mxu0 0.0
    %2423 = vmatpush.msra.mxu0 0.0
    %2424 = vmatpush.msra.mxu0 %v2247
    %2425 = vmatpush.msra.mxu0 %v2246
    %2426 = vmatpush.msra.mxu0 %v2245
    %2427 = vmatpush.msra.mxu0 %v2244
    %2428 = vmatmul.f32.gmra.mxu0 %v2388
    %v2429 = vpop.f32.mrf.mxu0
    %v2430 = vadd.f32 0.0, %v2429
    %2431 = vdwg.mxu0
    %v2432 = vadd.f32 %v2411, %v2430
    %v2433 = vld [vmem:[%s168] sm:$0x3]
    %2434 = vmatpush.msra.mxu0 0.0
    %2435 = vmatpush.msra.mxu0 0.0
    %2436 = vmatpush.msra.mxu0 0.0
    %2437 = vmatpush.msra.mxu0 0.0
    %2438 = vmatpush.msra.mxu0 0.0
    %2439 = vmatpush.msra.mxu0 0.0
    %2440 = vmatpush.msra.mxu0 0.0
    %2441 = vmatpush.msra.mxu0 0.0
    %2442 = vmatpush.msra.mxu0 0.0
    %2443 = vmatpush.msra.mxu0 0.0
    %2444 = vmatpush.msra.mxu0 0.0
    %2445 = vmatpush.msra.mxu0 0.0
    %2446 = vmatpush.msra.mxu0 %v2274
    %2447 = vmatpush.msra.mxu0 %v2273
    %2448 = vmatpush.msra.mxu0 %v2272
    %2449 = vmatpush.msra.mxu0 %v2271
    %2450 = vmatmul.f32.gmra.mxu0 %v2388
    %v2451 = vpop.f32.mrf.mxu0
    %v2452 = vadd.f32 0.0, %v2451
    %2453 = vdwg.mxu0
    %v2454 = vadd.f32 %v2433, %v2452
    %v2455 = vld [vmem:[%s173] sm:$0x3]
    %2456 = vmatpush.msra.mxu0 0.0
    %2457 = vmatpush.msra.mxu0 0.0
    %2458 = vmatpush.msra.mxu0 0.0
    %2459 = vmatpush.msra.mxu0 0.0
    %2460 = vmatpush.msra.mxu0 0.0
    %2461 = vmatpush.msra.mxu0 0.0
    %2462 = vmatpush.msra.mxu0 0.0
    %2463 = vmatpush.msra.mxu0 0.0
    %2464 = vmatpush.msra.mxu0 0.0
    %2465 = vmatpush.msra.mxu0 0.0
    %2466 = vmatpush.msra.mxu0 0.0
    %2467 = vmatpush.msra.mxu0 0.0
    %2468 = vmatpush.msra.mxu0 %v2301
    %2469 = vmatpush.msra.mxu0 %v2300
    %2470 = vmatpush.msra.mxu0 %v2299
    %2471 = vmatpush.msra.mxu0 %v2298
    %2472 = vmatmul.f32.gmra.mxu0 %v2388
    %v2473 = vpop.f32.mrf.mxu0
    %v2474 = vadd.f32 0.0, %v2473
    %2475 = vdwg.mxu0
    %v2476 = vadd.f32 %v2455, %v2474
    %v2477 = vxor.u32 %v2410, 2147483648
    %v2478 = vmul.f32 %v2477, 1.442695
    %v2479 = vpow.pop %v2478
    %v2480 = vadd.f32 %v2479, 1.0
    %v2481 = vrcp.pop %v2480
    %v2482 = vmul.f32 %v2480, %v2481
    %v2483 = vsub.f32 1.0, %v2482
    %v2484 = vmul.f32 %v2481, %v2483
    %v2485 = vadd.f32 %v2481, %v2484
    %vm2486 = vweird.f32 %v2480
    %vm2487 = vweird.f32 %v2481
    %vm2488 = vmor %vm2486, %vm2487
    %v2489 = vsel %vm2488, %v2481, %v2485
    %v2490 = vand.u32 2147483647, %v2480
    %vm2491 = vcmp.eq.f32.partialorder %v2490, 8.507059e+37
    %v2492 = vand.u32 %v2480, 2147483648
    %v2493 = vor.u32 1.1754944e-38, %v2492
    %v2494 = vsel %vm2491, %v2493, %v2489
    %v2495 = vmul.f32 1.0, %v2494
    %v2496 = vxor.u32 %v2432, 2147483648
    %v2497 = vmul.f32 %v2496, 1.442695
    %v2498 = vpow.pop %v2497
    %v2499 = vadd.f32 %v2498, 1.0
    %v2500 = vrcp.pop %v2499
    %v2501 = vmul.f32 %v2499, %v2500
    %v2502 = vsub.f32 1.0, %v2501
    %v2503 = vmul.f32 %v2500, %v2502
    %v2504 = vadd.f32 %v2500, %v2503
    %vm2505 = vweird.f32 %v2499
    %vm2506 = vweird.f32 %v2500
    %vm2507 = vmor %vm2505, %vm2506
    %v2508 = vsel %vm2507, %v2500, %v2504
    %v2509 = vand.u32 2147483647, %v2499
    %vm2510 = vcmp.eq.f32.partialorder %v2509, 8.507059e+37
    %v2511 = vand.u32 %v2499, 2147483648
    %v2512 = vor.u32 1.1754944e-38, %v2511
    %v2513 = vsel %vm2510, %v2512, %v2508
    %v2514 = vmul.f32 1.0, %v2513
    %v2515 = vtanh.pop %v2454
    %v2516 = vxor.u32 %v2476, 2147483648
    %v2517 = vmul.f32 %v2516, 1.442695
    %v2518 = vpow.pop %v2517
    %v2519 = vadd.f32 %v2518, 1.0
    %v2520 = vrcp.pop %v2519
    %v2521 = vmul.f32 %v2519, %v2520
    %v2522 = vsub.f32 1.0, %v2521
    %v2523 = vmul.f32 %v2520, %v2522
    %v2524 = vadd.f32 %v2520, %v2523
    %vm2525 = vweird.f32 %v2519
    %vm2526 = vweird.f32 %v2520
    %vm2527 = vmor %vm2525, %vm2526
    %v2528 = vsel %vm2527, %v2520, %v2524
    %v2529 = vand.u32 2147483647, %v2519
    %vm2530 = vcmp.eq.f32.partialorder %v2529, 8.507059e+37
    %v2531 = vand.u32 %v2519, 2147483648
    %v2532 = vor.u32 1.1754944e-38, %v2531
    %v2533 = vsel %vm2530, %v2532, %v2528
    %v2534 = vmul.f32 1.0, %v2533
    %v2535 = vmul.f32 %v2514, %v2383
    %v2536 = vmul.f32 %v2495, %v2515
    %v2537 = vadd.f32 %v2535, %v2536
    %v2538 = vtanh.pop %v2537
    %v2539 = vmul.f32 %v2534, %v2538
    %v2540 = vld [vmem:[%s206] sm:$0x3]
    %v2542 = vsel %vm474, %v2539, 0
    %2544 = vmatpush.msra.mxu0 0.0
    %2545 = vmatpush.msra.mxu0 0.0
    %2546 = vmatpush.msra.mxu0 0.0
    %2547 = vmatpush.msra.mxu0 0.0
    %2548 = vmatpush.msra.mxu0 0.0
    %2549 = vmatpush.msra.mxu0 0.0
    %2550 = vmatpush.msra.mxu0 0.0
    %2551 = vmatpush.msra.mxu0 0.0
    %2552 = vmatpush.msra.mxu0 0.0
    %2553 = vmatpush.msra.mxu0 0.0
    %2554 = vmatpush.msra.mxu0 0.0
    %2555 = vmatpush.msra.mxu0 0.0
    %2556 = vmatpush.msra.mxu0 %v2220
    %2557 = vmatpush.msra.mxu0 %v2219
    %2558 = vmatpush.msra.mxu0 %v2218
    %2559 = vmatpush.msra.mxu0 %v2217
    %2560 = vmatmul.f32.gmra.mxu0 %v2542
    %v2561 = vpop.f32.mrf.mxu0
    %v2562 = vadd.f32 0.0, %v2561
    %2563 = vdwg.mxu0
    %v2564 = vadd.f32 %v2540, %v2562
    %v2565 = vld [vmem:[%s212] sm:$0x3]
    %2566 = vmatpush.msra.mxu0 0.0
    %2567 = vmatpush.msra.mxu0 0.0
    %2568 = vmatpush.msra.mxu0 0.0
    %2569 = vmatpush.msra.mxu0 0.0
    %2570 = vmatpush.msra.mxu0 0.0
    %2571 = vmatpush.msra.mxu0 0.0
    %2572 = vmatpush.msra.mxu0 0.0
    %2573 = vmatpush.msra.mxu0 0.0
    %2574 = vmatpush.msra.mxu0 0.0
    %2575 = vmatpush.msra.mxu0 0.0
    %2576 = vmatpush.msra.mxu0 0.0
    %2577 = vmatpush.msra.mxu0 0.0
    %2578 = vmatpush.msra.mxu0 %v2247
    %2579 = vmatpush.msra.mxu0 %v2246
    %2580 = vmatpush.msra.mxu0 %v2245
    %2581 = vmatpush.msra.mxu0 %v2244
    %2582 = vmatmul.f32.gmra.mxu0 %v2542
    %v2583 = vpop.f32.mrf.mxu0
    %v2584 = vadd.f32 0.0, %v2583
    %2585 = vdwg.mxu0
    %v2586 = vadd.f32 %v2565, %v2584
    %v2587 = vld [vmem:[%s217] sm:$0x3]
    %2588 = vmatpush.msra.mxu0 0.0
    %2589 = vmatpush.msra.mxu0 0.0
    %2590 = vmatpush.msra.mxu0 0.0
    %2591 = vmatpush.msra.mxu0 0.0
    %2592 = vmatpush.msra.mxu0 0.0
    %2593 = vmatpush.msra.mxu0 0.0
    %2594 = vmatpush.msra.mxu0 0.0
    %2595 = vmatpush.msra.mxu0 0.0
    %2596 = vmatpush.msra.mxu0 0.0
    %2597 = vmatpush.msra.mxu0 0.0
    %2598 = vmatpush.msra.mxu0 0.0
    %2599 = vmatpush.msra.mxu0 0.0
    %2600 = vmatpush.msra.mxu0 %v2274
    %2601 = vmatpush.msra.mxu0 %v2273
    %2602 = vmatpush.msra.mxu0 %v2272
    %2603 = vmatpush.msra.mxu0 %v2271
    %2604 = vmatmul.f32.gmra.mxu0 %v2542
    %v2605 = vpop.f32.mrf.mxu0
    %v2606 = vadd.f32 0.0, %v2605
    %2607 = vdwg.mxu0
    %v2608 = vadd.f32 %v2587, %v2606
    %v2609 = vld [vmem:[%s222] sm:$0x3]
    %2610 = vmatpush.msra.mxu0 0.0
    %2611 = vmatpush.msra.mxu0 0.0
    %2612 = vmatpush.msra.mxu0 0.0
    %2613 = vmatpush.msra.mxu0 0.0
    %2614 = vmatpush.msra.mxu0 0.0
    %2615 = vmatpush.msra.mxu0 0.0
    %2616 = vmatpush.msra.mxu0 0.0
    %2617 = vmatpush.msra.mxu0 0.0
    %2618 = vmatpush.msra.mxu0 0.0
    %2619 = vmatpush.msra.mxu0 0.0
    %2620 = vmatpush.msra.mxu0 0.0
    %2621 = vmatpush.msra.mxu0 0.0
    %2622 = vmatpush.msra.mxu0 %v2301
    %2623 = vmatpush.msra.mxu0 %v2300
    %2624 = vmatpush.msra.mxu0 %v2299
    %2625 = vmatpush.msra.mxu0 %v2298
    %2626 = vmatmul.f32.gmra.mxu0 %v2542
    %v2627 = vpop.f32.mrf.mxu0
    %v2628 = vadd.f32 0.0, %v2627
    %2629 = vdwg.mxu0
    %v2630 = vadd.f32 %v2609, %v2628
    %v2631 = vxor.u32 %v2564, 2147483648
    %v2632 = vmul.f32 %v2631, 1.442695
    %v2633 = vpow.pop %v2632
    %v2634 = vadd.f32 %v2633, 1.0
    %v2635 = vrcp.pop %v2634
    %v2636 = vmul.f32 %v2634, %v2635
    %v2637 = vsub.f32 1.0, %v2636
    %v2638 = vmul.f32 %v2635, %v2637
    %v2639 = vadd.f32 %v2635, %v2638
    %vm2640 = vweird.f32 %v2634
    %vm2641 = vweird.f32 %v2635
    %vm2642 = vmor %vm2640, %vm2641
    %v2643 = vsel %vm2642, %v2635, %v2639
    %v2644 = vand.u32 2147483647, %v2634
    %vm2645 = vcmp.eq.f32.partialorder %v2644, 8.507059e+37
    %v2646 = vand.u32 %v2634, 2147483648
    %v2647 = vor.u32 1.1754944e-38, %v2646
    %v2648 = vsel %vm2645, %v2647, %v2643
    %v2649 = vmul.f32 1.0, %v2648
    %v2650 = vxor.u32 %v2586, 2147483648
    %v2651 = vmul.f32 %v2650, 1.442695
    %v2652 = vpow.pop %v2651
    %v2653 = vadd.f32 %v2652, 1.0
    %v2654 = vrcp.pop %v2653
    %v2655 = vmul.f32 %v2653, %v2654
    %v2656 = vsub.f32 1.0, %v2655
    %v2657 = vmul.f32 %v2654, %v2656
    %v2658 = vadd.f32 %v2654, %v2657
    %vm2659 = vweird.f32 %v2653
    %vm2660 = vweird.f32 %v2654
    %vm2661 = vmor %vm2659, %vm2660
    %v2662 = vsel %vm2661, %v2654, %v2658
    %v2663 = vand.u32 2147483647, %v2653
    %vm2664 = vcmp.eq.f32.partialorder %v2663, 8.507059e+37
    %v2665 = vand.u32 %v2653, 2147483648
    %v2666 = vor.u32 1.1754944e-38, %v2665
    %v2667 = vsel %vm2664, %v2666, %v2662
    %v2668 = vmul.f32 1.0, %v2667
    %v2669 = vtanh.pop %v2608
    %v2670 = vxor.u32 %v2630, 2147483648
    %v2671 = vmul.f32 %v2670, 1.442695
    %v2672 = vpow.pop %v2671
    %v2673 = vadd.f32 %v2672, 1.0
    %v2674 = vrcp.pop %v2673
    %v2675 = vmul.f32 %v2673, %v2674
    %v2676 = vsub.f32 1.0, %v2675
    %v2677 = vmul.f32 %v2674, %v2676
    %v2678 = vadd.f32 %v2674, %v2677
    %vm2679 = vweird.f32 %v2673
    %vm2680 = vweird.f32 %v2674
    %vm2681 = vmor %vm2679, %vm2680
    %v2682 = vsel %vm2681, %v2674, %v2678
    %v2683 = vand.u32 2147483647, %v2673
    %vm2684 = vcmp.eq.f32.partialorder %v2683, 8.507059e+37
    %v2685 = vand.u32 %v2673, 2147483648
    %v2686 = vor.u32 1.1754944e-38, %v2685
    %v2687 = vsel %vm2684, %v2686, %v2682
    %v2688 = vmul.f32 1.0, %v2687
    %v2689 = vmul.f32 %v2668, %v2537
    %v2690 = vmul.f32 %v2649, %v2669
    %v2691 = vadd.f32 %v2689, %v2690
    %v2692 = vtanh.pop %v2691
    %v2693 = vmul.f32 %v2688, %v2692
    %v2694 = vld [vmem:[%s255] sm:$0x3]
    %v2696 = vsel %vm474, %v2693, 0
    %2698 = vmatpush.msra.mxu0 0.0
    %2699 = vmatpush.msra.mxu0 0.0
    %2700 = vmatpush.msra.mxu0 0.0
    %2701 = vmatpush.msra.mxu0 0.0
    %2702 = vmatpush.msra.mxu0 0.0
    %2703 = vmatpush.msra.mxu0 0.0
    %2704 = vmatpush.msra.mxu0 0.0
    %2705 = vmatpush.msra.mxu0 0.0
    %2706 = vmatpush.msra.mxu0 0.0
    %2707 = vmatpush.msra.mxu0 0.0
    %2708 = vmatpush.msra.mxu0 0.0
    %2709 = vmatpush.msra.mxu0 0.0
    %2710 = vmatpush.msra.mxu0 %v2220
    %2711 = vmatpush.msra.mxu0 %v2219
    %2712 = vmatpush.msra.mxu0 %v2218
    %2713 = vmatpush.msra.mxu0 %v2217
    %2714 = vmatmul.f32.gmra.mxu0 %v2696
    %v2715 = vpop.f32.mrf.mxu0
    %v2716 = vadd.f32 0.0, %v2715
    %2717 = vdwg.mxu0
    %v2718 = vadd.f32 %v2694, %v2716
    %v2719 = vld [vmem:[%s261] sm:$0x3]
    %2720 = vmatpush.msra.mxu0 0.0
    %2721 = vmatpush.msra.mxu0 0.0
    %2722 = vmatpush.msra.mxu0 0.0
    %2723 = vmatpush.msra.mxu0 0.0
    %2724 = vmatpush.msra.mxu0 0.0
    %2725 = vmatpush.msra.mxu0 0.0
    %2726 = vmatpush.msra.mxu0 0.0
    %2727 = vmatpush.msra.mxu0 0.0
    %2728 = vmatpush.msra.mxu0 0.0
    %2729 = vmatpush.msra.mxu0 0.0
    %2730 = vmatpush.msra.mxu0 0.0
    %2731 = vmatpush.msra.mxu0 0.0
    %2732 = vmatpush.msra.mxu0 %v2247
    %2733 = vmatpush.msra.mxu0 %v2246
    %2734 = vmatpush.msra.mxu0 %v2245
    %2735 = vmatpush.msra.mxu0 %v2244
    %2736 = vmatmul.f32.gmra.mxu0 %v2696
    %v2737 = vpop.f32.mrf.mxu0
    %v2738 = vadd.f32 0.0, %v2737
    %2739 = vdwg.mxu0
    %v2740 = vadd.f32 %v2719, %v2738
    %v2741 = vld [vmem:[%s266] sm:$0x3]
    %2742 = vmatpush.msra.mxu0 0.0
    %2743 = vmatpush.msra.mxu0 0.0
    %2744 = vmatpush.msra.mxu0 0.0
    %2745 = vmatpush.msra.mxu0 0.0
    %2746 = vmatpush.msra.mxu0 0.0
    %2747 = vmatpush.msra.mxu0 0.0
    %2748 = vmatpush.msra.mxu0 0.0
    %2749 = vmatpush.msra.mxu0 0.0
    %2750 = vmatpush.msra.mxu0 0.0
    %2751 = vmatpush.msra.mxu0 0.0
    %2752 = vmatpush.msra.mxu0 0.0
    %2753 = vmatpush.msra.mxu0 0.0
    %2754 = vmatpush.msra.mxu0 %v2274
    %2755 = vmatpush.msra.mxu0 %v2273
    %2756 = vmatpush.msra.mxu0 %v2272
    %2757 = vmatpush.msra.mxu0 %v2271
    %2758 = vmatmul.f32.gmra.mxu0 %v2696
    %v2759 = vpop.f32.mrf.mxu0
    %v2760 = vadd.f32 0.0, %v2759
    %2761 = vdwg.mxu0
    %v2762 = vadd.f32 %v2741, %v2760
    %v2763 = vld [vmem:[%s271] sm:$0x3]
    %2764 = vmatpush.msra.mxu0 0.0
    %2765 = vmatpush.msra.mxu0 0.0
    %2766 = vmatpush.msra.mxu0 0.0
    %2767 = vmatpush.msra.mxu0 0.0
    %2768 = vmatpush.msra.mxu0 0.0
    %2769 = vmatpush.msra.mxu0 0.0
    %2770 = vmatpush.msra.mxu0 0.0
    %2771 = vmatpush.msra.mxu0 0.0
    %2772 = vmatpush.msra.mxu0 0.0
    %2773 = vmatpush.msra.mxu0 0.0
    %2774 = vmatpush.msra.mxu0 0.0
    %2775 = vmatpush.msra.mxu0 0.0
    %2776 = vmatpush.msra.mxu0 %v2301
    %2777 = vmatpush.msra.mxu0 %v2300
    %2778 = vmatpush.msra.mxu0 %v2299
    %2779 = vmatpush.msra.mxu0 %v2298
    %2780 = vmatmul.f32.gmra.mxu0 %v2696
    %v2781 = vpop.f32.mrf.mxu0
    %v2782 = vadd.f32 0.0, %v2781
    %2783 = vdwg.mxu0
    %v2784 = vadd.f32 %v2763, %v2782
    %v2785 = vxor.u32 %v2718, 2147483648
    %v2786 = vmul.f32 %v2785, 1.442695
    %v2787 = vpow.pop %v2786
    %v2788 = vadd.f32 %v2787, 1.0
    %v2789 = vrcp.pop %v2788
    %v2790 = vmul.f32 %v2788, %v2789
    %v2791 = vsub.f32 1.0, %v2790
    %v2792 = vmul.f32 %v2789, %v2791
    %v2793 = vadd.f32 %v2789, %v2792
    %vm2794 = vweird.f32 %v2788
    %vm2795 = vweird.f32 %v2789
    %vm2796 = vmor %vm2794, %vm2795
    %v2797 = vsel %vm2796, %v2789, %v2793
    %v2798 = vand.u32 2147483647, %v2788
    %vm2799 = vcmp.eq.f32.partialorder %v2798, 8.507059e+37
    %v2800 = vand.u32 %v2788, 2147483648
    %v2801 = vor.u32 1.1754944e-38, %v2800
    %v2802 = vsel %vm2799, %v2801, %v2797
    %v2803 = vmul.f32 1.0, %v2802
    %v2804 = vxor.u32 %v2740, 2147483648
    %v2805 = vmul.f32 %v2804, 1.442695
    %v2806 = vpow.pop %v2805
    %v2807 = vadd.f32 %v2806, 1.0
    %v2808 = vrcp.pop %v2807
    %v2809 = vmul.f32 %v2807, %v2808
    %v2810 = vsub.f32 1.0, %v2809
    %v2811 = vmul.f32 %v2808, %v2810
    %v2812 = vadd.f32 %v2808, %v2811
    %vm2813 = vweird.f32 %v2807
    %vm2814 = vweird.f32 %v2808
    %vm2815 = vmor %vm2813, %vm2814
    %v2816 = vsel %vm2815, %v2808, %v2812
    %v2817 = vand.u32 2147483647, %v2807
    %vm2818 = vcmp.eq.f32.partialorder %v2817, 8.507059e+37
    %v2819 = vand.u32 %v2807, 2147483648
    %v2820 = vor.u32 1.1754944e-38, %v2819
    %v2821 = vsel %vm2818, %v2820, %v2816
    %v2822 = vmul.f32 1.0, %v2821
    %v2823 = vtanh.pop %v2762
    %v2824 = vxor.u32 %v2784, 2147483648
    %v2825 = vmul.f32 %v2824, 1.442695
    %v2826 = vpow.pop %v2825
    %v2827 = vadd.f32 %v2826, 1.0
    %v2828 = vrcp.pop %v2827
    %v2829 = vmul.f32 %v2827, %v2828
    %v2830 = vsub.f32 1.0, %v2829
    %v2831 = vmul.f32 %v2828, %v2830
    %v2832 = vadd.f32 %v2828, %v2831
    %vm2833 = vweird.f32 %v2827
    %vm2834 = vweird.f32 %v2828
    %vm2835 = vmor %vm2833, %vm2834
    %v2836 = vsel %vm2835, %v2828, %v2832
    %v2837 = vand.u32 2147483647, %v2827
    %vm2838 = vcmp.eq.f32.partialorder %v2837, 8.507059e+37
    %v2839 = vand.u32 %v2827, 2147483648
    %v2840 = vor.u32 1.1754944e-38, %v2839
    %v2841 = vsel %vm2838, %v2840, %v2836
    %v2842 = vmul.f32 1.0, %v2841
    %v2843 = vmul.f32 %v2822, %v2691
    %v2844 = vmul.f32 %v2803, %v2823
    %v2845 = vadd.f32 %v2843, %v2844
    %v2846 = vtanh.pop %v2845
    %v2847 = vmul.f32 %v2842, %v2846
    %v2848 = vld [vmem:[%s304] sm:$0x3]
    %v2850 = vsel %vm474, %v2847, 0
    %2852 = vmatpush.msra.mxu0 0.0
    %2853 = vmatpush.msra.mxu0 0.0
    %2854 = vmatpush.msra.mxu0 0.0
    %2855 = vmatpush.msra.mxu0 0.0
    %2856 = vmatpush.msra.mxu0 0.0
    %2857 = vmatpush.msra.mxu0 0.0
    %2858 = vmatpush.msra.mxu0 0.0
    %2859 = vmatpush.msra.mxu0 0.0
    %2860 = vmatpush.msra.mxu0 0.0
    %2861 = vmatpush.msra.mxu0 0.0
    %2862 = vmatpush.msra.mxu0 0.0
    %2863 = vmatpush.msra.mxu0 0.0
    %2864 = vmatpush.msra.mxu0 %v2220
    %2865 = vmatpush.msra.mxu0 %v2219
    %2866 = vmatpush.msra.mxu0 %v2218
    %2867 = vmatpush.msra.mxu0 %v2217
    %2868 = vmatmul.f32.gmra.mxu0 %v2850
    %v2869 = vpop.f32.mrf.mxu0
    %v2870 = vadd.f32 0.0, %v2869
    %2871 = vdwg.mxu0
    %v2872 = vadd.f32 %v2848, %v2870
    %v2873 = vld [vmem:[%s310] sm:$0x3]
    %2874 = vmatpush.msra.mxu0 0.0
    %2875 = vmatpush.msra.mxu0 0.0
    %2876 = vmatpush.msra.mxu0 0.0
    %2877 = vmatpush.msra.mxu0 0.0
    %2878 = vmatpush.msra.mxu0 0.0
    %2879 = vmatpush.msra.mxu0 0.0
    %2880 = vmatpush.msra.mxu0 0.0
    %2881 = vmatpush.msra.mxu0 0.0
    %2882 = vmatpush.msra.mxu0 0.0
    %2883 = vmatpush.msra.mxu0 0.0
    %2884 = vmatpush.msra.mxu0 0.0
    %2885 = vmatpush.msra.mxu0 0.0
    %2886 = vmatpush.msra.mxu0 %v2247
    %2887 = vmatpush.msra.mxu0 %v2246
    %2888 = vmatpush.msra.mxu0 %v2245
    %2889 = vmatpush.msra.mxu0 %v2244
    %2890 = vmatmul.f32.gmra.mxu0 %v2850
    %v2891 = vpop.f32.mrf.mxu0
    %v2892 = vadd.f32 0.0, %v2891
    %2893 = vdwg.mxu0
    %v2894 = vadd.f32 %v2873, %v2892
    %v2895 = vld [vmem:[%s315] sm:$0x3]
    %2896 = vmatpush.msra.mxu0 0.0
    %2897 = vmatpush.msra.mxu0 0.0
    %2898 = vmatpush.msra.mxu0 0.0
    %2899 = vmatpush.msra.mxu0 0.0
    %2900 = vmatpush.msra.mxu0 0.0
    %2901 = vmatpush.msra.mxu0 0.0
    %2902 = vmatpush.msra.mxu0 0.0
    %2903 = vmatpush.msra.mxu0 0.0
    %2904 = vmatpush.msra.mxu0 0.0
    %2905 = vmatpush.msra.mxu0 0.0
    %2906 = vmatpush.msra.mxu0 0.0
    %2907 = vmatpush.msra.mxu0 0.0
    %2908 = vmatpush.msra.mxu0 %v2274
    %2909 = vmatpush.msra.mxu0 %v2273
    %2910 = vmatpush.msra.mxu0 %v2272
    %2911 = vmatpush.msra.mxu0 %v2271
    %2912 = vmatmul.f32.gmra.mxu0 %v2850
    %v2913 = vpop.f32.mrf.mxu0
    %v2914 = vadd.f32 0.0, %v2913
    %2915 = vdwg.mxu0
    %v2916 = vadd.f32 %v2895, %v2914
    %v2917 = vld [vmem:[%s320] sm:$0x3]
    %2918 = vmatpush.msra.mxu0 0.0
    %2919 = vmatpush.msra.mxu0 0.0
    %2920 = vmatpush.msra.mxu0 0.0
    %2921 = vmatpush.msra.mxu0 0.0
    %2922 = vmatpush.msra.mxu0 0.0
    %2923 = vmatpush.msra.mxu0 0.0
    %2924 = vmatpush.msra.mxu0 0.0
    %2925 = vmatpush.msra.mxu0 0.0
    %2926 = vmatpush.msra.mxu0 0.0
    %2927 = vmatpush.msra.mxu0 0.0
    %2928 = vmatpush.msra.mxu0 0.0
    %2929 = vmatpush.msra.mxu0 0.0
    %2930 = vmatpush.msra.mxu0 %v2301
    %2931 = vmatpush.msra.mxu0 %v2300
    %2932 = vmatpush.msra.mxu0 %v2299
    %2933 = vmatpush.msra.mxu0 %v2298
    %2934 = vmatmul.f32.gmra.mxu0 %v2850
    %v2935 = vpop.f32.mrf.mxu0
    %v2936 = vadd.f32 0.0, %v2935
    %2937 = vdwg.mxu0
    %v2938 = vadd.f32 %v2917, %v2936
    %v2939 = vxor.u32 %v2872, 2147483648
    %v2940 = vmul.f32 %v2939, 1.442695
    %v2941 = vpow.pop %v2940
    %v2942 = vadd.f32 %v2941, 1.0
    %v2943 = vrcp.pop %v2942
    %v2944 = vmul.f32 %v2942, %v2943
    %v2945 = vsub.f32 1.0, %v2944
    %v2946 = vmul.f32 %v2943, %v2945
    %v2947 = vadd.f32 %v2943, %v2946
    %vm2948 = vweird.f32 %v2942
    %vm2949 = vweird.f32 %v2943
    %vm2950 = vmor %vm2948, %vm2949
    %v2951 = vsel %vm2950, %v2943, %v2947
    %v2952 = vand.u32 2147483647, %v2942
    %vm2953 = vcmp.eq.f32.partialorder %v2952, 8.507059e+37
    %v2954 = vand.u32 %v2942, 2147483648
    %v2955 = vor.u32 1.1754944e-38, %v2954
    %v2956 = vsel %vm2953, %v2955, %v2951
    %v2957 = vmul.f32 1.0, %v2956
    %v2958 = vxor.u32 %v2894, 2147483648
    %v2959 = vmul.f32 %v2958, 1.442695
    %v2960 = vpow.pop %v2959
    %v2961 = vadd.f32 %v2960, 1.0
    %v2962 = vrcp.pop %v2961
    %v2963 = vmul.f32 %v2961, %v2962
    %v2964 = vsub.f32 1.0, %v2963
    %v2965 = vmul.f32 %v2962, %v2964
    %v2966 = vadd.f32 %v2962, %v2965
    %vm2967 = vweird.f32 %v2961
    %vm2968 = vweird.f32 %v2962
    %vm2969 = vmor %vm2967, %vm2968
    %v2970 = vsel %vm2969, %v2962, %v2966
    %v2971 = vand.u32 2147483647, %v2961
    %vm2972 = vcmp.eq.f32.partialorder %v2971, 8.507059e+37
    %v2973 = vand.u32 %v2961, 2147483648
    %v2974 = vor.u32 1.1754944e-38, %v2973
    %v2975 = vsel %vm2972, %v2974, %v2970
    %v2976 = vmul.f32 1.0, %v2975
    %v2977 = vtanh.pop %v2916
    %v2978 = vxor.u32 %v2938, 2147483648
    %v2979 = vmul.f32 %v2978, 1.442695
    %v2980 = vpow.pop %v2979
    %v2981 = vadd.f32 %v2980, 1.0
    %v2982 = vrcp.pop %v2981
    %v2983 = vmul.f32 %v2981, %v2982
    %v2984 = vsub.f32 1.0, %v2983
    %v2985 = vmul.f32 %v2982, %v2984
    %v2986 = vadd.f32 %v2982, %v2985
    %vm2987 = vweird.f32 %v2981
    %vm2988 = vweird.f32 %v2982
    %vm2989 = vmor %vm2987, %vm2988
    %v2990 = vsel %vm2989, %v2982, %v2986
    %v2991 = vand.u32 2147483647, %v2981
    %vm2992 = vcmp.eq.f32.partialorder %v2991, 8.507059e+37
    %v2993 = vand.u32 %v2981, 2147483648
    %v2994 = vor.u32 1.1754944e-38, %v2993
    %v2995 = vsel %vm2992, %v2994, %v2990
    %v2996 = vmul.f32 1.0, %v2995
    %v2997 = vmul.f32 %v2976, %v2845
    %v2998 = vmul.f32 %v2957, %v2977
    %v2999 = vadd.f32 %v2997, %v2998
    %v3000 = vtanh.pop %v2999
    %v3001 = vmul.f32 %v2996, %v3000
    %v3002 = vld [vmem:[%s353] sm:$0x3]
    %v3004 = vsel %vm474, %v3001, 0
    %3006 = vmatpush.msra.mxu0 0.0
    %3007 = vmatpush.msra.mxu0 0.0
    %3008 = vmatpush.msra.mxu0 0.0
    %3009 = vmatpush.msra.mxu0 0.0
    %3010 = vmatpush.msra.mxu0 0.0
    %3011 = vmatpush.msra.mxu0 0.0
    %3012 = vmatpush.msra.mxu0 0.0
    %3013 = vmatpush.msra.mxu0 0.0
    %3014 = vmatpush.msra.mxu0 0.0
    %3015 = vmatpush.msra.mxu0 0.0
    %3016 = vmatpush.msra.mxu0 0.0
    %3017 = vmatpush.msra.mxu0 0.0
    %3018 = vmatpush.msra.mxu0 %v2220
    %3019 = vmatpush.msra.mxu0 %v2219
    %3020 = vmatpush.msra.mxu0 %v2218
    %3021 = vmatpush.msra.mxu0 %v2217
    %3022 = vmatmul.f32.gmra.mxu0 %v3004
    %v3023 = vpop.f32.mrf.mxu0
    %v3024 = vadd.f32 0.0, %v3023
    %3025 = vdwg.mxu0
    %v3026 = vadd.f32 %v3002, %v3024
    %v3027 = vld [vmem:[%s359] sm:$0x3]
    %3028 = vmatpush.msra.mxu0 0.0
    %3029 = vmatpush.msra.mxu0 0.0
    %3030 = vmatpush.msra.mxu0 0.0
    %3031 = vmatpush.msra.mxu0 0.0
    %3032 = vmatpush.msra.mxu0 0.0
    %3033 = vmatpush.msra.mxu0 0.0
    %3034 = vmatpush.msra.mxu0 0.0
    %3035 = vmatpush.msra.mxu0 0.0
    %3036 = vmatpush.msra.mxu0 0.0
    %3037 = vmatpush.msra.mxu0 0.0
    %3038 = vmatpush.msra.mxu0 0.0
    %3039 = vmatpush.msra.mxu0 0.0
    %3040 = vmatpush.msra.mxu0 %v2247
    %3041 = vmatpush.msra.mxu0 %v2246
    %3042 = vmatpush.msra.mxu0 %v2245
    %3043 = vmatpush.msra.mxu0 %v2244
    %3044 = vmatmul.f32.gmra.mxu0 %v3004
    %v3045 = vpop.f32.mrf.mxu0
    %v3046 = vadd.f32 0.0, %v3045
    %3047 = vdwg.mxu0
    %v3048 = vadd.f32 %v3027, %v3046
    %v3049 = vld [vmem:[%s364] sm:$0x3]
    %3050 = vmatpush.msra.mxu0 0.0
    %3051 = vmatpush.msra.mxu0 0.0
    %3052 = vmatpush.msra.mxu0 0.0
    %3053 = vmatpush.msra.mxu0 0.0
    %3054 = vmatpush.msra.mxu0 0.0
    %3055 = vmatpush.msra.mxu0 0.0
    %3056 = vmatpush.msra.mxu0 0.0
    %3057 = vmatpush.msra.mxu0 0.0
    %3058 = vmatpush.msra.mxu0 0.0
    %3059 = vmatpush.msra.mxu0 0.0
    %3060 = vmatpush.msra.mxu0 0.0
    %3061 = vmatpush.msra.mxu0 0.0
    %3062 = vmatpush.msra.mxu0 %v2274
    %3063 = vmatpush.msra.mxu0 %v2273
    %3064 = vmatpush.msra.mxu0 %v2272
    %3065 = vmatpush.msra.mxu0 %v2271
    %3066 = vmatmul.f32.gmra.mxu0 %v3004
    %v3067 = vpop.f32.mrf.mxu0
    %v3068 = vadd.f32 0.0, %v3067
    %3069 = vdwg.mxu0
    %v3070 = vadd.f32 %v3049, %v3068
    %v3071 = vld [vmem:[%s369] sm:$0x3]
    %3072 = vmatpush.msra.mxu0 0.0
    %3073 = vmatpush.msra.mxu0 0.0
    %3074 = vmatpush.msra.mxu0 0.0
    %3075 = vmatpush.msra.mxu0 0.0
    %3076 = vmatpush.msra.mxu0 0.0
    %3077 = vmatpush.msra.mxu0 0.0
    %3078 = vmatpush.msra.mxu0 0.0
    %3079 = vmatpush.msra.mxu0 0.0
    %3080 = vmatpush.msra.mxu0 0.0
    %3081 = vmatpush.msra.mxu0 0.0
    %3082 = vmatpush.msra.mxu0 0.0
    %3083 = vmatpush.msra.mxu0 0.0
    %3084 = vmatpush.msra.mxu0 %v2301
    %3085 = vmatpush.msra.mxu0 %v2300
    %3086 = vmatpush.msra.mxu0 %v2299
    %3087 = vmatpush.msra.mxu0 %v2298
    %3088 = vmatmul.f32.gmra.mxu0 %v3004
    %v3089 = vpop.f32.mrf.mxu0
    %v3090 = vadd.f32 0.0, %v3089
    %3091 = vdwg.mxu0
    %v3092 = vadd.f32 %v3071, %v3090
    %v3093 = vxor.u32 %v3026, 2147483648
    %v3094 = vmul.f32 %v3093, 1.442695
    %v3095 = vpow.pop %v3094
    %v3096 = vadd.f32 %v3095, 1.0
    %v3097 = vrcp.pop %v3096
    %v3098 = vmul.f32 %v3096, %v3097
    %v3099 = vsub.f32 1.0, %v3098
    %v3100 = vmul.f32 %v3097, %v3099
    %v3101 = vadd.f32 %v3097, %v3100
    %vm3102 = vweird.f32 %v3096
    %vm3103 = vweird.f32 %v3097
    %vm3104 = vmor %vm3102, %vm3103
    %v3105 = vsel %vm3104, %v3097, %v3101
    %v3106 = vand.u32 2147483647, %v3096
    %vm3107 = vcmp.eq.f32.partialorder %v3106, 8.507059e+37
    %v3108 = vand.u32 %v3096, 2147483648
    %v3109 = vor.u32 1.1754944e-38, %v3108
    %v3110 = vsel %vm3107, %v3109, %v3105
    %v3111 = vmul.f32 1.0, %v3110
    %v3112 = vxor.u32 %v3048, 2147483648
    %v3113 = vmul.f32 %v3112, 1.442695
    %v3114 = vpow.pop %v3113
    %v3115 = vadd.f32 %v3114, 1.0
    %v3116 = vrcp.pop %v3115
    %v3117 = vmul.f32 %v3115, %v3116
    %v3118 = vsub.f32 1.0, %v3117
    %v3119 = vmul.f32 %v3116, %v3118
    %v3120 = vadd.f32 %v3116, %v3119
    %vm3121 = vweird.f32 %v3115
    %vm3122 = vweird.f32 %v3116
    %vm3123 = vmor %vm3121, %vm3122
    %v3124 = vsel %vm3123, %v3116, %v3120
    %v3125 = vand.u32 2147483647, %v3115
    %vm3126 = vcmp.eq.f32.partialorder %v3125, 8.507059e+37
    %v3127 = vand.u32 %v3115, 2147483648
    %v3128 = vor.u32 1.1754944e-38, %v3127
    %v3129 = vsel %vm3126, %v3128, %v3124
    %v3130 = vmul.f32 1.0, %v3129
    %v3131 = vtanh.pop %v3070
    %v3132 = vxor.u32 %v3092, 2147483648
    %v3133 = vmul.f32 %v3132, 1.442695
    %v3134 = vpow.pop %v3133
    %v3135 = vadd.f32 %v3134, 1.0
    %v3136 = vrcp.pop %v3135
    %v3137 = vmul.f32 %v3135, %v3136
    %v3138 = vsub.f32 1.0, %v3137
    %v3139 = vmul.f32 %v3136, %v3138
    %v3140 = vadd.f32 %v3136, %v3139
    %vm3141 = vweird.f32 %v3135
    %vm3142 = vweird.f32 %v3136
    %vm3143 = vmor %vm3141, %vm3142
    %v3144 = vsel %vm3143, %v3136, %v3140
    %v3145 = vand.u32 2147483647, %v3135
    %vm3146 = vcmp.eq.f32.partialorder %v3145, 8.507059e+37
    %v3147 = vand.u32 %v3135, 2147483648
    %v3148 = vor.u32 1.1754944e-38, %v3147
    %v3149 = vsel %vm3146, %v3148, %v3144
    %v3150 = vmul.f32 1.0, %v3149
    %v3151 = vmul.f32 %v3130, %v2999
    %v3152 = vmul.f32 %v3111, %v3131
    %v3153 = vadd.f32 %v3151, %v3152
    %v3154 = vtanh.pop %v3153
    %v3155 = vmul.f32 %v3150, %v3154
    %v3156 = vld [vmem:[%s402] sm:$0x3]
    %v3158 = vsel %vm474, %v3155, 0
    %3160 = vmatpush.msra.mxu0 0.0
    %3161 = vmatpush.msra.mxu0 0.0
    %3162 = vmatpush.msra.mxu0 0.0
    %3163 = vmatpush.msra.mxu0 0.0
    %3164 = vmatpush.msra.mxu0 0.0
    %3165 = vmatpush.msra.mxu0 0.0
    %3166 = vmatpush.msra.mxu0 0.0
    %3167 = vmatpush.msra.mxu0 0.0
    %3168 = vmatpush.msra.mxu0 0.0
    %3169 = vmatpush.msra.mxu0 0.0
    %3170 = vmatpush.msra.mxu0 0.0
    %3171 = vmatpush.msra.mxu0 0.0
    %3172 = vmatpush.msra.mxu0 %v2220
    %3173 = vmatpush.msra.mxu0 %v2219
    %3174 = vmatpush.msra.mxu0 %v2218
    %3175 = vmatpush.msra.mxu0 %v2217
    %3176 = vmatmul.f32.gmra.mxu0 %v3158
    %v3177 = vpop.f32.mrf.mxu0
    %v3178 = vadd.f32 0.0, %v3177
    %3179 = vdwg.mxu0
    %v3180 = vadd.f32 %v3156, %v3178
    %v3181 = vld [vmem:[%s408] sm:$0x3]
    %3182 = vmatpush.msra.mxu0 0.0
    %3183 = vmatpush.msra.mxu0 0.0
    %3184 = vmatpush.msra.mxu0 0.0
    %3185 = vmatpush.msra.mxu0 0.0
    %3186 = vmatpush.msra.mxu0 0.0
    %3187 = vmatpush.msra.mxu0 0.0
    %3188 = vmatpush.msra.mxu0 0.0
    %3189 = vmatpush.msra.mxu0 0.0
    %3190 = vmatpush.msra.mxu0 0.0
    %3191 = vmatpush.msra.mxu0 0.0
    %3192 = vmatpush.msra.mxu0 0.0
    %3193 = vmatpush.msra.mxu0 0.0
    %3194 = vmatpush.msra.mxu0 %v2247
    %3195 = vmatpush.msra.mxu0 %v2246
    %3196 = vmatpush.msra.mxu0 %v2245
    %3197 = vmatpush.msra.mxu0 %v2244
    %3198 = vmatmul.f32.gmra.mxu0 %v3158
    %v3199 = vpop.f32.mrf.mxu0
    %v3200 = vadd.f32 0.0, %v3199
    %3201 = vdwg.mxu0
    %v3202 = vadd.f32 %v3181, %v3200
    %v3203 = vld [vmem:[%s413] sm:$0x3]
    %3204 = vmatpush.msra.mxu0 0.0
    %3205 = vmatpush.msra.mxu0 0.0
    %3206 = vmatpush.msra.mxu0 0.0
    %3207 = vmatpush.msra.mxu0 0.0
    %3208 = vmatpush.msra.mxu0 0.0
    %3209 = vmatpush.msra.mxu0 0.0
    %3210 = vmatpush.msra.mxu0 0.0
    %3211 = vmatpush.msra.mxu0 0.0
    %3212 = vmatpush.msra.mxu0 0.0
    %3213 = vmatpush.msra.mxu0 0.0
    %3214 = vmatpush.msra.mxu0 0.0
    %3215 = vmatpush.msra.mxu0 0.0
    %3216 = vmatpush.msra.mxu0 %v2274
    %3217 = vmatpush.msra.mxu0 %v2273
    %3218 = vmatpush.msra.mxu0 %v2272
    %3219 = vmatpush.msra.mxu0 %v2271
    %3220 = vmatmul.f32.gmra.mxu0 %v3158
    %v3221 = vpop.f32.mrf.mxu0
    %v3222 = vadd.f32 0.0, %v3221
    %3223 = vdwg.mxu0
    %v3224 = vadd.f32 %v3203, %v3222
    %v3225 = vld [vmem:[%s418] sm:$0x3]
    %3226 = vmatpush.msra.mxu0 0.0
    %3227 = vmatpush.msra.mxu0 0.0
    %3228 = vmatpush.msra.mxu0 0.0
    %3229 = vmatpush.msra.mxu0 0.0
    %3230 = vmatpush.msra.mxu0 0.0
    %3231 = vmatpush.msra.mxu0 0.0
    %3232 = vmatpush.msra.mxu0 0.0
    %3233 = vmatpush.msra.mxu0 0.0
    %3234 = vmatpush.msra.mxu0 0.0
    %3235 = vmatpush.msra.mxu0 0.0
    %3236 = vmatpush.msra.mxu0 0.0
    %3237 = vmatpush.msra.mxu0 0.0
    %3238 = vmatpush.msra.mxu0 %v2301
    %3239 = vmatpush.msra.mxu0 %v2300
    %3240 = vmatpush.msra.mxu0 %v2299
    %3241 = vmatpush.msra.mxu0 %v2298
    %3242 = vmatmul.f32.gmra.mxu0 %v3158
    %v3243 = vpop.f32.mrf.mxu0
    %v3244 = vadd.f32 0.0, %v3243
    %3245 = vdwg.mxu0
    %v3246 = vadd.f32 %v3225, %v3244
    %v3247 = vxor.u32 %v3180, 2147483648
    %v3248 = vmul.f32 %v3247, 1.442695
    %v3249 = vpow.pop %v3248
    %v3250 = vadd.f32 %v3249, 1.0
    %v3251 = vrcp.pop %v3250
    %v3252 = vmul.f32 %v3250, %v3251
    %v3253 = vsub.f32 1.0, %v3252
    %v3254 = vmul.f32 %v3251, %v3253
    %v3255 = vadd.f32 %v3251, %v3254
    %vm3256 = vweird.f32 %v3250
    %vm3257 = vweird.f32 %v3251
    %vm3258 = vmor %vm3256, %vm3257
    %v3259 = vsel %vm3258, %v3251, %v3255
    %v3260 = vand.u32 2147483647, %v3250
    %vm3261 = vcmp.eq.f32.partialorder %v3260, 8.507059e+37
    %v3262 = vand.u32 %v3250, 2147483648
    %v3263 = vor.u32 1.1754944e-38, %v3262
    %v3264 = vsel %vm3261, %v3263, %v3259
    %v3265 = vmul.f32 1.0, %v3264
    %v3266 = vxor.u32 %v3202, 2147483648
    %v3267 = vmul.f32 %v3266, 1.442695
    %v3268 = vpow.pop %v3267
    %v3269 = vadd.f32 %v3268, 1.0
    %v3270 = vrcp.pop %v3269
    %v3271 = vmul.f32 %v3269, %v3270
    %v3272 = vsub.f32 1.0, %v3271
    %v3273 = vmul.f32 %v3270, %v3272
    %v3274 = vadd.f32 %v3270, %v3273
    %vm3275 = vweird.f32 %v3269
    %vm3276 = vweird.f32 %v3270
    %vm3277 = vmor %vm3275, %vm3276
    %v3278 = vsel %vm3277, %v3270, %v3274
    %v3279 = vand.u32 2147483647, %v3269
    %vm3280 = vcmp.eq.f32.partialorder %v3279, 8.507059e+37
    %v3281 = vand.u32 %v3269, 2147483648
    %v3282 = vor.u32 1.1754944e-38, %v3281
    %v3283 = vsel %vm3280, %v3282, %v3278
    %v3284 = vmul.f32 1.0, %v3283
    %v3285 = vtanh.pop %v3224
    %v3286 = vxor.u32 %v3246, 2147483648
    %v3287 = vmul.f32 %v3286, 1.442695
    %v3288 = vpow.pop %v3287
    %v3289 = vadd.f32 %v3288, 1.0
    %v3290 = vrcp.pop %v3289
    %v3291 = vmul.f32 %v3289, %v3290
    %v3292 = vsub.f32 1.0, %v3291
    %v3293 = vmul.f32 %v3290, %v3292
    %v3294 = vadd.f32 %v3290, %v3293
    %vm3295 = vweird.f32 %v3289
    %vm3296 = vweird.f32 %v3290
    %vm3297 = vmor %vm3295, %vm3296
    %v3298 = vsel %vm3297, %v3290, %v3294
    %v3299 = vand.u32 2147483647, %v3289
    %vm3300 = vcmp.eq.f32.partialorder %v3299, 8.507059e+37
    %v3301 = vand.u32 %v3289, 2147483648
    %v3302 = vor.u32 1.1754944e-38, %v3301
    %v3303 = vsel %vm3300, %v3302, %v3298
    %v3304 = vmul.f32 1.0, %v3303
    %v3305 = vmul.f32 %v3284, %v3153
    %v3306 = vmul.f32 %v3265, %v3285
    %v3307 = vadd.f32 %v3305, %v3306
    %v3308 = vtanh.pop %v3307
    %v3309 = vmul.f32 %v3304, %v3308
    %v3310 = vld [vmem:[%s451] sm:$0x3]
    %v3312 = vsel %vm474, %v3309, 0
    %3314 = vmatpush.msra.mxu0 0.0
    %3315 = vmatpush.msra.mxu0 0.0
    %3316 = vmatpush.msra.mxu0 0.0
    %3317 = vmatpush.msra.mxu0 0.0
    %3318 = vmatpush.msra.mxu0 0.0
    %3319 = vmatpush.msra.mxu0 0.0
    %3320 = vmatpush.msra.mxu0 0.0
    %3321 = vmatpush.msra.mxu0 0.0
    %3322 = vmatpush.msra.mxu0 0.0
    %3323 = vmatpush.msra.mxu0 0.0
    %3324 = vmatpush.msra.mxu0 0.0
    %3325 = vmatpush.msra.mxu0 0.0
    %3326 = vmatpush.msra.mxu0 %v2220
    %3327 = vmatpush.msra.mxu0 %v2219
    %3328 = vmatpush.msra.mxu0 %v2218
    %3329 = vmatpush.msra.mxu0 %v2217
    %3330 = vmatmul.f32.gmra.mxu0 %v3312
    %v3331 = vpop.f32.mrf.mxu0
    %v3332 = vadd.f32 0.0, %v3331
    %3333 = vdwg.mxu0
    %v3334 = vadd.f32 %v3310, %v3332
    %v3335 = vld [vmem:[%s457] sm:$0x3]
    %3336 = vmatpush.msra.mxu0 0.0
    %3337 = vmatpush.msra.mxu0 0.0
    %3338 = vmatpush.msra.mxu0 0.0
    %3339 = vmatpush.msra.mxu0 0.0
    %3340 = vmatpush.msra.mxu0 0.0
    %3341 = vmatpush.msra.mxu0 0.0
    %3342 = vmatpush.msra.mxu0 0.0
    %3343 = vmatpush.msra.mxu0 0.0
    %3344 = vmatpush.msra.mxu0 0.0
    %3345 = vmatpush.msra.mxu0 0.0
    %3346 = vmatpush.msra.mxu0 0.0
    %3347 = vmatpush.msra.mxu0 0.0
    %3348 = vmatpush.msra.mxu0 %v2247
    %3349 = vmatpush.msra.mxu0 %v2246
    %3350 = vmatpush.msra.mxu0 %v2245
    %3351 = vmatpush.msra.mxu0 %v2244
    %3352 = vmatmul.f32.gmra.mxu0 %v3312
    %v3353 = vpop.f32.mrf.mxu0
    %v3354 = vadd.f32 0.0, %v3353
    %3355 = vdwg.mxu0
    %v3356 = vadd.f32 %v3335, %v3354
    %v3357 = vld [vmem:[%s462] sm:$0x3]
    %3358 = vmatpush.msra.mxu0 0.0
    %3359 = vmatpush.msra.mxu0 0.0
    %3360 = vmatpush.msra.mxu0 0.0
    %3361 = vmatpush.msra.mxu0 0.0
    %3362 = vmatpush.msra.mxu0 0.0
    %3363 = vmatpush.msra.mxu0 0.0
    %3364 = vmatpush.msra.mxu0 0.0
    %3365 = vmatpush.msra.mxu0 0.0
    %3366 = vmatpush.msra.mxu0 0.0
    %3367 = vmatpush.msra.mxu0 0.0
    %3368 = vmatpush.msra.mxu0 0.0
    %3369 = vmatpush.msra.mxu0 0.0
    %3370 = vmatpush.msra.mxu0 %v2274
    %3371 = vmatpush.msra.mxu0 %v2273
    %3372 = vmatpush.msra.mxu0 %v2272
    %3373 = vmatpush.msra.mxu0 %v2271
    %3374 = vmatmul.f32.gmra.mxu0 %v3312
    %v3375 = vpop.f32.mrf.mxu0
    %v3376 = vadd.f32 0.0, %v3375
    %3377 = vdwg.mxu0
    %v3378 = vadd.f32 %v3357, %v3376
    %v3379 = vld [vmem:[%s467] sm:$0x3]
    %3380 = vmatpush.msra.mxu0 0.0
    %3381 = vmatpush.msra.mxu0 0.0
    %3382 = vmatpush.msra.mxu0 0.0
    %3383 = vmatpush.msra.mxu0 0.0
    %3384 = vmatpush.msra.mxu0 0.0
    %3385 = vmatpush.msra.mxu0 0.0
    %3386 = vmatpush.msra.mxu0 0.0
    %3387 = vmatpush.msra.mxu0 0.0
    %3388 = vmatpush.msra.mxu0 0.0
    %3389 = vmatpush.msra.mxu0 0.0
    %3390 = vmatpush.msra.mxu0 0.0
    %3391 = vmatpush.msra.mxu0 0.0
    %3392 = vmatpush.msra.mxu0 %v2301
    %3393 = vmatpush.msra.mxu0 %v2300
    %3394 = vmatpush.msra.mxu0 %v2299
    %3395 = vmatpush.msra.mxu0 %v2298
    %3396 = vmatmul.f32.gmra.mxu0 %v3312
    %v3397 = vpop.f32.mrf.mxu0
    %v3398 = vadd.f32 0.0, %v3397
    %3399 = vdwg.mxu0
    %v3400 = vadd.f32 %v3379, %v3398
    %v3401 = vxor.u32 %v3334, 2147483648
    %v3402 = vmul.f32 %v3401, 1.442695
    %v3403 = vpow.pop %v3402
    %v3404 = vadd.f32 %v3403, 1.0
    %v3405 = vrcp.pop %v3404
    %v3406 = vmul.f32 %v3404, %v3405
    %v3407 = vsub.f32 1.0, %v3406
    %v3408 = vmul.f32 %v3405, %v3407
    %v3409 = vadd.f32 %v3405, %v3408
    %vm3410 = vweird.f32 %v3404
    %vm3411 = vweird.f32 %v3405
    %vm3412 = vmor %vm3410, %vm3411
    %v3413 = vsel %vm3412, %v3405, %v3409
    %v3414 = vand.u32 2147483647, %v3404
    %vm3415 = vcmp.eq.f32.partialorder %v3414, 8.507059e+37
    %v3416 = vand.u32 %v3404, 2147483648
    %v3417 = vor.u32 1.1754944e-38, %v3416
    %v3418 = vsel %vm3415, %v3417, %v3413
    %v3419 = vmul.f32 1.0, %v3418
    %v3420 = vxor.u32 %v3356, 2147483648
    %v3421 = vmul.f32 %v3420, 1.442695
    %v3422 = vpow.pop %v3421
    %v3423 = vadd.f32 %v3422, 1.0
    %v3424 = vrcp.pop %v3423
    %v3425 = vmul.f32 %v3423, %v3424
    %v3426 = vsub.f32 1.0, %v3425
    %v3427 = vmul.f32 %v3424, %v3426
    %v3428 = vadd.f32 %v3424, %v3427
    %vm3429 = vweird.f32 %v3423
    %vm3430 = vweird.f32 %v3424
    %vm3431 = vmor %vm3429, %vm3430
    %v3432 = vsel %vm3431, %v3424, %v3428
    %v3433 = vand.u32 2147483647, %v3423
    %vm3434 = vcmp.eq.f32.partialorder %v3433, 8.507059e+37
    %v3435 = vand.u32 %v3423, 2147483648
    %v3436 = vor.u32 1.1754944e-38, %v3435
    %v3437 = vsel %vm3434, %v3436, %v3432
    %v3438 = vmul.f32 1.0, %v3437
    %v3439 = vtanh.pop %v3378
    %v3440 = vxor.u32 %v3400, 2147483648
    %v3441 = vmul.f32 %v3440, 1.442695
    %v3442 = vpow.pop %v3441
    %v3443 = vadd.f32 %v3442, 1.0
    %v3444 = vrcp.pop %v3443
    %v3445 = vmul.f32 %v3443, %v3444
    %v3446 = vsub.f32 1.0, %v3445
    %v3447 = vmul.f32 %v3444, %v3446
    %v3448 = vadd.f32 %v3444, %v3447
    %vm3449 = vweird.f32 %v3443
    %vm3450 = vweird.f32 %v3444
    %vm3451 = vmor %vm3449, %vm3450
    %v3452 = vsel %vm3451, %v3444, %v3448
    %v3453 = vand.u32 2147483647, %v3443
    %vm3454 = vcmp.eq.f32.partialorder %v3453, 8.507059e+37
    %v3455 = vand.u32 %v3443, 2147483648
    %v3456 = vor.u32 1.1754944e-38, %v3455
    %v3457 = vsel %vm3454, %v3456, %v3452
    %v3458 = vmul.f32 1.0, %v3457
    %v3459 = vmul.f32 %v3438, %v3307
    %v3460 = vmul.f32 %v3419, %v3439
    %v3461 = vadd.f32 %v3459, %v3460
    %v3462 = vtanh.pop %v3461
    %v3463 = vmul.f32 %v3458, %v3462
    %v3464 = vld [vmem:[%s7] sm:$0xff]
    %v3465 = vld [vmem:[%s7 + $0x8] sm:$0xff]
    %v3466 = vld [vmem:[%s7 + $0x10] sm:$0xff]
    %v3467 = vld [vmem:[%s7 + $0x18] sm:$0xff]
    %v3468 = vld [vmem:[%s8] sm:$0x1]
    %v3470 = vperm.slane %v3468, 0
    %v3473 = vsel %vm474, %v3463, 0
    %3475 = vmatpush.msra.mxu0 0.0
    %3476 = vmatpush.msra.mxu0 0.0
    %3477 = vmatpush.msra.mxu0 0.0
    %3478 = vmatpush.msra.mxu0 0.0
    %3479 = vmatpush.msra.mxu0 0.0
    %3480 = vmatpush.msra.mxu0 0.0
    %3481 = vmatpush.msra.mxu0 0.0
    %3482 = vmatpush.msra.mxu0 0.0
    %3483 = vmatpush.msra.mxu0 0.0
    %3484 = vmatpush.msra.mxu0 0.0
    %3485 = vmatpush.msra.mxu0 0.0
    %3486 = vmatpush.msra.mxu0 0.0
    %3487 = vmatpush.msra.mxu0 %v3467
    %3488 = vmatpush.msra.mxu0 %v3466
    %3489 = vmatpush.msra.mxu0 %v3465
    %3490 = vmatpush.msra.mxu0 %v3464
    %3491 = vmatmul.f32.gmra.mxu0 %v3473
    %v3492 = vpop.f32.mrf.mxu0
    %v3493 = vadd.f32 %v3470, %v3492
    %3494 = vdwg.mxu0
    %vm3495 = vcmask 74752
    %3496 = vst.msk [vmem:[#allocation13] sm:$0x3] %vm3495, %v3493
    // Predicated region
    $region50: #{tpu_custom_call.1} parent=1 // pred_check
      _
    $region51: #{tpu_custom_call.1} parent=1 // pred_check_branch
      %3498 = sbr.rel (0) target = $region53
    $region52: #{tpu_custom_call.1} parent=1 // pred_region
      %3500 = vsyncadd [#allocation9], 0
      %s3502 = sshll.u32 [#allocation13], 4
      %s3503 = int_to_ptr.vmem [resolvable:$true] %s3502
      %s3504 = sshll.u32 %s9, 4
      %s3505 = int_to_ptr.hbm [resolvable:$true] %s3504
      %3507 = dma.vmem_to_hbm [thread:$0]  %s3503, 32, %s3505, [#allocation9]
    $region53: #{tpu_custom_call.1} parent=1 // pred_fallthru
      _
    // Predicated region
    $region54: #{tpu_custom_call.1} parent=1 // pred_check
      _
    $region55: #{tpu_custom_call.1} parent=1 // pred_check_branch
      %3509 = sbr.rel (0) target = $region57
    $region56: #{tpu_custom_call.1} parent=1 // pred_region
      %3511 = dma.done [#allocation9], 32
    $region57: #{tpu_custom_call.1} parent=1 // pred_fallthru
      _
    %3512 = vsyncpa [#allocation8], 1
    %3513 = vsyncpa [#allocation11], 1
    %3514 = vsyncpa [#allocation9], 1

</llo_original>
